<compile_context>
chip_gen: v5e
topology: v5e:2x2
jax: 0.10.0
libtpu: 0.0.40
codegen_flags: <defaults>
</compile_context>

<pallas_src>
import functools

import jax
import jax.numpy as jnp
from jax import lax
from jax.experimental import pallas as pl
from jax.experimental.pallas import tpu as pltpu


_PARALLEL_B = pltpu.CompilerParams(dimension_semantics=("parallel",))
_SQRT_2_OVER_PI = 0.7978845608028654


def _gelu(x):
    # TODO(synk): PyTorch F.gelu defaults to the exact erf form; the tanh
    # approximation is used here because erf is not guaranteed to lower on
    # Mosaic TPU.  The pure-JAX reference below uses the same approximation.
    return 0.5 * x * (1.0 + jnp.tanh(_SQRT_2_OVER_PI * (x + 0.044715 * x * x * x)))


# ---------------------------------------------------------------------------
# Kernel 1: whole MSA channel-attention path for one batch element.
#   inputs (channel-major): y, x2, x4, x8            (C, T), T = H*W
#   outputs:                out_c^T (C, T), v_m^T (C, T)  (v_m feeds pos_emb)
# ---------------------------------------------------------------------------
def msa_kernel(y_ref, x2_ref, x4_ref, x8_ref, wq_ref, wk_ref, wv_ref,
               rescale_ref, wp_ref, bp_ref, outc_ref, vm_ref, *, heads):
    c = y_ref.shape[1]
    T = y_ref.shape[2]
    d = c // heads

    srcs = (y_ref[0], x2_ref[0], x4_ref[0], x8_ref[0])          # each (C, T)

    def l2norm_rows(m):                                          # F.normalize(dim=-1)
        s = jnp.sum(m * m, axis=-1, keepdims=True)
        return m / jnp.maximum(jnp.sqrt(s), 1e-12)

    # q^T = Wq @ y^T -> (C, T); tokens stay on lanes (lane-dense).
    qn = l2norm_rows(jnp.dot(wq_ref[...], srcs[0],
                             preferred_element_type=jnp.float32))

    kns, vts = [], []
    for s in range(4):                                           # scales m, 2, 4, 8
        kT = jnp.dot(wk_ref[s], srcs[s], preferred_element_type=jnp.float32)
        vT = jnp.dot(wv_ref[s], srcs[s], preferred_element_type=jnp.float32)
        kns.append(l2norm_rows(kT))
        vts.append(vT)

    # v_inpm is needed outside for the depthwise positional branch.
    vm_ref[...] = vts[0].reshape(1, c, T).astype(vm_ref.dtype)

    head_outs = []
    for hh in range(heads):
        qh = qn[hh * d:(hh + 1) * d, :]                          # (d, T)
        out_h = jnp.zeros((d, T), jnp.float32)
        for s in range(4):
            kh = kns[s][hh * d:(hh + 1) * d, :]                  # (d, T)
            vh = vts[s][hh * d:(hh + 1) * d, :]                  # (d, T)
            # attn = k @ q^T over tokens -> (d, d) channel attention.
            attn = lax.dot_general(kh, qh, (((1,), (1,)), ((), ())),
                                   preferred_element_type=jnp.float32)
            attn = attn * rescale_ref[s:s + 1, hh:hh + 1]        # per-head scale
            attn = attn - jnp.max(attn, axis=-1, keepdims=True)  # softmax(dim=-1)
            attn = jnp.exp(attn)
            attn = attn / jnp.sum(attn, axis=-1, keepdims=True)
            out_h = out_h + jnp.dot(attn, vh,
                                    preferred_element_type=jnp.float32)
        head_outs.append(out_h)

    xcomb = jnp.concatenate(head_outs, axis=0)                   # (C, T)
    outc = jnp.dot(wp_ref[...], xcomb,
                   preferred_element_type=jnp.float32) + bp_ref[...]
    outc_ref[...] = outc.reshape(1, c, T).astype(outc_ref.dtype)


# ---------------------------------------------------------------------------
# Kernel 2: depthwise 3x3 conv (padding=1) [+ GELU], one batch element.
#   xpad: (C, H+2, W+2) zero-padded input; w: (C, 9) taps, row-major 3x3.
# ---------------------------------------------------------------------------
def dwconv_kernel(xpad_ref, w_ref, o_ref, *, gelu):
    C, H, W = o_ref.shape[1], o_ref.shape[2], o_ref.shape[3]
    acc = jnp.zeros((C, H, W), jnp.float32)
    for dy in range(3):
        for dx in range(3):
            k = dy * 3 + dx
            tap = w_ref[:, k:k + 1][:, :, None]                  # (C, 1, 1)
            acc = acc + tap * xpad_ref[0, :, dy:dy + H, dx:dx + W]
    if gelu:
        acc = _gelu(acc)
    o_ref[...] = acc.reshape(1, C, H, W).astype(o_ref.dtype)


# Same conv (no GELU) fused with the two residual adds of the attention branch:
#   out = dwconv(xpad) + out_c + y      (this is "x = attn(...) + y" of MLSIF)
def dwconv_add2_kernel(xpad_ref, w_ref, a_ref, b_ref, o_ref):
    C, H, W = o_ref.shape[1], o_ref.shape[2], o_ref.shape[3]
    acc = jnp.zeros((C, H, W), jnp.float32)
    for dy in range(3):
        for dx in range(3):
            k = dy * 3 + dx
            tap = w_ref[:, k:k + 1][:, :, None]
            acc = acc + tap * xpad_ref[0, :, dy:dy + H, dx:dx + W]
    acc = acc + a_ref[0] + b_ref[0]
    o_ref[...] = acc.reshape(1, C, H, W).astype(o_ref.dtype)


# ---------------------------------------------------------------------------
# Kernel 3: PreNorm (LayerNorm over channels) + 1x1 conv (C -> 4C) + GELU.
# ---------------------------------------------------------------------------
def ff_in_kernel(r_ref, g_ref, b_ref, w1_ref, o_ref):
    hid = o_ref.shape[1]
    T = o_ref.shape[2]
    x = r_ref[0]                                           # (C, T)
    mu = jnp.mean(x, axis=0, keepdims=True)                # per-token stats
    xc = x - mu
    var = jnp.mean(xc * xc, axis=0, keepdims=True)
    xn = xc * lax.rsqrt(var + 1e-5)
    xn = xn * g_ref[...] + b_ref[...]                      # affine, (C,1) broadcast
    h = jnp.dot(w1_ref[...], xn, preferred_element_type=jnp.float32)   # (4C, T)
    o_ref[...] = _gelu(h).reshape(1, hid, T).astype(o_ref.dtype)


# ---------------------------------------------------------------------------
# Kernel 4: final 1x1 conv (4C -> C) + residual add (x = ff(x) + x).
# ---------------------------------------------------------------------------
def ff_out_kernel(h_ref, w2_ref, r_ref, o_ref):
    c = o_ref.shape[1]
    T = o_ref.shape[2]
    out = jnp.dot(w2_ref[...], h_ref[0],
                  preferred_element_type=jnp.float32) + r_ref[0]
    o_ref[...] = out.reshape(1, c, T).astype(o_ref.dtype)


# ---------------------------------------------------------------------------
# pallas_call wrappers (grid over batch; weights broadcast across the grid).
# ---------------------------------------------------------------------------
def _bcast(shape):
    nd = len(shape)
    return pl.BlockSpec(tuple(shape), lambda i, _nd=nd: (0,) * _nd)


def _per_batch(shape_tail):
    nd = len(shape_tail)
    return pl.BlockSpec((1,) + tuple(shape_tail),
                        lambda i, _nd=nd: (i,) + (0,) * _nd)


def msa_call(blk, yf, x2f, x4f, x8f, *, heads):
    b, c, T = yf.shape
    act = _per_batch((c, T))
    return pl.pallas_call(
        functools.partial(msa_kernel, heads=heads),
        out_shape=(jax.ShapeDtypeStruct((b, c, T), jnp.float32),
                   jax.ShapeDtypeStruct((b, c, T), jnp.float32)),
        grid_spec=pltpu.PrefetchScalarGridSpec(
            num_scalar_prefetch=0, grid=(b,),
            in_specs=[act, act, act, act,
                      _bcast((c, c)),                  # wq
                      _bcast((4, c, c)),               # wk (m,2,4,8)
                      _bcast((4, c, c)),               # wv (m,2,4,8)
                      _bcast((4, heads)),              # rescale (m,2,4,4)
                      _bcast((c, c)),                  # proj weight
                      _bcast((c, 1))],                 # proj bias
            out_specs=[act, act]),
        compiler_params=_PARALLEL_B,
    )(yf, x2f, x4f, x8f, blk["wq"], blk["wk"], blk["wv"],
      blk["rescale"], blk["wp"], blk["bp"])


def dwconv_call(xpad, wdw, *, gelu):
    b, C, Hp, Wp = xpad.shape
    H, W = Hp - 2, Wp - 2
    return pl.pallas_call(
        functools.partial(dwconv_kernel, gelu=gelu),
        out_shape=jax.ShapeDtypeStruct((b, C, H, W), jnp.float32),
        grid_spec=pltpu.PrefetchScalarGridSpec(
            num_scalar_prefetch=0, grid=(b,),
            in_specs=[_per_batch((C, Hp, Wp)), _bcast((C, 9))],
            out_specs=_per_batch((C, H, W))),
        compiler_params=_PARALLEL_B,
    )(xpad, wdw)


def dwconv_add2_call(xpad, wdw, a_img, b_img):
    b, C, Hp, Wp = xpad.shape
    H, W = Hp - 2, Wp - 2
    return pl.pallas_call(
        dwconv_add2_kernel,
        out_shape=jax.ShapeDtypeStruct((b, C, H, W), jnp.float32),
        grid_spec=pltpu.PrefetchScalarGridSpec(
            num_scalar_prefetch=0, grid=(b,),
            in_specs=[_per_batch((C, Hp, Wp)), _bcast((C, 9)),
                      _per_batch((C, H, W)), _per_batch((C, H, W))],
            out_specs=_per_batch((C, H, W))),
        compiler_params=_PARALLEL_B,
    )(xpad, wdw, a_img, b_img)


def ff_in_call(r, g, beta, w1):
    b, c, T = r.shape
    hid = w1.shape[0]
    return pl.pallas_call(
        ff_in_kernel,
        out_shape=jax.ShapeDtypeStruct((b, hid, T), jnp.float32),
        grid_spec=pltpu.PrefetchScalarGridSpec(
            num_scalar_prefetch=0, grid=(b,),
            in_specs=[_per_batch((c, T)), _bcast((c, 1)), _bcast((c, 1)),
                      _bcast((hid, c))],
            out_specs=_per_batch((hid, T))),
        compiler_params=_PARALLEL_B,
    )(r, g, beta, w1)


def ff_out_call(h2, w2, r):
    b, hid, T = h2.shape
    c = w2.shape[0]
    return pl.pallas_call(
        ff_out_kernel,
        out_shape=jax.ShapeDtypeStruct((b, c, T), jnp.float32),
        grid_spec=pltpu.PrefetchScalarGridSpec(
            num_scalar_prefetch=0, grid=(b,),
            in_specs=[_per_batch((hid, T)), _bcast((c, hid)), _per_batch((c, T))],
            out_specs=_per_batch((c, T))),
        compiler_params=_PARALLEL_B,
    )(h2, w2, r)


# ---------------------------------------------------------------------------
# MLSIF forward driver (all heavy math inside Pallas; only reshape/pad glue).
# ---------------------------------------------------------------------------
def mlsif_forward(params, x_2, x_4, x_8, y, *, heads):
    """Inputs are NCHW (B, C, H, W) float32; returns NCHW."""
    b, c, h, w = y.shape
    T = h * w
    pad = lambda t: jnp.pad(t, ((0, 0), (0, 0), (1, 1), (1, 1)))

    yf = y.reshape(b, c, T)
    x2f = x_2.reshape(b, c, T)
    x4f = x_4.reshape(b, c, T)
    x8f = x_8.reshape(b, c, T)

    x_cur = yf
    for blk in params["blocks"]:
        # ---- MSA ----------------------------------------------------------
        out_c, v_m = msa_call(blk, yf, x2f, x4f, x8f, heads=heads)
        # positional branch: depthwise 3x3 -> GELU -> depthwise 3x3 on v_inpm
        p1 = dwconv_call(pad(v_m.reshape(b, c, h, w)), blk["pos_dw1"], gelu=True)
        # second depthwise conv fused with the "out_c + pos + y" adds
        r_img = dwconv_add2_call(pad(p1), blk["pos_dw2"],
                                 out_c.reshape(b, c, h, w), y)
        r = r_img.reshape(b, c, T)                       # x = attn(...) + y
        # ---- PreNorm + FeedForward ----------------------------------------
        h1 = ff_in_call(r, blk["ln_g"], blk["ln_b"], blk["ff_w1"])     # (b,4c,T)
        h2 = dwconv_call(pad(h1.reshape(b, 4 * c, h, w)), blk["ff_dw"], gelu=True)
        x_cur = ff_out_call(h2.reshape(b, 4 * c, T), blk["ff_w2"], r)  # ff(x)+x
    return x_cur.reshape(b, c, h, w)


# ---------------------------------------------------------------------------
# Pure-JAX reference mirroring the PyTorch module (token-major, f32).
# ---------------------------------------------------------------------------
def ref_mlsif(params, x_2, x_4, x_8, y, *, heads):
    hp = lax.Precision.HIGHEST
    b, c, h, w = y.shape
    d = c // heads
    n = h * w
    nhwc = lambda t: jnp.transpose(t, (0, 2, 3, 1))
    x2n, x4n, x8n, yn = nhwc(x_2), nhwc(x_4), nhwc(x_8), nhwc(y)

    def lin(t, W):                                     # nn.Linear, no bias
        return jnp.einsum('bnc,oc->bno', t, W, precision=hp)

    def heads_dn(t):                                   # b n (h d) -> b h d n
        return t.reshape(b, n, heads, d).transpose(0, 2, 3, 1)

    def l2n(t):                                        # F.normalize(dim=-1)
        nrm = jnp.sqrt(jnp.sum(t * t, axis=-1, keepdims=True))
        return t / jnp.maximum(nrm, 1e-12)

    def dwconv(t, wdw):                                # depthwise 3x3, pad=1
        C = t.shape[-1]
        w_hwio = wdw.reshape(C, 3, 3).transpose(1, 2, 0)[:, :, None, :]
        return lax.conv_general_dilated(
            t, w_hwio, (1, 1), "SAME",
            dimension_numbers=("NHWC", "HWIO", "NHWC"),
            feature_group_count=C, precision=hp)

    x_cur = yn
    for blk in params["blocks"]:
        srcs = [yn.reshape(b, n, c), x2n.reshape(b, n, c),
                x4n.reshape(b, n, c), x8n.reshape(b, n, c)]
        q = l2n(heads_dn(lin(srcs[0], blk["wq"])))
        vm_tok = lin(srcs[0], blk["wv"][0])
        xacc = jnp.zeros((b, heads, d, n), jnp.float32)
        for s in range(4):
            ks = l2n(heads_dn(lin(srcs[s], blk["wk"][s])))
            vs = heads_dn(lin(srcs[s], blk["wv"][s]))
            attn = jnp.einsum('bhdn,bhen->bhde', ks, q, precision=hp)
            attn = attn * blk["rescale"][s][None, :, None, None]
            attn = jax.nn.softmax(attn, axis=-1)
            xacc = xacc + jnp.einsum('bhde,bhen->bhdn', attn, vs, precision=hp)
        xtok = xacc.transpose(0, 3, 1, 2).reshape(b, n, c)
        out_c = (jnp.einsum('bnc,oc->bno', xtok, blk["wp"], precision=hp)
                 + blk["bp"][:, 0]).reshape(b, h, w, c)
        pos = dwconv(_gelu(dwconv(vm_tok.reshape(b, h, w, c), blk["pos_dw1"])),
                     blk["pos_dw2"])
        xattn = out_c + pos + yn                       # x = attn(...) + y
        mu = jnp.mean(xattn, axis=-1, keepdims=True)
        var = jnp.mean((xattn - mu) ** 2, axis=-1, keepdims=True)
        ln = ((xattn - mu) / jnp.sqrt(var + 1e-5)) * blk["ln_g"][:, 0] + blk["ln_b"][:, 0]
        h1 = _gelu(jnp.einsum('bhwc,oc->bhwo', ln, blk["ff_w1"], precision=hp))
        h2 = _gelu(dwconv(h1, blk["ff_dw"]))
        x_cur = jnp.einsum('bhwo,co->bhwc', h2, blk["ff_w2"], precision=hp) + xattn
    return jnp.transpose(x_cur, (0, 3, 1, 2))


if __name__ == "__main__":
    B, DIM, H, W = 2, 16, 8, 8
    HEADS = 2                      # dim_head * heads == dim (module requirement)
    NUM_BLOCKS = 2

    key = jax.random.PRNGKey(0)
    key, kx2, kx4, kx8, ky = jax.random.split(key, 5)
    x_2 = jax.random.normal(kx2, (B, DIM, H, W), jnp.float32)
    x_4 = jax.random.normal(kx4, (B, DIM, H, W), jnp.float32)
    x_8 = jax.random.normal(kx8, (B, DIM, H, W), jnp.float32)
    y = jax.random.normal(ky, (B, DIM, H, W), jnp.float32)

    blocks = []
    for _ in range(NUM_BLOCKS):
        key, *bk = jax.random.split(key, 16)
        rm = 1.0 + 0.2 * jax.random.normal(bk[3], (HEADS,), jnp.float32)
        r2 = 1.0 + 0.2 * jax.random.normal(bk[4], (HEADS,), jnp.float32)
        r4 = 1.0 + 0.2 * jax.random.normal(bk[5], (HEADS,), jnp.float32)
        blocks.append(dict(
            wq=0.2 * jax.random.normal(bk[0], (DIM, DIM), jnp.float32),
            wk=0.2 * jax.random.normal(bk[1], (4, DIM, DIM), jnp.float32),
            wv=0.2 * jax.random.normal(bk[2], (4, DIM, DIM), jnp.float32),
            # Row order [rescalem, rescale2, rescale4, rescale4]: the original
            # module multiplies attn8 by rescale4 (its rescale8 is unused).
            rescale=jnp.stack([rm, r2, r4, r4], axis=0),
            wp=0.2 * jax.random.normal(bk[6], (DIM, DIM), jnp.float32),
            bp=0.1 * jax.random.normal(bk[7], (DIM, 1), jnp.float32),
            pos_dw1=0.2 * jax.random.normal(bk[8], (DIM, 9), jnp.float32),
            pos_dw2=0.2 * jax.random.normal(bk[9], (DIM, 9), jnp.float32),
            ln_g=1.0 + 0.1 * jax.random.normal(bk[10], (DIM, 1), jnp.float32),
            ln_b=0.1 * jax.random.normal(bk[11], (DIM, 1), jnp.float32),
            ff_w1=0.2 * jax.random.normal(bk[12], (4 * DIM, DIM), jnp.float32),
            ff_dw=0.2 * jax.random.normal(bk[13], (4 * DIM, 9), jnp.float32),
            ff_w2=0.2 * jax.random.normal(bk[14], (DIM, 4 * DIM), jnp.float32),
        ))
    params = dict(blocks=blocks)

    fwd = jax.jit(functools.partial(mlsif_forward, heads=HEADS))
    out = jax.block_until_ready(fwd(params, x_2, x_4, x_8, y))
    assert out.shape == (B, DIM, H, W)

    ref = jax.block_until_ready(ref_mlsif(params, x_2, x_4, x_8, y, heads=HEADS))
    err = float(jnp.max(jnp.abs(out - ref)))
    assert jnp.allclose(out, ref, atol=1e-3, rtol=1e-3), f"mismatch vs reference: {err}"

    print("KERNEL_OK")
</pallas_src>

<mosaic_0001>
module attributes {stable_mosaic.version = 11 : i64} {
  func.func @msa_kernel(%arg0: i32, %arg1: memref<1x16x64xf32, #tpu.memory_space<vmem>>, %arg2: memref<1x16x64xf32, #tpu.memory_space<vmem>>, %arg3: memref<1x16x64xf32, #tpu.memory_space<vmem>>, %arg4: memref<1x16x64xf32, #tpu.memory_space<vmem>>, %arg5: memref<16x16xf32, #tpu.memory_space<vmem>>, %arg6: memref<4x16x16xf32, #tpu.memory_space<vmem>>, %arg7: memref<4x16x16xf32, #tpu.memory_space<vmem>>, %arg8: memref<4x2xf32, #tpu.memory_space<vmem>>, %arg9: memref<16x16xf32, #tpu.memory_space<vmem>>, %arg10: memref<16x1xf32, #tpu.memory_space<vmem>>, %arg11: memref<1x16x64xf32, #tpu.memory_space<vmem>>, %arg12: memref<1x16x64xf32, #tpu.memory_space<vmem>>) attributes {dimension_semantics = [#tpu.dimension_semantics<parallel>], iteration_bounds = array<i64: 2>, scalar_prefetch = 0 : i64, scratch_operands = 0 : i64, tpu.core_type = #tpu.core_type<tc>, window_params = [{transform_indices = @transform_0, window_bounds = array<i64: 1, 16, 64>}, {transform_indices = @transform_1, window_bounds = array<i64: 1, 16, 64>}, {transform_indices = @transform_2, window_bounds = array<i64: 1, 16, 64>}, {transform_indices = @transform_3, window_bounds = array<i64: 1, 16, 64>}, {pipeline_mode = #tpu.pipeline_mode<synchronous>, transform_indices = @transform_4, window_bounds = array<i64: 16, 16>}, {pipeline_mode = #tpu.pipeline_mode<synchronous>, transform_indices = @transform_5, window_bounds = array<i64: 4, 16, 16>}, {pipeline_mode = #tpu.pipeline_mode<synchronous>, transform_indices = @transform_6, window_bounds = array<i64: 4, 16, 16>}, {pipeline_mode = #tpu.pipeline_mode<synchronous>, transform_indices = @transform_7, window_bounds = array<i64: 4, 2>}, {pipeline_mode = #tpu.pipeline_mode<synchronous>, transform_indices = @transform_8, window_bounds = array<i64: 16, 16>}, {pipeline_mode = #tpu.pipeline_mode<synchronous>, transform_indices = @transform_9, window_bounds = array<i64: 16, 1>}, {transform_indices = @transform_10, window_bounds = array<i64: 1, 16, 64>}, {transform_indices = @transform_11, window_bounds = array<i64: 1, 16, 64>}]} {
    %c0 = arith.constant 0 : index
    %c0_0 = arith.constant 0 : index
    %c0_1 = arith.constant 0 : index
    %0 = vector.load %arg1[%c0, %c0_0, %c0_1] : memref<1x16x64xf32, #tpu.memory_space<vmem>>, vector<1x16x64xf32>
    %1 = vector.shape_cast %0 : vector<1x16x64xf32> to vector<16x64xf32>
    %c0_2 = arith.constant 0 : index
    %c0_3 = arith.constant 0 : index
    %c0_4 = arith.constant 0 : index
    %2 = vector.load %arg2[%c0_2, %c0_3, %c0_4] : memref<1x16x64xf32, #tpu.memory_space<vmem>>, vector<1x16x64xf32>
    %3 = vector.shape_cast %2 : vector<1x16x64xf32> to vector<16x64xf32>
    %c0_5 = arith.constant 0 : index
    %c0_6 = arith.constant 0 : index
    %c0_7 = arith.constant 0 : index
    %4 = vector.load %arg3[%c0_5, %c0_6, %c0_7] : memref<1x16x64xf32, #tpu.memory_space<vmem>>, vector<1x16x64xf32>
    %5 = vector.shape_cast %4 : vector<1x16x64xf32> to vector<16x64xf32>
    %c0_8 = arith.constant 0 : index
    %c0_9 = arith.constant 0 : index
    %c0_10 = arith.constant 0 : index
    %6 = vector.load %arg4[%c0_8, %c0_9, %c0_10] : memref<1x16x64xf32, #tpu.memory_space<vmem>>, vector<1x16x64xf32>
    %7 = vector.shape_cast %6 : vector<1x16x64xf32> to vector<16x64xf32>
    %c0_11 = arith.constant 0 : index
    %c0_12 = arith.constant 0 : index
    %8 = vector.load %arg5[%c0_11, %c0_12] : memref<16x16xf32, #tpu.memory_space<vmem>>, vector<16x16xf32>
    %cst = arith.constant dense<0.000000e+00> : vector<16x64xf32>
    %9 = tpu.matmul %8, %1, %cst {dimension_numbers = #tpu.dot_dimension_numbers<[1], [0], [0], [1], [0, 0, 1, 1], [], []>} : vector<16x16xf32>, vector<16x64xf32>, vector<16x64xf32> -> vector<16x64xf32>
    %10 = arith.mulf %9, %9 : vector<16x64xf32>
    %cst_13 = arith.constant dense<0.000000e+00> : vector<16xf32>
    %11 = vector.multi_reduction <add>, %10, %cst_13 [1] : vector<16x64xf32> to vector<16xf32>
    %12 = vector.shape_cast %11 : vector<16xf32> to vector<16x1xf32>
    %13 = math.sqrt %12 : vector<16x1xf32>
    %cst_14 = arith.constant 9.99999996E-13 : f32
    %14 = vector.broadcast %cst_14 : f32 to vector<16x1xf32>
    %15 = arith.maximumf %13, %14 : vector<16x1xf32>
    %16 = vector.broadcast %15 : vector<16x1xf32> to vector<16x64xf32>
    %17 = arith.divf %9, %16 : vector<16x64xf32>
    %c0_15 = arith.constant 0 : index
    %c0_16 = arith.constant 0 : index
    %c0_17 = arith.constant 0 : index
    %18 = vector.load %arg6[%c0_15, %c0_16, %c0_17] : memref<4x16x16xf32, #tpu.memory_space<vmem>>, vector<1x16x16xf32>
    %19 = vector.shape_cast %18 : vector<1x16x16xf32> to vector<16x16xf32>
    %cst_18 = arith.constant dense<0.000000e+00> : vector<16x64xf32>
    %20 = tpu.matmul %19, %1, %cst_18 {dimension_numbers = #tpu.dot_dimension_numbers<[1], [0], [0], [1], [0, 0, 1, 1], [], []>} : vector<16x16xf32>, vector<16x64xf32>, vector<16x64xf32> -> vector<16x64xf32>
    %c0_19 = arith.constant 0 : index
    %c0_20 = arith.constant 0 : index
    %c0_21 = arith.constant 0 : index
    %21 = vector.load %arg7[%c0_19, %c0_20, %c0_21] : memref<4x16x16xf32, #tpu.memory_space<vmem>>, vector<1x16x16xf32>
    %22 = vector.shape_cast %21 : vector<1x16x16xf32> to vector<16x16xf32>
    %cst_22 = arith.constant dense<0.000000e+00> : vector<16x64xf32>
    %23 = tpu.matmul %22, %1, %cst_22 {dimension_numbers = #tpu.dot_dimension_numbers<[1], [0], [0], [1], [0, 0, 1, 1], [], []>} : vector<16x16xf32>, vector<16x64xf32>, vector<16x64xf32> -> vector<16x64xf32>
    %24 = arith.mulf %20, %20 : vector<16x64xf32>
    %cst_23 = arith.constant dense<0.000000e+00> : vector<16xf32>
    %25 = vector.multi_reduction <add>, %24, %cst_23 [1] : vector<16x64xf32> to vector<16xf32>
    %26 = vector.shape_cast %25 : vector<16xf32> to vector<16x1xf32>
    %27 = math.sqrt %26 : vector<16x1xf32>
    %cst_24 = arith.constant 9.99999996E-13 : f32
    %28 = vector.broadcast %cst_24 : f32 to vector<16x1xf32>
    %29 = arith.maximumf %27, %28 : vector<16x1xf32>
    %30 = vector.broadcast %29 : vector<16x1xf32> to vector<16x64xf32>
    %31 = arith.divf %20, %30 : vector<16x64xf32>
    %c1 = arith.constant 1 : index
    %c0_25 = arith.constant 0 : index
    %c0_26 = arith.constant 0 : index
    %32 = vector.load %arg6[%c1, %c0_25, %c0_26] : memref<4x16x16xf32, #tpu.memory_space<vmem>>, vector<1x16x16xf32>
    %33 = vector.shape_cast %32 : vector<1x16x16xf32> to vector<16x16xf32>
    %cst_27 = arith.constant dense<0.000000e+00> : vector<16x64xf32>
    %34 = tpu.matmul %33, %3, %cst_27 {dimension_numbers = #tpu.dot_dimension_numbers<[1], [0], [0], [1], [0, 0, 1, 1], [], []>} : vector<16x16xf32>, vector<16x64xf32>, vector<16x64xf32> -> vector<16x64xf32>
    %c1_28 = arith.constant 1 : index
    %c0_29 = arith.constant 0 : index
    %c0_30 = arith.constant 0 : index
    %35 = vector.load %arg7[%c1_28, %c0_29, %c0_30] : memref<4x16x16xf32, #tpu.memory_space<vmem>>, vector<1x16x16xf32>
    %36 = vector.shape_cast %35 : vector<1x16x16xf32> to vector<16x16xf32>
    %cst_31 = arith.constant dense<0.000000e+00> : vector<16x64xf32>
    %37 = tpu.matmul %36, %3, %cst_31 {dimension_numbers = #tpu.dot_dimension_numbers<[1], [0], [0], [1], [0, 0, 1, 1], [], []>} : vector<16x16xf32>, vector<16x64xf32>, vector<16x64xf32> -> vector<16x64xf32>
    %38 = arith.mulf %34, %34 : vector<16x64xf32>
    %cst_32 = arith.constant dense<0.000000e+00> : vector<16xf32>
    %39 = vector.multi_reduction <add>, %38, %cst_32 [1] : vector<16x64xf32> to vector<16xf32>
    %40 = vector.shape_cast %39 : vector<16xf32> to vector<16x1xf32>
    %41 = math.sqrt %40 : vector<16x1xf32>
    %cst_33 = arith.constant 9.99999996E-13 : f32
    %42 = vector.broadcast %cst_33 : f32 to vector<16x1xf32>
    %43 = arith.maximumf %41, %42 : vector<16x1xf32>
    %44 = vector.broadcast %43 : vector<16x1xf32> to vector<16x64xf32>
    %45 = arith.divf %34, %44 : vector<16x64xf32>
    %c2 = arith.constant 2 : index
    %c0_34 = arith.constant 0 : index
    %c0_35 = arith.constant 0 : index
    %46 = vector.load %arg6[%c2, %c0_34, %c0_35] : memref<4x16x16xf32, #tpu.memory_space<vmem>>, vector<1x16x16xf32>
    %47 = vector.shape_cast %46 : vector<1x16x16xf32> to vector<16x16xf32>
    %cst_36 = arith.constant dense<0.000000e+00> : vector<16x64xf32>
    %48 = tpu.matmul %47, %5, %cst_36 {dimension_numbers = #tpu.dot_dimension_numbers<[1], [0], [0], [1], [0, 0, 1, 1], [], []>} : vector<16x16xf32>, vector<16x64xf32>, vector<16x64xf32> -> vector<16x64xf32>
    %c2_37 = arith.constant 2 : index
    %c0_38 = arith.constant 0 : index
    %c0_39 = arith.constant 0 : index
    %49 = vector.load %arg7[%c2_37, %c0_38, %c0_39] : memref<4x16x16xf32, #tpu.memory_space<vmem>>, vector<1x16x16xf32>
    %50 = vector.shape_cast %49 : vector<1x16x16xf32> to vector<16x16xf32>
    %cst_40 = arith.constant dense<0.000000e+00> : vector<16x64xf32>
    %51 = tpu.matmul %50, %5, %cst_40 {dimension_numbers = #tpu.dot_dimension_numbers<[1], [0], [0], [1], [0, 0, 1, 1], [], []>} : vector<16x16xf32>, vector<16x64xf32>, vector<16x64xf32> -> vector<16x64xf32>
    %52 = arith.mulf %48, %48 : vector<16x64xf32>
    %cst_41 = arith.constant dense<0.000000e+00> : vector<16xf32>
    %53 = vector.multi_reduction <add>, %52, %cst_41 [1] : vector<16x64xf32> to vector<16xf32>
    %54 = vector.shape_cast %53 : vector<16xf32> to vector<16x1xf32>
    %55 = math.sqrt %54 : vector<16x1xf32>
    %cst_42 = arith.constant 9.99999996E-13 : f32
    %56 = vector.broadcast %cst_42 : f32 to vector<16x1xf32>
    %57 = arith.maximumf %55, %56 : vector<16x1xf32>
    %58 = vector.broadcast %57 : vector<16x1xf32> to vector<16x64xf32>
    %59 = arith.divf %48, %58 : vector<16x64xf32>
    %c3 = arith.constant 3 : index
    %c0_43 = arith.constant 0 : index
    %c0_44 = arith.constant 0 : index
    %60 = vector.load %arg6[%c3, %c0_43, %c0_44] : memref<4x16x16xf32, #tpu.memory_space<vmem>>, vector<1x16x16xf32>
    %61 = vector.shape_cast %60 : vector<1x16x16xf32> to vector<16x16xf32>
    %cst_45 = arith.constant dense<0.000000e+00> : vector<16x64xf32>
    %62 = tpu.matmul %61, %7, %cst_45 {dimension_numbers = #tpu.dot_dimension_numbers<[1], [0], [0], [1], [0, 0, 1, 1], [], []>} : vector<16x16xf32>, vector<16x64xf32>, vector<16x64xf32> -> vector<16x64xf32>
    %c3_46 = arith.constant 3 : index
    %c0_47 = arith.constant 0 : index
    %c0_48 = arith.constant 0 : index
    %63 = vector.load %arg7[%c3_46, %c0_47, %c0_48] : memref<4x16x16xf32, #tpu.memory_space<vmem>>, vector<1x16x16xf32>
    %64 = vector.shape_cast %63 : vector<1x16x16xf32> to vector<16x16xf32>
    %cst_49 = arith.constant dense<0.000000e+00> : vector<16x64xf32>
    %65 = tpu.matmul %64, %7, %cst_49 {dimension_numbers = #tpu.dot_dimension_numbers<[1], [0], [0], [1], [0, 0, 1, 1], [], []>} : vector<16x16xf32>, vector<16x64xf32>, vector<16x64xf32> -> vector<16x64xf32>
    %66 = arith.mulf %62, %62 : vector<16x64xf32>
    %cst_50 = arith.constant dense<0.000000e+00> : vector<16xf32>
    %67 = vector.multi_reduction <add>, %66, %cst_50 [1] : vector<16x64xf32> to vector<16xf32>
    %68 = vector.shape_cast %67 : vector<16xf32> to vector<16x1xf32>
    %69 = math.sqrt %68 : vector<16x1xf32>
    %cst_51 = arith.constant 9.99999996E-13 : f32
    %70 = vector.broadcast %cst_51 : f32 to vector<16x1xf32>
    %71 = arith.maximumf %69, %70 : vector<16x1xf32>
    %72 = vector.broadcast %71 : vector<16x1xf32> to vector<16x64xf32>
    %73 = arith.divf %62, %72 : vector<16x64xf32>
    %74 = vector.shape_cast %23 : vector<16x64xf32> to vector<1x16x64xf32>
    %c0_52 = arith.constant 0 : index
    %c0_53 = arith.constant 0 : index
    %c0_54 = arith.constant 0 : index
    %75 = vector.load %arg12[%c0_52, %c0_53, %c0_54] : memref<1x16x64xf32, #tpu.memory_space<vmem>>, vector<1x16x64xf32>
    tpu.vector_store %arg12[%c0_52, %c0_53, %c0_54], %74 {strides = array<i32>} : memref<1x16x64xf32, #tpu.memory_space<vmem>>, vector<1x16x64xf32>,
    %76 = vector.extract_strided_slice %17 {offsets = [0, 0], sizes = [8, 64], strides = [1, 1]} : vector<16x64xf32> to vector<8x64xf32>
    %cst_55 = arith.constant 0.000000e+00 : f32
    %77 = vector.broadcast %cst_55 : f32 to vector<8x64xf32>
    %78 = vector.extract_strided_slice %31 {offsets = [0, 0], sizes = [8, 64], strides = [1, 1]} : vector<16x64xf32> to vector<8x64xf32>
    %79 = vector.extract_strided_slice %23 {offsets = [0, 0], sizes = [8, 64], strides = [1, 1]} : vector<16x64xf32> to vector<8x64xf32>
    %cst_56 = arith.constant dense<0.000000e+00> : vector<8x8xf32>
    %80 = tpu.matmul %78, %76, %cst_56 {dimension_numbers = #tpu.dot_dimension_numbers<[1], [1], [0], [0], [0, 0, 1, 0], [], []>} : vector<8x64xf32>, vector<8x64xf32>, vector<8x8xf32> -> vector<8x8xf32>
    %c0_57 = arith.constant 0 : index
    %c0_58 = arith.constant 0 : index
    %81 = vector.load %arg8[%c0_57, %c0_58] : memref<4x2xf32, #tpu.memory_space<vmem>>, vector<1x1xf32>
    %82 = vector.broadcast %81 : vector<1x1xf32> to vector<8x8xf32>
    %83 = arith.mulf %80, %82 : vector<8x8xf32>
    %cst_59 = arith.constant dense<0xFF800000> : vector<8xf32>
    %84 = vector.multi_reduction <maximumf>, %83, %cst_59 [1] : vector<8x8xf32> to vector<8xf32>
    %85 = vector.shape_cast %84 : vector<8xf32> to vector<8x1xf32>
    %86 = vector.broadcast %85 : vector<8x1xf32> to vector<8x8xf32>
    %87 = arith.subf %83, %86 : vector<8x8xf32>
    %88 = math.exp %87 : vector<8x8xf32>
    %cst_60 = arith.constant dense<0.000000e+00> : vector<8xf32>
    %89 = vector.multi_reduction <add>, %88, %cst_60 [1] : vector<8x8xf32> to vector<8xf32>
    %90 = vector.shape_cast %89 : vector<8xf32> to vector<8x1xf32>
    %91 = vector.broadcast %90 : vector<8x1xf32> to vector<8x8xf32>
    %92 = arith.divf %88, %91 : vector<8x8xf32>
    %cst_61 = arith.constant dense<0.000000e+00> : vector<8x64xf32>
    %93 = tpu.matmul %92, %79, %cst_61 {dimension_numbers = #tpu.dot_dimension_numbers<[1], [0], [0], [1], [0, 0, 1, 1], [], []>} : vector<8x8xf32>, vector<8x64xf32>, vector<8x64xf32> -> vector<8x64xf32>
    %94 = arith.addf %77, %93 : vector<8x64xf32>
    %95 = vector.extract_strided_slice %45 {offsets = [0, 0], sizes = [8, 64], strides = [1, 1]} : vector<16x64xf32> to vector<8x64xf32>
    %96 = vector.extract_strided_slice %37 {offsets = [0, 0], sizes = [8, 64], strides = [1, 1]} : vector<16x64xf32> to vector<8x64xf32>
    %cst_62 = arith.constant dense<0.000000e+00> : vector<8x8xf32>
    %97 = tpu.matmul %95, %76, %cst_62 {dimension_numbers = #tpu.dot_dimension_numbers<[1], [1], [0], [0], [0, 0, 1, 0], [], []>} : vector<8x64xf32>, vector<8x64xf32>, vector<8x8xf32> -> vector<8x8xf32>
    %c1_63 = arith.constant 1 : index
    %c0_64 = arith.constant 0 : index
    %98 = vector.load %arg8[%c1_63, %c0_64] : memref<4x2xf32, #tpu.memory_space<vmem>>, vector<1x1xf32>
    %99 = vector.broadcast %98 : vector<1x1xf32> to vector<8x8xf32>
    %100 = arith.mulf %97, %99 : vector<8x8xf32>
    %cst_65 = arith.constant dense<0xFF800000> : vector<8xf32>
    %101 = vector.multi_reduction <maximumf>, %100, %cst_65 [1] : vector<8x8xf32> to vector<8xf32>
    %102 = vector.shape_cast %101 : vector<8xf32> to vector<8x1xf32>
    %103 = vector.broadcast %102 : vector<8x1xf32> to vector<8x8xf32>
    %104 = arith.subf %100, %103 : vector<8x8xf32>
    %105 = math.exp %104 : vector<8x8xf32>
    %cst_66 = arith.constant dense<0.000000e+00> : vector<8xf32>
    %106 = vector.multi_reduction <add>, %105, %cst_66 [1] : vector<8x8xf32> to vector<8xf32>
    %107 = vector.shape_cast %106 : vector<8xf32> to vector<8x1xf32>
    %108 = vector.broadcast %107 : vector<8x1xf32> to vector<8x8xf32>
    %109 = arith.divf %105, %108 : vector<8x8xf32>
    %cst_67 = arith.constant dense<0.000000e+00> : vector<8x64xf32>
    %110 = tpu.matmul %109, %96, %cst_67 {dimension_numbers = #tpu.dot_dimension_numbers<[1], [0], [0], [1], [0, 0, 1, 1], [], []>} : vector<8x8xf32>, vector<8x64xf32>, vector<8x64xf32> -> vector<8x64xf32>
    %111 = arith.addf %94, %110 : vector<8x64xf32>
    %112 = vector.extract_strided_slice %59 {offsets = [0, 0], sizes = [8, 64], strides = [1, 1]} : vector<16x64xf32> to vector<8x64xf32>
    %113 = vector.extract_strided_slice %51 {offsets = [0, 0], sizes = [8, 64], strides = [1, 1]} : vector<16x64xf32> to vector<8x64xf32>
    %cst_68 = arith.constant dense<0.000000e+00> : vector<8x8xf32>
    %114 = tpu.matmul %112, %76, %cst_68 {dimension_numbers = #tpu.dot_dimension_numbers<[1], [1], [0], [0], [0, 0, 1, 0], [], []>} : vector<8x64xf32>, vector<8x64xf32>, vector<8x8xf32> -> vector<8x8xf32>
    %c2_69 = arith.constant 2 : index
    %c0_70 = arith.constant 0 : index
    %115 = vector.load %arg8[%c2_69, %c0_70] : memref<4x2xf32, #tpu.memory_space<vmem>>, vector<1x1xf32>
    %116 = vector.broadcast %115 : vector<1x1xf32> to vector<8x8xf32>
    %117 = arith.mulf %114, %116 : vector<8x8xf32>
    %cst_71 = arith.constant dense<0xFF800000> : vector<8xf32>
    %118 = vector.multi_reduction <maximumf>, %117, %cst_71 [1] : vector<8x8xf32> to vector<8xf32>
    %119 = vector.shape_cast %118 : vector<8xf32> to vector<8x1xf32>
    %120 = vector.broadcast %119 : vector<8x1xf32> to vector<8x8xf32>
    %121 = arith.subf %117, %120 : vector<8x8xf32>
    %122 = math.exp %121 : vector<8x8xf32>
    %cst_72 = arith.constant dense<0.000000e+00> : vector<8xf32>
    %123 = vector.multi_reduction <add>, %122, %cst_72 [1] : vector<8x8xf32> to vector<8xf32>
    %124 = vector.shape_cast %123 : vector<8xf32> to vector<8x1xf32>
    %125 = vector.broadcast %124 : vector<8x1xf32> to vector<8x8xf32>
    %126 = arith.divf %122, %125 : vector<8x8xf32>
    %cst_73 = arith.constant dense<0.000000e+00> : vector<8x64xf32>
    %127 = tpu.matmul %126, %113, %cst_73 {dimension_numbers = #tpu.dot_dimension_numbers<[1], [0], [0], [1], [0, 0, 1, 1], [], []>} : vector<8x8xf32>, vector<8x64xf32>, vector<8x64xf32> -> vector<8x64xf32>
    %128 = arith.addf %111, %127 : vector<8x64xf32>
    %129 = vector.extract_strided_slice %73 {offsets = [0, 0], sizes = [8, 64], strides = [1, 1]} : vector<16x64xf32> to vector<8x64xf32>
    %130 = vector.extract_strided_slice %65 {offsets = [0, 0], sizes = [8, 64], strides = [1, 1]} : vector<16x64xf32> to vector<8x64xf32>
    %cst_74 = arith.constant dense<0.000000e+00> : vector<8x8xf32>
    %131 = tpu.matmul %129, %76, %cst_74 {dimension_numbers = #tpu.dot_dimension_numbers<[1], [1], [0], [0], [0, 0, 1, 0], [], []>} : vector<8x64xf32>, vector<8x64xf32>, vector<8x8xf32> -> vector<8x8xf32>
    %c3_75 = arith.constant 3 : index
    %c0_76 = arith.constant 0 : index
    %132 = vector.load %arg8[%c3_75, %c0_76] : memref<4x2xf32, #tpu.memory_space<vmem>>, vector<1x1xf32>
    %133 = vector.broadcast %132 : vector<1x1xf32> to vector<8x8xf32>
    %134 = arith.mulf %131, %133 : vector<8x8xf32>
    %cst_77 = arith.constant dense<0xFF800000> : vector<8xf32>
    %135 = vector.multi_reduction <maximumf>, %134, %cst_77 [1] : vector<8x8xf32> to vector<8xf32>
    %136 = vector.shape_cast %135 : vector<8xf32> to vector<8x1xf32>
    %137 = vector.broadcast %136 : vector<8x1xf32> to vector<8x8xf32>
    %138 = arith.subf %134, %137 : vector<8x8xf32>
    %139 = math.exp %138 : vector<8x8xf32>
    %cst_78 = arith.constant dense<0.000000e+00> : vector<8xf32>
    %140 = vector.multi_reduction <add>, %139, %cst_78 [1] : vector<8x8xf32> to vector<8xf32>
    %141 = vector.shape_cast %140 : vector<8xf32> to vector<8x1xf32>
    %142 = vector.broadcast %141 : vector<8x1xf32> to vector<8x8xf32>
    %143 = arith.divf %139, %142 : vector<8x8xf32>
    %cst_79 = arith.constant dense<0.000000e+00> : vector<8x64xf32>
    %144 = tpu.matmul %143, %130, %cst_79 {dimension_numbers = #tpu.dot_dimension_numbers<[1], [0], [0], [1], [0, 0, 1, 1], [], []>} : vector<8x8xf32>, vector<8x64xf32>, vector<8x64xf32> -> vector<8x64xf32>
    %145 = arith.addf %128, %144 : vector<8x64xf32>
    %146 = vector.extract_strided_slice %17 {offsets = [8, 0], sizes = [8, 64], strides = [1, 1]} : vector<16x64xf32> to vector<8x64xf32>
    %cst_80 = arith.constant 0.000000e+00 : f32
    %147 = vector.broadcast %cst_80 : f32 to vector<8x64xf32>
    %148 = vector.extract_strided_slice %31 {offsets = [8, 0], sizes = [8, 64], strides = [1, 1]} : vector<16x64xf32> to vector<8x64xf32>
    %149 = vector.extract_strided_slice %23 {offsets = [8, 0], sizes = [8, 64], strides = [1, 1]} : vector<16x64xf32> to vector<8x64xf32>
    %cst_81 = arith.constant dense<0.000000e+00> : vector<8x8xf32>
    %150 = tpu.matmul %148, %146, %cst_81 {dimension_numbers = #tpu.dot_dimension_numbers<[1], [1], [0], [0], [0, 0, 1, 0], [], []>} : vector<8x64xf32>, vector<8x64xf32>, vector<8x8xf32> -> vector<8x8xf32>
    %c0_82 = arith.constant 0 : index
    %c1_83 = arith.constant 1 : index
    %151 = vector.load %arg8[%c0_82, %c1_83] : memref<4x2xf32, #tpu.memory_space<vmem>>, vector<1x1xf32>
    %152 = vector.broadcast %151 : vector<1x1xf32> to vector<8x8xf32>
    %153 = arith.mulf %150, %152 : vector<8x8xf32>
    %cst_84 = arith.constant dense<0xFF800000> : vector<8xf32>
    %154 = vector.multi_reduction <maximumf>, %153, %cst_84 [1] : vector<8x8xf32> to vector<8xf32>
    %155 = vector.shape_cast %154 : vector<8xf32> to vector<8x1xf32>
    %156 = vector.broadcast %155 : vector<8x1xf32> to vector<8x8xf32>
    %157 = arith.subf %153, %156 : vector<8x8xf32>
    %158 = math.exp %157 : vector<8x8xf32>
    %cst_85 = arith.constant dense<0.000000e+00> : vector<8xf32>
    %159 = vector.multi_reduction <add>, %158, %cst_85 [1] : vector<8x8xf32> to vector<8xf32>
    %160 = vector.shape_cast %159 : vector<8xf32> to vector<8x1xf32>
    %161 = vector.broadcast %160 : vector<8x1xf32> to vector<8x8xf32>
    %162 = arith.divf %158, %161 : vector<8x8xf32>
    %cst_86 = arith.constant dense<0.000000e+00> : vector<8x64xf32>
    %163 = tpu.matmul %162, %149, %cst_86 {dimension_numbers = #tpu.dot_dimension_numbers<[1], [0], [0], [1], [0, 0, 1, 1], [], []>} : vector<8x8xf32>, vector<8x64xf32>, vector<8x64xf32> -> vector<8x64xf32>
    %164 = arith.addf %147, %163 : vector<8x64xf32>
    %165 = vector.extract_strided_slice %45 {offsets = [8, 0], sizes = [8, 64], strides = [1, 1]} : vector<16x64xf32> to vector<8x64xf32>
    %166 = vector.extract_strided_slice %37 {offsets = [8, 0], sizes = [8, 64], strides = [1, 1]} : vector<16x64xf32> to vector<8x64xf32>
    %cst_87 = arith.constant dense<0.000000e+00> : vector<8x8xf32>
    %167 = tpu.matmul %165, %146, %cst_87 {dimension_numbers = #tpu.dot_dimension_numbers<[1], [1], [0], [0], [0, 0, 1, 0], [], []>} : vector<8x64xf32>, vector<8x64xf32>, vector<8x8xf32> -> vector<8x8xf32>
    %c1_88 = arith.constant 1 : index
    %c1_89 = arith.constant 1 : index
    %168 = vector.load %arg8[%c1_88, %c1_89] : memref<4x2xf32, #tpu.memory_space<vmem>>, vector<1x1xf32>
    %169 = vector.broadcast %168 : vector<1x1xf32> to vector<8x8xf32>
    %170 = arith.mulf %167, %169 : vector<8x8xf32>
    %cst_90 = arith.constant dense<0xFF800000> : vector<8xf32>
    %171 = vector.multi_reduction <maximumf>, %170, %cst_90 [1] : vector<8x8xf32> to vector<8xf32>
    %172 = vector.shape_cast %171 : vector<8xf32> to vector<8x1xf32>
    %173 = vector.broadcast %172 : vector<8x1xf32> to vector<8x8xf32>
    %174 = arith.subf %170, %173 : vector<8x8xf32>
    %175 = math.exp %174 : vector<8x8xf32>
    %cst_91 = arith.constant dense<0.000000e+00> : vector<8xf32>
    %176 = vector.multi_reduction <add>, %175, %cst_91 [1] : vector<8x8xf32> to vector<8xf32>
    %177 = vector.shape_cast %176 : vector<8xf32> to vector<8x1xf32>
    %178 = vector.broadcast %177 : vector<8x1xf32> to vector<8x8xf32>
    %179 = arith.divf %175, %178 : vector<8x8xf32>
    %cst_92 = arith.constant dense<0.000000e+00> : vector<8x64xf32>
    %180 = tpu.matmul %179, %166, %cst_92 {dimension_numbers = #tpu.dot_dimension_numbers<[1], [0], [0], [1], [0, 0, 1, 1], [], []>} : vector<8x8xf32>, vector<8x64xf32>, vector<8x64xf32> -> vector<8x64xf32>
    %181 = arith.addf %164, %180 : vector<8x64xf32>
    %182 = vector.extract_strided_slice %59 {offsets = [8, 0], sizes = [8, 64], strides = [1, 1]} : vector<16x64xf32> to vector<8x64xf32>
    %183 = vector.extract_strided_slice %51 {offsets = [8, 0], sizes = [8, 64], strides = [1, 1]} : vector<16x64xf32> to vector<8x64xf32>
    %cst_93 = arith.constant dense<0.000000e+00> : vector<8x8xf32>
    %184 = tpu.matmul %182, %146, %cst_93 {dimension_numbers = #tpu.dot_dimension_numbers<[1], [1], [0], [0], [0, 0, 1, 0], [], []>} : vector<8x64xf32>, vector<8x64xf32>, vector<8x8xf32> -> vector<8x8xf32>
    %c2_94 = arith.constant 2 : index
    %c1_95 = arith.constant 1 : index
    %185 = vector.load %arg8[%c2_94, %c1_95] : memref<4x2xf32, #tpu.memory_space<vmem>>, vector<1x1xf32>
    %186 = vector.broadcast %185 : vector<1x1xf32> to vector<8x8xf32>
    %187 = arith.mulf %184, %186 : vector<8x8xf32>
    %cst_96 = arith.constant dense<0xFF800000> : vector<8xf32>
    %188 = vector.multi_reduction <maximumf>, %187, %cst_96 [1] : vector<8x8xf32> to vector<8xf32>
    %189 = vector.shape_cast %188 : vector<8xf32> to vector<8x1xf32>
    %190 = vector.broadcast %189 : vector<8x1xf32> to vector<8x8xf32>
    %191 = arith.subf %187, %190 : vector<8x8xf32>
    %192 = math.exp %191 : vector<8x8xf32>
    %cst_97 = arith.constant dense<0.000000e+00> : vector<8xf32>
    %193 = vector.multi_reduction <add>, %192, %cst_97 [1] : vector<8x8xf32> to vector<8xf32>
    %194 = vector.shape_cast %193 : vector<8xf32> to vector<8x1xf32>
    %195 = vector.broadcast %194 : vector<8x1xf32> to vector<8x8xf32>
    %196 = arith.divf %192, %195 : vector<8x8xf32>
    %cst_98 = arith.constant dense<0.000000e+00> : vector<8x64xf32>
    %197 = tpu.matmul %196, %183, %cst_98 {dimension_numbers = #tpu.dot_dimension_numbers<[1], [0], [0], [1], [0, 0, 1, 1], [], []>} : vector<8x8xf32>, vector<8x64xf32>, vector<8x64xf32> -> vector<8x64xf32>
    %198 = arith.addf %181, %197 : vector<8x64xf32>
    %199 = vector.extract_strided_slice %73 {offsets = [8, 0], sizes = [8, 64], strides = [1, 1]} : vector<16x64xf32> to vector<8x64xf32>
    %200 = vector.extract_strided_slice %65 {offsets = [8, 0], sizes = [8, 64], strides = [1, 1]} : vector<16x64xf32> to vector<8x64xf32>
    %cst_99 = arith.constant dense<0.000000e+00> : vector<8x8xf32>
    %201 = tpu.matmul %199, %146, %cst_99 {dimension_numbers = #tpu.dot_dimension_numbers<[1], [1], [0], [0], [0, 0, 1, 0], [], []>} : vector<8x64xf32>, vector<8x64xf32>, vector<8x8xf32> -> vector<8x8xf32>
    %c3_100 = arith.constant 3 : index
    %c1_101 = arith.constant 1 : index
    %202 = vector.load %arg8[%c3_100, %c1_101] : memref<4x2xf32, #tpu.memory_space<vmem>>, vector<1x1xf32>
    %203 = vector.broadcast %202 : vector<1x1xf32> to vector<8x8xf32>
    %204 = arith.mulf %201, %203 : vector<8x8xf32>
    %cst_102 = arith.constant dense<0xFF800000> : vector<8xf32>
    %205 = vector.multi_reduction <maximumf>, %204, %cst_102 [1] : vector<8x8xf32> to vector<8xf32>
    %206 = vector.shape_cast %205 : vector<8xf32> to vector<8x1xf32>
    %207 = vector.broadcast %206 : vector<8x1xf32> to vector<8x8xf32>
    %208 = arith.subf %204, %207 : vector<8x8xf32>
    %209 = math.exp %208 : vector<8x8xf32>
    %cst_103 = arith.constant dense<0.000000e+00> : vector<8xf32>
    %210 = vector.multi_reduction <add>, %209, %cst_103 [1] : vector<8x8xf32> to vector<8xf32>
    %211 = vector.shape_cast %210 : vector<8xf32> to vector<8x1xf32>
    %212 = vector.broadcast %211 : vector<8x1xf32> to vector<8x8xf32>
    %213 = arith.divf %209, %212 : vector<8x8xf32>
    %cst_104 = arith.constant dense<0.000000e+00> : vector<8x64xf32>
    %214 = tpu.matmul %213, %200, %cst_104 {dimension_numbers = #tpu.dot_dimension_numbers<[1], [0], [0], [1], [0, 0, 1, 1], [], []>} : vector<8x8xf32>, vector<8x64xf32>, vector<8x64xf32> -> vector<8x64xf32>
    %215 = arith.addf %198, %214 : vector<8x64xf32>
    %216 = tpu.concatenate %145, %215 in 0 : vector<8x64xf32>, vector<8x64xf32> -> vector<16x64xf32>
    %c0_105 = arith.constant 0 : index
    %c0_106 = arith.constant 0 : index
    %217 = vector.load %arg9[%c0_105, %c0_106] : memref<16x16xf32, #tpu.memory_space<vmem>>, vector<16x16xf32>
    %cst_107 = arith.constant dense<0.000000e+00> : vector<16x64xf32>
    %218 = tpu.matmul %217, %216, %cst_107 {dimension_numbers = #tpu.dot_dimension_numbers<[1], [0], [0], [1], [0, 0, 1, 1], [], []>} : vector<16x16xf32>, vector<16x64xf32>, vector<16x64xf32> -> vector<16x64xf32>
    %c0_108 = arith.constant 0 : index
    %c0_109 = arith.constant 0 : index
    %219 = vector.load %arg10[%c0_108, %c0_109] : memref<16x1xf32, #tpu.memory_space<vmem>>, vector<16x1xf32>
    %220 = vector.broadcast %219 : vector<16x1xf32> to vector<16x64xf32>
    %221 = arith.addf %218, %220 : vector<16x64xf32>
    %222 = vector.shape_cast %221 : vector<16x64xf32> to vector<1x16x64xf32>
    %c0_110 = arith.constant 0 : index
    %c0_111 = arith.constant 0 : index
    %c0_112 = arith.constant 0 : index
    %223 = vector.load %arg11[%c0_110, %c0_111, %c0_112] : memref<1x16x64xf32, #tpu.memory_space<vmem>>, vector<1x16x64xf32>
    tpu.vector_store %arg11[%c0_110, %c0_111, %c0_112], %222 {strides = array<i32>} : memref<1x16x64xf32, #tpu.memory_space<vmem>>, vector<1x16x64xf32>,
    return
  }
  func.func @transform_0(%arg0: i32) -> (i32, i32, i32) {
    %c0_i32 = arith.constant 0 : i32
    %c0_i32_0 = arith.constant 0 : i32
    %c0_i32_1 = arith.constant 0 : i32
    return %arg0, %c0_i32, %c0_i32_0 : i32, i32, i32
  }
  func.func @transform_1(%arg0: i32) -> (i32, i32, i32) {
    %c0_i32 = arith.constant 0 : i32
    %c0_i32_0 = arith.constant 0 : i32
    %c0_i32_1 = arith.constant 0 : i32
    return %arg0, %c0_i32, %c0_i32_0 : i32, i32, i32
  }
  func.func @transform_2(%arg0: i32) -> (i32, i32, i32) {
    %c0_i32 = arith.constant 0 : i32
    %c0_i32_0 = arith.constant 0 : i32
    %c0_i32_1 = arith.constant 0 : i32
    return %arg0, %c0_i32, %c0_i32_0 : i32, i32, i32
  }
  func.func @transform_3(%arg0: i32) -> (i32, i32, i32) {
    %c0_i32 = arith.constant 0 : i32
    %c0_i32_0 = arith.constant 0 : i32
    %c0_i32_1 = arith.constant 0 : i32
    return %arg0, %c0_i32, %c0_i32_0 : i32, i32, i32
  }
  func.func @transform_4(%arg0: i32) -> (i32, i32) {
    %c0_i32 = arith.constant 0 : i32
    %c0_i32_0 = arith.constant 0 : i32
    %c0_i32_1 = arith.constant 0 : i32
    return %c0_i32, %c0_i32_0 : i32, i32
  }
  func.func @transform_5(%arg0: i32) -> (i32, i32, i32) {
    %c0_i32 = arith.constant 0 : i32
    %c0_i32_0 = arith.constant 0 : i32
    %c0_i32_1 = arith.constant 0 : i32
    %c0_i32_2 = arith.constant 0 : i32
    return %c0_i32, %c0_i32_0, %c0_i32_1 : i32, i32, i32
  }
  func.func @transform_6(%arg0: i32) -> (i32, i32, i32) {
    %c0_i32 = arith.constant 0 : i32
    %c0_i32_0 = arith.constant 0 : i32
    %c0_i32_1 = arith.constant 0 : i32
    %c0_i32_2 = arith.constant 0 : i32
    return %c0_i32, %c0_i32_0, %c0_i32_1 : i32, i32, i32
  }
  func.func @transform_7(%arg0: i32) -> (i32, i32) {
    %c0_i32 = arith.constant 0 : i32
    %c0_i32_0 = arith.constant 0 : i32
    %c0_i32_1 = arith.constant 0 : i32
    return %c0_i32, %c0_i32_0 : i32, i32
  }
  func.func @transform_8(%arg0: i32) -> (i32, i32) {
    %c0_i32 = arith.constant 0 : i32
    %c0_i32_0 = arith.constant 0 : i32
    %c0_i32_1 = arith.constant 0 : i32
    return %c0_i32, %c0_i32_0 : i32, i32
  }
  func.func @transform_9(%arg0: i32) -> (i32, i32) {
    %c0_i32 = arith.constant 0 : i32
    %c0_i32_0 = arith.constant 0 : i32
    %c0_i32_1 = arith.constant 0 : i32
    return %c0_i32, %c0_i32_0 : i32, i32
  }
  func.func @transform_10(%arg0: i32) -> (i32, i32, i32) {
    %c0_i32 = arith.constant 0 : i32
    %c0_i32_0 = arith.constant 0 : i32
    %c0_i32_1 = arith.constant 0 : i32
    return %arg0, %c0_i32, %c0_i32_0 : i32, i32, i32
  }
  func.func @transform_11(%arg0: i32) -> (i32, i32, i32) {
    %c0_i32 = arith.constant 0 : i32
    %c0_i32_0 = arith.constant 0 : i32
    %c0_i32_1 = arith.constant 0 : i32
    return %arg0, %c0_i32, %c0_i32_0 : i32, i32, i32
  }
}

module attributes {stable_mosaic.version = 11 : i64} {
  func.func @dwconv_kernel(%arg0: i32, %arg1: memref<1x16x10x10xf32, #tpu.memory_space<vmem>>, %arg2: memref<16x9xf32, #tpu.memory_space<vmem>>, %arg3: memref<1x16x8x8xf32, #tpu.memory_space<vmem>>) attributes {dimension_semantics = [#tpu.dimension_semantics<parallel>], iteration_bounds = array<i64: 2>, scalar_prefetch = 0 : i64, scratch_operands = 0 : i64, tpu.core_type = #tpu.core_type<tc>, window_params = [{transform_indices = @transform_0, window_bounds = array<i64: 1, 16, 10, 10>}, {pipeline_mode = #tpu.pipeline_mode<synchronous>, transform_indices = @transform_1, window_bounds = array<i64: 16, 9>}, {transform_indices = @transform_2, window_bounds = array<i64: 1, 16, 8, 8>}]} {
    %cst = arith.constant 0.000000e+00 : f32
    %0 = vector.broadcast %cst : f32 to vector<16x8x8xf32>
    %c0 = arith.constant 0 : index
    %c0_0 = arith.constant 0 : index
    %1 = vector.load %arg2[%c0, %c0_0] : memref<16x9xf32, #tpu.memory_space<vmem>>, vector<16x1xf32>
    %2 = vector.shape_cast %1 : vector<16x1xf32> to vector<16x1x1xf32>
    %c0_1 = arith.constant 0 : index
    %c0_2 = arith.constant 0 : index
    %c0_3 = arith.constant 0 : index
    %c0_4 = arith.constant 0 : index
    %3 = vector.load %arg1[%c0_1, %c0_2, %c0_3, %c0_4] : memref<1x16x10x10xf32, #tpu.memory_space<vmem>>, vector<1x16x8x8xf32>
    %4 = vector.shape_cast %3 : vector<1x16x8x8xf32> to vector<16x8x8xf32>
    %5 = vector.broadcast %2 : vector<16x1x1xf32> to vector<16x8x8xf32>
    %6 = arith.mulf %5, %4 : vector<16x8x8xf32>
    %7 = arith.addf %0, %6 : vector<16x8x8xf32>
    %c0_5 = arith.constant 0 : index
    %c1 = arith.constant 1 : index
    %8 = vector.load %arg2[%c0_5, %c1] : memref<16x9xf32, #tpu.memory_space<vmem>>, vector<16x1xf32>
    %9 = vector.shape_cast %8 : vector<16x1xf32> to vector<16x1x1xf32>
    %c0_6 = arith.constant 0 : index
    %c0_7 = arith.constant 0 : index
    %c0_8 = arith.constant 0 : index
    %c1_9 = arith.constant 1 : index
    %10 = vector.load %arg1[%c0_6, %c0_7, %c0_8, %c1_9] : memref<1x16x10x10xf32, #tpu.memory_space<vmem>>, vector<1x16x8x8xf32>
    %11 = vector.shape_cast %10 : vector<1x16x8x8xf32> to vector<16x8x8xf32>
    %12 = vector.broadcast %9 : vector<16x1x1xf32> to vector<16x8x8xf32>
    %13 = arith.mulf %12, %11 : vector<16x8x8xf32>
    %14 = arith.addf %7, %13 : vector<16x8x8xf32>
    %c0_10 = arith.constant 0 : index
    %c2 = arith.constant 2 : index
    %15 = vector.load %arg2[%c0_10, %c2] : memref<16x9xf32, #tpu.memory_space<vmem>>, vector<16x1xf32>
    %16 = vector.shape_cast %15 : vector<16x1xf32> to vector<16x1x1xf32>
    %c0_11 = arith.constant 0 : index
    %c0_12 = arith.constant 0 : index
    %c0_13 = arith.constant 0 : index
    %c2_14 = arith.constant 2 : index
    %17 = vector.load %arg1[%c0_11, %c0_12, %c0_13, %c2_14] : memref<1x16x10x10xf32, #tpu.memory_space<vmem>>, vector<1x16x8x8xf32>
    %18 = vector.shape_cast %17 : vector<1x16x8x8xf32> to vector<16x8x8xf32>
    %19 = vector.broadcast %16 : vector<16x1x1xf32> to vector<16x8x8xf32>
    %20 = arith.mulf %19, %18 : vector<16x8x8xf32>
    %21 = arith.addf %14, %20 : vector<16x8x8xf32>
    %c0_15 = arith.constant 0 : index
    %c3 = arith.constant 3 : index
    %22 = vector.load %arg2[%c0_15, %c3] : memref<16x9xf32, #tpu.memory_space<vmem>>, vector<16x1xf32>
    %23 = vector.shape_cast %22 : vector<16x1xf32> to vector<16x1x1xf32>
    %c0_16 = arith.constant 0 : index
    %c0_17 = arith.constant 0 : index
    %c1_18 = arith.constant 1 : index
    %c0_19 = arith.constant 0 : index
    %24 = vector.load %arg1[%c0_16, %c0_17, %c1_18, %c0_19] : memref<1x16x10x10xf32, #tpu.memory_space<vmem>>, vector<1x16x8x8xf32>
    %25 = vector.shape_cast %24 : vector<1x16x8x8xf32> to vector<16x8x8xf32>
    %26 = vector.broadcast %23 : vector<16x1x1xf32> to vector<16x8x8xf32>
    %27 = arith.mulf %26, %25 : vector<16x8x8xf32>
    %28 = arith.addf %21, %27 : vector<16x8x8xf32>
    %c0_20 = arith.constant 0 : index
    %c4 = arith.constant 4 : index
    %29 = vector.load %arg2[%c0_20, %c4] : memref<16x9xf32, #tpu.memory_space<vmem>>, vector<16x1xf32>
    %30 = vector.shape_cast %29 : vector<16x1xf32> to vector<16x1x1xf32>
    %c0_21 = arith.constant 0 : index
    %c0_22 = arith.constant 0 : index
    %c1_23 = arith.constant 1 : index
    %c1_24 = arith.constant 1 : index
    %31 = vector.load %arg1[%c0_21, %c0_22, %c1_23, %c1_24] : memref<1x16x10x10xf32, #tpu.memory_space<vmem>>, vector<1x16x8x8xf32>
    %32 = vector.shape_cast %31 : vector<1x16x8x8xf32> to vector<16x8x8xf32>
    %33 = vector.broadcast %30 : vector<16x1x1xf32> to vector<16x8x8xf32>
    %34 = arith.mulf %33, %32 : vector<16x8x8xf32>
    %35 = arith.addf %28, %34 : vector<16x8x8xf32>
    %c0_25 = arith.constant 0 : index
    %c5 = arith.constant 5 : index
    %36 = vector.load %arg2[%c0_25, %c5] : memref<16x9xf32, #tpu.memory_space<vmem>>, vector<16x1xf32>
    %37 = vector.shape_cast %36 : vector<16x1xf32> to vector<16x1x1xf32>
    %c0_26 = arith.constant 0 : index
    %c0_27 = arith.constant 0 : index
    %c1_28 = arith.constant 1 : index
    %c2_29 = arith.constant 2 : index
    %38 = vector.load %arg1[%c0_26, %c0_27, %c1_28, %c2_29] : memref<1x16x10x10xf32, #tpu.memory_space<vmem>>, vector<1x16x8x8xf32>
    %39 = vector.shape_cast %38 : vector<1x16x8x8xf32> to vector<16x8x8xf32>
    %40 = vector.broadcast %37 : vector<16x1x1xf32> to vector<16x8x8xf32>
    %41 = arith.mulf %40, %39 : vector<16x8x8xf32>
    %42 = arith.addf %35, %41 : vector<16x8x8xf32>
    %c0_30 = arith.constant 0 : index
    %c6 = arith.constant 6 : index
    %43 = vector.load %arg2[%c0_30, %c6] : memref<16x9xf32, #tpu.memory_space<vmem>>, vector<16x1xf32>
    %44 = vector.shape_cast %43 : vector<16x1xf32> to vector<16x1x1xf32>
    %c0_31 = arith.constant 0 : index
    %c0_32 = arith.constant 0 : index
    %c2_33 = arith.constant 2 : index
    %c0_34 = arith.constant 0 : index
    %45 = vector.load %arg1[%c0_31, %c0_32, %c2_33, %c0_34] : memref<1x16x10x10xf32, #tpu.memory_space<vmem>>, vector<1x16x8x8xf32>
    %46 = vector.shape_cast %45 : vector<1x16x8x8xf32> to vector<16x8x8xf32>
    %47 = vector.broadcast %44 : vector<16x1x1xf32> to vector<16x8x8xf32>
    %48 = arith.mulf %47, %46 : vector<16x8x8xf32>
    %49 = arith.addf %42, %48 : vector<16x8x8xf32>
    %c0_35 = arith.constant 0 : index
    %c7 = arith.constant 7 : index
    %50 = vector.load %arg2[%c0_35, %c7] : memref<16x9xf32, #tpu.memory_space<vmem>>, vector<16x1xf32>
    %51 = vector.shape_cast %50 : vector<16x1xf32> to vector<16x1x1xf32>
    %c0_36 = arith.constant 0 : index
    %c0_37 = arith.constant 0 : index
    %c2_38 = arith.constant 2 : index
    %c1_39 = arith.constant 1 : index
    %52 = vector.load %arg1[%c0_36, %c0_37, %c2_38, %c1_39] : memref<1x16x10x10xf32, #tpu.memory_space<vmem>>, vector<1x16x8x8xf32>
    %53 = vector.shape_cast %52 : vector<1x16x8x8xf32> to vector<16x8x8xf32>
    %54 = vector.broadcast %51 : vector<16x1x1xf32> to vector<16x8x8xf32>
    %55 = arith.mulf %54, %53 : vector<16x8x8xf32>
    %56 = arith.addf %49, %55 : vector<16x8x8xf32>
    %c0_40 = arith.constant 0 : index
    %c8 = arith.constant 8 : index
    %57 = vector.load %arg2[%c0_40, %c8] : memref<16x9xf32, #tpu.memory_space<vmem>>, vector<16x1xf32>
    %58 = vector.shape_cast %57 : vector<16x1xf32> to vector<16x1x1xf32>
    %c0_41 = arith.constant 0 : index
    %c0_42 = arith.constant 0 : index
    %c2_43 = arith.constant 2 : index
    %c2_44 = arith.constant 2 : index
    %59 = vector.load %arg1[%c0_41, %c0_42, %c2_43, %c2_44] : memref<1x16x10x10xf32, #tpu.memory_space<vmem>>, vector<1x16x8x8xf32>
    %60 = vector.shape_cast %59 : vector<1x16x8x8xf32> to vector<16x8x8xf32>
    %61 = vector.broadcast %58 : vector<16x1x1xf32> to vector<16x8x8xf32>
    %62 = arith.mulf %61, %60 : vector<16x8x8xf32>
    %63 = arith.addf %56, %62 : vector<16x8x8xf32>
    %cst_45 = arith.constant 5.000000e-01 : f32
    %64 = vector.broadcast %cst_45 : f32 to vector<16x8x8xf32>
    %65 = arith.mulf %64, %63 : vector<16x8x8xf32>
    %cst_46 = arith.constant 4.471500e-02 : f32
    %66 = vector.broadcast %cst_46 : f32 to vector<16x8x8xf32>
    %67 = arith.mulf %66, %63 : vector<16x8x8xf32>
    %68 = arith.mulf %67, %63 : vector<16x8x8xf32>
    %69 = arith.mulf %68, %63 : vector<16x8x8xf32>
    %70 = arith.addf %63, %69 : vector<16x8x8xf32>
    %cst_47 = arith.constant 0.797884583 : f32
    %71 = vector.broadcast %cst_47 : f32 to vector<16x8x8xf32>
    %72 = arith.mulf %71, %70 : vector<16x8x8xf32>
    %73 = math.tanh %72 : vector<16x8x8xf32>
    %cst_48 = arith.constant 1.000000e+00 : f32
    %74 = vector.broadcast %cst_48 : f32 to vector<16x8x8xf32>
    %75 = arith.addf %74, %73 : vector<16x8x8xf32>
    %76 = arith.mulf %65, %75 : vector<16x8x8xf32>
    %77 = vector.shape_cast %76 : vector<16x8x8xf32> to vector<1x16x8x8xf32>
    %c0_49 = arith.constant 0 : index
    %c0_50 = arith.constant 0 : index
    %c0_51 = arith.constant 0 : index
    %c0_52 = arith.constant 0 : index
    %78 = vector.load %arg3[%c0_49, %c0_50, %c0_51, %c0_52] : memref<1x16x8x8xf32, #tpu.memory_space<vmem>>, vector<1x16x8x8xf32>
    tpu.vector_store %arg3[%c0_49, %c0_50, %c0_51, %c0_52], %77 {strides = array<i32>} : memref<1x16x8x8xf32, #tpu.memory_space<vmem>>, vector<1x16x8x8xf32>,
    return
  }
  func.func @transform_0(%arg0: i32) -> (i32, i32, i32, i32) {
    %c0_i32 = arith.constant 0 : i32
    %c0_i32_0 = arith.constant 0 : i32
    %c0_i32_1 = arith.constant 0 : i32
    %c0_i32_2 = arith.constant 0 : i32
    return %arg0, %c0_i32, %c0_i32_0, %c0_i32_1 : i32, i32, i32, i32
  }
  func.func @transform_1(%arg0: i32) -> (i32, i32) {
    %c0_i32 = arith.constant 0 : i32
    %c0_i32_0 = arith.constant 0 : i32
    %c0_i32_1 = arith.constant 0 : i32
    return %c0_i32, %c0_i32_0 : i32, i32
  }
  func.func @transform_2(%arg0: i32) -> (i32, i32, i32, i32) {
    %c0_i32 = arith.constant 0 : i32
    %c0_i32_0 = arith.constant 0 : i32
    %c0_i32_1 = arith.constant 0 : i32
    %c0_i32_2 = arith.constant 0 : i32
    return %arg0, %c0_i32, %c0_i32_0, %c0_i32_1 : i32, i32, i32, i32
  }
}

module attributes {stable_mosaic.version = 11 : i64} {
  func.func @dwconv_add2_kernel(%arg0: i32, %arg1: memref<1x16x10x10xf32, #tpu.memory_space<vmem>>, %arg2: memref<16x9xf32, #tpu.memory_space<vmem>>, %arg3: memref<1x16x8x8xf32, #tpu.memory_space<vmem>>, %arg4: memref<1x16x8x8xf32, #tpu.memory_space<vmem>>, %arg5: memref<1x16x8x8xf32, #tpu.memory_space<vmem>>) attributes {dimension_semantics = [#tpu.dimension_semantics<parallel>], iteration_bounds = array<i64: 2>, scalar_prefetch = 0 : i64, scratch_operands = 0 : i64, tpu.core_type = #tpu.core_type<tc>, window_params = [{transform_indices = @transform_0, window_bounds = array<i64: 1, 16, 10, 10>}, {pipeline_mode = #tpu.pipeline_mode<synchronous>, transform_indices = @transform_1, window_bounds = array<i64: 16, 9>}, {transform_indices = @transform_2, window_bounds = array<i64: 1, 16, 8, 8>}, {transform_indices = @transform_3, window_bounds = array<i64: 1, 16, 8, 8>}, {transform_indices = @transform_4, window_bounds = array<i64: 1, 16, 8, 8>}]} {
    %cst = arith.constant 0.000000e+00 : f32
    %0 = vector.broadcast %cst : f32 to vector<16x8x8xf32>
    %c0 = arith.constant 0 : index
    %c0_0 = arith.constant 0 : index
    %1 = vector.load %arg2[%c0, %c0_0] : memref<16x9xf32, #tpu.memory_space<vmem>>, vector<16x1xf32>
    %2 = vector.shape_cast %1 : vector<16x1xf32> to vector<16x1x1xf32>
    %c0_1 = arith.constant 0 : index
    %c0_2 = arith.constant 0 : index
    %c0_3 = arith.constant 0 : index
    %c0_4 = arith.constant 0 : index
    %3 = vector.load %arg1[%c0_1, %c0_2, %c0_3, %c0_4] : memref<1x16x10x10xf32, #tpu.memory_space<vmem>>, vector<1x16x8x8xf32>
    %4 = vector.shape_cast %3 : vector<1x16x8x8xf32> to vector<16x8x8xf32>
    %5 = vector.broadcast %2 : vector<16x1x1xf32> to vector<16x8x8xf32>
    %6 = arith.mulf %5, %4 : vector<16x8x8xf32>
    %7 = arith.addf %0, %6 : vector<16x8x8xf32>
    %c0_5 = arith.constant 0 : index
    %c1 = arith.constant 1 : index
    %8 = vector.load %arg2[%c0_5, %c1] : memref<16x9xf32, #tpu.memory_space<vmem>>, vector<16x1xf32>
    %9 = vector.shape_cast %8 : vector<16x1xf32> to vector<16x1x1xf32>
    %c0_6 = arith.constant 0 : index
    %c0_7 = arith.constant 0 : index
    %c0_8 = arith.constant 0 : index
    %c1_9 = arith.constant 1 : index
    %10 = vector.load %arg1[%c0_6, %c0_7, %c0_8, %c1_9] : memref<1x16x10x10xf32, #tpu.memory_space<vmem>>, vector<1x16x8x8xf32>
    %11 = vector.shape_cast %10 : vector<1x16x8x8xf32> to vector<16x8x8xf32>
    %12 = vector.broadcast %9 : vector<16x1x1xf32> to vector<16x8x8xf32>
    %13 = arith.mulf %12, %11 : vector<16x8x8xf32>
    %14 = arith.addf %7, %13 : vector<16x8x8xf32>
    %c0_10 = arith.constant 0 : index
    %c2 = arith.constant 2 : index
    %15 = vector.load %arg2[%c0_10, %c2] : memref<16x9xf32, #tpu.memory_space<vmem>>, vector<16x1xf32>
    %16 = vector.shape_cast %15 : vector<16x1xf32> to vector<16x1x1xf32>
    %c0_11 = arith.constant 0 : index
    %c0_12 = arith.constant 0 : index
    %c0_13 = arith.constant 0 : index
    %c2_14 = arith.constant 2 : index
    %17 = vector.load %arg1[%c0_11, %c0_12, %c0_13, %c2_14] : memref<1x16x10x10xf32, #tpu.memory_space<vmem>>, vector<1x16x8x8xf32>
    %18 = vector.shape_cast %17 : vector<1x16x8x8xf32> to vector<16x8x8xf32>
    %19 = vector.broadcast %16 : vector<16x1x1xf32> to vector<16x8x8xf32>
    %20 = arith.mulf %19, %18 : vector<16x8x8xf32>
    %21 = arith.addf %14, %20 : vector<16x8x8xf32>
    %c0_15 = arith.constant 0 : index
    %c3 = arith.constant 3 : index
    %22 = vector.load %arg2[%c0_15, %c3] : memref<16x9xf32, #tpu.memory_space<vmem>>, vector<16x1xf32>
    %23 = vector.shape_cast %22 : vector<16x1xf32> to vector<16x1x1xf32>
    %c0_16 = arith.constant 0 : index
    %c0_17 = arith.constant 0 : index
    %c1_18 = arith.constant 1 : index
    %c0_19 = arith.constant 0 : index
    %24 = vector.load %arg1[%c0_16, %c0_17, %c1_18, %c0_19] : memref<1x16x10x10xf32, #tpu.memory_space<vmem>>, vector<1x16x8x8xf32>
    %25 = vector.shape_cast %24 : vector<1x16x8x8xf32> to vector<16x8x8xf32>
    %26 = vector.broadcast %23 : vector<16x1x1xf32> to vector<16x8x8xf32>
    %27 = arith.mulf %26, %25 : vector<16x8x8xf32>
    %28 = arith.addf %21, %27 : vector<16x8x8xf32>
    %c0_20 = arith.constant 0 : index
    %c4 = arith.constant 4 : index
    %29 = vector.load %arg2[%c0_20, %c4] : memref<16x9xf32, #tpu.memory_space<vmem>>, vector<16x1xf32>
    %30 = vector.shape_cast %29 : vector<16x1xf32> to vector<16x1x1xf32>
    %c0_21 = arith.constant 0 : index
    %c0_22 = arith.constant 0 : index
    %c1_23 = arith.constant 1 : index
    %c1_24 = arith.constant 1 : index
    %31 = vector.load %arg1[%c0_21, %c0_22, %c1_23, %c1_24] : memref<1x16x10x10xf32, #tpu.memory_space<vmem>>, vector<1x16x8x8xf32>
    %32 = vector.shape_cast %31 : vector<1x16x8x8xf32> to vector<16x8x8xf32>
    %33 = vector.broadcast %30 : vector<16x1x1xf32> to vector<16x8x8xf32>
    %34 = arith.mulf %33, %32 : vector<16x8x8xf32>
    %35 = arith.addf %28, %34 : vector<16x8x8xf32>
    %c0_25 = arith.constant 0 : index
    %c5 = arith.constant 5 : index
    %36 = vector.load %arg2[%c0_25, %c5] : memref<16x9xf32, #tpu.memory_space<vmem>>, vector<16x1xf32>
    %37 = vector.shape_cast %36 : vector<16x1xf32> to vector<16x1x1xf32>
    %c0_26 = arith.constant 0 : index
    %c0_27 = arith.constant 0 : index
    %c1_28 = arith.constant 1 : index
    %c2_29 = arith.constant 2 : index
    %38 = vector.load %arg1[%c0_26, %c0_27, %c1_28, %c2_29] : memref<1x16x10x10xf32, #tpu.memory_space<vmem>>, vector<1x16x8x8xf32>
    %39 = vector.shape_cast %38 : vector<1x16x8x8xf32> to vector<16x8x8xf32>
    %40 = vector.broadcast %37 : vector<16x1x1xf32> to vector<16x8x8xf32>
    %41 = arith.mulf %40, %39 : vector<16x8x8xf32>
    %42 = arith.addf %35, %41 : vector<16x8x8xf32>
    %c0_30 = arith.constant 0 : index
    %c6 = arith.constant 6 : index
    %43 = vector.load %arg2[%c0_30, %c6] : memref<16x9xf32, #tpu.memory_space<vmem>>, vector<16x1xf32>
    %44 = vector.shape_cast %43 : vector<16x1xf32> to vector<16x1x1xf32>
    %c0_31 = arith.constant 0 : index
    %c0_32 = arith.constant 0 : index
    %c2_33 = arith.constant 2 : index
    %c0_34 = arith.constant 0 : index
    %45 = vector.load %arg1[%c0_31, %c0_32, %c2_33, %c0_34] : memref<1x16x10x10xf32, #tpu.memory_space<vmem>>, vector<1x16x8x8xf32>
    %46 = vector.shape_cast %45 : vector<1x16x8x8xf32> to vector<16x8x8xf32>
    %47 = vector.broadcast %44 : vector<16x1x1xf32> to vector<16x8x8xf32>
    %48 = arith.mulf %47, %46 : vector<16x8x8xf32>
    %49 = arith.addf %42, %48 : vector<16x8x8xf32>
    %c0_35 = arith.constant 0 : index
    %c7 = arith.constant 7 : index
    %50 = vector.load %arg2[%c0_35, %c7] : memref<16x9xf32, #tpu.memory_space<vmem>>, vector<16x1xf32>
    %51 = vector.shape_cast %50 : vector<16x1xf32> to vector<16x1x1xf32>
    %c0_36 = arith.constant 0 : index
    %c0_37 = arith.constant 0 : index
    %c2_38 = arith.constant 2 : index
    %c1_39 = arith.constant 1 : index
    %52 = vector.load %arg1[%c0_36, %c0_37, %c2_38, %c1_39] : memref<1x16x10x10xf32, #tpu.memory_space<vmem>>, vector<1x16x8x8xf32>
    %53 = vector.shape_cast %52 : vector<1x16x8x8xf32> to vector<16x8x8xf32>
    %54 = vector.broadcast %51 : vector<16x1x1xf32> to vector<16x8x8xf32>
    %55 = arith.mulf %54, %53 : vector<16x8x8xf32>
    %56 = arith.addf %49, %55 : vector<16x8x8xf32>
    %c0_40 = arith.constant 0 : index
    %c8 = arith.constant 8 : index
    %57 = vector.load %arg2[%c0_40, %c8] : memref<16x9xf32, #tpu.memory_space<vmem>>, vector<16x1xf32>
    %58 = vector.shape_cast %57 : vector<16x1xf32> to vector<16x1x1xf32>
    %c0_41 = arith.constant 0 : index
    %c0_42 = arith.constant 0 : index
    %c2_43 = arith.constant 2 : index
    %c2_44 = arith.constant 2 : index
    %59 = vector.load %arg1[%c0_41, %c0_42, %c2_43, %c2_44] : memref<1x16x10x10xf32, #tpu.memory_space<vmem>>, vector<1x16x8x8xf32>
    %60 = vector.shape_cast %59 : vector<1x16x8x8xf32> to vector<16x8x8xf32>
    %61 = vector.broadcast %58 : vector<16x1x1xf32> to vector<16x8x8xf32>
    %62 = arith.mulf %61, %60 : vector<16x8x8xf32>
    %63 = arith.addf %56, %62 : vector<16x8x8xf32>
    %c0_45 = arith.constant 0 : index
    %c0_46 = arith.constant 0 : index
    %c0_47 = arith.constant 0 : index
    %c0_48 = arith.constant 0 : index
    %64 = vector.load %arg3[%c0_45, %c0_46, %c0_47, %c0_48] : memref<1x16x8x8xf32, #tpu.memory_space<vmem>>, vector<1x16x8x8xf32>
    %65 = vector.shape_cast %64 : vector<1x16x8x8xf32> to vector<16x8x8xf32>
    %66 = arith.addf %63, %65 : vector<16x8x8xf32>
    %c0_49 = arith.constant 0 : index
    %c0_50 = arith.constant 0 : index
    %c0_51 = arith.constant 0 : index
    %c0_52 = arith.constant 0 : index
    %67 = vector.load %arg4[%c0_49, %c0_50, %c0_51, %c0_52] : memref<1x16x8x8xf32, #tpu.memory_space<vmem>>, vector<1x16x8x8xf32>
    %68 = vector.shape_cast %67 : vector<1x16x8x8xf32> to vector<16x8x8xf32>
    %69 = arith.addf %66, %68 : vector<16x8x8xf32>
    %70 = vector.shape_cast %69 : vector<16x8x8xf32> to vector<1x16x8x8xf32>
    %c0_53 = arith.constant 0 : index
    %c0_54 = arith.constant 0 : index
    %c0_55 = arith.constant 0 : index
    %c0_56 = arith.constant 0 : index
    %71 = vector.load %arg5[%c0_53, %c0_54, %c0_55, %c0_56] : memref<1x16x8x8xf32, #tpu.memory_space<vmem>>, vector<1x16x8x8xf32>
    tpu.vector_store %arg5[%c0_53, %c0_54, %c0_55, %c0_56], %70 {strides = array<i32>} : memref<1x16x8x8xf32, #tpu.memory_space<vmem>>, vector<1x16x8x8xf32>,
    return
  }
  func.func @transform_0(%arg0: i32) -> (i32, i32, i32, i32) {
    %c0_i32 = arith.constant 0 : i32
    %c0_i32_0 = arith.constant 0 : i32
    %c0_i32_1 = arith.constant 0 : i32
    %c0_i32_2 = arith.constant 0 : i32
    return %arg0, %c0_i32, %c0_i32_0, %c0_i32_1 : i32, i32, i32, i32
  }
  func.func @transform_1(%arg0: i32) -> (i32, i32) {
    %c0_i32 = arith.constant 0 : i32
    %c0_i32_0 = arith.constant 0 : i32
    %c0_i32_1 = arith.constant 0 : i32
    return %c0_i32, %c0_i32_0 : i32, i32
  }
  func.func @transform_2(%arg0: i32) -> (i32, i32, i32, i32) {
    %c0_i32 = arith.constant 0 : i32
    %c0_i32_0 = arith.constant 0 : i32
    %c0_i32_1 = arith.constant 0 : i32
    %c0_i32_2 = arith.constant 0 : i32
    return %arg0, %c0_i32, %c0_i32_0, %c0_i32_1 : i32, i32, i32, i32
  }
  func.func @transform_3(%arg0: i32) -> (i32, i32, i32, i32) {
    %c0_i32 = arith.constant 0 : i32
    %c0_i32_0 = arith.constant 0 : i32
    %c0_i32_1 = arith.constant 0 : i32
    %c0_i32_2 = arith.constant 0 : i32
    return %arg0, %c0_i32, %c0_i32_0, %c0_i32_1 : i32, i32, i32, i32
  }
  func.func @transform_4(%arg0: i32) -> (i32, i32, i32, i32) {
    %c0_i32 = arith.constant 0 : i32
    %c0_i32_0 = arith.constant 0 : i32
    %c0_i32_1 = arith.constant 0 : i32
    %c0_i32_2 = arith.constant 0 : i32
    return %arg0, %c0_i32, %c0_i32_0, %c0_i32_1 : i32, i32, i32, i32
  }
}

module attributes {stable_mosaic.version = 11 : i64} {
  func.func @ff_in_kernel(%arg0: i32, %arg1: memref<1x16x64xf32, #tpu.memory_space<vmem>>, %arg2: memref<16x1xf32, #tpu.memory_space<vmem>>, %arg3: memref<16x1xf32, #tpu.memory_space<vmem>>, %arg4: memref<64x16xf32, #tpu.memory_space<vmem>>, %arg5: memref<1x64x64xf32, #tpu.memory_space<vmem>>) attributes {dimension_semantics = [#tpu.dimension_semantics<parallel>], iteration_bounds = array<i64: 2>, scalar_prefetch = 0 : i64, scratch_operands = 0 : i64, tpu.core_type = #tpu.core_type<tc>, window_params = [{transform_indices = @transform_0, window_bounds = array<i64: 1, 16, 64>}, {pipeline_mode = #tpu.pipeline_mode<synchronous>, transform_indices = @transform_1, window_bounds = array<i64: 16, 1>}, {pipeline_mode = #tpu.pipeline_mode<synchronous>, transform_indices = @transform_2, window_bounds = array<i64: 16, 1>}, {pipeline_mode = #tpu.pipeline_mode<synchronous>, transform_indices = @transform_3, window_bounds = array<i64: 64, 16>}, {transform_indices = @transform_4, window_bounds = array<i64: 1, 64, 64>}]} {
    %c0 = arith.constant 0 : index
    %c0_0 = arith.constant 0 : index
    %c0_1 = arith.constant 0 : index
    %0 = vector.load %arg1[%c0, %c0_0, %c0_1] : memref<1x16x64xf32, #tpu.memory_space<vmem>>, vector<1x16x64xf32>
    %1 = vector.shape_cast %0 : vector<1x16x64xf32> to vector<16x64xf32>
    %cst = arith.constant dense<0.000000e+00> : vector<64xf32>
    %2 = vector.multi_reduction <add>, %1, %cst [0] : vector<16x64xf32> to vector<64xf32>
    %3 = vector.shape_cast %2 : vector<64xf32> to vector<1x64xf32>
    %cst_2 = arith.constant 1.600000e+01 : f32
    %4 = vector.broadcast %cst_2 : f32 to vector<1x64xf32>
    %5 = arith.divf %3, %4 : vector<1x64xf32>
    %6 = vector.broadcast %5 : vector<1x64xf32> to vector<16x64xf32>
    %7 = arith.subf %1, %6 : vector<16x64xf32>
    %8 = arith.mulf %7, %7 : vector<16x64xf32>
    %cst_3 = arith.constant dense<0.000000e+00> : vector<64xf32>
    %9 = vector.multi_reduction <add>, %8, %cst_3 [0] : vector<16x64xf32> to vector<64xf32>
    %10 = vector.shape_cast %9 : vector<64xf32> to vector<1x64xf32>
    %cst_4 = arith.constant 1.600000e+01 : f32
    %11 = vector.broadcast %cst_4 : f32 to vector<1x64xf32>
    %12 = arith.divf %10, %11 : vector<1x64xf32>
    %cst_5 = arith.constant 9.99999974E-6 : f32
    %13 = vector.broadcast %cst_5 : f32 to vector<1x64xf32>
    %14 = arith.addf %12, %13 : vector<1x64xf32>
    %15 = math.rsqrt %14 : vector<1x64xf32>
    %16 = vector.broadcast %15 : vector<1x64xf32> to vector<16x64xf32>
    %17 = arith.mulf %7, %16 : vector<16x64xf32>
    %c0_6 = arith.constant 0 : index
    %c0_7 = arith.constant 0 : index
    %18 = vector.load %arg2[%c0_6, %c0_7] : memref<16x1xf32, #tpu.memory_space<vmem>>, vector<16x1xf32>
    %19 = vector.broadcast %18 : vector<16x1xf32> to vector<16x64xf32>
    %20 = arith.mulf %17, %19 : vector<16x64xf32>
    %c0_8 = arith.constant 0 : index
    %c0_9 = arith.constant 0 : index
    %21 = vector.load %arg3[%c0_8, %c0_9] : memref<16x1xf32, #tpu.memory_space<vmem>>, vector<16x1xf32>
    %22 = vector.broadcast %21 : vector<16x1xf32> to vector<16x64xf32>
    %23 = arith.addf %20, %22 : vector<16x64xf32>
    %c0_10 = arith.constant 0 : index
    %c0_11 = arith.constant 0 : index
    %24 = vector.load %arg4[%c0_10, %c0_11] : memref<64x16xf32, #tpu.memory_space<vmem>>, vector<64x16xf32>
    %cst_12 = arith.constant dense<0.000000e+00> : vector<64x64xf32>
    %25 = tpu.matmul %24, %23, %cst_12 {dimension_numbers = #tpu.dot_dimension_numbers<[1], [0], [0], [1], [0, 0, 1, 1], [], []>} : vector<64x16xf32>, vector<16x64xf32>, vector<64x64xf32> -> vector<64x64xf32>
    %cst_13 = arith.constant 5.000000e-01 : f32
    %26 = vector.broadcast %cst_13 : f32 to vector<64x64xf32>
    %27 = arith.mulf %26, %25 : vector<64x64xf32>
    %cst_14 = arith.constant 4.471500e-02 : f32
    %28 = vector.broadcast %cst_14 : f32 to vector<64x64xf32>
    %29 = arith.mulf %28, %25 : vector<64x64xf32>
    %30 = arith.mulf %29, %25 : vector<64x64xf32>
    %31 = arith.mulf %30, %25 : vector<64x64xf32>
    %32 = arith.addf %25, %31 : vector<64x64xf32>
    %cst_15 = arith.constant 0.797884583 : f32
    %33 = vector.broadcast %cst_15 : f32 to vector<64x64xf32>
    %34 = arith.mulf %33, %32 : vector<64x64xf32>
    %35 = math.tanh %34 : vector<64x64xf32>
    %cst_16 = arith.constant 1.000000e+00 : f32
    %36 = vector.broadcast %cst_16 : f32 to vector<64x64xf32>
    %37 = arith.addf %36, %35 : vector<64x64xf32>
    %38 = arith.mulf %27, %37 : vector<64x64xf32>
    %39 = vector.shape_cast %38 : vector<64x64xf32> to vector<1x64x64xf32>
    %c0_17 = arith.constant 0 : index
    %c0_18 = arith.constant 0 : index
    %c0_19 = arith.constant 0 : index
    %40 = vector.load %arg5[%c0_17, %c0_18, %c0_19] : memref<1x64x64xf32, #tpu.memory_space<vmem>>, vector<1x64x64xf32>
    tpu.vector_store %arg5[%c0_17, %c0_18, %c0_19], %39 {strides = array<i32>} : memref<1x64x64xf32, #tpu.memory_space<vmem>>, vector<1x64x64xf32>,
    return
  }
  func.func @transform_0(%arg0: i32) -> (i32, i32, i32) {
    %c0_i32 = arith.constant 0 : i32
    %c0_i32_0 = arith.constant 0 : i32
    %c0_i32_1 = arith.constant 0 : i32
    return %arg0, %c0_i32, %c0_i32_0 : i32, i32, i32
  }
  func.func @transform_1(%arg0: i32) -> (i32, i32) {
    %c0_i32 = arith.constant 0 : i32
    %c0_i32_0 = arith.constant 0 : i32
    %c0_i32_1 = arith.constant 0 : i32
    return %c0_i32, %c0_i32_0 : i32, i32
  }
  func.func @transform_2(%arg0: i32) -> (i32, i32) {
    %c0_i32 = arith.constant 0 : i32
    %c0_i32_0 = arith.constant 0 : i32
    %c0_i32_1 = arith.constant 0 : i32
    return %c0_i32, %c0_i32_0 : i32, i32
  }
  func.func @transform_3(%arg0: i32) -> (i32, i32) {
    %c0_i32 = arith.constant 0 : i32
    %c0_i32_0 = arith.constant 0 : i32
    %c0_i32_1 = arith.constant 0 : i32
    return %c0_i32, %c0_i32_0 : i32, i32
  }
  func.func @transform_4(%arg0: i32) -> (i32, i32, i32) {
    %c0_i32 = arith.constant 0 : i32
    %c0_i32_0 = arith.constant 0 : i32
    %c0_i32_1 = arith.constant 0 : i32
    return %arg0, %c0_i32, %c0_i32_0 : i32, i32, i32
  }
}

module attributes {stable_mosaic.version = 11 : i64} {
  func.func @dwconv_kernel(%arg0: i32, %arg1: memref<1x64x10x10xf32, #tpu.memory_space<vmem>>, %arg2: memref<64x9xf32, #tpu.memory_space<vmem>>, %arg3: memref<1x64x8x8xf32, #tpu.memory_space<vmem>>) attributes {dimension_semantics = [#tpu.dimension_semantics<parallel>], iteration_bounds = array<i64: 2>, scalar_prefetch = 0 : i64, scratch_operands = 0 : i64, tpu.core_type = #tpu.core_type<tc>, window_params = [{transform_indices = @transform_0, window_bounds = array<i64: 1, 64, 10, 10>}, {pipeline_mode = #tpu.pipeline_mode<synchronous>, transform_indices = @transform_1, window_bounds = array<i64: 64, 9>}, {transform_indices = @transform_2, window_bounds = array<i64: 1, 64, 8, 8>}]} {
    %cst = arith.constant 0.000000e+00 : f32
    %0 = vector.broadcast %cst : f32 to vector<64x8x8xf32>
    %c0 = arith.constant 0 : index
    %c0_0 = arith.constant 0 : index
    %1 = vector.load %arg2[%c0, %c0_0] : memref<64x9xf32, #tpu.memory_space<vmem>>, vector<64x1xf32>
    %2 = vector.shape_cast %1 : vector<64x1xf32> to vector<64x1x1xf32>
    %c0_1 = arith.constant 0 : index
    %c0_2 = arith.constant 0 : index
    %c0_3 = arith.constant 0 : index
    %c0_4 = arith.constant 0 : index
    %3 = vector.load %arg1[%c0_1, %c0_2, %c0_3, %c0_4] : memref<1x64x10x10xf32, #tpu.memory_space<vmem>>, vector<1x64x8x8xf32>
    %4 = vector.shape_cast %3 : vector<1x64x8x8xf32> to vector<64x8x8xf32>
    %5 = vector.broadcast %2 : vector<64x1x1xf32> to vector<64x8x8xf32>
    %6 = arith.mulf %5, %4 : vector<64x8x8xf32>
    %7 = arith.addf %0, %6 : vector<64x8x8xf32>
    %c0_5 = arith.constant 0 : index
    %c1 = arith.constant 1 : index
    %8 = vector.load %arg2[%c0_5, %c1] : memref<64x9xf32, #tpu.memory_space<vmem>>, vector<64x1xf32>
    %9 = vector.shape_cast %8 : vector<64x1xf32> to vector<64x1x1xf32>
    %c0_6 = arith.constant 0 : index
    %c0_7 = arith.constant 0 : index
    %c0_8 = arith.constant 0 : index
    %c1_9 = arith.constant 1 : index
    %10 = vector.load %arg1[%c0_6, %c0_7, %c0_8, %c1_9] : memref<1x64x10x10xf32, #tpu.memory_space<vmem>>, vector<1x64x8x8xf32>
    %11 = vector.shape_cast %10 : vector<1x64x8x8xf32> to vector<64x8x8xf32>
    %12 = vector.broadcast %9 : vector<64x1x1xf32> to vector<64x8x8xf32>
    %13 = arith.mulf %12, %11 : vector<64x8x8xf32>
    %14 = arith.addf %7, %13 : vector<64x8x8xf32>
    %c0_10 = arith.constant 0 : index
    %c2 = arith.constant 2 : index
    %15 = vector.load %arg2[%c0_10, %c2] : memref<64x9xf32, #tpu.memory_space<vmem>>, vector<64x1xf32>
    %16 = vector.shape_cast %15 : vector<64x1xf32> to vector<64x1x1xf32>
    %c0_11 = arith.constant 0 : index
    %c0_12 = arith.constant 0 : index
    %c0_13 = arith.constant 0 : index
    %c2_14 = arith.constant 2 : index
    %17 = vector.load %arg1[%c0_11, %c0_12, %c0_13, %c2_14] : memref<1x64x10x10xf32, #tpu.memory_space<vmem>>, vector<1x64x8x8xf32>
    %18 = vector.shape_cast %17 : vector<1x64x8x8xf32> to vector<64x8x8xf32>
    %19 = vector.broadcast %16 : vector<64x1x1xf32> to vector<64x8x8xf32>
    %20 = arith.mulf %19, %18 : vector<64x8x8xf32>
    %21 = arith.addf %14, %20 : vector<64x8x8xf32>
    %c0_15 = arith.constant 0 : index
    %c3 = arith.constant 3 : index
    %22 = vector.load %arg2[%c0_15, %c3] : memref<64x9xf32, #tpu.memory_space<vmem>>, vector<64x1xf32>
    %23 = vector.shape_cast %22 : vector<64x1xf32> to vector<64x1x1xf32>
    %c0_16 = arith.constant 0 : index
    %c0_17 = arith.constant 0 : index
    %c1_18 = arith.constant 1 : index
    %c0_19 = arith.constant 0 : index
    %24 = vector.load %arg1[%c0_16, %c0_17, %c1_18, %c0_19] : memref<1x64x10x10xf32, #tpu.memory_space<vmem>>, vector<1x64x8x8xf32>
    %25 = vector.shape_cast %24 : vector<1x64x8x8xf32> to vector<64x8x8xf32>
    %26 = vector.broadcast %23 : vector<64x1x1xf32> to vector<64x8x8xf32>
    %27 = arith.mulf %26, %25 : vector<64x8x8xf32>
    %28 = arith.addf %21, %27 : vector<64x8x8xf32>
    %c0_20 = arith.constant 0 : index
    %c4 = arith.constant 4 : index
    %29 = vector.load %arg2[%c0_20, %c4] : memref<64x9xf32, #tpu.memory_space<vmem>>, vector<64x1xf32>
    %30 = vector.shape_cast %29 : vector<64x1xf32> to vector<64x1x1xf32>
    %c0_21 = arith.constant 0 : index
    %c0_22 = arith.constant 0 : index
    %c1_23 = arith.constant 1 : index
    %c1_24 = arith.constant 1 : index
    %31 = vector.load %arg1[%c0_21, %c0_22, %c1_23, %c1_24] : memref<1x64x10x10xf32, #tpu.memory_space<vmem>>, vector<1x64x8x8xf32>
    %32 = vector.shape_cast %31 : vector<1x64x8x8xf32> to vector<64x8x8xf32>
    %33 = vector.broadcast %30 : vector<64x1x1xf32> to vector<64x8x8xf32>
    %34 = arith.mulf %33, %32 : vector<64x8x8xf32>
    %35 = arith.addf %28, %34 : vector<64x8x8xf32>
    %c0_25 = arith.constant 0 : index
    %c5 = arith.constant 5 : index
    %36 = vector.load %arg2[%c0_25, %c5] : memref<64x9xf32, #tpu.memory_space<vmem>>, vector<64x1xf32>
    %37 = vector.shape_cast %36 : vector<64x1xf32> to vector<64x1x1xf32>
    %c0_26 = arith.constant 0 : index
    %c0_27 = arith.constant 0 : index
    %c1_28 = arith.constant 1 : index
    %c2_29 = arith.constant 2 : index
    %38 = vector.load %arg1[%c0_26, %c0_27, %c1_28, %c2_29] : memref<1x64x10x10xf32, #tpu.memory_space<vmem>>, vector<1x64x8x8xf32>
    %39 = vector.shape_cast %38 : vector<1x64x8x8xf32> to vector<64x8x8xf32>
    %40 = vector.broadcast %37 : vector<64x1x1xf32> to vector<64x8x8xf32>
    %41 = arith.mulf %40, %39 : vector<64x8x8xf32>
    %42 = arith.addf %35, %41 : vector<64x8x8xf32>
    %c0_30 = arith.constant 0 : index
    %c6 = arith.constant 6 : index
    %43 = vector.load %arg2[%c0_30, %c6] : memref<64x9xf32, #tpu.memory_space<vmem>>, vector<64x1xf32>
    %44 = vector.shape_cast %43 : vector<64x1xf32> to vector<64x1x1xf32>
    %c0_31 = arith.constant 0 : index
    %c0_32 = arith.constant 0 : index
    %c2_33 = arith.constant 2 : index
    %c0_34 = arith.constant 0 : index
    %45 = vector.load %arg1[%c0_31, %c0_32, %c2_33, %c0_34] : memref<1x64x10x10xf32, #tpu.memory_space<vmem>>, vector<1x64x8x8xf32>
    %46 = vector.shape_cast %45 : vector<1x64x8x8xf32> to vector<64x8x8xf32>
    %47 = vector.broadcast %44 : vector<64x1x1xf32> to vector<64x8x8xf32>
    %48 = arith.mulf %47, %46 : vector<64x8x8xf32>
    %49 = arith.addf %42, %48 : vector<64x8x8xf32>
    %c0_35 = arith.constant 0 : index
    %c7 = arith.constant 7 : index
    %50 = vector.load %arg2[%c0_35, %c7] : memref<64x9xf32, #tpu.memory_space<vmem>>, vector<64x1xf32>
    %51 = vector.shape_cast %50 : vector<64x1xf32> to vector<64x1x1xf32>
    %c0_36 = arith.constant 0 : index
    %c0_37 = arith.constant 0 : index
    %c2_38 = arith.constant 2 : index
    %c1_39 = arith.constant 1 : index
    %52 = vector.load %arg1[%c0_36, %c0_37, %c2_38, %c1_39] : memref<1x64x10x10xf32, #tpu.memory_space<vmem>>, vector<1x64x8x8xf32>
    %53 = vector.shape_cast %52 : vector<1x64x8x8xf32> to vector<64x8x8xf32>
    %54 = vector.broadcast %51 : vector<64x1x1xf32> to vector<64x8x8xf32>
    %55 = arith.mulf %54, %53 : vector<64x8x8xf32>
    %56 = arith.addf %49, %55 : vector<64x8x8xf32>
    %c0_40 = arith.constant 0 : index
    %c8 = arith.constant 8 : index
    %57 = vector.load %arg2[%c0_40, %c8] : memref<64x9xf32, #tpu.memory_space<vmem>>, vector<64x1xf32>
    %58 = vector.shape_cast %57 : vector<64x1xf32> to vector<64x1x1xf32>
    %c0_41 = arith.constant 0 : index
    %c0_42 = arith.constant 0 : index
    %c2_43 = arith.constant 2 : index
    %c2_44 = arith.constant 2 : index
    %59 = vector.load %arg1[%c0_41, %c0_42, %c2_43, %c2_44] : memref<1x64x10x10xf32, #tpu.memory_space<vmem>>, vector<1x64x8x8xf32>
    %60 = vector.shape_cast %59 : vector<1x64x8x8xf32> to vector<64x8x8xf32>
    %61 = vector.broadcast %58 : vector<64x1x1xf32> to vector<64x8x8xf32>
    %62 = arith.mulf %61, %60 : vector<64x8x8xf32>
    %63 = arith.addf %56, %62 : vector<64x8x8xf32>
    %cst_45 = arith.constant 5.000000e-01 : f32
    %64 = vector.broadcast %cst_45 : f32 to vector<64x8x8xf32>
    %65 = arith.mulf %64, %63 : vector<64x8x8xf32>
    %cst_46 = arith.constant 4.471500e-02 : f32
    %66 = vector.broadcast %cst_46 : f32 to vector<64x8x8xf32>
    %67 = arith.mulf %66, %63 : vector<64x8x8xf32>
    %68 = arith.mulf %67, %63 : vector<64x8x8xf32>
    %69 = arith.mulf %68, %63 : vector<64x8x8xf32>
    %70 = arith.addf %63, %69 : vector<64x8x8xf32>
    %cst_47 = arith.constant 0.797884583 : f32
    %71 = vector.broadcast %cst_47 : f32 to vector<64x8x8xf32>
    %72 = arith.mulf %71, %70 : vector<64x8x8xf32>
    %73 = math.tanh %72 : vector<64x8x8xf32>
    %cst_48 = arith.constant 1.000000e+00 : f32
    %74 = vector.broadcast %cst_48 : f32 to vector<64x8x8xf32>
    %75 = arith.addf %74, %73 : vector<64x8x8xf32>
    %76 = arith.mulf %65, %75 : vector<64x8x8xf32>
    %77 = vector.shape_cast %76 : vector<64x8x8xf32> to vector<1x64x8x8xf32>
    %c0_49 = arith.constant 0 : index
    %c0_50 = arith.constant 0 : index
    %c0_51 = arith.constant 0 : index
    %c0_52 = arith.constant 0 : index
    %78 = vector.load %arg3[%c0_49, %c0_50, %c0_51, %c0_52] : memref<1x64x8x8xf32, #tpu.memory_space<vmem>>, vector<1x64x8x8xf32>
    tpu.vector_store %arg3[%c0_49, %c0_50, %c0_51, %c0_52], %77 {strides = array<i32>} : memref<1x64x8x8xf32, #tpu.memory_space<vmem>>, vector<1x64x8x8xf32>,
    return
  }
  func.func @transform_0(%arg0: i32) -> (i32, i32, i32, i32) {
    %c0_i32 = arith.constant 0 : i32
    %c0_i32_0 = arith.constant 0 : i32
    %c0_i32_1 = arith.constant 0 : i32
    %c0_i32_2 = arith.constant 0 : i32
    return %arg0, %c0_i32, %c0_i32_0, %c0_i32_1 : i32, i32, i32, i32
  }
  func.func @transform_1(%arg0: i32) -> (i32, i32) {
    %c0_i32 = arith.constant 0 : i32
    %c0_i32_0 = arith.constant 0 : i32
    %c0_i32_1 = arith.constant 0 : i32
    return %c0_i32, %c0_i32_0 : i32, i32
  }
  func.func @transform_2(%arg0: i32) -> (i32, i32, i32, i32) {
    %c0_i32 = arith.constant 0 : i32
    %c0_i32_0 = arith.constant 0 : i32
    %c0_i32_1 = arith.constant 0 : i32
    %c0_i32_2 = arith.constant 0 : i32
    return %arg0, %c0_i32, %c0_i32_0, %c0_i32_1 : i32, i32, i32, i32
  }
}

module attributes {stable_mosaic.version = 11 : i64} {
  func.func @ff_out_kernel(%arg0: i32, %arg1: memref<1x64x64xf32, #tpu.memory_space<vmem>>, %arg2: memref<16x64xf32, #tpu.memory_space<vmem>>, %arg3: memref<1x16x64xf32, #tpu.memory_space<vmem>>, %arg4: memref<1x16x64xf32, #tpu.memory_space<vmem>>) attributes {dimension_semantics = [#tpu.dimension_semantics<parallel>], iteration_bounds = array<i64: 2>, scalar_prefetch = 0 : i64, scratch_operands = 0 : i64, tpu.core_type = #tpu.core_type<tc>, window_params = [{transform_indices = @transform_0, window_bounds = array<i64: 1, 64, 64>}, {pipeline_mode = #tpu.pipeline_mode<synchronous>, transform_indices = @transform_1, window_bounds = array<i64: 16, 64>}, {transform_indices = @transform_2, window_bounds = array<i64: 1, 16, 64>}, {transform_indices = @transform_3, window_bounds = array<i64: 1, 16, 64>}]} {
    %c0 = arith.constant 0 : index
    %c0_0 = arith.constant 0 : index
    %0 = vector.load %arg2[%c0, %c0_0] : memref<16x64xf32, #tpu.memory_space<vmem>>, vector<16x64xf32>
    %c0_1 = arith.constant 0 : index
    %c0_2 = arith.constant 0 : index
    %c0_3 = arith.constant 0 : index
    %1 = vector.load %arg1[%c0_1, %c0_2, %c0_3] : memref<1x64x64xf32, #tpu.memory_space<vmem>>, vector<1x64x64xf32>
    %2 = vector.shape_cast %1 : vector<1x64x64xf32> to vector<64x64xf32>
    %cst = arith.constant dense<0.000000e+00> : vector<16x64xf32>
    %3 = tpu.matmul %0, %2, %cst {dimension_numbers = #tpu.dot_dimension_numbers<[1], [0], [0], [1], [0, 0, 1, 1], [], []>} : vector<16x64xf32>, vector<64x64xf32>, vector<16x64xf32> -> vector<16x64xf32>
    %c0_4 = arith.constant 0 : index
    %c0_5 = arith.constant 0 : index
    %c0_6 = arith.constant 0 : index
    %4 = vector.load %arg3[%c0_4, %c0_5, %c0_6] : memref<1x16x64xf32, #tpu.memory_space<vmem>>, vector<1x16x64xf32>
    %5 = vector.shape_cast %4 : vector<1x16x64xf32> to vector<16x64xf32>
    %6 = arith.addf %3, %5 : vector<16x64xf32>
    %7 = vector.shape_cast %6 : vector<16x64xf32> to vector<1x16x64xf32>
    %c0_7 = arith.constant 0 : index
    %c0_8 = arith.constant 0 : index
    %c0_9 = arith.constant 0 : index
    %8 = vector.load %arg4[%c0_7, %c0_8, %c0_9] : memref<1x16x64xf32, #tpu.memory_space<vmem>>, vector<1x16x64xf32>
    tpu.vector_store %arg4[%c0_7, %c0_8, %c0_9], %7 {strides = array<i32>} : memref<1x16x64xf32, #tpu.memory_space<vmem>>, vector<1x16x64xf32>,
    return
  }
  func.func @transform_0(%arg0: i32) -> (i32, i32, i32) {
    %c0_i32 = arith.constant 0 : i32
    %c0_i32_0 = arith.constant 0 : i32
    %c0_i32_1 = arith.constant 0 : i32
    return %arg0, %c0_i32, %c0_i32_0 : i32, i32, i32
  }
  func.func @transform_1(%arg0: i32) -> (i32, i32) {
    %c0_i32 = arith.constant 0 : i32
    %c0_i32_0 = arith.constant 0 : i32
    %c0_i32_1 = arith.constant 0 : i32
    return %c0_i32, %c0_i32_0 : i32, i32
  }
  func.func @transform_2(%arg0: i32) -> (i32, i32, i32) {
    %c0_i32 = arith.constant 0 : i32
    %c0_i32_0 = arith.constant 0 : i32
    %c0_i32_1 = arith.constant 0 : i32
    return %arg0, %c0_i32, %c0_i32_0 : i32, i32, i32
  }
  func.func @transform_3(%arg0: i32) -> (i32, i32, i32) {
    %c0_i32 = arith.constant 0 : i32
    %c0_i32_0 = arith.constant 0 : i32
    %c0_i32_1 = arith.constant 0 : i32
    return %arg0, %c0_i32, %c0_i32_0 : i32, i32, i32
  }
}

</mosaic_0001>

<llo_original>
// kernel: mlsif_forward.6
$region0: #{mlsif_forward.6}
  #allocation0 [shape = 'u32[]', space=smem, size = 0x4, offset = 0x4, fixed_abs, tag = 'smem constant byte address 0x4 - core index']
  #allocation1 [shape = 'u32[72,128]{1,0:T(1,128)}', space=vmem, size = 0x9000, scoped, tag = 'internal scratch']
  %s0 = inlined_call_operand.vmem [shape: f32[2,16,64], index: 0, kind: input, shape index: {}]
  %s1 = inlined_call_operand.vmem [shape: f32[2,16,64], index: 1, kind: input, shape index: {}]
  %s2 = inlined_call_operand.vmem [shape: f32[2,16,64], index: 2, kind: input, shape index: {}]
  %s3 = inlined_call_operand.vmem [shape: f32[2,16,64], index: 3, kind: input, shape index: {}]
  %s4 = inlined_call_operand.vmem [shape: f32[16,16], index: 4, kind: input, shape index: {}]
  %s5 = inlined_call_operand.vmem [shape: f32[4,16,16], index: 5, kind: input, shape index: {}]
  %s6 = inlined_call_operand.vmem [shape: f32[4,16,16], index: 6, kind: input, shape index: {}]
  %s7 = inlined_call_operand.vmem [shape: f32[4,2], index: 7, kind: input, shape index: {}]
  %s8 = inlined_call_operand.vmem [shape: f32[16,16], index: 8, kind: input, shape index: {}]
  %s9 = inlined_call_operand.vmem [shape: f32[16,1], index: 9, kind: input, shape index: {}]
  %s10 = inlined_call_operand.vmem [shape: f32[2,16,64], index: 10, kind: output, shape index: {0}]
  %s11 = inlined_call_operand.vmem [shape: f32[2,16,64], index: 11, kind: output, shape index: {1}]
  %12 = xla_tuple %s10, %s11
  %s13 = sld [smem:[#allocation0]]
  $region81: #{mlsif_forward.6} parent=0
    _
  %s15 = ssub.s32 1, %s13
  %s16 = scalar_select 0, %s15, %s13
  loop: start=0, step=1, limit=4
  $region2: #{mlsif_forward.6} parent=0 // loop_pre_header
    _
  $region3: #{mlsif_forward.6} parent=0 // loop_header
    %s18 = sphi 0, %s22
    %p19 = scmp.ge.s32.totalorder %s18, 4
    %s28 = sphi 0, %s30
    %s31 = sphi 0, %s28
    %s32 = sphi 0, %s31
    %s48 = sphi 0, %s32
    %s54 = sphi 0, %s56
    %s57 = sphi 0, %s54
    %s58 = sphi 0, %s57
    %s74 = sphi 0, %s58
    %s80 = sphi 0, %s82
    %s83 = sphi 0, %s80
    %s84 = sphi 0, %s83
    %s100 = sphi 0, %s84
    %s106 = sphi 0, %s108
    %s109 = sphi 0, %s106
    %s110 = sphi 0, %s109
    %s126 = sphi 0, %s110
    %s130 = sphi 0, %s130
    %s132 = sphi 0, %s130
    %s133 = sphi 0, %s132
    %s147 = sphi 0, %s133
    %s151 = sphi 0, %s151
    %s153 = sphi 0, %s151
    %s154 = sphi 0, %s153
    %s168 = sphi 0, %s154
    %s172 = sphi 0, %s172
    %s174 = sphi 0, %s172
    %s175 = sphi 0, %s174
    %s189 = sphi 0, %s175
    %s193 = sphi 0, %s193
    %s195 = sphi 0, %s193
    %s196 = sphi 0, %s195
    %s210 = sphi 0, %s196
    %s214 = sphi 0, %s214
    %s216 = sphi 0, %s214
    %s217 = sphi 0, %s216
    %s231 = sphi 0, %s217
    %s235 = sphi 0, %s235
    %s237 = sphi 0, %s235
    %s238 = sphi 0, %s237
    %s252 = sphi 0, %s238
    %s258 = sphi 0, %s260
    %s261 = sphi 0, %s258
    %s262 = sphi 0, %s261
    %s278 = sphi 0, %s262
    %s284 = sphi 0, %s286
    %s287 = sphi 0, %s284
    %s288 = sphi 0, %s287
    %s304 = sphi 0, %s288
  $region4: #{mlsif_forward.6} parent=0 // loop_header_branch
    %21 = sbr.rel (%p19) target = $region8
  $region5: #{mlsif_forward.6} parent=0 // loop_body
    %s23 = ssub.s32 %s18, 1
    %s24 = ssub.s32 %s18, 2
    %s25 = sadd.s32 %s18, 1
    %s26 = ssub.s32 %s18, %s25
    %p27 = scmp.eq.s32.totalorder %s26, 0
    %s29 = sadd.s32 %s28, 1
    %s30 = scalar_select %p27, %s28, %s29
    %p33 = pneg %p27
    %p34 = scmp.eq.s32.totalorder %s18, 1
    %p35 = por %p33, %p34
    %p36 = scmp.ne.s32.totalorder %s28, %s31
    %p37 = scmp.eq.s32.totalorder %s18, 0
    %p38 = por %p36, %p37
    %p39 = scmp.ne.s32.totalorder %s28, %s31
    %p40 = scmp.eq.s32.totalorder %s23, 1
    %p41 = por %p39, %p40
    %p42 = scmp.ne.s32.totalorder %s31, %s32
    %p43 = scmp.eq.s32.totalorder %s23, 0
    %p44 = por %p42, %p43
    %p45 = scmp.ne.s32.totalorder %s31, %s32
    %p46 = scmp.eq.s32.totalorder %s24, 1
    %p47 = por %p45, %p46
    %p49 = scmp.ne.s32.totalorder %s32, %s48
    %p50 = scmp.eq.s32.totalorder %s24, 0
    %p51 = por %p49, %p50
    %s52 = ssub.s32 %s18, %s25
    %p53 = scmp.eq.s32.totalorder %s52, 0
    %s55 = sadd.s32 %s54, 1
    %s56 = scalar_select %p53, %s54, %s55
    %p59 = pneg %p53
    %p60 = scmp.eq.s32.totalorder %s18, 1
    %p61 = por %p59, %p60
    %p62 = scmp.ne.s32.totalorder %s54, %s57
    %p63 = scmp.eq.s32.totalorder %s18, 0
    %p64 = por %p62, %p63
    %p65 = scmp.ne.s32.totalorder %s54, %s57
    %p66 = scmp.eq.s32.totalorder %s23, 1
    %p67 = por %p65, %p66
    %p68 = scmp.ne.s32.totalorder %s57, %s58
    %p69 = scmp.eq.s32.totalorder %s23, 0
    %p70 = por %p68, %p69
    %p71 = scmp.ne.s32.totalorder %s57, %s58
    %p72 = scmp.eq.s32.totalorder %s24, 1
    %p73 = por %p71, %p72
    %p75 = scmp.ne.s32.totalorder %s58, %s74
    %p76 = scmp.eq.s32.totalorder %s24, 0
    %p77 = por %p75, %p76
    %s78 = ssub.s32 %s18, %s25
    %p79 = scmp.eq.s32.totalorder %s78, 0
    %s81 = sadd.s32 %s80, 1
    %s82 = scalar_select %p79, %s80, %s81
    %p85 = pneg %p79
    %p86 = scmp.eq.s32.totalorder %s18, 1
    %p87 = por %p85, %p86
    %p88 = scmp.ne.s32.totalorder %s80, %s83
    %p89 = scmp.eq.s32.totalorder %s18, 0
    %p90 = por %p88, %p89
    %p91 = scmp.ne.s32.totalorder %s80, %s83
    %p92 = scmp.eq.s32.totalorder %s23, 1
    %p93 = por %p91, %p92
    %p94 = scmp.ne.s32.totalorder %s83, %s84
    %p95 = scmp.eq.s32.totalorder %s23, 0
    %p96 = por %p94, %p95
    %p97 = scmp.ne.s32.totalorder %s83, %s84
    %p98 = scmp.eq.s32.totalorder %s24, 1
    %p99 = por %p97, %p98
    %p101 = scmp.ne.s32.totalorder %s84, %s100
    %p102 = scmp.eq.s32.totalorder %s24, 0
    %p103 = por %p101, %p102
    %s104 = ssub.s32 %s18, %s25
    %p105 = scmp.eq.s32.totalorder %s104, 0
    %s107 = sadd.s32 %s106, 1
    %s108 = scalar_select %p105, %s106, %s107
    %p111 = pneg %p105
    %p112 = scmp.eq.s32.totalorder %s18, 1
    %p113 = por %p111, %p112
    %p114 = scmp.ne.s32.totalorder %s106, %s109
    %p115 = scmp.eq.s32.totalorder %s18, 0
    %p116 = por %p114, %p115
    %p117 = scmp.ne.s32.totalorder %s106, %s109
    %p118 = scmp.eq.s32.totalorder %s23, 1
    %p119 = por %p117, %p118
    %p120 = scmp.ne.s32.totalorder %s109, %s110
    %p121 = scmp.eq.s32.totalorder %s23, 0
    %p122 = por %p120, %p121
    %p123 = scmp.ne.s32.totalorder %s109, %s110
    %p124 = scmp.eq.s32.totalorder %s24, 1
    %p125 = por %p123, %p124
    %p127 = scmp.ne.s32.totalorder %s110, %s126
    %p128 = scmp.eq.s32.totalorder %s24, 0
    %p129 = por %p127, %p128
    %s131 = sadd.s32 %s130, 1
    %p134 = scmp.eq.s32.totalorder %s18, 1
    %p135 = scmp.ne.s32.totalorder %s130, %s132
    %p136 = scmp.eq.s32.totalorder %s18, 0
    %p137 = por %p135, %p136
    %p138 = scmp.ne.s32.totalorder %s130, %s132
    %p139 = scmp.eq.s32.totalorder %s23, 1
    %p140 = por %p138, %p139
    %p141 = scmp.ne.s32.totalorder %s132, %s133
    %p142 = scmp.eq.s32.totalorder %s23, 0
    %p143 = por %p141, %p142
    %p144 = scmp.ne.s32.totalorder %s132, %s133
    %p145 = scmp.eq.s32.totalorder %s24, 1
    %p146 = por %p144, %p145
    %p148 = scmp.ne.s32.totalorder %s133, %s147
    %p149 = scmp.eq.s32.totalorder %s24, 0
    %p150 = por %p148, %p149
    %s152 = sadd.s32 %s151, 1
    %p155 = scmp.eq.s32.totalorder %s18, 1
    %p156 = scmp.ne.s32.totalorder %s151, %s153
    %p157 = scmp.eq.s32.totalorder %s18, 0
    %p158 = por %p156, %p157
    %p159 = scmp.ne.s32.totalorder %s151, %s153
    %p160 = scmp.eq.s32.totalorder %s23, 1
    %p161 = por %p159, %p160
    %p162 = scmp.ne.s32.totalorder %s153, %s154
    %p163 = scmp.eq.s32.totalorder %s23, 0
    %p164 = por %p162, %p163
    %p165 = scmp.ne.s32.totalorder %s153, %s154
    %p166 = scmp.eq.s32.totalorder %s24, 1
    %p167 = por %p165, %p166
    %p169 = scmp.ne.s32.totalorder %s154, %s168
    %p170 = scmp.eq.s32.totalorder %s24, 0
    %p171 = por %p169, %p170
    %s173 = sadd.s32 %s172, 1
    %p176 = scmp.eq.s32.totalorder %s18, 1
    %p177 = scmp.ne.s32.totalorder %s172, %s174
    %p178 = scmp.eq.s32.totalorder %s18, 0
    %p179 = por %p177, %p178
    %p180 = scmp.ne.s32.totalorder %s172, %s174
    %p181 = scmp.eq.s32.totalorder %s23, 1
    %p182 = por %p180, %p181
    %p183 = scmp.ne.s32.totalorder %s174, %s175
    %p184 = scmp.eq.s32.totalorder %s23, 0
    %p185 = por %p183, %p184
    %p186 = scmp.ne.s32.totalorder %s174, %s175
    %p187 = scmp.eq.s32.totalorder %s24, 1
    %p188 = por %p186, %p187
    %p190 = scmp.ne.s32.totalorder %s175, %s189
    %p191 = scmp.eq.s32.totalorder %s24, 0
    %p192 = por %p190, %p191
    %s194 = sadd.s32 %s193, 1
    %p197 = scmp.eq.s32.totalorder %s18, 1
    %p198 = scmp.ne.s32.totalorder %s193, %s195
    %p199 = scmp.eq.s32.totalorder %s18, 0
    %p200 = por %p198, %p199
    %p201 = scmp.ne.s32.totalorder %s193, %s195
    %p202 = scmp.eq.s32.totalorder %s23, 1
    %p203 = por %p201, %p202
    %p204 = scmp.ne.s32.totalorder %s195, %s196
    %p205 = scmp.eq.s32.totalorder %s23, 0
    %p206 = por %p204, %p205
    %p207 = scmp.ne.s32.totalorder %s195, %s196
    %p208 = scmp.eq.s32.totalorder %s24, 1
    %p209 = por %p207, %p208
    %p211 = scmp.ne.s32.totalorder %s196, %s210
    %p212 = scmp.eq.s32.totalorder %s24, 0
    %p213 = por %p211, %p212
    %s215 = sadd.s32 %s214, 1
    %p218 = scmp.eq.s32.totalorder %s18, 1
    %p219 = scmp.ne.s32.totalorder %s214, %s216
    %p220 = scmp.eq.s32.totalorder %s18, 0
    %p221 = por %p219, %p220
    %p222 = scmp.ne.s32.totalorder %s214, %s216
    %p223 = scmp.eq.s32.totalorder %s23, 1
    %p224 = por %p222, %p223
    %p225 = scmp.ne.s32.totalorder %s216, %s217
    %p226 = scmp.eq.s32.totalorder %s23, 0
    %p227 = por %p225, %p226
    %p228 = scmp.ne.s32.totalorder %s216, %s217
    %p229 = scmp.eq.s32.totalorder %s24, 1
    %p230 = por %p228, %p229
    %p232 = scmp.ne.s32.totalorder %s217, %s231
    %p233 = scmp.eq.s32.totalorder %s24, 0
    %p234 = por %p232, %p233
    %s236 = sadd.s32 %s235, 1
    %p239 = scmp.eq.s32.totalorder %s18, 1
    %p240 = scmp.ne.s32.totalorder %s235, %s237
    %p241 = scmp.eq.s32.totalorder %s18, 0
    %p242 = por %p240, %p241
    %p243 = scmp.ne.s32.totalorder %s235, %s237
    %p244 = scmp.eq.s32.totalorder %s23, 1
    %p245 = por %p243, %p244
    %p246 = scmp.ne.s32.totalorder %s237, %s238
    %p247 = scmp.eq.s32.totalorder %s23, 0
    %p248 = por %p246, %p247
    %p249 = scmp.ne.s32.totalorder %s237, %s238
    %p250 = scmp.eq.s32.totalorder %s24, 1
    %p251 = por %p249, %p250
    %p253 = scmp.ne.s32.totalorder %s238, %s252
    %p254 = scmp.eq.s32.totalorder %s24, 0
    %p255 = por %p253, %p254
    %s256 = ssub.s32 %s18, %s25
    %p257 = scmp.eq.s32.totalorder %s256, 0
    %s259 = sadd.s32 %s258, 1
    %s260 = scalar_select %p257, %s258, %s259
    %p263 = pneg %p257
    %p264 = scmp.eq.s32.totalorder %s18, 1
    %p265 = por %p263, %p264
    %p266 = scmp.ne.s32.totalorder %s258, %s261
    %p267 = scmp.eq.s32.totalorder %s18, 0
    %p268 = por %p266, %p267
    %p269 = scmp.ne.s32.totalorder %s258, %s261
    %p270 = scmp.eq.s32.totalorder %s23, 1
    %p271 = por %p269, %p270
    %p272 = scmp.ne.s32.totalorder %s261, %s262
    %p273 = scmp.eq.s32.totalorder %s23, 0
    %p274 = por %p272, %p273
    %p275 = scmp.ne.s32.totalorder %s261, %s262
    %p276 = scmp.eq.s32.totalorder %s24, 1
    %p277 = por %p275, %p276
    %p279 = scmp.ne.s32.totalorder %s262, %s278
    %p280 = scmp.eq.s32.totalorder %s24, 0
    %p281 = por %p279, %p280
    %s282 = ssub.s32 %s18, %s25
    %p283 = scmp.eq.s32.totalorder %s282, 0
    %s285 = sadd.s32 %s284, 1
    %s286 = scalar_select %p283, %s284, %s285
    %p289 = pneg %p283
    %p290 = scmp.eq.s32.totalorder %s18, 1
    %p291 = por %p289, %p290
    %p292 = scmp.ne.s32.totalorder %s284, %s287
    %p293 = scmp.eq.s32.totalorder %s18, 0
    %p294 = por %p292, %p293
    %p295 = scmp.ne.s32.totalorder %s284, %s287
    %p296 = scmp.eq.s32.totalorder %s23, 1
    %p297 = por %p295, %p296
    %p298 = scmp.ne.s32.totalorder %s287, %s288
    %p299 = scmp.eq.s32.totalorder %s23, 0
    %p300 = por %p298, %p299
    %p301 = scmp.ne.s32.totalorder %s287, %s288
    %p302 = scmp.eq.s32.totalorder %s24, 1
    %p303 = por %p301, %p302
    %p305 = scmp.ne.s32.totalorder %s288, %s304
    %p306 = scmp.eq.s32.totalorder %s24, 0
    %p307 = por %p305, %p306
    %p308 = scmp.le.s32.totalorder 1, %s18
    %p309 = scmp.lt.s32.totalorder %s18, 3
    %p310 = pnand %p308, %p309
    %p311 = pneg %p310
    // Predicated region
    $region9: #{mlsif_forward.6} parent=5 // pred_check
      _
    $region10: #{mlsif_forward.6} parent=5 // pred_check_branch
      %313 = sbr.rel (%p310) target = $region12
    $region11: #{mlsif_forward.6} parent=5 // pred_region
      %s314 = ssub.s32 %s18, 1
      // Predicated region
      $region13: #{mlsif_forward.6} parent=11 // pred_check
        %p315 = pneg %p143
      $region14: #{mlsif_forward.6} parent=11 // pred_check_branch
        %317 = sbr.rel (%p315) target = $region16
      $region15: #{mlsif_forward.6} parent=11 // pred_region
        _
      $region16: #{mlsif_forward.6} parent=11 // pred_fallthru
        _
      // Predicated region
      $region17: #{mlsif_forward.6} parent=11 // pred_check
        %p318 = pneg %p164
      $region18: #{mlsif_forward.6} parent=11 // pred_check_branch
        %320 = sbr.rel (%p318) target = $region20
      $region19: #{mlsif_forward.6} parent=11 // pred_region
        _
      $region20: #{mlsif_forward.6} parent=11 // pred_fallthru
        _
      // Predicated region
      $region21: #{mlsif_forward.6} parent=11 // pred_check
        %p321 = pneg %p185
      $region22: #{mlsif_forward.6} parent=11 // pred_check_branch
        %323 = sbr.rel (%p321) target = $region24
      $region23: #{mlsif_forward.6} parent=11 // pred_region
        _
      $region24: #{mlsif_forward.6} parent=11 // pred_fallthru
        _
      // Predicated region
      $region25: #{mlsif_forward.6} parent=11 // pred_check
        %p324 = pneg %p206
      $region26: #{mlsif_forward.6} parent=11 // pred_check_branch
        %326 = sbr.rel (%p324) target = $region28
      $region27: #{mlsif_forward.6} parent=11 // pred_region
        _
      $region28: #{mlsif_forward.6} parent=11 // pred_fallthru
        _
      // Predicated region
      $region29: #{mlsif_forward.6} parent=11 // pred_check
        %p327 = pneg %p227
      $region30: #{mlsif_forward.6} parent=11 // pred_check_branch
        %329 = sbr.rel (%p327) target = $region32
      $region31: #{mlsif_forward.6} parent=11 // pred_region
        _
      $region32: #{mlsif_forward.6} parent=11 // pred_fallthru
        _
      // Predicated region
      $region33: #{mlsif_forward.6} parent=11 // pred_check
        %p330 = pneg %p248
      $region34: #{mlsif_forward.6} parent=11 // pred_check_branch
        %332 = sbr.rel (%p330) target = $region36
      $region35: #{mlsif_forward.6} parent=11 // pred_region
        _
      $region36: #{mlsif_forward.6} parent=11 // pred_fallthru
        _
    $region12: #{mlsif_forward.6} parent=5 // pred_fallthru
      _
    %p333 = scmp.lt.s32.totalorder %s18, 2
    // Predicated region
    $region37: #{mlsif_forward.6} parent=5 // pred_check
      %p334 = pneg %p333
    $region38: #{mlsif_forward.6} parent=5 // pred_check_branch
      %336 = sbr.rel (%p334) target = $region40
    $region39: #{mlsif_forward.6} parent=5 // pred_region
      // Predicated region
      $region41: #{mlsif_forward.6} parent=39 // pred_check
        %p337 = pneg %p38
      $region42: #{mlsif_forward.6} parent=39 // pred_check_branch
        %339 = sbr.rel (%p337) target = $region44
      $region43: #{mlsif_forward.6} parent=39 // pred_region
        %p340 = scmp.lt.s32.totalorder %s18, 1
        %s341 = scalar_select %p340, %s18, 1
        %s342 = smul.addr %s341, 2
        %s343 = smul.addr %s342, 8
        %s344 = scalar_lea.vmem %s0, %s343
      $region44: #{mlsif_forward.6} parent=39 // pred_fallthru
        _
      // Predicated region
      $region45: #{mlsif_forward.6} parent=39 // pred_check
        %p345 = pneg %p64
      $region46: #{mlsif_forward.6} parent=39 // pred_check_branch
        %347 = sbr.rel (%p345) target = $region48
      $region47: #{mlsif_forward.6} parent=39 // pred_region
        %p348 = scmp.lt.s32.totalorder %s18, 1
        %s349 = scalar_select %p348, %s18, 1
        %s350 = smul.addr %s349, 2
        %s351 = smul.addr %s350, 8
        %s352 = scalar_lea.vmem %s1, %s351
      $region48: #{mlsif_forward.6} parent=39 // pred_fallthru
        _
      // Predicated region
      $region49: #{mlsif_forward.6} parent=39 // pred_check
        %p353 = pneg %p90
      $region50: #{mlsif_forward.6} parent=39 // pred_check_branch
        %355 = sbr.rel (%p353) target = $region52
      $region51: #{mlsif_forward.6} parent=39 // pred_region
        %p356 = scmp.lt.s32.totalorder %s18, 1
        %s357 = scalar_select %p356, %s18, 1
        %s358 = smul.addr %s357, 2
        %s359 = smul.addr %s358, 8
        %s360 = scalar_lea.vmem %s2, %s359
      $region52: #{mlsif_forward.6} parent=39 // pred_fallthru
        _
      // Predicated region
      $region53: #{mlsif_forward.6} parent=39 // pred_check
        %p361 = pneg %p116
      $region54: #{mlsif_forward.6} parent=39 // pred_check_branch
        %363 = sbr.rel (%p361) target = $region56
      $region55: #{mlsif_forward.6} parent=39 // pred_region
        %p364 = scmp.lt.s32.totalorder %s18, 1
        %s365 = scalar_select %p364, %s18, 1
        %s366 = smul.addr %s365, 2
        %s367 = smul.addr %s366, 8
        %s368 = scalar_lea.vmem %s3, %s367
      $region56: #{mlsif_forward.6} parent=39 // pred_fallthru
        _
    $region40: #{mlsif_forward.6} parent=5 // pred_fallthru
      _
    %p369 = scmp.le.s32.totalorder 1, %s18
    %p370 = scmp.lt.s32.totalorder %s18, 3
    %p371 = pnand %p369, %p370
    %p372 = pneg %p371
    // Predicated region
    $region57: #{mlsif_forward.6} parent=5 // pred_check
      _
    $region58: #{mlsif_forward.6} parent=5 // pred_check_branch
      %374 = sbr.rel (%p371) target = $region60
    $region59: #{mlsif_forward.6} parent=5 // pred_region
      %s375 = ssub.s32 %s18, 1
      %p376 = scmp.lt.s32.totalorder %s23, 1
      %s377 = scalar_select %p376, %s23, 1
      %s378 = smul.addr %s377, 2
      %s379 = smul.addr %s378, 8
      %s380 = scalar_lea.vmem %s0, %s379
      %p381 = pneg %p44
      %p382 = pneg %p41
      %p383 = scmp.lt.s32.totalorder %s23, 1
      %s384 = scalar_select %p383, %s23, 1
      %s385 = smul.addr %s384, 2
      %s386 = smul.addr %s385, 8
      %s387 = scalar_lea.vmem %s1, %s386
      %p388 = pneg %p70
      %p389 = pneg %p67
      %p390 = scmp.lt.s32.totalorder %s23, 1
      %s391 = scalar_select %p390, %s23, 1
      %s392 = smul.addr %s391, 2
      %s393 = smul.addr %s392, 8
      %s394 = scalar_lea.vmem %s2, %s393
      %p395 = pneg %p96
      %p396 = pneg %p93
      %p397 = scmp.lt.s32.totalorder %s23, 1
      %s398 = scalar_select %p397, %s23, 1
      %s399 = smul.addr %s398, 2
      %s400 = smul.addr %s399, 8
      %s401 = scalar_lea.vmem %s3, %s400
      %p402 = pneg %p122
      %p403 = pneg %p119
      %p404 = pneg %p143
      %p405 = pneg %p140
      %p406 = pneg %p164
      %p407 = pneg %p161
      %p408 = pneg %p185
      %p409 = pneg %p182
      %p410 = pneg %p206
      %p411 = pneg %p203
      %p412 = pneg %p227
      %p413 = pneg %p224
      %p414 = pneg %p248
      %p415 = pneg %p245
      %p416 = pneg %p274
      %p417 = pneg %p271
      %p418 = scmp.lt.s32.totalorder %s23, 1
      %s419 = scalar_select %p418, %s23, 1
      %s420 = smul.addr %s419, 2
      %s421 = smul.addr %s420, 8
      %s422 = scalar_lea.vmem %s10, %s421
      %p423 = pneg %p300
      %p424 = pneg %p297
      %p425 = scmp.lt.s32.totalorder %s23, 1
      %s426 = scalar_select %p425, %s23, 1
      %s427 = smul.addr %s426, 2
      %s428 = smul.addr %s427, 8
      %s429 = scalar_lea.vmem %s11, %s428
      %p430 = scmp.lt.s32.totalorder %s23, 1
      %s431 = scalar_select %p430, %s23, 1
      %s432 = smul.addr %s431, 2
      %s433 = smul.addr %s432, 8
      %s434 = scalar_lea.vmem %s0, %s433
      %p435 = scmp.lt.s32.totalorder %s23, 1
      %s436 = scalar_select %p435, %s23, 1
      %s437 = smul.addr %s436, 2
      %s438 = smul.addr %s437, 8
      %s439 = scalar_lea.vmem %s1, %s438
      %p440 = scmp.lt.s32.totalorder %s23, 1
      %s441 = scalar_select %p440, %s23, 1
      %s442 = smul.addr %s441, 2
      %s443 = smul.addr %s442, 8
      %s444 = scalar_lea.vmem %s2, %s443
      %p445 = scmp.lt.s32.totalorder %s23, 1
      %s446 = scalar_select %p445, %s23, 1
      %s447 = smul.addr %s446, 2
      %s448 = smul.addr %s447, 8
      %s449 = scalar_lea.vmem %s3, %s448
      %p450 = scmp.lt.s32.totalorder %s23, 1
      %s451 = scalar_select %p450, %s23, 1
      %s452 = smul.addr %s451, 2
      %s453 = smul.addr %s452, 8
      %s454 = scalar_lea.vmem %s10, %s453
      %p455 = scmp.lt.s32.totalorder %s23, 1
      %s456 = scalar_select %p455, %s23, 1
      %s457 = smul.addr %s456, 2
      %s458 = smul.addr %s457, 8
      %s459 = scalar_lea.vmem %s11, %s458
      %v460 = vld [vmem:[%s434] sm:$0xff]
      %v461 = vld [vmem:[%s434 + $0x8] sm:$0xff]
      %v462 = vld [vmem:[%s439] sm:$0xff]
      %v463 = vld [vmem:[%s439 + $0x8] sm:$0xff]
      %v464 = vld [vmem:[%s444] sm:$0xff]
      %v465 = vld [vmem:[%s444 + $0x8] sm:$0xff]
      %v466 = vld [vmem:[%s449] sm:$0xff]
      %v467 = vld [vmem:[%s449 + $0x8] sm:$0xff]
      %v468 = vld [vmem:[%s4] sm:$0xff]
      %v469 = vld [vmem:[%s4 + $0x8] sm:$0xff]
      %vm470 = vcmask 130048
      %v472 = vsel %vm470, %v468, 0
      %v475 = vsel %vm470, %v469, 0
      %477 = vmatpush.msra.mxu0 0.0
      %478 = vmatpush.msra.mxu0 0.0
      %479 = vmatpush.msra.mxu0 0.0
      %480 = vmatpush.msra.mxu0 0.0
      %481 = vmatpush.msra.mxu0 0.0
      %482 = vmatpush.msra.mxu0 0.0
      %483 = vmatpush.msra.mxu0 0.0
      %484 = vmatpush.msra.mxu0 0.0
      %485 = vmatpush.msra.mxu0 0.0
      %486 = vmatpush.msra.mxu0 0.0
      %487 = vmatpush.msra.mxu0 0.0
      %488 = vmatpush.msra.mxu0 0.0
      %489 = vmatpush.msra.mxu0 0.0
      %490 = vmatpush.msra.mxu0 0.0
      %491 = vmatpush.msra.mxu0 %v461
      %492 = vmatpush.msra.mxu0 %v460
      %493 = vmatmul.f32.gmra.mxu0 %v472
      %v494 = vpop.f32.mrf.mxu0
      %v495 = vadd.f32 0.0, %v494
      %496 = vmatmul.f32.gmra.mxu0 %v475
      %v497 = vpop.f32.mrf.mxu0
      %v498 = vadd.f32 0.0, %v497
      %499 = vdwg.mxu0
      %v500 = vmul.f32 %v495, %v495
      %v501 = vmul.f32 %v498, %v498
      %vm502 = vcmask 523264
      %v503 = vsel %vm502, %v500, 0.0
      %504 = vadd.xlane.f32.xlu0 %v503
      %v505 = vpop.xlane.xlu0 %504
      %v506 = vsel %vm502, %v501, 0.0
      %507 = vadd.xlane.f32.xlu0 %v506
      %v508 = vpop.xlane.xlu0 %507
      %v509 = vrsqrt.pop %v505
      %v510 = vmul.f32 %v509, %v505
      %v511 = vmul.f32 %v510, %v509
      %v512 = vmul.f32 0.5, %v511
      %v513 = vsub.f32 1.5, %v512
      %v514 = vmul.f32 %v509, %v513
      %v515 = vmul.f32 %v505, %v514
      %vm516 = vcmp.eq.f32.partialorder %v505, inf
      %v517 = vsel %vm516, %v505, %v515
      %vm518 = vcmp.eq.f32.partialorder %v505, 0.0
      %v519 = vand.u32 %v505, 2147483648
      %v520 = vsel %vm518, %v519, %v517
      %v521 = vrsqrt.pop %v508
      %v522 = vmul.f32 %v521, %v508
      %v523 = vmul.f32 %v522, %v521
      %v524 = vmul.f32 0.5, %v523
      %v525 = vsub.f32 1.5, %v524
      %v526 = vmul.f32 %v521, %v525
      %v527 = vmul.f32 %v508, %v526
      %vm528 = vcmp.eq.f32.partialorder %v508, inf
      %v529 = vsel %vm528, %v508, %v527
      %vm530 = vcmp.eq.f32.partialorder %v508, 0.0
      %v531 = vand.u32 %v508, 2147483648
      %v532 = vsel %vm530, %v531, %v529
      %v533 = vmax.f32 %v520, 1e-12
      %v534 = vmax.f32 %v532, 1e-12
      %v535 = vrcp.pop %v533
      %v536 = vmul.f32 %v533, %v535
      %v537 = vsub.f32 1.0, %v536
      %v538 = vmul.f32 %v535, %v537
      %v539 = vadd.f32 %v535, %v538
      %vm540 = vweird.f32 %v533
      %vm541 = vweird.f32 %v535
      %vm542 = vmor %vm540, %vm541
      %v543 = vsel %vm542, %v535, %v539
      %v544 = vand.u32 2147483647, %v533
      %vm545 = vcmp.eq.f32.partialorder %v544, 8.507059e+37
      %v546 = vand.u32 %v533, 2147483648
      %v547 = vor.u32 1.1754944e-38, %v546
      %v548 = vsel %vm545, %v547, %v543
      %v549 = vmul.f32 %v495, %v548
      %v550 = vrcp.pop %v534
      %v551 = vmul.f32 %v534, %v550
      %v552 = vsub.f32 1.0, %v551
      %v553 = vmul.f32 %v550, %v552
      %v554 = vadd.f32 %v550, %v553
      %vm555 = vweird.f32 %v534
      %vm556 = vweird.f32 %v550
      %vm557 = vmor %vm555, %vm556
      %v558 = vsel %vm557, %v550, %v554
      %v559 = vand.u32 2147483647, %v534
      %vm560 = vcmp.eq.f32.partialorder %v559, 8.507059e+37
      %v561 = vand.u32 %v534, 2147483648
      %v562 = vor.u32 1.1754944e-38, %v561
      %v563 = vsel %vm560, %v562, %v558
      %v564 = vmul.f32 %v498, %v563
      %v565 = vld [vmem:[%s5] sm:$0xff]
      %v566 = vld [vmem:[%s5 + $0x8] sm:$0xff]
      %v568 = vsel %vm470, %v565, 0
      %v571 = vsel %vm470, %v566, 0
      %573 = vmatpush.msra.mxu0 0.0
      %574 = vmatpush.msra.mxu0 0.0
      %575 = vmatpush.msra.mxu0 0.0
      %576 = vmatpush.msra.mxu0 0.0
      %577 = vmatpush.msra.mxu0 0.0
      %578 = vmatpush.msra.mxu0 0.0
      %579 = vmatpush.msra.mxu0 0.0
      %580 = vmatpush.msra.mxu0 0.0
      %581 = vmatpush.msra.mxu0 0.0
      %582 = vmatpush.msra.mxu0 0.0
      %583 = vmatpush.msra.mxu0 0.0
      %584 = vmatpush.msra.mxu0 0.0
      %585 = vmatpush.msra.mxu0 0.0
      %586 = vmatpush.msra.mxu0 0.0
      %587 = vmatpush.msra.mxu0 %v461
      %588 = vmatpush.msra.mxu0 %v460
      %589 = vmatmul.f32.gmra.mxu0 %v568
      %v590 = vpop.f32.mrf.mxu0
      %v591 = vadd.f32 0.0, %v590
      %592 = vmatmul.f32.gmra.mxu0 %v571
      %v593 = vpop.f32.mrf.mxu0
      %v594 = vadd.f32 0.0, %v593
      %595 = vdwg.mxu0
      %v596 = vld [vmem:[%s6] sm:$0xff]
      %v597 = vld [vmem:[%s6 + $0x8] sm:$0xff]
      %v599 = vsel %vm470, %v596, 0
      %v602 = vsel %vm470, %v597, 0
      %604 = vmatpush.msra.mxu0 0.0
      %605 = vmatpush.msra.mxu0 0.0
      %606 = vmatpush.msra.mxu0 0.0
      %607 = vmatpush.msra.mxu0 0.0
      %608 = vmatpush.msra.mxu0 0.0
      %609 = vmatpush.msra.mxu0 0.0
      %610 = vmatpush.msra.mxu0 0.0
      %611 = vmatpush.msra.mxu0 0.0
      %612 = vmatpush.msra.mxu0 0.0
      %613 = vmatpush.msra.mxu0 0.0
      %614 = vmatpush.msra.mxu0 0.0
      %615 = vmatpush.msra.mxu0 0.0
      %616 = vmatpush.msra.mxu0 0.0
      %617 = vmatpush.msra.mxu0 0.0
      %618 = vmatpush.msra.mxu0 %v461
      %619 = vmatpush.msra.mxu0 %v460
      %620 = vmatmul.f32.gmra.mxu0 %v599
      %v621 = vpop.f32.mrf.mxu0
      %v622 = vadd.f32 0.0, %v621
      %623 = vmatmul.f32.gmra.mxu0 %v602
      %v624 = vpop.f32.mrf.mxu0
      %v625 = vadd.f32 0.0, %v624
      %626 = vdwg.mxu0
      %v627 = vmul.f32 %v591, %v591
      %v628 = vmul.f32 %v594, %v594
      %v629 = vsel %vm502, %v627, 0.0
      %630 = vadd.xlane.f32.xlu0 %v629
      %v631 = vpop.xlane.xlu0 %630
      %v632 = vsel %vm502, %v628, 0.0
      %633 = vadd.xlane.f32.xlu0 %v632
      %v634 = vpop.xlane.xlu0 %633
      %v635 = vrsqrt.pop %v631
      %v636 = vmul.f32 %v635, %v631
      %v637 = vmul.f32 %v636, %v635
      %v638 = vmul.f32 0.5, %v637
      %v639 = vsub.f32 1.5, %v638
      %v640 = vmul.f32 %v635, %v639
      %v641 = vmul.f32 %v631, %v640
      %vm642 = vcmp.eq.f32.partialorder %v631, inf
      %v643 = vsel %vm642, %v631, %v641
      %vm644 = vcmp.eq.f32.partialorder %v631, 0.0
      %v645 = vand.u32 %v631, 2147483648
      %v646 = vsel %vm644, %v645, %v643
      %v647 = vrsqrt.pop %v634
      %v648 = vmul.f32 %v647, %v634
      %v649 = vmul.f32 %v648, %v647
      %v650 = vmul.f32 0.5, %v649
      %v651 = vsub.f32 1.5, %v650
      %v652 = vmul.f32 %v647, %v651
      %v653 = vmul.f32 %v634, %v652
      %vm654 = vcmp.eq.f32.partialorder %v634, inf
      %v655 = vsel %vm654, %v634, %v653
      %vm656 = vcmp.eq.f32.partialorder %v634, 0.0
      %v657 = vand.u32 %v634, 2147483648
      %v658 = vsel %vm656, %v657, %v655
      %v659 = vmax.f32 %v646, 1e-12
      %v660 = vmax.f32 %v658, 1e-12
      %v661 = vrcp.pop %v659
      %v662 = vmul.f32 %v659, %v661
      %v663 = vsub.f32 1.0, %v662
      %v664 = vmul.f32 %v661, %v663
      %v665 = vadd.f32 %v661, %v664
      %vm666 = vweird.f32 %v659
      %vm667 = vweird.f32 %v661
      %vm668 = vmor %vm666, %vm667
      %v669 = vsel %vm668, %v661, %v665
      %v670 = vand.u32 2147483647, %v659
      %vm671 = vcmp.eq.f32.partialorder %v670, 8.507059e+37
      %v672 = vand.u32 %v659, 2147483648
      %v673 = vor.u32 1.1754944e-38, %v672
      %v674 = vsel %vm671, %v673, %v669
      %v675 = vmul.f32 %v591, %v674
      %v676 = vrcp.pop %v660
      %v677 = vmul.f32 %v660, %v676
      %v678 = vsub.f32 1.0, %v677
      %v679 = vmul.f32 %v676, %v678
      %v680 = vadd.f32 %v676, %v679
      %vm681 = vweird.f32 %v660
      %vm682 = vweird.f32 %v676
      %vm683 = vmor %vm681, %vm682
      %v684 = vsel %vm683, %v676, %v680
      %v685 = vand.u32 2147483647, %v660
      %vm686 = vcmp.eq.f32.partialorder %v685, 8.507059e+37
      %v687 = vand.u32 %v660, 2147483648
      %v688 = vor.u32 1.1754944e-38, %v687
      %v689 = vsel %vm686, %v688, %v684
      %v690 = vmul.f32 %v594, %v689
      %s691 = scalar_lea.vmem %s5, 16
      %v692 = vld [vmem:[%s691] sm:$0xff]
      %v693 = vld [vmem:[%s691 + $0x8] sm:$0xff]
      %v695 = vsel %vm470, %v692, 0
      %v698 = vsel %vm470, %v693, 0
      %700 = vmatpush.msra.mxu0 0.0
      %701 = vmatpush.msra.mxu0 0.0
      %702 = vmatpush.msra.mxu0 0.0
      %703 = vmatpush.msra.mxu0 0.0
      %704 = vmatpush.msra.mxu0 0.0
      %705 = vmatpush.msra.mxu0 0.0
      %706 = vmatpush.msra.mxu0 0.0
      %707 = vmatpush.msra.mxu0 0.0
      %708 = vmatpush.msra.mxu0 0.0
      %709 = vmatpush.msra.mxu0 0.0
      %710 = vmatpush.msra.mxu0 0.0
      %711 = vmatpush.msra.mxu0 0.0
      %712 = vmatpush.msra.mxu0 0.0
      %713 = vmatpush.msra.mxu0 0.0
      %714 = vmatpush.msra.mxu0 %v463
      %715 = vmatpush.msra.mxu0 %v462
      %716 = vmatmul.f32.gmra.mxu0 %v695
      %v717 = vpop.f32.mrf.mxu0
      %v718 = vadd.f32 0.0, %v717
      %719 = vmatmul.f32.gmra.mxu0 %v698
      %v720 = vpop.f32.mrf.mxu0
      %v721 = vadd.f32 0.0, %v720
      %722 = vdwg.mxu0
      %s723 = scalar_lea.vmem %s6, 16
      %v724 = vld [vmem:[%s723] sm:$0xff]
      %v725 = vld [vmem:[%s723 + $0x8] sm:$0xff]
      %v727 = vsel %vm470, %v724, 0
      %v730 = vsel %vm470, %v725, 0
      %732 = vmatpush.msra.mxu0 0.0
      %733 = vmatpush.msra.mxu0 0.0
      %734 = vmatpush.msra.mxu0 0.0
      %735 = vmatpush.msra.mxu0 0.0
      %736 = vmatpush.msra.mxu0 0.0
      %737 = vmatpush.msra.mxu0 0.0
      %738 = vmatpush.msra.mxu0 0.0
      %739 = vmatpush.msra.mxu0 0.0
      %740 = vmatpush.msra.mxu0 0.0
      %741 = vmatpush.msra.mxu0 0.0
      %742 = vmatpush.msra.mxu0 0.0
      %743 = vmatpush.msra.mxu0 0.0
      %744 = vmatpush.msra.mxu0 0.0
      %745 = vmatpush.msra.mxu0 0.0
      %746 = vmatpush.msra.mxu0 %v463
      %747 = vmatpush.msra.mxu0 %v462
      %748 = vmatmul.f32.gmra.mxu0 %v727
      %v749 = vpop.f32.mrf.mxu0
      %v750 = vadd.f32 0.0, %v749
      %751 = vmatmul.f32.gmra.mxu0 %v730
      %v752 = vpop.f32.mrf.mxu0
      %v753 = vadd.f32 0.0, %v752
      %754 = vdwg.mxu0
      %v755 = vmul.f32 %v718, %v718
      %v756 = vmul.f32 %v721, %v721
      %v757 = vsel %vm502, %v755, 0.0
      %758 = vadd.xlane.f32.xlu0 %v757
      %v759 = vpop.xlane.xlu0 %758
      %v760 = vsel %vm502, %v756, 0.0
      %761 = vadd.xlane.f32.xlu0 %v760
      %v762 = vpop.xlane.xlu0 %761
      %v763 = vrsqrt.pop %v759
      %v764 = vmul.f32 %v763, %v759
      %v765 = vmul.f32 %v764, %v763
      %v766 = vmul.f32 0.5, %v765
      %v767 = vsub.f32 1.5, %v766
      %v768 = vmul.f32 %v763, %v767
      %v769 = vmul.f32 %v759, %v768
      %vm770 = vcmp.eq.f32.partialorder %v759, inf
      %v771 = vsel %vm770, %v759, %v769
      %vm772 = vcmp.eq.f32.partialorder %v759, 0.0
      %v773 = vand.u32 %v759, 2147483648
      %v774 = vsel %vm772, %v773, %v771
      %v775 = vrsqrt.pop %v762
      %v776 = vmul.f32 %v775, %v762
      %v777 = vmul.f32 %v776, %v775
      %v778 = vmul.f32 0.5, %v777
      %v779 = vsub.f32 1.5, %v778
      %v780 = vmul.f32 %v775, %v779
      %v781 = vmul.f32 %v762, %v780
      %vm782 = vcmp.eq.f32.partialorder %v762, inf
      %v783 = vsel %vm782, %v762, %v781
      %vm784 = vcmp.eq.f32.partialorder %v762, 0.0
      %v785 = vand.u32 %v762, 2147483648
      %v786 = vsel %vm784, %v785, %v783
      %v787 = vmax.f32 %v774, 1e-12
      %v788 = vmax.f32 %v786, 1e-12
      %v789 = vrcp.pop %v787
      %v790 = vmul.f32 %v787, %v789
      %v791 = vsub.f32 1.0, %v790
      %v792 = vmul.f32 %v789, %v791
      %v793 = vadd.f32 %v789, %v792
      %vm794 = vweird.f32 %v787
      %vm795 = vweird.f32 %v789
      %vm796 = vmor %vm794, %vm795
      %v797 = vsel %vm796, %v789, %v793
      %v798 = vand.u32 2147483647, %v787
      %vm799 = vcmp.eq.f32.partialorder %v798, 8.507059e+37
      %v800 = vand.u32 %v787, 2147483648
      %v801 = vor.u32 1.1754944e-38, %v800
      %v802 = vsel %vm799, %v801, %v797
      %v803 = vmul.f32 %v718, %v802
      %v804 = vrcp.pop %v788
      %v805 = vmul.f32 %v788, %v804
      %v806 = vsub.f32 1.0, %v805
      %v807 = vmul.f32 %v804, %v806
      %v808 = vadd.f32 %v804, %v807
      %vm809 = vweird.f32 %v788
      %vm810 = vweird.f32 %v804
      %vm811 = vmor %vm809, %vm810
      %v812 = vsel %vm811, %v804, %v808
      %v813 = vand.u32 2147483647, %v788
      %vm814 = vcmp.eq.f32.partialorder %v813, 8.507059e+37
      %v815 = vand.u32 %v788, 2147483648
      %v816 = vor.u32 1.1754944e-38, %v815
      %v817 = vsel %vm814, %v816, %v812
      %v818 = vmul.f32 %v721, %v817
      %s819 = scalar_lea.vmem %s5, 32
      %v820 = vld [vmem:[%s819] sm:$0xff]
      %v821 = vld [vmem:[%s819 + $0x8] sm:$0xff]
      %v823 = vsel %vm470, %v820, 0
      %v826 = vsel %vm470, %v821, 0
      %828 = vmatpush.msra.mxu0 0.0
      %829 = vmatpush.msra.mxu0 0.0
      %830 = vmatpush.msra.mxu0 0.0
      %831 = vmatpush.msra.mxu0 0.0
      %832 = vmatpush.msra.mxu0 0.0
      %833 = vmatpush.msra.mxu0 0.0
      %834 = vmatpush.msra.mxu0 0.0
      %835 = vmatpush.msra.mxu0 0.0
      %836 = vmatpush.msra.mxu0 0.0
      %837 = vmatpush.msra.mxu0 0.0
      %838 = vmatpush.msra.mxu0 0.0
      %839 = vmatpush.msra.mxu0 0.0
      %840 = vmatpush.msra.mxu0 0.0
      %841 = vmatpush.msra.mxu0 0.0
      %842 = vmatpush.msra.mxu0 %v465
      %843 = vmatpush.msra.mxu0 %v464
      %844 = vmatmul.f32.gmra.mxu0 %v823
      %v845 = vpop.f32.mrf.mxu0
      %v846 = vadd.f32 0.0, %v845
      %847 = vmatmul.f32.gmra.mxu0 %v826
      %v848 = vpop.f32.mrf.mxu0
      %v849 = vadd.f32 0.0, %v848
      %850 = vdwg.mxu0
      %s851 = scalar_lea.vmem %s6, 32
      %v852 = vld [vmem:[%s851] sm:$0xff]
      %v853 = vld [vmem:[%s851 + $0x8] sm:$0xff]
      %v855 = vsel %vm470, %v852, 0
      %v858 = vsel %vm470, %v853, 0
      %860 = vmatpush.msra.mxu0 0.0
      %861 = vmatpush.msra.mxu0 0.0
      %862 = vmatpush.msra.mxu0 0.0
      %863 = vmatpush.msra.mxu0 0.0
      %864 = vmatpush.msra.mxu0 0.0
      %865 = vmatpush.msra.mxu0 0.0
      %866 = vmatpush.msra.mxu0 0.0
      %867 = vmatpush.msra.mxu0 0.0
      %868 = vmatpush.msra.mxu0 0.0
      %869 = vmatpush.msra.mxu0 0.0
      %870 = vmatpush.msra.mxu0 0.0
      %871 = vmatpush.msra.mxu0 0.0
      %872 = vmatpush.msra.mxu0 0.0
      %873 = vmatpush.msra.mxu0 0.0
      %874 = vmatpush.msra.mxu0 %v465
      %875 = vmatpush.msra.mxu0 %v464
      %876 = vmatmul.f32.gmra.mxu0 %v855
      %v877 = vpop.f32.mrf.mxu0
      %v878 = vadd.f32 0.0, %v877
      %879 = vmatmul.f32.gmra.mxu0 %v858
      %v880 = vpop.f32.mrf.mxu0
      %v881 = vadd.f32 0.0, %v880
      %882 = vdwg.mxu0
      %v883 = vmul.f32 %v846, %v846
      %v884 = vmul.f32 %v849, %v849
      %v885 = vsel %vm502, %v883, 0.0
      %886 = vadd.xlane.f32.xlu0 %v885
      %v887 = vpop.xlane.xlu0 %886
      %v888 = vsel %vm502, %v884, 0.0
      %889 = vadd.xlane.f32.xlu0 %v888
      %v890 = vpop.xlane.xlu0 %889
      %v891 = vrsqrt.pop %v887
      %v892 = vmul.f32 %v891, %v887
      %v893 = vmul.f32 %v892, %v891
      %v894 = vmul.f32 0.5, %v893
      %v895 = vsub.f32 1.5, %v894
      %v896 = vmul.f32 %v891, %v895
      %v897 = vmul.f32 %v887, %v896
      %vm898 = vcmp.eq.f32.partialorder %v887, inf
      %v899 = vsel %vm898, %v887, %v897
      %vm900 = vcmp.eq.f32.partialorder %v887, 0.0
      %v901 = vand.u32 %v887, 2147483648
      %v902 = vsel %vm900, %v901, %v899
      %v903 = vrsqrt.pop %v890
      %v904 = vmul.f32 %v903, %v890
      %v905 = vmul.f32 %v904, %v903
      %v906 = vmul.f32 0.5, %v905
      %v907 = vsub.f32 1.5, %v906
      %v908 = vmul.f32 %v903, %v907
      %v909 = vmul.f32 %v890, %v908
      %vm910 = vcmp.eq.f32.partialorder %v890, inf
      %v911 = vsel %vm910, %v890, %v909
      %vm912 = vcmp.eq.f32.partialorder %v890, 0.0
      %v913 = vand.u32 %v890, 2147483648
      %v914 = vsel %vm912, %v913, %v911
      %v915 = vmax.f32 %v902, 1e-12
      %v916 = vmax.f32 %v914, 1e-12
      %v917 = vrcp.pop %v915
      %v918 = vmul.f32 %v915, %v917
      %v919 = vsub.f32 1.0, %v918
      %v920 = vmul.f32 %v917, %v919
      %v921 = vadd.f32 %v917, %v920
      %vm922 = vweird.f32 %v915
      %vm923 = vweird.f32 %v917
      %vm924 = vmor %vm922, %vm923
      %v925 = vsel %vm924, %v917, %v921
      %v926 = vand.u32 2147483647, %v915
      %vm927 = vcmp.eq.f32.partialorder %v926, 8.507059e+37
      %v928 = vand.u32 %v915, 2147483648
      %v929 = vor.u32 1.1754944e-38, %v928
      %v930 = vsel %vm927, %v929, %v925
      %v931 = vmul.f32 %v846, %v930
      %v932 = vrcp.pop %v916
      %v933 = vmul.f32 %v916, %v932
      %v934 = vsub.f32 1.0, %v933
      %v935 = vmul.f32 %v932, %v934
      %v936 = vadd.f32 %v932, %v935
      %vm937 = vweird.f32 %v916
      %vm938 = vweird.f32 %v932
      %vm939 = vmor %vm937, %vm938
      %v940 = vsel %vm939, %v932, %v936
      %v941 = vand.u32 2147483647, %v916
      %vm942 = vcmp.eq.f32.partialorder %v941, 8.507059e+37
      %v943 = vand.u32 %v916, 2147483648
      %v944 = vor.u32 1.1754944e-38, %v943
      %v945 = vsel %vm942, %v944, %v940
      %v946 = vmul.f32 %v849, %v945
      %s947 = scalar_lea.vmem %s5, 48
      %v948 = vld [vmem:[%s947] sm:$0xff]
      %v949 = vld [vmem:[%s947 + $0x8] sm:$0xff]
      %v951 = vsel %vm470, %v948, 0
      %v954 = vsel %vm470, %v949, 0
      %956 = vmatpush.msra.mxu0 0.0
      %957 = vmatpush.msra.mxu0 0.0
      %958 = vmatpush.msra.mxu0 0.0
      %959 = vmatpush.msra.mxu0 0.0
      %960 = vmatpush.msra.mxu0 0.0
      %961 = vmatpush.msra.mxu0 0.0
      %962 = vmatpush.msra.mxu0 0.0
      %963 = vmatpush.msra.mxu0 0.0
      %964 = vmatpush.msra.mxu0 0.0
      %965 = vmatpush.msra.mxu0 0.0
      %966 = vmatpush.msra.mxu0 0.0
      %967 = vmatpush.msra.mxu0 0.0
      %968 = vmatpush.msra.mxu0 0.0
      %969 = vmatpush.msra.mxu0 0.0
      %970 = vmatpush.msra.mxu0 %v467
      %971 = vmatpush.msra.mxu0 %v466
      %972 = vmatmul.f32.gmra.mxu0 %v951
      %v973 = vpop.f32.mrf.mxu0
      %v974 = vadd.f32 0.0, %v973
      %975 = vmatmul.f32.gmra.mxu0 %v954
      %v976 = vpop.f32.mrf.mxu0
      %v977 = vadd.f32 0.0, %v976
      %978 = vdwg.mxu0
      %s979 = scalar_lea.vmem %s6, 48
      %v980 = vld [vmem:[%s979] sm:$0xff]
      %v981 = vld [vmem:[%s979 + $0x8] sm:$0xff]
      %v983 = vsel %vm470, %v980, 0
      %v986 = vsel %vm470, %v981, 0
      %988 = vmatpush.msra.mxu0 0.0
      %989 = vmatpush.msra.mxu0 0.0
      %990 = vmatpush.msra.mxu0 0.0
      %991 = vmatpush.msra.mxu0 0.0
      %992 = vmatpush.msra.mxu0 0.0
      %993 = vmatpush.msra.mxu0 0.0
      %994 = vmatpush.msra.mxu0 0.0
      %995 = vmatpush.msra.mxu0 0.0
      %996 = vmatpush.msra.mxu0 0.0
      %997 = vmatpush.msra.mxu0 0.0
      %998 = vmatpush.msra.mxu0 0.0
      %999 = vmatpush.msra.mxu0 0.0
      %1000 = vmatpush.msra.mxu0 0.0
      %1001 = vmatpush.msra.mxu0 0.0
      %1002 = vmatpush.msra.mxu0 %v467
      %1003 = vmatpush.msra.mxu0 %v466
      %1004 = vmatmul.f32.gmra.mxu0 %v983
      %v1005 = vpop.f32.mrf.mxu0
      %v1006 = vadd.f32 0.0, %v1005
      %1007 = vmatmul.f32.gmra.mxu0 %v986
      %v1008 = vpop.f32.mrf.mxu0
      %v1009 = vadd.f32 0.0, %v1008
      %1010 = vdwg.mxu0
      %v1011 = vmul.f32 %v974, %v974
      %v1012 = vmul.f32 %v977, %v977
      %v1013 = vsel %vm502, %v1011, 0.0
      %1014 = vadd.xlane.f32.xlu0 %v1013
      %v1015 = vpop.xlane.xlu0 %1014
      %v1016 = vsel %vm502, %v1012, 0.0
      %1017 = vadd.xlane.f32.xlu0 %v1016
      %v1018 = vpop.xlane.xlu0 %1017
      %v1019 = vrsqrt.pop %v1015
      %v1020 = vmul.f32 %v1019, %v1015
      %v1021 = vmul.f32 %v1020, %v1019
      %v1022 = vmul.f32 0.5, %v1021
      %v1023 = vsub.f32 1.5, %v1022
      %v1024 = vmul.f32 %v1019, %v1023
      %v1025 = vmul.f32 %v1015, %v1024
      %vm1026 = vcmp.eq.f32.partialorder %v1015, inf
      %v1027 = vsel %vm1026, %v1015, %v1025
      %vm1028 = vcmp.eq.f32.partialorder %v1015, 0.0
      %v1029 = vand.u32 %v1015, 2147483648
      %v1030 = vsel %vm1028, %v1029, %v1027
      %v1031 = vrsqrt.pop %v1018
      %v1032 = vmul.f32 %v1031, %v1018
      %v1033 = vmul.f32 %v1032, %v1031
      %v1034 = vmul.f32 0.5, %v1033
      %v1035 = vsub.f32 1.5, %v1034
      %v1036 = vmul.f32 %v1031, %v1035
      %v1037 = vmul.f32 %v1018, %v1036
      %vm1038 = vcmp.eq.f32.partialorder %v1018, inf
      %v1039 = vsel %vm1038, %v1018, %v1037
      %vm1040 = vcmp.eq.f32.partialorder %v1018, 0.0
      %v1041 = vand.u32 %v1018, 2147483648
      %v1042 = vsel %vm1040, %v1041, %v1039
      %v1043 = vmax.f32 %v1030, 1e-12
      %v1044 = vmax.f32 %v1042, 1e-12
      %v1045 = vrcp.pop %v1043
      %v1046 = vmul.f32 %v1043, %v1045
      %v1047 = vsub.f32 1.0, %v1046
      %v1048 = vmul.f32 %v1045, %v1047
      %v1049 = vadd.f32 %v1045, %v1048
      %vm1050 = vweird.f32 %v1043
      %vm1051 = vweird.f32 %v1045
      %vm1052 = vmor %vm1050, %vm1051
      %v1053 = vsel %vm1052, %v1045, %v1049
      %v1054 = vand.u32 2147483647, %v1043
      %vm1055 = vcmp.eq.f32.partialorder %v1054, 8.507059e+37
      %v1056 = vand.u32 %v1043, 2147483648
      %v1057 = vor.u32 1.1754944e-38, %v1056
      %v1058 = vsel %vm1055, %v1057, %v1053
      %v1059 = vmul.f32 %v974, %v1058
      %v1060 = vrcp.pop %v1044
      %v1061 = vmul.f32 %v1044, %v1060
      %v1062 = vsub.f32 1.0, %v1061
      %v1063 = vmul.f32 %v1060, %v1062
      %v1064 = vadd.f32 %v1060, %v1063
      %vm1065 = vweird.f32 %v1044
      %vm1066 = vweird.f32 %v1060
      %vm1067 = vmor %vm1065, %vm1066
      %v1068 = vsel %vm1067, %v1060, %v1064
      %v1069 = vand.u32 2147483647, %v1044
      %vm1070 = vcmp.eq.f32.partialorder %v1069, 8.507059e+37
      %v1071 = vand.u32 %v1044, 2147483648
      %v1072 = vor.u32 1.1754944e-38, %v1071
      %v1073 = vsel %vm1070, %v1072, %v1068
      %v1074 = vmul.f32 %v977, %v1073
      %1075 = vst.msk [vmem:[%s459] sm:$0xff] %vm502, %v622
      %1076 = vst.msk [vmem:[%s459 + $0x8] sm:$0xff] %vm502, %v625
      %v1078 = vsel %vm502, %v675, 0
      %v1081 = vsel %vm502, %v549, 0
      %1083 = vmatpush.xpose.msra.mxu0 0.0
      %1084 = vmatpush.xpose.msra.mxu0 0.0
      %1085 = vmatpush.xpose.msra.mxu0 0.0
      %1086 = vmatpush.xpose.msra.mxu0 0.0
      %1087 = vmatpush.xpose.msra.mxu0 0.0
      %1088 = vmatpush.xpose.msra.mxu0 0.0
      %1089 = vmatpush.xpose.msra.mxu0 0.0
      %1090 = vmatpush.xpose.msra.mxu0 0.0
      %1091 = vmatpush.xpose.msra.mxu0 0.0
      %1092 = vmatpush.xpose.msra.mxu0 0.0
      %1093 = vmatpush.xpose.msra.mxu0 0.0
      %1094 = vmatpush.xpose.msra.mxu0 0.0
      %1095 = vmatpush.xpose.msra.mxu0 0.0
      %1096 = vmatpush.xpose.msra.mxu0 0.0
      %1097 = vmatpush.xpose.msra.mxu0 0.0
      %1098 = vmatpush.xpose.msra.mxu0 %v1081
      %1099 = vmatmul.f32.gmra.mxu0 %v1078
      %v1100 = vpop.f32.mrf.mxu0
      %v1101 = vadd.f32 0.0, %v1100
      %1102 = vdwg.mxu0
      %v1103 = vld [vmem:[%s7] sm:$0x1]
      %s1105 = vtos %v1103
      %v1106 = vstv %s1105
      %v1108 = vmul.f32 %v1101, %v1106
      %vm1109 = vcmask 64512
      %v1110 = vsel %vm1109, %v1108, -inf
      %1111 = vmax.xlane.f32.xlu0 %v1110
      %v1112 = vpop.xlane.xlu0 %1111
      %v1113 = vsub.f32 %v1108, %v1112
      %v1114 = vmul.f32 %v1113, 1.442695
      %v1115 = vpow.pop %v1114
      %v1116 = vsel %vm1109, %v1115, 0.0
      %1117 = vadd.xlane.f32.xlu0 %v1116
      %v1118 = vpop.xlane.xlu0 %1117
      %v1119 = vrcp.pop %v1118
      %v1120 = vmul.f32 %v1118, %v1119
      %v1121 = vsub.f32 1.0, %v1120
      %v1122 = vmul.f32 %v1119, %v1121
      %v1123 = vadd.f32 %v1119, %v1122
      %vm1124 = vweird.f32 %v1118
      %vm1125 = vweird.f32 %v1119
      %vm1126 = vmor %vm1124, %vm1125
      %v1127 = vsel %vm1126, %v1119, %v1123
      %v1128 = vand.u32 2147483647, %v1118
      %vm1129 = vcmp.eq.f32.partialorder %v1128, 8.507059e+37
      %v1130 = vand.u32 %v1118, 2147483648
      %v1131 = vor.u32 1.1754944e-38, %v1130
      %v1132 = vsel %vm1129, %v1131, %v1127
      %v1133 = vmul.f32 %v1115, %v1132
      %v1135 = vsel %vm502, %v803, 0
      %1137 = vmatpush.xpose.msra.mxu0 0.0
      %1138 = vmatpush.xpose.msra.mxu0 0.0
      %1139 = vmatpush.xpose.msra.mxu0 0.0
      %1140 = vmatpush.xpose.msra.mxu0 0.0
      %1141 = vmatpush.xpose.msra.mxu0 0.0
      %1142 = vmatpush.xpose.msra.mxu0 0.0
      %1143 = vmatpush.xpose.msra.mxu0 0.0
      %1144 = vmatpush.xpose.msra.mxu0 0.0
      %1145 = vmatpush.xpose.msra.mxu0 0.0
      %1146 = vmatpush.xpose.msra.mxu0 0.0
      %1147 = vmatpush.xpose.msra.mxu0 0.0
      %1148 = vmatpush.xpose.msra.mxu0 0.0
      %1149 = vmatpush.xpose.msra.mxu0 0.0
      %1150 = vmatpush.xpose.msra.mxu0 0.0
      %1151 = vmatpush.xpose.msra.mxu0 0.0
      %1152 = vmatpush.xpose.msra.mxu0 %v1081
      %1153 = vmatmul.f32.gmra.mxu0 %v1135
      %v1154 = vpop.f32.mrf.mxu0
      %v1155 = vadd.f32 0.0, %v1154
      %1156 = vdwg.mxu0
      %v1157 = vld [vmem:[%s7 + $0x1] sm:$0x1]
      %s1159 = vtos %v1157
      %v1160 = vstv %s1159
      %v1162 = vmul.f32 %v1155, %v1160
      %v1163 = vsel %vm1109, %v1162, -inf
      %1164 = vmax.xlane.f32.xlu0 %v1163
      %v1165 = vpop.xlane.xlu0 %1164
      %v1166 = vsub.f32 %v1162, %v1165
      %v1167 = vmul.f32 %v1166, 1.442695
      %v1168 = vpow.pop %v1167
      %v1169 = vsel %vm1109, %v1168, 0.0
      %1170 = vadd.xlane.f32.xlu0 %v1169
      %v1171 = vpop.xlane.xlu0 %1170
      %v1172 = vrcp.pop %v1171
      %v1173 = vmul.f32 %v1171, %v1172
      %v1174 = vsub.f32 1.0, %v1173
      %v1175 = vmul.f32 %v1172, %v1174
      %v1176 = vadd.f32 %v1172, %v1175
      %vm1177 = vweird.f32 %v1171
      %vm1178 = vweird.f32 %v1172
      %vm1179 = vmor %vm1177, %vm1178
      %v1180 = vsel %vm1179, %v1172, %v1176
      %v1181 = vand.u32 2147483647, %v1171
      %vm1182 = vcmp.eq.f32.partialorder %v1181, 8.507059e+37
      %v1183 = vand.u32 %v1171, 2147483648
      %v1184 = vor.u32 1.1754944e-38, %v1183
      %v1185 = vsel %vm1182, %v1184, %v1180
      %v1186 = vmul.f32 %v1168, %v1185
      %v1188 = vsel %vm1109, %v1186, 0
      %1190 = vmatpush.msra.mxu0 0.0
      %1191 = vmatpush.msra.mxu0 0.0
      %1192 = vmatpush.msra.mxu0 0.0
      %1193 = vmatpush.msra.mxu0 0.0
      %1194 = vmatpush.msra.mxu0 0.0
      %1195 = vmatpush.msra.mxu0 0.0
      %1196 = vmatpush.msra.mxu0 0.0
      %1197 = vmatpush.msra.mxu0 0.0
      %1198 = vmatpush.msra.mxu0 0.0
      %1199 = vmatpush.msra.mxu0 0.0
      %1200 = vmatpush.msra.mxu0 0.0
      %1201 = vmatpush.msra.mxu0 0.0
      %1202 = vmatpush.msra.mxu0 0.0
      %1203 = vmatpush.msra.mxu0 0.0
      %1204 = vmatpush.msra.mxu0 0.0
      %1205 = vmatpush.msra.mxu0 %v750
      %1206 = vmatmul.f32.gmra.mxu0 %v1188
      %v1207 = vpop.f32.mrf.mxu0
      %v1208 = vadd.f32 0.0, %v1207
      %1209 = vdwg.mxu0
      %v1211 = vsel %vm1109, %v1133, 0
      %1213 = vmatpush.msra.mxu0 0.0
      %1214 = vmatpush.msra.mxu0 0.0
      %1215 = vmatpush.msra.mxu0 0.0
      %1216 = vmatpush.msra.mxu0 0.0
      %1217 = vmatpush.msra.mxu0 0.0
      %1218 = vmatpush.msra.mxu0 0.0
      %1219 = vmatpush.msra.mxu0 0.0
      %1220 = vmatpush.msra.mxu0 0.0
      %1221 = vmatpush.msra.mxu0 0.0
      %1222 = vmatpush.msra.mxu0 0.0
      %1223 = vmatpush.msra.mxu0 0.0
      %1224 = vmatpush.msra.mxu0 0.0
      %1225 = vmatpush.msra.mxu0 0.0
      %1226 = vmatpush.msra.mxu0 0.0
      %1227 = vmatpush.msra.mxu0 0.0
      %1228 = vmatpush.msra.mxu0 %v622
      %1229 = vmatmul.f32.gmra.mxu0 %v1211
      %v1230 = vpop.f32.mrf.mxu0
      %v1231 = vadd.f32 %v1208, %v1230
      %1232 = vdwg.mxu0
      %v1234 = vsel %vm502, %v931, 0
      %1236 = vmatpush.xpose.msra.mxu0 0.0
      %1237 = vmatpush.xpose.msra.mxu0 0.0
      %1238 = vmatpush.xpose.msra.mxu0 0.0
      %1239 = vmatpush.xpose.msra.mxu0 0.0
      %1240 = vmatpush.xpose.msra.mxu0 0.0
      %1241 = vmatpush.xpose.msra.mxu0 0.0
      %1242 = vmatpush.xpose.msra.mxu0 0.0
      %1243 = vmatpush.xpose.msra.mxu0 0.0
      %1244 = vmatpush.xpose.msra.mxu0 0.0
      %1245 = vmatpush.xpose.msra.mxu0 0.0
      %1246 = vmatpush.xpose.msra.mxu0 0.0
      %1247 = vmatpush.xpose.msra.mxu0 0.0
      %1248 = vmatpush.xpose.msra.mxu0 0.0
      %1249 = vmatpush.xpose.msra.mxu0 0.0
      %1250 = vmatpush.xpose.msra.mxu0 0.0
      %1251 = vmatpush.xpose.msra.mxu0 %v1081
      %1252 = vmatmul.f32.gmra.mxu0 %v1234
      %v1253 = vpop.f32.mrf.mxu0
      %v1254 = vadd.f32 0.0, %v1253
      %1255 = vdwg.mxu0
      %v1256 = vld [vmem:[%s7 + $0x2] sm:$0x1]
      %s1258 = vtos %v1256
      %v1259 = vstv %s1258
      %v1261 = vmul.f32 %v1254, %v1259
      %v1262 = vsel %vm1109, %v1261, -inf
      %1263 = vmax.xlane.f32.xlu0 %v1262
      %v1264 = vpop.xlane.xlu0 %1263
      %v1265 = vsub.f32 %v1261, %v1264
      %v1266 = vmul.f32 %v1265, 1.442695
      %v1267 = vpow.pop %v1266
      %v1268 = vsel %vm1109, %v1267, 0.0
      %1269 = vadd.xlane.f32.xlu0 %v1268
      %v1270 = vpop.xlane.xlu0 %1269
      %v1271 = vrcp.pop %v1270
      %v1272 = vmul.f32 %v1270, %v1271
      %v1273 = vsub.f32 1.0, %v1272
      %v1274 = vmul.f32 %v1271, %v1273
      %v1275 = vadd.f32 %v1271, %v1274
      %vm1276 = vweird.f32 %v1270
      %vm1277 = vweird.f32 %v1271
      %vm1278 = vmor %vm1276, %vm1277
      %v1279 = vsel %vm1278, %v1271, %v1275
      %v1280 = vand.u32 2147483647, %v1270
      %vm1281 = vcmp.eq.f32.partialorder %v1280, 8.507059e+37
      %v1282 = vand.u32 %v1270, 2147483648
      %v1283 = vor.u32 1.1754944e-38, %v1282
      %v1284 = vsel %vm1281, %v1283, %v1279
      %v1285 = vmul.f32 %v1267, %v1284
      %v1287 = vsel %vm1109, %v1285, 0
      %1289 = vmatpush.msra.mxu0 0.0
      %1290 = vmatpush.msra.mxu0 0.0
      %1291 = vmatpush.msra.mxu0 0.0
      %1292 = vmatpush.msra.mxu0 0.0
      %1293 = vmatpush.msra.mxu0 0.0
      %1294 = vmatpush.msra.mxu0 0.0
      %1295 = vmatpush.msra.mxu0 0.0
      %1296 = vmatpush.msra.mxu0 0.0
      %1297 = vmatpush.msra.mxu0 0.0
      %1298 = vmatpush.msra.mxu0 0.0
      %1299 = vmatpush.msra.mxu0 0.0
      %1300 = vmatpush.msra.mxu0 0.0
      %1301 = vmatpush.msra.mxu0 0.0
      %1302 = vmatpush.msra.mxu0 0.0
      %1303 = vmatpush.msra.mxu0 0.0
      %1304 = vmatpush.msra.mxu0 %v878
      %1305 = vmatmul.f32.gmra.mxu0 %v1287
      %v1306 = vpop.f32.mrf.mxu0
      %v1307 = vadd.f32 0.0, %v1306
      %1308 = vdwg.mxu0
      %v1309 = vadd.f32 %v1231, %v1307
      %v1311 = vsel %vm502, %v1059, 0
      %1313 = vmatpush.xpose.msra.mxu0 0.0
      %1314 = vmatpush.xpose.msra.mxu0 0.0
      %1315 = vmatpush.xpose.msra.mxu0 0.0
      %1316 = vmatpush.xpose.msra.mxu0 0.0
      %1317 = vmatpush.xpose.msra.mxu0 0.0
      %1318 = vmatpush.xpose.msra.mxu0 0.0
      %1319 = vmatpush.xpose.msra.mxu0 0.0
      %1320 = vmatpush.xpose.msra.mxu0 0.0
      %1321 = vmatpush.xpose.msra.mxu0 0.0
      %1322 = vmatpush.xpose.msra.mxu0 0.0
      %1323 = vmatpush.xpose.msra.mxu0 0.0
      %1324 = vmatpush.xpose.msra.mxu0 0.0
      %1325 = vmatpush.xpose.msra.mxu0 0.0
      %1326 = vmatpush.xpose.msra.mxu0 0.0
      %1327 = vmatpush.xpose.msra.mxu0 0.0
      %1328 = vmatpush.xpose.msra.mxu0 %v1081
      %1329 = vmatmul.f32.gmra.mxu0 %v1311
      %v1330 = vpop.f32.mrf.mxu0
      %v1331 = vadd.f32 0.0, %v1330
      %1332 = vdwg.mxu0
      %v1333 = vld [vmem:[%s7 + $0x3] sm:$0x1]
      %s1335 = vtos %v1333
      %v1336 = vstv %s1335
      %v1338 = vmul.f32 %v1331, %v1336
      %v1339 = vsel %vm1109, %v1338, -inf
      %1340 = vmax.xlane.f32.xlu0 %v1339
      %v1341 = vpop.xlane.xlu0 %1340
      %v1342 = vsub.f32 %v1338, %v1341
      %v1343 = vmul.f32 %v1342, 1.442695
      %v1344 = vpow.pop %v1343
      %v1345 = vsel %vm1109, %v1344, 0.0
      %1346 = vadd.xlane.f32.xlu0 %v1345
      %v1347 = vpop.xlane.xlu0 %1346
      %v1348 = vrcp.pop %v1347
      %v1349 = vmul.f32 %v1347, %v1348
      %v1350 = vsub.f32 1.0, %v1349
      %v1351 = vmul.f32 %v1348, %v1350
      %v1352 = vadd.f32 %v1348, %v1351
      %vm1353 = vweird.f32 %v1347
      %vm1354 = vweird.f32 %v1348
      %vm1355 = vmor %vm1353, %vm1354
      %v1356 = vsel %vm1355, %v1348, %v1352
      %v1357 = vand.u32 2147483647, %v1347
      %vm1358 = vcmp.eq.f32.partialorder %v1357, 8.507059e+37
      %v1359 = vand.u32 %v1347, 2147483648
      %v1360 = vor.u32 1.1754944e-38, %v1359
      %v1361 = vsel %vm1358, %v1360, %v1356
      %v1362 = vmul.f32 %v1344, %v1361
      %v1364 = vsel %vm1109, %v1362, 0
      %1366 = vmatpush.msra.mxu0 0.0
      %1367 = vmatpush.msra.mxu0 0.0
      %1368 = vmatpush.msra.mxu0 0.0
      %1369 = vmatpush.msra.mxu0 0.0
      %1370 = vmatpush.msra.mxu0 0.0
      %1371 = vmatpush.msra.mxu0 0.0
      %1372 = vmatpush.msra.mxu0 0.0
      %1373 = vmatpush.msra.mxu0 0.0
      %1374 = vmatpush.msra.mxu0 0.0
      %1375 = vmatpush.msra.mxu0 0.0
      %1376 = vmatpush.msra.mxu0 0.0
      %1377 = vmatpush.msra.mxu0 0.0
      %1378 = vmatpush.msra.mxu0 0.0
      %1379 = vmatpush.msra.mxu0 0.0
      %1380 = vmatpush.msra.mxu0 0.0
      %1381 = vmatpush.msra.mxu0 %v1006
      %1382 = vmatmul.f32.gmra.mxu0 %v1364
      %v1383 = vpop.f32.mrf.mxu0
      %v1384 = vadd.f32 0.0, %v1383
      %1385 = vdwg.mxu0
      %v1386 = vadd.f32 %v1309, %v1384
      %v1388 = vsel %vm502, %v690, 0
      %v1391 = vsel %vm502, %v564, 0
      %1393 = vmatpush.xpose.msra.mxu0 0.0
      %1394 = vmatpush.xpose.msra.mxu0 0.0
      %1395 = vmatpush.xpose.msra.mxu0 0.0
      %1396 = vmatpush.xpose.msra.mxu0 0.0
      %1397 = vmatpush.xpose.msra.mxu0 0.0
      %1398 = vmatpush.xpose.msra.mxu0 0.0
      %1399 = vmatpush.xpose.msra.mxu0 0.0
      %1400 = vmatpush.xpose.msra.mxu0 0.0
      %1401 = vmatpush.xpose.msra.mxu0 0.0
      %1402 = vmatpush.xpose.msra.mxu0 0.0
      %1403 = vmatpush.xpose.msra.mxu0 0.0
      %1404 = vmatpush.xpose.msra.mxu0 0.0
      %1405 = vmatpush.xpose.msra.mxu0 0.0
      %1406 = vmatpush.xpose.msra.mxu0 0.0
      %1407 = vmatpush.xpose.msra.mxu0 0.0
      %1408 = vmatpush.xpose.msra.mxu0 %v1391
      %1409 = vmatmul.f32.gmra.mxu0 %v1388
      %v1410 = vpop.f32.mrf.mxu0
      %v1411 = vadd.f32 0.0, %v1410
      %1412 = vdwg.mxu0
      %1413 = vrot.lane.b32.xlu0 %v1103, 127
      %v1414 = vpop.permute.xlu0 %1413
      %s1415 = vtos %v1414
      %v1416 = vstv %s1415
      %v1418 = vmul.f32 %v1411, %v1416
      %v1419 = vsel %vm1109, %v1418, -inf
      %1420 = vmax.xlane.f32.xlu0 %v1419
      %v1421 = vpop.xlane.xlu0 %1420
      %v1422 = vsub.f32 %v1418, %v1421
      %v1423 = vmul.f32 %v1422, 1.442695
      %v1424 = vpow.pop %v1423
      %v1425 = vsel %vm1109, %v1424, 0.0
      %1426 = vadd.xlane.f32.xlu0 %v1425
      %v1427 = vpop.xlane.xlu0 %1426
      %v1428 = vrcp.pop %v1427
      %v1429 = vmul.f32 %v1427, %v1428
      %v1430 = vsub.f32 1.0, %v1429
      %v1431 = vmul.f32 %v1428, %v1430
      %v1432 = vadd.f32 %v1428, %v1431
      %vm1433 = vweird.f32 %v1427
      %vm1434 = vweird.f32 %v1428
      %vm1435 = vmor %vm1433, %vm1434
      %v1436 = vsel %vm1435, %v1428, %v1432
      %v1437 = vand.u32 2147483647, %v1427
      %vm1438 = vcmp.eq.f32.partialorder %v1437, 8.507059e+37
      %v1439 = vand.u32 %v1427, 2147483648
      %v1440 = vor.u32 1.1754944e-38, %v1439
      %v1441 = vsel %vm1438, %v1440, %v1436
      %v1442 = vmul.f32 %v1424, %v1441
      %v1444 = vsel %vm502, %v818, 0
      %1446 = vmatpush.xpose.msra.mxu0 0.0
      %1447 = vmatpush.xpose.msra.mxu0 0.0
      %1448 = vmatpush.xpose.msra.mxu0 0.0
      %1449 = vmatpush.xpose.msra.mxu0 0.0
      %1450 = vmatpush.xpose.msra.mxu0 0.0
      %1451 = vmatpush.xpose.msra.mxu0 0.0
      %1452 = vmatpush.xpose.msra.mxu0 0.0
      %1453 = vmatpush.xpose.msra.mxu0 0.0
      %1454 = vmatpush.xpose.msra.mxu0 0.0
      %1455 = vmatpush.xpose.msra.mxu0 0.0
      %1456 = vmatpush.xpose.msra.mxu0 0.0
      %1457 = vmatpush.xpose.msra.mxu0 0.0
      %1458 = vmatpush.xpose.msra.mxu0 0.0
      %1459 = vmatpush.xpose.msra.mxu0 0.0
      %1460 = vmatpush.xpose.msra.mxu0 0.0
      %1461 = vmatpush.xpose.msra.mxu0 %v1391
      %1462 = vmatmul.f32.gmra.mxu0 %v1444
      %v1463 = vpop.f32.mrf.mxu0
      %v1464 = vadd.f32 0.0, %v1463
      %1465 = vdwg.mxu0
      %1466 = vrot.lane.b32.xlu0 %v1157, 127
      %v1467 = vpop.permute.xlu0 %1466
      %s1468 = vtos %v1467
      %v1469 = vstv %s1468
      %v1471 = vmul.f32 %v1464, %v1469
      %v1472 = vsel %vm1109, %v1471, -inf
      %1473 = vmax.xlane.f32.xlu0 %v1472
      %v1474 = vpop.xlane.xlu0 %1473
      %v1475 = vsub.f32 %v1471, %v1474
      %v1476 = vmul.f32 %v1475, 1.442695
      %v1477 = vpow.pop %v1476
      %v1478 = vsel %vm1109, %v1477, 0.0
      %1479 = vadd.xlane.f32.xlu0 %v1478
      %v1480 = vpop.xlane.xlu0 %1479
      %v1481 = vrcp.pop %v1480
      %v1482 = vmul.f32 %v1480, %v1481
      %v1483 = vsub.f32 1.0, %v1482
      %v1484 = vmul.f32 %v1481, %v1483
      %v1485 = vadd.f32 %v1481, %v1484
      %vm1486 = vweird.f32 %v1480
      %vm1487 = vweird.f32 %v1481
      %vm1488 = vmor %vm1486, %vm1487
      %v1489 = vsel %vm1488, %v1481, %v1485
      %v1490 = vand.u32 2147483647, %v1480
      %vm1491 = vcmp.eq.f32.partialorder %v1490, 8.507059e+37
      %v1492 = vand.u32 %v1480, 2147483648
      %v1493 = vor.u32 1.1754944e-38, %v1492
      %v1494 = vsel %vm1491, %v1493, %v1489
      %v1495 = vmul.f32 %v1477, %v1494
      %v1497 = vsel %vm1109, %v1495, 0
      %1499 = vmatpush.msra.mxu0 0.0
      %1500 = vmatpush.msra.mxu0 0.0
      %1501 = vmatpush.msra.mxu0 0.0
      %1502 = vmatpush.msra.mxu0 0.0
      %1503 = vmatpush.msra.mxu0 0.0
      %1504 = vmatpush.msra.mxu0 0.0
      %1505 = vmatpush.msra.mxu0 0.0
      %1506 = vmatpush.msra.mxu0 0.0
      %1507 = vmatpush.msra.mxu0 0.0
      %1508 = vmatpush.msra.mxu0 0.0
      %1509 = vmatpush.msra.mxu0 0.0
      %1510 = vmatpush.msra.mxu0 0.0
      %1511 = vmatpush.msra.mxu0 0.0
      %1512 = vmatpush.msra.mxu0 0.0
      %1513 = vmatpush.msra.mxu0 0.0
      %1514 = vmatpush.msra.mxu0 %v753
      %1515 = vmatmul.f32.gmra.mxu0 %v1497
      %v1516 = vpop.f32.mrf.mxu0
      %v1517 = vadd.f32 0.0, %v1516
      %1518 = vdwg.mxu0
      %v1520 = vsel %vm1109, %v1442, 0
      %1522 = vmatpush.msra.mxu0 0.0
      %1523 = vmatpush.msra.mxu0 0.0
      %1524 = vmatpush.msra.mxu0 0.0
      %1525 = vmatpush.msra.mxu0 0.0
      %1526 = vmatpush.msra.mxu0 0.0
      %1527 = vmatpush.msra.mxu0 0.0
      %1528 = vmatpush.msra.mxu0 0.0
      %1529 = vmatpush.msra.mxu0 0.0
      %1530 = vmatpush.msra.mxu0 0.0
      %1531 = vmatpush.msra.mxu0 0.0
      %1532 = vmatpush.msra.mxu0 0.0
      %1533 = vmatpush.msra.mxu0 0.0
      %1534 = vmatpush.msra.mxu0 0.0
      %1535 = vmatpush.msra.mxu0 0.0
      %1536 = vmatpush.msra.mxu0 0.0
      %1537 = vmatpush.msra.mxu0 %v625
      %1538 = vmatmul.f32.gmra.mxu0 %v1520
      %v1539 = vpop.f32.mrf.mxu0
      %v1540 = vadd.f32 %v1517, %v1539
      %1541 = vdwg.mxu0
      %v1543 = vsel %vm502, %v946, 0
      %1545 = vmatpush.xpose.msra.mxu0 0.0
      %1546 = vmatpush.xpose.msra.mxu0 0.0
      %1547 = vmatpush.xpose.msra.mxu0 0.0
      %1548 = vmatpush.xpose.msra.mxu0 0.0
      %1549 = vmatpush.xpose.msra.mxu0 0.0
      %1550 = vmatpush.xpose.msra.mxu0 0.0
      %1551 = vmatpush.xpose.msra.mxu0 0.0
      %1552 = vmatpush.xpose.msra.mxu0 0.0
      %1553 = vmatpush.xpose.msra.mxu0 0.0
      %1554 = vmatpush.xpose.msra.mxu0 0.0
      %1555 = vmatpush.xpose.msra.mxu0 0.0
      %1556 = vmatpush.xpose.msra.mxu0 0.0
      %1557 = vmatpush.xpose.msra.mxu0 0.0
      %1558 = vmatpush.xpose.msra.mxu0 0.0
      %1559 = vmatpush.xpose.msra.mxu0 0.0
      %1560 = vmatpush.xpose.msra.mxu0 %v1391
      %1561 = vmatmul.f32.gmra.mxu0 %v1543
      %v1562 = vpop.f32.mrf.mxu0
      %v1563 = vadd.f32 0.0, %v1562
      %1564 = vdwg.mxu0
      %1565 = vrot.lane.b32.xlu0 %v1256, 127
      %v1566 = vpop.permute.xlu0 %1565
      %s1567 = vtos %v1566
      %v1568 = vstv %s1567
      %v1570 = vmul.f32 %v1563, %v1568
      %v1571 = vsel %vm1109, %v1570, -inf
      %1572 = vmax.xlane.f32.xlu0 %v1571
      %v1573 = vpop.xlane.xlu0 %1572
      %v1574 = vsub.f32 %v1570, %v1573
      %v1575 = vmul.f32 %v1574, 1.442695
      %v1576 = vpow.pop %v1575
      %v1577 = vsel %vm1109, %v1576, 0.0
      %1578 = vadd.xlane.f32.xlu0 %v1577
      %v1579 = vpop.xlane.xlu0 %1578
      %v1580 = vrcp.pop %v1579
      %v1581 = vmul.f32 %v1579, %v1580
      %v1582 = vsub.f32 1.0, %v1581
      %v1583 = vmul.f32 %v1580, %v1582
      %v1584 = vadd.f32 %v1580, %v1583
      %vm1585 = vweird.f32 %v1579
      %vm1586 = vweird.f32 %v1580
      %vm1587 = vmor %vm1585, %vm1586
      %v1588 = vsel %vm1587, %v1580, %v1584
      %v1589 = vand.u32 2147483647, %v1579
      %vm1590 = vcmp.eq.f32.partialorder %v1589, 8.507059e+37
      %v1591 = vand.u32 %v1579, 2147483648
      %v1592 = vor.u32 1.1754944e-38, %v1591
      %v1593 = vsel %vm1590, %v1592, %v1588
      %v1594 = vmul.f32 %v1576, %v1593
      %v1596 = vsel %vm1109, %v1594, 0
      %1598 = vmatpush.msra.mxu0 0.0
      %1599 = vmatpush.msra.mxu0 0.0
      %1600 = vmatpush.msra.mxu0 0.0
      %1601 = vmatpush.msra.mxu0 0.0
      %1602 = vmatpush.msra.mxu0 0.0
      %1603 = vmatpush.msra.mxu0 0.0
      %1604 = vmatpush.msra.mxu0 0.0
      %1605 = vmatpush.msra.mxu0 0.0
      %1606 = vmatpush.msra.mxu0 0.0
      %1607 = vmatpush.msra.mxu0 0.0
      %1608 = vmatpush.msra.mxu0 0.0
      %1609 = vmatpush.msra.mxu0 0.0
      %1610 = vmatpush.msra.mxu0 0.0
      %1611 = vmatpush.msra.mxu0 0.0
      %1612 = vmatpush.msra.mxu0 0.0
      %1613 = vmatpush.msra.mxu0 %v881
      %1614 = vmatmul.f32.gmra.mxu0 %v1596
      %v1615 = vpop.f32.mrf.mxu0
      %v1616 = vadd.f32 0.0, %v1615
      %1617 = vdwg.mxu0
      %v1618 = vadd.f32 %v1540, %v1616
      %v1620 = vsel %vm502, %v1074, 0
      %1622 = vmatpush.xpose.msra.mxu0 0.0
      %1623 = vmatpush.xpose.msra.mxu0 0.0
      %1624 = vmatpush.xpose.msra.mxu0 0.0
      %1625 = vmatpush.xpose.msra.mxu0 0.0
      %1626 = vmatpush.xpose.msra.mxu0 0.0
      %1627 = vmatpush.xpose.msra.mxu0 0.0
      %1628 = vmatpush.xpose.msra.mxu0 0.0
      %1629 = vmatpush.xpose.msra.mxu0 0.0
      %1630 = vmatpush.xpose.msra.mxu0 0.0
      %1631 = vmatpush.xpose.msra.mxu0 0.0
      %1632 = vmatpush.xpose.msra.mxu0 0.0
      %1633 = vmatpush.xpose.msra.mxu0 0.0
      %1634 = vmatpush.xpose.msra.mxu0 0.0
      %1635 = vmatpush.xpose.msra.mxu0 0.0
      %1636 = vmatpush.xpose.msra.mxu0 0.0
      %1637 = vmatpush.xpose.msra.mxu0 %v1391
      %1638 = vmatmul.f32.gmra.mxu0 %v1620
      %v1639 = vpop.f32.mrf.mxu0
      %v1640 = vadd.f32 0.0, %v1639
      %1641 = vdwg.mxu0
      %1642 = vrot.lane.b32.xlu0 %v1333, 127
      %v1643 = vpop.permute.xlu0 %1642
      %s1644 = vtos %v1643
      %v1645 = vstv %s1644
      %v1647 = vmul.f32 %v1640, %v1645
      %v1648 = vsel %vm1109, %v1647, -inf
      %1649 = vmax.xlane.f32.xlu0 %v1648
      %v1650 = vpop.xlane.xlu0 %1649
      %v1651 = vsub.f32 %v1647, %v1650
      %v1652 = vmul.f32 %v1651, 1.442695
      %v1653 = vpow.pop %v1652
      %v1654 = vsel %vm1109, %v1653, 0.0
      %1655 = vadd.xlane.f32.xlu0 %v1654
      %v1656 = vpop.xlane.xlu0 %1655
      %v1657 = vrcp.pop %v1656
      %v1658 = vmul.f32 %v1656, %v1657
      %v1659 = vsub.f32 1.0, %v1658
      %v1660 = vmul.f32 %v1657, %v1659
      %v1661 = vadd.f32 %v1657, %v1660
      %vm1662 = vweird.f32 %v1656
      %vm1663 = vweird.f32 %v1657
      %vm1664 = vmor %vm1662, %vm1663
      %v1665 = vsel %vm1664, %v1657, %v1661
      %v1666 = vand.u32 2147483647, %v1656
      %vm1667 = vcmp.eq.f32.partialorder %v1666, 8.507059e+37
      %v1668 = vand.u32 %v1656, 2147483648
      %v1669 = vor.u32 1.1754944e-38, %v1668
      %v1670 = vsel %vm1667, %v1669, %v1665
      %v1671 = vmul.f32 %v1653, %v1670
      %v1673 = vsel %vm1109, %v1671, 0
      %1675 = vmatpush.msra.mxu0 0.0
      %1676 = vmatpush.msra.mxu0 0.0
      %1677 = vmatpush.msra.mxu0 0.0
      %1678 = vmatpush.msra.mxu0 0.0
      %1679 = vmatpush.msra.mxu0 0.0
      %1680 = vmatpush.msra.mxu0 0.0
      %1681 = vmatpush.msra.mxu0 0.0
      %1682 = vmatpush.msra.mxu0 0.0
      %1683 = vmatpush.msra.mxu0 0.0
      %1684 = vmatpush.msra.mxu0 0.0
      %1685 = vmatpush.msra.mxu0 0.0
      %1686 = vmatpush.msra.mxu0 0.0
      %1687 = vmatpush.msra.mxu0 0.0
      %1688 = vmatpush.msra.mxu0 0.0
      %1689 = vmatpush.msra.mxu0 0.0
      %1690 = vmatpush.msra.mxu0 %v1009
      %1691 = vmatmul.f32.gmra.mxu0 %v1673
      %v1692 = vpop.f32.mrf.mxu0
      %v1693 = vadd.f32 0.0, %v1692
      %1694 = vdwg.mxu0
      %v1695 = vadd.f32 %v1618, %v1693
      %v1696 = vld [vmem:[%s8] sm:$0xff]
      %v1697 = vld [vmem:[%s8 + $0x8] sm:$0xff]
      %v1698 = vld [vmem:[%s9] sm:$0xff]
      %v1699 = vld [vmem:[%s9 + $0x8] sm:$0xff]
      %1701 = vset.pattern.permute.xlu0 0
      %1702 = vperm.xlu0 %1701, %v1698
      %v1703 = vpop.permute.xlu0 %1702
      %1706 = vset.pattern.permute.xlu0 0
      %1707 = vperm.xlu0 %1706, %v1699
      %v1708 = vpop.permute.xlu0 %1707
      %v1711 = vsel %vm470, %v1696, 0
      %v1714 = vsel %vm470, %v1697, 0
      %1716 = vmatpush.msra.mxu0 0.0
      %1717 = vmatpush.msra.mxu0 0.0
      %1718 = vmatpush.msra.mxu0 0.0
      %1719 = vmatpush.msra.mxu0 0.0
      %1720 = vmatpush.msra.mxu0 0.0
      %1721 = vmatpush.msra.mxu0 0.0
      %1722 = vmatpush.msra.mxu0 0.0
      %1723 = vmatpush.msra.mxu0 0.0
      %1724 = vmatpush.msra.mxu0 0.0
      %1725 = vmatpush.msra.mxu0 0.0
      %1726 = vmatpush.msra.mxu0 0.0
      %1727 = vmatpush.msra.mxu0 0.0
      %1728 = vmatpush.msra.mxu0 0.0
      %1729 = vmatpush.msra.mxu0 0.0
      %1730 = vmatpush.msra.mxu0 %v1695
      %1731 = vmatpush.msra.mxu0 %v1386
      %1732 = vmatmul.f32.gmra.mxu0 %v1711
      %v1733 = vpop.f32.mrf.mxu0
      %v1734 = vadd.f32 %v1703, %v1733
      %1735 = vmatmul.f32.gmra.mxu0 %v1714
      %v1736 = vpop.f32.mrf.mxu0
      %v1737 = vadd.f32 %v1708, %v1736
      %1738 = vdwg.mxu0
      %1739 = vst.msk [vmem:[%s454] sm:$0xff] %vm502, %v1734
      %1740 = vst.msk [vmem:[%s454 + $0x8] sm:$0xff] %vm502, %v1737
      %p1741 = scmp.lt.s32.totalorder %s23, 1
      %s1742 = scalar_select %p1741, %s23, 1
      %s1743 = smul.addr %s1742, 2
      %s1744 = smul.addr %s1743, 8
      %s1745 = scalar_lea.vmem %s10, %s1744
      %p1746 = scmp.lt.s32.totalorder %s23, 1
      %s1747 = scalar_select %p1746, %s23, 1
      %s1748 = smul.addr %s1747, 2
      %s1749 = smul.addr %s1748, 8
      %s1750 = scalar_lea.vmem %s11, %s1749
      // Predicated region
      $region61: #{mlsif_forward.6} parent=59 // pred_check
        %p1751 = pneg %p271
      $region62: #{mlsif_forward.6} parent=59 // pred_check_branch
        %1753 = sbr.rel (%p1751) target = $region64
      $region63: #{mlsif_forward.6} parent=59 // pred_region
        _
      $region64: #{mlsif_forward.6} parent=59 // pred_fallthru
        _
      // Predicated region
      $region65: #{mlsif_forward.6} parent=59 // pred_check
        %p1754 = pneg %p297
      $region66: #{mlsif_forward.6} parent=59 // pred_check_branch
        %1756 = sbr.rel (%p1754) target = $region68
      $region67: #{mlsif_forward.6} parent=59 // pred_region
        _
      $region68: #{mlsif_forward.6} parent=59 // pred_fallthru
        _
    $region60: #{mlsif_forward.6} parent=5 // pred_fallthru
      _
    %p1757 = scmp.le.s32.totalorder 2, %s18
    // Predicated region
    $region69: #{mlsif_forward.6} parent=5 // pred_check
      %p1758 = pneg %p1757
    $region70: #{mlsif_forward.6} parent=5 // pred_check_branch
      %1760 = sbr.rel (%p1758) target = $region72
    $region71: #{mlsif_forward.6} parent=5 // pred_region
      %s1761 = ssub.s32 %s18, 2
      // Predicated region
      $region73: #{mlsif_forward.6} parent=71 // pred_check
        %p1762 = pneg %p277
      $region74: #{mlsif_forward.6} parent=71 // pred_check_branch
        %1764 = sbr.rel (%p1762) target = $region76
      $region75: #{mlsif_forward.6} parent=71 // pred_region
        %p1765 = scmp.lt.s32.totalorder %s24, 1
        %s1766 = scalar_select %p1765, %s24, 1
        %s1767 = smul.addr %s1766, 2
        %s1768 = smul.addr %s1767, 8
        %s1769 = scalar_lea.vmem %s10, %s1768
      $region76: #{mlsif_forward.6} parent=71 // pred_fallthru
        _
      // Predicated region
      $region77: #{mlsif_forward.6} parent=71 // pred_check
        %p1770 = pneg %p303
      $region78: #{mlsif_forward.6} parent=71 // pred_check_branch
        %1772 = sbr.rel (%p1770) target = $region80
      $region79: #{mlsif_forward.6} parent=71 // pred_region
        %p1773 = scmp.lt.s32.totalorder %s24, 1
        %s1774 = scalar_select %p1773, %s24, 1
        %s1775 = smul.addr %s1774, 2
        %s1776 = smul.addr %s1775, 8
        %s1777 = scalar_lea.vmem %s11, %s1776
      $region80: #{mlsif_forward.6} parent=71 // pred_fallthru
        _
    $region72: #{mlsif_forward.6} parent=5 // pred_fallthru
      _
  $region6: #{mlsif_forward.6} parent=0 // loop_footer
    %s22 = sadd.s32 1, %s18
  $region7: #{mlsif_forward.6} parent=0 // loop_footer_branch
    %17 = sbr.rel target = $region3
  $region8: #{mlsif_forward.6} parent=0 // loop_exit
    _

// kernel: mlsif_forward.8
$region0: #{mlsif_forward.8}
  #allocation0 [shape = 'u32[]', space=smem, size = 0x4, offset = 0x4, fixed_abs, tag = 'smem constant byte address 0x4 - core index']
  #allocation1 [shape = 'u32[72,128]{1,0:T(1,128)}', space=vmem, size = 0x9000, scoped, tag = 'internal scratch']
  %s0 = inlined_call_operand.vmem [shape: f32[2,16,10,10], index: 0, kind: input, shape index: {}]
  %s1 = inlined_call_operand.vmem [shape: f32[16,9], index: 1, kind: input, shape index: {}]
  %s2 = inlined_call_operand.vmem [shape: f32[2,16,8,8], index: 2, kind: input, shape index: {}]
  %s3 = inlined_call_operand.vmem [shape: f32[2,16,8,8], index: 3, kind: input, shape index: {}]
  %s4 = inlined_call_operand.vmem [shape: f32[2,16,8,8], index: 4, kind: output, shape index: {}]
  %s5 = sld [smem:[#allocation0]]
  $region49: #{mlsif_forward.8} parent=0
    _
  %s7 = ssub.s32 1, %s5
  %s8 = scalar_select 0, %s7, %s5
  loop: start=0, step=1, limit=4
  $region2: #{mlsif_forward.8} parent=0 // loop_pre_header
    _
  $region3: #{mlsif_forward.8} parent=0 // loop_header
    %s10 = sphi 0, %s14
    %p11 = scmp.ge.s32.totalorder %s10, 4
    %s20 = sphi 0, %s22
    %s23 = sphi 0, %s20
    %s24 = sphi 0, %s23
    %s40 = sphi 0, %s24
    %s44 = sphi 0, %s44
    %s46 = sphi 0, %s44
    %s47 = sphi 0, %s46
    %s61 = sphi 0, %s47
    %s67 = sphi 0, %s69
    %s70 = sphi 0, %s67
    %s71 = sphi 0, %s70
    %s87 = sphi 0, %s71
    %s93 = sphi 0, %s95
    %s96 = sphi 0, %s93
    %s97 = sphi 0, %s96
    %s113 = sphi 0, %s97
    %s119 = sphi 0, %s121
    %s122 = sphi 0, %s119
    %s123 = sphi 0, %s122
    %s139 = sphi 0, %s123
  $region4: #{mlsif_forward.8} parent=0 // loop_header_branch
    %13 = sbr.rel (%p11) target = $region8
  $region5: #{mlsif_forward.8} parent=0 // loop_body
    %s15 = ssub.s32 %s10, 1
    %s16 = ssub.s32 %s10, 2
    %s17 = sadd.s32 %s10, 1
    %s18 = ssub.s32 %s10, %s17
    %p19 = scmp.eq.s32.totalorder %s18, 0
    %s21 = sadd.s32 %s20, 1
    %s22 = scalar_select %p19, %s20, %s21
    %p25 = pneg %p19
    %p26 = scmp.eq.s32.totalorder %s10, 1
    %p27 = por %p25, %p26
    %p28 = scmp.ne.s32.totalorder %s20, %s23
    %p29 = scmp.eq.s32.totalorder %s10, 0
    %p30 = por %p28, %p29
    %p31 = scmp.ne.s32.totalorder %s20, %s23
    %p32 = scmp.eq.s32.totalorder %s15, 1
    %p33 = por %p31, %p32
    %p34 = scmp.ne.s32.totalorder %s23, %s24
    %p35 = scmp.eq.s32.totalorder %s15, 0
    %p36 = por %p34, %p35
    %p37 = scmp.ne.s32.totalorder %s23, %s24
    %p38 = scmp.eq.s32.totalorder %s16, 1
    %p39 = por %p37, %p38
    %p41 = scmp.ne.s32.totalorder %s24, %s40
    %p42 = scmp.eq.s32.totalorder %s16, 0
    %p43 = por %p41, %p42
    %s45 = sadd.s32 %s44, 1
    %p48 = scmp.eq.s32.totalorder %s10, 1
    %p49 = scmp.ne.s32.totalorder %s44, %s46
    %p50 = scmp.eq.s32.totalorder %s10, 0
    %p51 = por %p49, %p50
    %p52 = scmp.ne.s32.totalorder %s44, %s46
    %p53 = scmp.eq.s32.totalorder %s15, 1
    %p54 = por %p52, %p53
    %p55 = scmp.ne.s32.totalorder %s46, %s47
    %p56 = scmp.eq.s32.totalorder %s15, 0
    %p57 = por %p55, %p56
    %p58 = scmp.ne.s32.totalorder %s46, %s47
    %p59 = scmp.eq.s32.totalorder %s16, 1
    %p60 = por %p58, %p59
    %p62 = scmp.ne.s32.totalorder %s47, %s61
    %p63 = scmp.eq.s32.totalorder %s16, 0
    %p64 = por %p62, %p63
    %s65 = ssub.s32 %s10, %s17
    %p66 = scmp.eq.s32.totalorder %s65, 0
    %s68 = sadd.s32 %s67, 1
    %s69 = scalar_select %p66, %s67, %s68
    %p72 = pneg %p66
    %p73 = scmp.eq.s32.totalorder %s10, 1
    %p74 = por %p72, %p73
    %p75 = scmp.ne.s32.totalorder %s67, %s70
    %p76 = scmp.eq.s32.totalorder %s10, 0
    %p77 = por %p75, %p76
    %p78 = scmp.ne.s32.totalorder %s67, %s70
    %p79 = scmp.eq.s32.totalorder %s15, 1
    %p80 = por %p78, %p79
    %p81 = scmp.ne.s32.totalorder %s70, %s71
    %p82 = scmp.eq.s32.totalorder %s15, 0
    %p83 = por %p81, %p82
    %p84 = scmp.ne.s32.totalorder %s70, %s71
    %p85 = scmp.eq.s32.totalorder %s16, 1
    %p86 = por %p84, %p85
    %p88 = scmp.ne.s32.totalorder %s71, %s87
    %p89 = scmp.eq.s32.totalorder %s16, 0
    %p90 = por %p88, %p89
    %s91 = ssub.s32 %s10, %s17
    %p92 = scmp.eq.s32.totalorder %s91, 0
    %s94 = sadd.s32 %s93, 1
    %s95 = scalar_select %p92, %s93, %s94
    %p98 = pneg %p92
    %p99 = scmp.eq.s32.totalorder %s10, 1
    %p100 = por %p98, %p99
    %p101 = scmp.ne.s32.totalorder %s93, %s96
    %p102 = scmp.eq.s32.totalorder %s10, 0
    %p103 = por %p101, %p102
    %p104 = scmp.ne.s32.totalorder %s93, %s96
    %p105 = scmp.eq.s32.totalorder %s15, 1
    %p106 = por %p104, %p105
    %p107 = scmp.ne.s32.totalorder %s96, %s97
    %p108 = scmp.eq.s32.totalorder %s15, 0
    %p109 = por %p107, %p108
    %p110 = scmp.ne.s32.totalorder %s96, %s97
    %p111 = scmp.eq.s32.totalorder %s16, 1
    %p112 = por %p110, %p111
    %p114 = scmp.ne.s32.totalorder %s97, %s113
    %p115 = scmp.eq.s32.totalorder %s16, 0
    %p116 = por %p114, %p115
    %s117 = ssub.s32 %s10, %s17
    %p118 = scmp.eq.s32.totalorder %s117, 0
    %s120 = sadd.s32 %s119, 1
    %s121 = scalar_select %p118, %s119, %s120
    %p124 = pneg %p118
    %p125 = scmp.eq.s32.totalorder %s10, 1
    %p126 = por %p124, %p125
    %p127 = scmp.ne.s32.totalorder %s119, %s122
    %p128 = scmp.eq.s32.totalorder %s10, 0
    %p129 = por %p127, %p128
    %p130 = scmp.ne.s32.totalorder %s119, %s122
    %p131 = scmp.eq.s32.totalorder %s15, 1
    %p132 = por %p130, %p131
    %p133 = scmp.ne.s32.totalorder %s122, %s123
    %p134 = scmp.eq.s32.totalorder %s15, 0
    %p135 = por %p133, %p134
    %p136 = scmp.ne.s32.totalorder %s122, %s123
    %p137 = scmp.eq.s32.totalorder %s16, 1
    %p138 = por %p136, %p137
    %p140 = scmp.ne.s32.totalorder %s123, %s139
    %p141 = scmp.eq.s32.totalorder %s16, 0
    %p142 = por %p140, %p141
    %p143 = scmp.le.s32.totalorder 1, %s10
    %p144 = scmp.lt.s32.totalorder %s10, 3
    %p145 = pnand %p143, %p144
    %p146 = pneg %p145
    // Predicated region
    $region9: #{mlsif_forward.8} parent=5 // pred_check
      _
    $region10: #{mlsif_forward.8} parent=5 // pred_check_branch
      %148 = sbr.rel (%p145) target = $region12
    $region11: #{mlsif_forward.8} parent=5 // pred_region
      %s149 = ssub.s32 %s10, 1
      // Predicated region
      $region13: #{mlsif_forward.8} parent=11 // pred_check
        %p150 = pneg %p57
      $region14: #{mlsif_forward.8} parent=11 // pred_check_branch
        %152 = sbr.rel (%p150) target = $region16
      $region15: #{mlsif_forward.8} parent=11 // pred_region
        _
      $region16: #{mlsif_forward.8} parent=11 // pred_fallthru
        _
    $region12: #{mlsif_forward.8} parent=5 // pred_fallthru
      _
    %p153 = scmp.lt.s32.totalorder %s10, 2
    // Predicated region
    $region17: #{mlsif_forward.8} parent=5 // pred_check
      %p154 = pneg %p153
    $region18: #{mlsif_forward.8} parent=5 // pred_check_branch
      %156 = sbr.rel (%p154) target = $region20
    $region19: #{mlsif_forward.8} parent=5 // pred_region
      // Predicated region
      $region21: #{mlsif_forward.8} parent=19 // pred_check
        %p157 = pneg %p30
      $region22: #{mlsif_forward.8} parent=19 // pred_check_branch
        %159 = sbr.rel (%p157) target = $region24
      $region23: #{mlsif_forward.8} parent=19 // pred_region
        %p160 = scmp.lt.s32.totalorder %s10, 1
        %s161 = scalar_select %p160, %s10, 1
        %s162 = smul.addr %s161, 32
        %s163 = smul.addr %s162, 8
        %s164 = scalar_lea.vmem %s0, %s163
      $region24: #{mlsif_forward.8} parent=19 // pred_fallthru
        _
      // Predicated region
      $region25: #{mlsif_forward.8} parent=19 // pred_check
        %p165 = pneg %p77
      $region26: #{mlsif_forward.8} parent=19 // pred_check_branch
        %167 = sbr.rel (%p165) target = $region28
      $region27: #{mlsif_forward.8} parent=19 // pred_region
        %p168 = scmp.lt.s32.totalorder %s10, 1
        %s169 = scalar_select %p168, %s10, 1
        %s170 = smul.addr %s169, 16
        %s171 = smul.addr %s170, 8
        %s172 = scalar_lea.vmem %s2, %s171
      $region28: #{mlsif_forward.8} parent=19 // pred_fallthru
        _
      // Predicated region
      $region29: #{mlsif_forward.8} parent=19 // pred_check
        %p173 = pneg %p103
      $region30: #{mlsif_forward.8} parent=19 // pred_check_branch
        %175 = sbr.rel (%p173) target = $region32
      $region31: #{mlsif_forward.8} parent=19 // pred_region
        %p176 = scmp.lt.s32.totalorder %s10, 1
        %s177 = scalar_select %p176, %s10, 1
        %s178 = smul.addr %s177, 16
        %s179 = smul.addr %s178, 8
        %s180 = scalar_lea.vmem %s3, %s179
      $region32: #{mlsif_forward.8} parent=19 // pred_fallthru
        _
    $region20: #{mlsif_forward.8} parent=5 // pred_fallthru
      _
    %p181 = scmp.le.s32.totalorder 1, %s10
    %p182 = scmp.lt.s32.totalorder %s10, 3
    %p183 = pnand %p181, %p182
    %p184 = pneg %p183
    // Predicated region
    $region33: #{mlsif_forward.8} parent=5 // pred_check
      _
    $region34: #{mlsif_forward.8} parent=5 // pred_check_branch
      %186 = sbr.rel (%p183) target = $region36
    $region35: #{mlsif_forward.8} parent=5 // pred_region
      %s187 = ssub.s32 %s10, 1
      %p188 = scmp.lt.s32.totalorder %s15, 1
      %s189 = scalar_select %p188, %s15, 1
      %s190 = smul.addr %s189, 32
      %s191 = smul.addr %s190, 8
      %s192 = scalar_lea.vmem %s0, %s191
      %p193 = pneg %p36
      %p194 = pneg %p33
      %p195 = pneg %p57
      %p196 = pneg %p54
      %p197 = scmp.lt.s32.totalorder %s15, 1
      %s198 = scalar_select %p197, %s15, 1
      %s199 = smul.addr %s198, 16
      %s200 = smul.addr %s199, 8
      %s201 = scalar_lea.vmem %s2, %s200
      %p202 = pneg %p83
      %p203 = pneg %p80
      %p204 = scmp.lt.s32.totalorder %s15, 1
      %s205 = scalar_select %p204, %s15, 1
      %s206 = smul.addr %s205, 16
      %s207 = smul.addr %s206, 8
      %s208 = scalar_lea.vmem %s3, %s207
      %p209 = pneg %p109
      %p210 = pneg %p106
      %p211 = pneg %p135
      %p212 = pneg %p132
      %p213 = scmp.lt.s32.totalorder %s15, 1
      %s214 = scalar_select %p213, %s15, 1
      %s215 = smul.addr %s214, 16
      %s216 = smul.addr %s215, 8
      %s217 = scalar_lea.vmem %s4, %s216
      %p218 = scmp.lt.s32.totalorder %s15, 1
      %s219 = scalar_select %p218, %s15, 1
      %s220 = smul.addr %s219, 32
      %s221 = smul.addr %s220, 8
      %s222 = scalar_lea.vmem %s0, %s221
      %p223 = scmp.lt.s32.totalorder %s15, 1
      %s224 = scalar_select %p223, %s15, 1
      %s225 = smul.addr %s224, 16
      %s226 = smul.addr %s225, 8
      %s227 = scalar_lea.vmem %s2, %s226
      %p228 = scmp.lt.s32.totalorder %s15, 1
      %s229 = scalar_select %p228, %s15, 1
      %s230 = smul.addr %s229, 16
      %s231 = smul.addr %s230, 8
      %s232 = scalar_lea.vmem %s3, %s231
      %p233 = scmp.lt.s32.totalorder %s15, 1
      %s234 = scalar_select %p233, %s15, 1
      %s235 = smul.addr %s234, 16
      %s236 = smul.addr %s235, 8
      %s237 = scalar_lea.vmem %s4, %s236
      %v238 = vld [vmem:[%s1] sm:$0xff]
      %v239 = vld [vmem:[%s1 + $0x8] sm:$0xff]
      %v242 = vrot.slane %v238, 1
      %v243 = vrot.slane %v238, 2
      %v244 = vrot.slane %v238, 3
      %v245 = vrot.slane %v238, 4
      %v246 = vrot.slane %v238, 5
      %v247 = vrot.slane %v238, 6
      %v248 = vrot.slane %v238, 7
      %v249 = vrot.slane %v239, 1
      %v250 = vrot.slane %v239, 2
      %v251 = vrot.slane %v239, 3
      %v252 = vrot.slane %v239, 4
      %v253 = vrot.slane %v239, 5
      %v254 = vrot.slane %v239, 6
      %v255 = vrot.slane %v239, 7
      %v256 = vld [vmem:[%s222] sm:$0xff]
      %v257 = vld [vmem:[%s222 + $0x10] sm:$0xff]
      %v258 = vld [vmem:[%s222 + $0x20] sm:$0xff]
      %v259 = vld [vmem:[%s222 + $0x30] sm:$0xff]
      %v260 = vld [vmem:[%s222 + $0x40] sm:$0xff]
      %v261 = vld [vmem:[%s222 + $0x50] sm:$0xff]
      %v262 = vld [vmem:[%s222 + $0x60] sm:$0xff]
      %v263 = vld [vmem:[%s222 + $0x70] sm:$0xff]
      %v264 = vld [vmem:[%s222 + $0x80] sm:$0xff]
      %v265 = vld [vmem:[%s222 + $0x90] sm:$0xff]
      %v266 = vld [vmem:[%s222 + $0xa0] sm:$0xff]
      %v267 = vld [vmem:[%s222 + $0xb0] sm:$0xff]
      %v268 = vld [vmem:[%s222 + $0xc0] sm:$0xff]
      %v269 = vld [vmem:[%s222 + $0xd0] sm:$0xff]
      %v270 = vld [vmem:[%s222 + $0xe0] sm:$0xff]
      %v271 = vld [vmem:[%s222 + $0xf0] sm:$0xff]
      %v272 = vperm.slane %v238, 0
      %v273 = vperm.slane %v242, 0
      %v274 = vperm.slane %v243, 0
      %v275 = vperm.slane %v244, 0
      %v276 = vperm.slane %v245, 0
      %v277 = vperm.slane %v246, 0
      %v278 = vperm.slane %v247, 0
      %v279 = vperm.slane %v248, 0
      %v280 = vperm.slane %v239, 0
      %v281 = vperm.slane %v249, 0
      %v282 = vperm.slane %v250, 0
      %v283 = vperm.slane %v251, 0
      %v284 = vperm.slane %v252, 0
      %v285 = vperm.slane %v253, 0
      %v286 = vperm.slane %v254, 0
      %v287 = vperm.slane %v255, 0
      %288 = vset.pattern.permute.xlu0 0
      %289 = vperm.xlu0 %288, %v272
      %v290 = vpop.permute.xlu0 %289
      %292 = vset.pattern.permute.xlu0 0
      %293 = vperm.xlu0 %292, %v273
      %v294 = vpop.permute.xlu0 %293
      %296 = vset.pattern.permute.xlu0 0
      %297 = vperm.xlu0 %296, %v274
      %v298 = vpop.permute.xlu0 %297
      %300 = vset.pattern.permute.xlu0 0
      %301 = vperm.xlu0 %300, %v275
      %v302 = vpop.permute.xlu0 %301
      %304 = vset.pattern.permute.xlu0 0
      %305 = vperm.xlu0 %304, %v276
      %v306 = vpop.permute.xlu0 %305
      %308 = vset.pattern.permute.xlu0 0
      %309 = vperm.xlu0 %308, %v277
      %v310 = vpop.permute.xlu0 %309
      %312 = vset.pattern.permute.xlu0 0
      %313 = vperm.xlu0 %312, %v278
      %v314 = vpop.permute.xlu0 %313
      %316 = vset.pattern.permute.xlu0 0
      %317 = vperm.xlu0 %316, %v279
      %v318 = vpop.permute.xlu0 %317
      %320 = vset.pattern.permute.xlu0 0
      %321 = vperm.xlu0 %320, %v280
      %v322 = vpop.permute.xlu0 %321
      %324 = vset.pattern.permute.xlu0 0
      %325 = vperm.xlu0 %324, %v281
      %v326 = vpop.permute.xlu0 %325
      %328 = vset.pattern.permute.xlu0 0
      %329 = vperm.xlu0 %328, %v282
      %v330 = vpop.permute.xlu0 %329
      %332 = vset.pattern.permute.xlu0 0
      %333 = vperm.xlu0 %332, %v283
      %v334 = vpop.permute.xlu0 %333
      %336 = vset.pattern.permute.xlu0 0
      %337 = vperm.xlu0 %336, %v284
      %v338 = vpop.permute.xlu0 %337
      %340 = vset.pattern.permute.xlu0 0
      %341 = vperm.xlu0 %340, %v285
      %v342 = vpop.permute.xlu0 %341
      %344 = vset.pattern.permute.xlu0 0
      %345 = vperm.xlu0 %344, %v286
      %v346 = vpop.permute.xlu0 %345
      %348 = vset.pattern.permute.xlu0 0
      %349 = vperm.xlu0 %348, %v287
      %v350 = vpop.permute.xlu0 %349
      %v352 = vmul.f32 %v290, %v256
      %v353 = vmul.f32 %v294, %v257
      %v354 = vmul.f32 %v298, %v258
      %v355 = vmul.f32 %v302, %v259
      %v356 = vmul.f32 %v306, %v260
      %v357 = vmul.f32 %v310, %v261
      %v358 = vmul.f32 %v314, %v262
      %v359 = vmul.f32 %v318, %v263
      %v360 = vmul.f32 %v322, %v264
      %v361 = vmul.f32 %v326, %v265
      %v362 = vmul.f32 %v330, %v266
      %v363 = vmul.f32 %v334, %v267
      %v364 = vmul.f32 %v338, %v268
      %v365 = vmul.f32 %v342, %v269
      %v366 = vmul.f32 %v346, %v270
      %v367 = vmul.f32 %v350, %v271
      %v368 = vadd.f32 %v352, 0.0
      %v369 = vadd.f32 %v353, 0.0
      %v370 = vadd.f32 %v354, 0.0
      %v371 = vadd.f32 %v355, 0.0
      %v372 = vadd.f32 %v356, 0.0
      %v373 = vadd.f32 %v357, 0.0
      %v374 = vadd.f32 %v358, 0.0
      %v375 = vadd.f32 %v359, 0.0
      %v376 = vadd.f32 %v360, 0.0
      %v377 = vadd.f32 %v361, 0.0
      %v378 = vadd.f32 %v362, 0.0
      %v379 = vadd.f32 %v363, 0.0
      %v380 = vadd.f32 %v364, 0.0
      %v381 = vadd.f32 %v365, 0.0
      %v382 = vadd.f32 %v366, 0.0
      %v383 = vadd.f32 %v367, 0.0
      %384 = vset.pattern.permute.xlu0 1
      %385 = vperm.xlu0 %384, %v272
      %v386 = vpop.permute.xlu0 %385
      %388 = vset.pattern.permute.xlu0 1
      %389 = vperm.xlu0 %388, %v273
      %v390 = vpop.permute.xlu0 %389
      %392 = vset.pattern.permute.xlu0 1
      %393 = vperm.xlu0 %392, %v274
      %v394 = vpop.permute.xlu0 %393
      %396 = vset.pattern.permute.xlu0 1
      %397 = vperm.xlu0 %396, %v275
      %v398 = vpop.permute.xlu0 %397
      %400 = vset.pattern.permute.xlu0 1
      %401 = vperm.xlu0 %400, %v276
      %v402 = vpop.permute.xlu0 %401
      %404 = vset.pattern.permute.xlu0 1
      %405 = vperm.xlu0 %404, %v277
      %v406 = vpop.permute.xlu0 %405
      %408 = vset.pattern.permute.xlu0 1
      %409 = vperm.xlu0 %408, %v278
      %v410 = vpop.permute.xlu0 %409
      %412 = vset.pattern.permute.xlu0 1
      %413 = vperm.xlu0 %412, %v279
      %v414 = vpop.permute.xlu0 %413
      %416 = vset.pattern.permute.xlu0 1
      %417 = vperm.xlu0 %416, %v280
      %v418 = vpop.permute.xlu0 %417
      %420 = vset.pattern.permute.xlu0 1
      %421 = vperm.xlu0 %420, %v281
      %v422 = vpop.permute.xlu0 %421
      %424 = vset.pattern.permute.xlu0 1
      %425 = vperm.xlu0 %424, %v282
      %v426 = vpop.permute.xlu0 %425
      %428 = vset.pattern.permute.xlu0 1
      %429 = vperm.xlu0 %428, %v283
      %v430 = vpop.permute.xlu0 %429
      %432 = vset.pattern.permute.xlu0 1
      %433 = vperm.xlu0 %432, %v284
      %v434 = vpop.permute.xlu0 %433
      %436 = vset.pattern.permute.xlu0 1
      %437 = vperm.xlu0 %436, %v285
      %v438 = vpop.permute.xlu0 %437
      %440 = vset.pattern.permute.xlu0 1
      %441 = vperm.xlu0 %440, %v286
      %v442 = vpop.permute.xlu0 %441
      %444 = vset.pattern.permute.xlu0 1
      %445 = vperm.xlu0 %444, %v287
      %v446 = vpop.permute.xlu0 %445
      %v448 = vmul.f32 %v386, %v256
      %v449 = vmul.f32 %v390, %v257
      %v450 = vmul.f32 %v394, %v258
      %v451 = vmul.f32 %v398, %v259
      %v452 = vmul.f32 %v402, %v260
      %v453 = vmul.f32 %v406, %v261
      %v454 = vmul.f32 %v410, %v262
      %v455 = vmul.f32 %v414, %v263
      %v456 = vmul.f32 %v418, %v264
      %v457 = vmul.f32 %v422, %v265
      %v458 = vmul.f32 %v426, %v266
      %v459 = vmul.f32 %v430, %v267
      %v460 = vmul.f32 %v434, %v268
      %v461 = vmul.f32 %v438, %v269
      %v462 = vmul.f32 %v442, %v270
      %v463 = vmul.f32 %v446, %v271
      %480 = vrot.lane.b32.xlu0 %v448, 127
      %v481 = vpop.permute.xlu0 %480
      %482 = vrot.lane.b32.xlu0 %v449, 127
      %v483 = vpop.permute.xlu0 %482
      %484 = vrot.lane.b32.xlu0 %v450, 127
      %v485 = vpop.permute.xlu0 %484
      %486 = vrot.lane.b32.xlu0 %v451, 127
      %v487 = vpop.permute.xlu0 %486
      %488 = vrot.lane.b32.xlu0 %v452, 127
      %v489 = vpop.permute.xlu0 %488
      %490 = vrot.lane.b32.xlu0 %v453, 127
      %v491 = vpop.permute.xlu0 %490
      %492 = vrot.lane.b32.xlu0 %v454, 127
      %v493 = vpop.permute.xlu0 %492
      %494 = vrot.lane.b32.xlu0 %v455, 127
      %v495 = vpop.permute.xlu0 %494
      %496 = vrot.lane.b32.xlu0 %v456, 127
      %v497 = vpop.permute.xlu0 %496
      %498 = vrot.lane.b32.xlu0 %v457, 127
      %v499 = vpop.permute.xlu0 %498
      %500 = vrot.lane.b32.xlu0 %v458, 127
      %v501 = vpop.permute.xlu0 %500
      %502 = vrot.lane.b32.xlu0 %v459, 127
      %v503 = vpop.permute.xlu0 %502
      %504 = vrot.lane.b32.xlu0 %v460, 127
      %v505 = vpop.permute.xlu0 %504
      %506 = vrot.lane.b32.xlu0 %v461, 127
      %v507 = vpop.permute.xlu0 %506
      %508 = vrot.lane.b32.xlu0 %v462, 127
      %v509 = vpop.permute.xlu0 %508
      %510 = vrot.lane.b32.xlu0 %v463, 127
      %v511 = vpop.permute.xlu0 %510
      %v528 = vadd.f32 %v368, %v481
      %v529 = vadd.f32 %v369, %v483
      %v530 = vadd.f32 %v370, %v485
      %v531 = vadd.f32 %v371, %v487
      %v532 = vadd.f32 %v372, %v489
      %v533 = vadd.f32 %v373, %v491
      %v534 = vadd.f32 %v374, %v493
      %v535 = vadd.f32 %v375, %v495
      %v536 = vadd.f32 %v376, %v497
      %v537 = vadd.f32 %v377, %v499
      %v538 = vadd.f32 %v378, %v501
      %v539 = vadd.f32 %v379, %v503
      %v540 = vadd.f32 %v380, %v505
      %v541 = vadd.f32 %v381, %v507
      %v542 = vadd.f32 %v382, %v509
      %v543 = vadd.f32 %v383, %v511
      %544 = vset.pattern.permute.xlu0 2
      %545 = vperm.xlu0 %544, %v272
      %v546 = vpop.permute.xlu0 %545
      %548 = vset.pattern.permute.xlu0 2
      %549 = vperm.xlu0 %548, %v273
      %v550 = vpop.permute.xlu0 %549
      %552 = vset.pattern.permute.xlu0 2
      %553 = vperm.xlu0 %552, %v274
      %v554 = vpop.permute.xlu0 %553
      %556 = vset.pattern.permute.xlu0 2
      %557 = vperm.xlu0 %556, %v275
      %v558 = vpop.permute.xlu0 %557
      %560 = vset.pattern.permute.xlu0 2
      %561 = vperm.xlu0 %560, %v276
      %v562 = vpop.permute.xlu0 %561
      %564 = vset.pattern.permute.xlu0 2
      %565 = vperm.xlu0 %564, %v277
      %v566 = vpop.permute.xlu0 %565
      %568 = vset.pattern.permute.xlu0 2
      %569 = vperm.xlu0 %568, %v278
      %v570 = vpop.permute.xlu0 %569
      %572 = vset.pattern.permute.xlu0 2
      %573 = vperm.xlu0 %572, %v279
      %v574 = vpop.permute.xlu0 %573
      %576 = vset.pattern.permute.xlu0 2
      %577 = vperm.xlu0 %576, %v280
      %v578 = vpop.permute.xlu0 %577
      %580 = vset.pattern.permute.xlu0 2
      %581 = vperm.xlu0 %580, %v281
      %v582 = vpop.permute.xlu0 %581
      %584 = vset.pattern.permute.xlu0 2
      %585 = vperm.xlu0 %584, %v282
      %v586 = vpop.permute.xlu0 %585
      %588 = vset.pattern.permute.xlu0 2
      %589 = vperm.xlu0 %588, %v283
      %v590 = vpop.permute.xlu0 %589
      %592 = vset.pattern.permute.xlu0 2
      %593 = vperm.xlu0 %592, %v284
      %v594 = vpop.permute.xlu0 %593
      %596 = vset.pattern.permute.xlu0 2
      %597 = vperm.xlu0 %596, %v285
      %v598 = vpop.permute.xlu0 %597
      %600 = vset.pattern.permute.xlu0 2
      %601 = vperm.xlu0 %600, %v286
      %v602 = vpop.permute.xlu0 %601
      %604 = vset.pattern.permute.xlu0 2
      %605 = vperm.xlu0 %604, %v287
      %v606 = vpop.permute.xlu0 %605
      %v608 = vmul.f32 %v546, %v256
      %v609 = vmul.f32 %v550, %v257
      %v610 = vmul.f32 %v554, %v258
      %v611 = vmul.f32 %v558, %v259
      %v612 = vmul.f32 %v562, %v260
      %v613 = vmul.f32 %v566, %v261
      %v614 = vmul.f32 %v570, %v262
      %v615 = vmul.f32 %v574, %v263
      %v616 = vmul.f32 %v578, %v264
      %v617 = vmul.f32 %v582, %v265
      %v618 = vmul.f32 %v586, %v266
      %v619 = vmul.f32 %v590, %v267
      %v620 = vmul.f32 %v594, %v268
      %v621 = vmul.f32 %v598, %v269
      %v622 = vmul.f32 %v602, %v270
      %v623 = vmul.f32 %v606, %v271
      %640 = vrot.lane.b32.xlu0 %v608, 126
      %v641 = vpop.permute.xlu0 %640
      %642 = vrot.lane.b32.xlu0 %v609, 126
      %v643 = vpop.permute.xlu0 %642
      %644 = vrot.lane.b32.xlu0 %v610, 126
      %v645 = vpop.permute.xlu0 %644
      %646 = vrot.lane.b32.xlu0 %v611, 126
      %v647 = vpop.permute.xlu0 %646
      %648 = vrot.lane.b32.xlu0 %v612, 126
      %v649 = vpop.permute.xlu0 %648
      %650 = vrot.lane.b32.xlu0 %v613, 126
      %v651 = vpop.permute.xlu0 %650
      %652 = vrot.lane.b32.xlu0 %v614, 126
      %v653 = vpop.permute.xlu0 %652
      %654 = vrot.lane.b32.xlu0 %v615, 126
      %v655 = vpop.permute.xlu0 %654
      %656 = vrot.lane.b32.xlu0 %v616, 126
      %v657 = vpop.permute.xlu0 %656
      %658 = vrot.lane.b32.xlu0 %v617, 126
      %v659 = vpop.permute.xlu0 %658
      %660 = vrot.lane.b32.xlu0 %v618, 126
      %v661 = vpop.permute.xlu0 %660
      %662 = vrot.lane.b32.xlu0 %v619, 126
      %v663 = vpop.permute.xlu0 %662
      %664 = vrot.lane.b32.xlu0 %v620, 126
      %v665 = vpop.permute.xlu0 %664
      %666 = vrot.lane.b32.xlu0 %v621, 126
      %v667 = vpop.permute.xlu0 %666
      %668 = vrot.lane.b32.xlu0 %v622, 126
      %v669 = vpop.permute.xlu0 %668
      %670 = vrot.lane.b32.xlu0 %v623, 126
      %v671 = vpop.permute.xlu0 %670
      %v688 = vadd.f32 %v528, %v641
      %v689 = vadd.f32 %v529, %v643
      %v690 = vadd.f32 %v530, %v645
      %v691 = vadd.f32 %v531, %v647
      %v692 = vadd.f32 %v532, %v649
      %v693 = vadd.f32 %v533, %v651
      %v694 = vadd.f32 %v534, %v653
      %v695 = vadd.f32 %v535, %v655
      %v696 = vadd.f32 %v536, %v657
      %v697 = vadd.f32 %v537, %v659
      %v698 = vadd.f32 %v538, %v661
      %v699 = vadd.f32 %v539, %v663
      %v700 = vadd.f32 %v540, %v665
      %v701 = vadd.f32 %v541, %v667
      %v702 = vadd.f32 %v542, %v669
      %v703 = vadd.f32 %v543, %v671
      %v704 = vld [vmem:[%s222 + $0x1] sm:$0xff]
      %v705 = vld [vmem:[%s222 + $0x11] sm:$0xff]
      %v706 = vld [vmem:[%s222 + $0x21] sm:$0xff]
      %v707 = vld [vmem:[%s222 + $0x31] sm:$0xff]
      %v708 = vld [vmem:[%s222 + $0x41] sm:$0xff]
      %v709 = vld [vmem:[%s222 + $0x51] sm:$0xff]
      %v710 = vld [vmem:[%s222 + $0x61] sm:$0xff]
      %v711 = vld [vmem:[%s222 + $0x71] sm:$0xff]
      %v712 = vld [vmem:[%s222 + $0x81] sm:$0xff]
      %v713 = vld [vmem:[%s222 + $0x91] sm:$0xff]
      %v714 = vld [vmem:[%s222 + $0xa1] sm:$0xff]
      %v715 = vld [vmem:[%s222 + $0xb1] sm:$0xff]
      %v716 = vld [vmem:[%s222 + $0xc1] sm:$0xff]
      %v717 = vld [vmem:[%s222 + $0xd1] sm:$0xff]
      %v718 = vld [vmem:[%s222 + $0xe1] sm:$0xff]
      %v719 = vld [vmem:[%s222 + $0xf1] sm:$0xff]
      %720 = vset.pattern.permute.xlu0 3
      %721 = vperm.xlu0 %720, %v272
      %v722 = vpop.permute.xlu0 %721
      %724 = vset.pattern.permute.xlu0 3
      %725 = vperm.xlu0 %724, %v273
      %v726 = vpop.permute.xlu0 %725
      %728 = vset.pattern.permute.xlu0 3
      %729 = vperm.xlu0 %728, %v274
      %v730 = vpop.permute.xlu0 %729
      %732 = vset.pattern.permute.xlu0 3
      %733 = vperm.xlu0 %732, %v275
      %v734 = vpop.permute.xlu0 %733
      %736 = vset.pattern.permute.xlu0 3
      %737 = vperm.xlu0 %736, %v276
      %v738 = vpop.permute.xlu0 %737
      %740 = vset.pattern.permute.xlu0 3
      %741 = vperm.xlu0 %740, %v277
      %v742 = vpop.permute.xlu0 %741
      %744 = vset.pattern.permute.xlu0 3
      %745 = vperm.xlu0 %744, %v278
      %v746 = vpop.permute.xlu0 %745
      %748 = vset.pattern.permute.xlu0 3
      %749 = vperm.xlu0 %748, %v279
      %v750 = vpop.permute.xlu0 %749
      %752 = vset.pattern.permute.xlu0 3
      %753 = vperm.xlu0 %752, %v280
      %v754 = vpop.permute.xlu0 %753
      %756 = vset.pattern.permute.xlu0 3
      %757 = vperm.xlu0 %756, %v281
      %v758 = vpop.permute.xlu0 %757
      %760 = vset.pattern.permute.xlu0 3
      %761 = vperm.xlu0 %760, %v282
      %v762 = vpop.permute.xlu0 %761
      %764 = vset.pattern.permute.xlu0 3
      %765 = vperm.xlu0 %764, %v283
      %v766 = vpop.permute.xlu0 %765
      %768 = vset.pattern.permute.xlu0 3
      %769 = vperm.xlu0 %768, %v284
      %v770 = vpop.permute.xlu0 %769
      %772 = vset.pattern.permute.xlu0 3
      %773 = vperm.xlu0 %772, %v285
      %v774 = vpop.permute.xlu0 %773
      %776 = vset.pattern.permute.xlu0 3
      %777 = vperm.xlu0 %776, %v286
      %v778 = vpop.permute.xlu0 %777
      %780 = vset.pattern.permute.xlu0 3
      %781 = vperm.xlu0 %780, %v287
      %v782 = vpop.permute.xlu0 %781
      %v784 = vmul.f32 %v722, %v704
      %v785 = vmul.f32 %v726, %v705
      %v786 = vmul.f32 %v730, %v706
      %v787 = vmul.f32 %v734, %v707
      %v788 = vmul.f32 %v738, %v708
      %v789 = vmul.f32 %v742, %v709
      %v790 = vmul.f32 %v746, %v710
      %v791 = vmul.f32 %v750, %v711
      %v792 = vmul.f32 %v754, %v712
      %v793 = vmul.f32 %v758, %v713
      %v794 = vmul.f32 %v762, %v714
      %v795 = vmul.f32 %v766, %v715
      %v796 = vmul.f32 %v770, %v716
      %v797 = vmul.f32 %v774, %v717
      %v798 = vmul.f32 %v778, %v718
      %v799 = vmul.f32 %v782, %v719
      %v800 = vadd.f32 %v688, %v784
      %v801 = vadd.f32 %v689, %v785
      %v802 = vadd.f32 %v690, %v786
      %v803 = vadd.f32 %v691, %v787
      %v804 = vadd.f32 %v692, %v788
      %v805 = vadd.f32 %v693, %v789
      %v806 = vadd.f32 %v694, %v790
      %v807 = vadd.f32 %v695, %v791
      %v808 = vadd.f32 %v696, %v792
      %v809 = vadd.f32 %v697, %v793
      %v810 = vadd.f32 %v698, %v794
      %v811 = vadd.f32 %v699, %v795
      %v812 = vadd.f32 %v700, %v796
      %v813 = vadd.f32 %v701, %v797
      %v814 = vadd.f32 %v702, %v798
      %v815 = vadd.f32 %v703, %v799
      %816 = vset.pattern.permute.xlu0 4
      %817 = vperm.xlu0 %816, %v272
      %v818 = vpop.permute.xlu0 %817
      %820 = vset.pattern.permute.xlu0 4
      %821 = vperm.xlu0 %820, %v273
      %v822 = vpop.permute.xlu0 %821
      %824 = vset.pattern.permute.xlu0 4
      %825 = vperm.xlu0 %824, %v274
      %v826 = vpop.permute.xlu0 %825
      %828 = vset.pattern.permute.xlu0 4
      %829 = vperm.xlu0 %828, %v275
      %v830 = vpop.permute.xlu0 %829
      %832 = vset.pattern.permute.xlu0 4
      %833 = vperm.xlu0 %832, %v276
      %v834 = vpop.permute.xlu0 %833
      %836 = vset.pattern.permute.xlu0 4
      %837 = vperm.xlu0 %836, %v277
      %v838 = vpop.permute.xlu0 %837
      %840 = vset.pattern.permute.xlu0 4
      %841 = vperm.xlu0 %840, %v278
      %v842 = vpop.permute.xlu0 %841
      %844 = vset.pattern.permute.xlu0 4
      %845 = vperm.xlu0 %844, %v279
      %v846 = vpop.permute.xlu0 %845
      %848 = vset.pattern.permute.xlu0 4
      %849 = vperm.xlu0 %848, %v280
      %v850 = vpop.permute.xlu0 %849
      %852 = vset.pattern.permute.xlu0 4
      %853 = vperm.xlu0 %852, %v281
      %v854 = vpop.permute.xlu0 %853
      %856 = vset.pattern.permute.xlu0 4
      %857 = vperm.xlu0 %856, %v282
      %v858 = vpop.permute.xlu0 %857
      %860 = vset.pattern.permute.xlu0 4
      %861 = vperm.xlu0 %860, %v283
      %v862 = vpop.permute.xlu0 %861
      %864 = vset.pattern.permute.xlu0 4
      %865 = vperm.xlu0 %864, %v284
      %v866 = vpop.permute.xlu0 %865
      %868 = vset.pattern.permute.xlu0 4
      %869 = vperm.xlu0 %868, %v285
      %v870 = vpop.permute.xlu0 %869
      %872 = vset.pattern.permute.xlu0 4
      %873 = vperm.xlu0 %872, %v286
      %v874 = vpop.permute.xlu0 %873
      %876 = vset.pattern.permute.xlu0 4
      %877 = vperm.xlu0 %876, %v287
      %v878 = vpop.permute.xlu0 %877
      %v880 = vmul.f32 %v818, %v704
      %v881 = vmul.f32 %v822, %v705
      %v882 = vmul.f32 %v826, %v706
      %v883 = vmul.f32 %v830, %v707
      %v884 = vmul.f32 %v834, %v708
      %v885 = vmul.f32 %v838, %v709
      %v886 = vmul.f32 %v842, %v710
      %v887 = vmul.f32 %v846, %v711
      %v888 = vmul.f32 %v850, %v712
      %v889 = vmul.f32 %v854, %v713
      %v890 = vmul.f32 %v858, %v714
      %v891 = vmul.f32 %v862, %v715
      %v892 = vmul.f32 %v866, %v716
      %v893 = vmul.f32 %v870, %v717
      %v894 = vmul.f32 %v874, %v718
      %v895 = vmul.f32 %v878, %v719
      %912 = vrot.lane.b32.xlu0 %v880, 127
      %v913 = vpop.permute.xlu0 %912
      %914 = vrot.lane.b32.xlu0 %v881, 127
      %v915 = vpop.permute.xlu0 %914
      %916 = vrot.lane.b32.xlu0 %v882, 127
      %v917 = vpop.permute.xlu0 %916
      %918 = vrot.lane.b32.xlu0 %v883, 127
      %v919 = vpop.permute.xlu0 %918
      %920 = vrot.lane.b32.xlu0 %v884, 127
      %v921 = vpop.permute.xlu0 %920
      %922 = vrot.lane.b32.xlu0 %v885, 127
      %v923 = vpop.permute.xlu0 %922
      %924 = vrot.lane.b32.xlu0 %v886, 127
      %v925 = vpop.permute.xlu0 %924
      %926 = vrot.lane.b32.xlu0 %v887, 127
      %v927 = vpop.permute.xlu0 %926
      %928 = vrot.lane.b32.xlu0 %v888, 127
      %v929 = vpop.permute.xlu0 %928
      %930 = vrot.lane.b32.xlu0 %v889, 127
      %v931 = vpop.permute.xlu0 %930
      %932 = vrot.lane.b32.xlu0 %v890, 127
      %v933 = vpop.permute.xlu0 %932
      %934 = vrot.lane.b32.xlu0 %v891, 127
      %v935 = vpop.permute.xlu0 %934
      %936 = vrot.lane.b32.xlu0 %v892, 127
      %v937 = vpop.permute.xlu0 %936
      %938 = vrot.lane.b32.xlu0 %v893, 127
      %v939 = vpop.permute.xlu0 %938
      %940 = vrot.lane.b32.xlu0 %v894, 127
      %v941 = vpop.permute.xlu0 %940
      %942 = vrot.lane.b32.xlu0 %v895, 127
      %v943 = vpop.permute.xlu0 %942
      %v960 = vadd.f32 %v800, %v913
      %v961 = vadd.f32 %v801, %v915
      %v962 = vadd.f32 %v802, %v917
      %v963 = vadd.f32 %v803, %v919
      %v964 = vadd.f32 %v804, %v921
      %v965 = vadd.f32 %v805, %v923
      %v966 = vadd.f32 %v806, %v925
      %v967 = vadd.f32 %v807, %v927
      %v968 = vadd.f32 %v808, %v929
      %v969 = vadd.f32 %v809, %v931
      %v970 = vadd.f32 %v810, %v933
      %v971 = vadd.f32 %v811, %v935
      %v972 = vadd.f32 %v812, %v937
      %v973 = vadd.f32 %v813, %v939
      %v974 = vadd.f32 %v814, %v941
      %v975 = vadd.f32 %v815, %v943
      %976 = vset.pattern.permute.xlu0 5
      %977 = vperm.xlu0 %976, %v272
      %v978 = vpop.permute.xlu0 %977
      %980 = vset.pattern.permute.xlu0 5
      %981 = vperm.xlu0 %980, %v273
      %v982 = vpop.permute.xlu0 %981
      %984 = vset.pattern.permute.xlu0 5
      %985 = vperm.xlu0 %984, %v274
      %v986 = vpop.permute.xlu0 %985
      %988 = vset.pattern.permute.xlu0 5
      %989 = vperm.xlu0 %988, %v275
      %v990 = vpop.permute.xlu0 %989
      %992 = vset.pattern.permute.xlu0 5
      %993 = vperm.xlu0 %992, %v276
      %v994 = vpop.permute.xlu0 %993
      %996 = vset.pattern.permute.xlu0 5
      %997 = vperm.xlu0 %996, %v277
      %v998 = vpop.permute.xlu0 %997
      %1000 = vset.pattern.permute.xlu0 5
      %1001 = vperm.xlu0 %1000, %v278
      %v1002 = vpop.permute.xlu0 %1001
      %1004 = vset.pattern.permute.xlu0 5
      %1005 = vperm.xlu0 %1004, %v279
      %v1006 = vpop.permute.xlu0 %1005
      %1008 = vset.pattern.permute.xlu0 5
      %1009 = vperm.xlu0 %1008, %v280
      %v1010 = vpop.permute.xlu0 %1009
      %1012 = vset.pattern.permute.xlu0 5
      %1013 = vperm.xlu0 %1012, %v281
      %v1014 = vpop.permute.xlu0 %1013
      %1016 = vset.pattern.permute.xlu0 5
      %1017 = vperm.xlu0 %1016, %v282
      %v1018 = vpop.permute.xlu0 %1017
      %1020 = vset.pattern.permute.xlu0 5
      %1021 = vperm.xlu0 %1020, %v283
      %v1022 = vpop.permute.xlu0 %1021
      %1024 = vset.pattern.permute.xlu0 5
      %1025 = vperm.xlu0 %1024, %v284
      %v1026 = vpop.permute.xlu0 %1025
      %1028 = vset.pattern.permute.xlu0 5
      %1029 = vperm.xlu0 %1028, %v285
      %v1030 = vpop.permute.xlu0 %1029
      %1032 = vset.pattern.permute.xlu0 5
      %1033 = vperm.xlu0 %1032, %v286
      %v1034 = vpop.permute.xlu0 %1033
      %1036 = vset.pattern.permute.xlu0 5
      %1037 = vperm.xlu0 %1036, %v287
      %v1038 = vpop.permute.xlu0 %1037
      %v1040 = vmul.f32 %v978, %v704
      %v1041 = vmul.f32 %v982, %v705
      %v1042 = vmul.f32 %v986, %v706
      %v1043 = vmul.f32 %v990, %v707
      %v1044 = vmul.f32 %v994, %v708
      %v1045 = vmul.f32 %v998, %v709
      %v1046 = vmul.f32 %v1002, %v710
      %v1047 = vmul.f32 %v1006, %v711
      %v1048 = vmul.f32 %v1010, %v712
      %v1049 = vmul.f32 %v1014, %v713
      %v1050 = vmul.f32 %v1018, %v714
      %v1051 = vmul.f32 %v1022, %v715
      %v1052 = vmul.f32 %v1026, %v716
      %v1053 = vmul.f32 %v1030, %v717
      %v1054 = vmul.f32 %v1034, %v718
      %v1055 = vmul.f32 %v1038, %v719
      %1072 = vrot.lane.b32.xlu0 %v1040, 126
      %v1073 = vpop.permute.xlu0 %1072
      %1074 = vrot.lane.b32.xlu0 %v1041, 126
      %v1075 = vpop.permute.xlu0 %1074
      %1076 = vrot.lane.b32.xlu0 %v1042, 126
      %v1077 = vpop.permute.xlu0 %1076
      %1078 = vrot.lane.b32.xlu0 %v1043, 126
      %v1079 = vpop.permute.xlu0 %1078
      %1080 = vrot.lane.b32.xlu0 %v1044, 126
      %v1081 = vpop.permute.xlu0 %1080
      %1082 = vrot.lane.b32.xlu0 %v1045, 126
      %v1083 = vpop.permute.xlu0 %1082
      %1084 = vrot.lane.b32.xlu0 %v1046, 126
      %v1085 = vpop.permute.xlu0 %1084
      %1086 = vrot.lane.b32.xlu0 %v1047, 126
      %v1087 = vpop.permute.xlu0 %1086
      %1088 = vrot.lane.b32.xlu0 %v1048, 126
      %v1089 = vpop.permute.xlu0 %1088
      %1090 = vrot.lane.b32.xlu0 %v1049, 126
      %v1091 = vpop.permute.xlu0 %1090
      %1092 = vrot.lane.b32.xlu0 %v1050, 126
      %v1093 = vpop.permute.xlu0 %1092
      %1094 = vrot.lane.b32.xlu0 %v1051, 126
      %v1095 = vpop.permute.xlu0 %1094
      %1096 = vrot.lane.b32.xlu0 %v1052, 126
      %v1097 = vpop.permute.xlu0 %1096
      %1098 = vrot.lane.b32.xlu0 %v1053, 126
      %v1099 = vpop.permute.xlu0 %1098
      %1100 = vrot.lane.b32.xlu0 %v1054, 126
      %v1101 = vpop.permute.xlu0 %1100
      %1102 = vrot.lane.b32.xlu0 %v1055, 126
      %v1103 = vpop.permute.xlu0 %1102
      %v1120 = vadd.f32 %v960, %v1073
      %v1121 = vadd.f32 %v961, %v1075
      %v1122 = vadd.f32 %v962, %v1077
      %v1123 = vadd.f32 %v963, %v1079
      %v1124 = vadd.f32 %v964, %v1081
      %v1125 = vadd.f32 %v965, %v1083
      %v1126 = vadd.f32 %v966, %v1085
      %v1127 = vadd.f32 %v967, %v1087
      %v1128 = vadd.f32 %v968, %v1089
      %v1129 = vadd.f32 %v969, %v1091
      %v1130 = vadd.f32 %v970, %v1093
      %v1131 = vadd.f32 %v971, %v1095
      %v1132 = vadd.f32 %v972, %v1097
      %v1133 = vadd.f32 %v973, %v1099
      %v1134 = vadd.f32 %v974, %v1101
      %v1135 = vadd.f32 %v975, %v1103
      %v1136 = vld [vmem:[%s222 + $0x2] sm:$0xff]
      %v1137 = vld [vmem:[%s222 + $0x12] sm:$0xff]
      %v1138 = vld [vmem:[%s222 + $0x22] sm:$0xff]
      %v1139 = vld [vmem:[%s222 + $0x32] sm:$0xff]
      %v1140 = vld [vmem:[%s222 + $0x42] sm:$0xff]
      %v1141 = vld [vmem:[%s222 + $0x52] sm:$0xff]
      %v1142 = vld [vmem:[%s222 + $0x62] sm:$0xff]
      %v1143 = vld [vmem:[%s222 + $0x72] sm:$0xff]
      %v1144 = vld [vmem:[%s222 + $0x82] sm:$0xff]
      %v1145 = vld [vmem:[%s222 + $0x92] sm:$0xff]
      %v1146 = vld [vmem:[%s222 + $0xa2] sm:$0xff]
      %v1147 = vld [vmem:[%s222 + $0xb2] sm:$0xff]
      %v1148 = vld [vmem:[%s222 + $0xc2] sm:$0xff]
      %v1149 = vld [vmem:[%s222 + $0xd2] sm:$0xff]
      %v1150 = vld [vmem:[%s222 + $0xe2] sm:$0xff]
      %v1151 = vld [vmem:[%s222 + $0xf2] sm:$0xff]
      %1152 = vset.pattern.permute.xlu0 6
      %1153 = vperm.xlu0 %1152, %v272
      %v1154 = vpop.permute.xlu0 %1153
      %1156 = vset.pattern.permute.xlu0 6
      %1157 = vperm.xlu0 %1156, %v273
      %v1158 = vpop.permute.xlu0 %1157
      %1160 = vset.pattern.permute.xlu0 6
      %1161 = vperm.xlu0 %1160, %v274
      %v1162 = vpop.permute.xlu0 %1161
      %1164 = vset.pattern.permute.xlu0 6
      %1165 = vperm.xlu0 %1164, %v275
      %v1166 = vpop.permute.xlu0 %1165
      %1168 = vset.pattern.permute.xlu0 6
      %1169 = vperm.xlu0 %1168, %v276
      %v1170 = vpop.permute.xlu0 %1169
      %1172 = vset.pattern.permute.xlu0 6
      %1173 = vperm.xlu0 %1172, %v277
      %v1174 = vpop.permute.xlu0 %1173
      %1176 = vset.pattern.permute.xlu0 6
      %1177 = vperm.xlu0 %1176, %v278
      %v1178 = vpop.permute.xlu0 %1177
      %1180 = vset.pattern.permute.xlu0 6
      %1181 = vperm.xlu0 %1180, %v279
      %v1182 = vpop.permute.xlu0 %1181
      %1184 = vset.pattern.permute.xlu0 6
      %1185 = vperm.xlu0 %1184, %v280
      %v1186 = vpop.permute.xlu0 %1185
      %1188 = vset.pattern.permute.xlu0 6
      %1189 = vperm.xlu0 %1188, %v281
      %v1190 = vpop.permute.xlu0 %1189
      %1192 = vset.pattern.permute.xlu0 6
      %1193 = vperm.xlu0 %1192, %v282
      %v1194 = vpop.permute.xlu0 %1193
      %1196 = vset.pattern.permute.xlu0 6
      %1197 = vperm.xlu0 %1196, %v283
      %v1198 = vpop.permute.xlu0 %1197
      %1200 = vset.pattern.permute.xlu0 6
      %1201 = vperm.xlu0 %1200, %v284
      %v1202 = vpop.permute.xlu0 %1201
      %1204 = vset.pattern.permute.xlu0 6
      %1205 = vperm.xlu0 %1204, %v285
      %v1206 = vpop.permute.xlu0 %1205
      %1208 = vset.pattern.permute.xlu0 6
      %1209 = vperm.xlu0 %1208, %v286
      %v1210 = vpop.permute.xlu0 %1209
      %1212 = vset.pattern.permute.xlu0 6
      %1213 = vperm.xlu0 %1212, %v287
      %v1214 = vpop.permute.xlu0 %1213
      %v1216 = vmul.f32 %v1154, %v1136
      %v1217 = vmul.f32 %v1158, %v1137
      %v1218 = vmul.f32 %v1162, %v1138
      %v1219 = vmul.f32 %v1166, %v1139
      %v1220 = vmul.f32 %v1170, %v1140
      %v1221 = vmul.f32 %v1174, %v1141
      %v1222 = vmul.f32 %v1178, %v1142
      %v1223 = vmul.f32 %v1182, %v1143
      %v1224 = vmul.f32 %v1186, %v1144
      %v1225 = vmul.f32 %v1190, %v1145
      %v1226 = vmul.f32 %v1194, %v1146
      %v1227 = vmul.f32 %v1198, %v1147
      %v1228 = vmul.f32 %v1202, %v1148
      %v1229 = vmul.f32 %v1206, %v1149
      %v1230 = vmul.f32 %v1210, %v1150
      %v1231 = vmul.f32 %v1214, %v1151
      %v1232 = vadd.f32 %v1120, %v1216
      %v1233 = vadd.f32 %v1121, %v1217
      %v1234 = vadd.f32 %v1122, %v1218
      %v1235 = vadd.f32 %v1123, %v1219
      %v1236 = vadd.f32 %v1124, %v1220
      %v1237 = vadd.f32 %v1125, %v1221
      %v1238 = vadd.f32 %v1126, %v1222
      %v1239 = vadd.f32 %v1127, %v1223
      %v1240 = vadd.f32 %v1128, %v1224
      %v1241 = vadd.f32 %v1129, %v1225
      %v1242 = vadd.f32 %v1130, %v1226
      %v1243 = vadd.f32 %v1131, %v1227
      %v1244 = vadd.f32 %v1132, %v1228
      %v1245 = vadd.f32 %v1133, %v1229
      %v1246 = vadd.f32 %v1134, %v1230
      %v1247 = vadd.f32 %v1135, %v1231
      %1248 = vset.pattern.permute.xlu0 7
      %1249 = vperm.xlu0 %1248, %v272
      %v1250 = vpop.permute.xlu0 %1249
      %1252 = vset.pattern.permute.xlu0 7
      %1253 = vperm.xlu0 %1252, %v273
      %v1254 = vpop.permute.xlu0 %1253
      %1256 = vset.pattern.permute.xlu0 7
      %1257 = vperm.xlu0 %1256, %v274
      %v1258 = vpop.permute.xlu0 %1257
      %1260 = vset.pattern.permute.xlu0 7
      %1261 = vperm.xlu0 %1260, %v275
      %v1262 = vpop.permute.xlu0 %1261
      %1264 = vset.pattern.permute.xlu0 7
      %1265 = vperm.xlu0 %1264, %v276
      %v1266 = vpop.permute.xlu0 %1265
      %1268 = vset.pattern.permute.xlu0 7
      %1269 = vperm.xlu0 %1268, %v277
      %v1270 = vpop.permute.xlu0 %1269
      %1272 = vset.pattern.permute.xlu0 7
      %1273 = vperm.xlu0 %1272, %v278
      %v1274 = vpop.permute.xlu0 %1273
      %1276 = vset.pattern.permute.xlu0 7
      %1277 = vperm.xlu0 %1276, %v279
      %v1278 = vpop.permute.xlu0 %1277
      %1280 = vset.pattern.permute.xlu0 7
      %1281 = vperm.xlu0 %1280, %v280
      %v1282 = vpop.permute.xlu0 %1281
      %1284 = vset.pattern.permute.xlu0 7
      %1285 = vperm.xlu0 %1284, %v281
      %v1286 = vpop.permute.xlu0 %1285
      %1288 = vset.pattern.permute.xlu0 7
      %1289 = vperm.xlu0 %1288, %v282
      %v1290 = vpop.permute.xlu0 %1289
      %1292 = vset.pattern.permute.xlu0 7
      %1293 = vperm.xlu0 %1292, %v283
      %v1294 = vpop.permute.xlu0 %1293
      %1296 = vset.pattern.permute.xlu0 7
      %1297 = vperm.xlu0 %1296, %v284
      %v1298 = vpop.permute.xlu0 %1297
      %1300 = vset.pattern.permute.xlu0 7
      %1301 = vperm.xlu0 %1300, %v285
      %v1302 = vpop.permute.xlu0 %1301
      %1304 = vset.pattern.permute.xlu0 7
      %1305 = vperm.xlu0 %1304, %v286
      %v1306 = vpop.permute.xlu0 %1305
      %1308 = vset.pattern.permute.xlu0 7
      %1309 = vperm.xlu0 %1308, %v287
      %v1310 = vpop.permute.xlu0 %1309
      %v1312 = vmul.f32 %v1250, %v1136
      %v1313 = vmul.f32 %v1254, %v1137
      %v1314 = vmul.f32 %v1258, %v1138
      %v1315 = vmul.f32 %v1262, %v1139
      %v1316 = vmul.f32 %v1266, %v1140
      %v1317 = vmul.f32 %v1270, %v1141
      %v1318 = vmul.f32 %v1274, %v1142
      %v1319 = vmul.f32 %v1278, %v1143
      %v1320 = vmul.f32 %v1282, %v1144
      %v1321 = vmul.f32 %v1286, %v1145
      %v1322 = vmul.f32 %v1290, %v1146
      %v1323 = vmul.f32 %v1294, %v1147
      %v1324 = vmul.f32 %v1298, %v1148
      %v1325 = vmul.f32 %v1302, %v1149
      %v1326 = vmul.f32 %v1306, %v1150
      %v1327 = vmul.f32 %v1310, %v1151
      %1344 = vrot.lane.b32.xlu0 %v1312, 127
      %v1345 = vpop.permute.xlu0 %1344
      %1346 = vrot.lane.b32.xlu0 %v1313, 127
      %v1347 = vpop.permute.xlu0 %1346
      %1348 = vrot.lane.b32.xlu0 %v1314, 127
      %v1349 = vpop.permute.xlu0 %1348
      %1350 = vrot.lane.b32.xlu0 %v1315, 127
      %v1351 = vpop.permute.xlu0 %1350
      %1352 = vrot.lane.b32.xlu0 %v1316, 127
      %v1353 = vpop.permute.xlu0 %1352
      %1354 = vrot.lane.b32.xlu0 %v1317, 127
      %v1355 = vpop.permute.xlu0 %1354
      %1356 = vrot.lane.b32.xlu0 %v1318, 127
      %v1357 = vpop.permute.xlu0 %1356
      %1358 = vrot.lane.b32.xlu0 %v1319, 127
      %v1359 = vpop.permute.xlu0 %1358
      %1360 = vrot.lane.b32.xlu0 %v1320, 127
      %v1361 = vpop.permute.xlu0 %1360
      %1362 = vrot.lane.b32.xlu0 %v1321, 127
      %v1363 = vpop.permute.xlu0 %1362
      %1364 = vrot.lane.b32.xlu0 %v1322, 127
      %v1365 = vpop.permute.xlu0 %1364
      %1366 = vrot.lane.b32.xlu0 %v1323, 127
      %v1367 = vpop.permute.xlu0 %1366
      %1368 = vrot.lane.b32.xlu0 %v1324, 127
      %v1369 = vpop.permute.xlu0 %1368
      %1370 = vrot.lane.b32.xlu0 %v1325, 127
      %v1371 = vpop.permute.xlu0 %1370
      %1372 = vrot.lane.b32.xlu0 %v1326, 127
      %v1373 = vpop.permute.xlu0 %1372
      %1374 = vrot.lane.b32.xlu0 %v1327, 127
      %v1375 = vpop.permute.xlu0 %1374
      %v1392 = vadd.f32 %v1232, %v1345
      %v1393 = vadd.f32 %v1233, %v1347
      %v1394 = vadd.f32 %v1234, %v1349
      %v1395 = vadd.f32 %v1235, %v1351
      %v1396 = vadd.f32 %v1236, %v1353
      %v1397 = vadd.f32 %v1237, %v1355
      %v1398 = vadd.f32 %v1238, %v1357
      %v1399 = vadd.f32 %v1239, %v1359
      %v1400 = vadd.f32 %v1240, %v1361
      %v1401 = vadd.f32 %v1241, %v1363
      %v1402 = vadd.f32 %v1242, %v1365
      %v1403 = vadd.f32 %v1243, %v1367
      %v1404 = vadd.f32 %v1244, %v1369
      %v1405 = vadd.f32 %v1245, %v1371
      %v1406 = vadd.f32 %v1246, %v1373
      %v1407 = vadd.f32 %v1247, %v1375
      %1408 = vset.pattern.permute.xlu0 8
      %1409 = vperm.xlu0 %1408, %v272
      %v1410 = vpop.permute.xlu0 %1409
      %1412 = vset.pattern.permute.xlu0 8
      %1413 = vperm.xlu0 %1412, %v273
      %v1414 = vpop.permute.xlu0 %1413
      %1416 = vset.pattern.permute.xlu0 8
      %1417 = vperm.xlu0 %1416, %v274
      %v1418 = vpop.permute.xlu0 %1417
      %1420 = vset.pattern.permute.xlu0 8
      %1421 = vperm.xlu0 %1420, %v275
      %v1422 = vpop.permute.xlu0 %1421
      %1424 = vset.pattern.permute.xlu0 8
      %1425 = vperm.xlu0 %1424, %v276
      %v1426 = vpop.permute.xlu0 %1425
      %1428 = vset.pattern.permute.xlu0 8
      %1429 = vperm.xlu0 %1428, %v277
      %v1430 = vpop.permute.xlu0 %1429
      %1432 = vset.pattern.permute.xlu0 8
      %1433 = vperm.xlu0 %1432, %v278
      %v1434 = vpop.permute.xlu0 %1433
      %1436 = vset.pattern.permute.xlu0 8
      %1437 = vperm.xlu0 %1436, %v279
      %v1438 = vpop.permute.xlu0 %1437
      %1440 = vset.pattern.permute.xlu0 8
      %1441 = vperm.xlu0 %1440, %v280
      %v1442 = vpop.permute.xlu0 %1441
      %1444 = vset.pattern.permute.xlu0 8
      %1445 = vperm.xlu0 %1444, %v281
      %v1446 = vpop.permute.xlu0 %1445
      %1448 = vset.pattern.permute.xlu0 8
      %1449 = vperm.xlu0 %1448, %v282
      %v1450 = vpop.permute.xlu0 %1449
      %1452 = vset.pattern.permute.xlu0 8
      %1453 = vperm.xlu0 %1452, %v283
      %v1454 = vpop.permute.xlu0 %1453
      %1456 = vset.pattern.permute.xlu0 8
      %1457 = vperm.xlu0 %1456, %v284
      %v1458 = vpop.permute.xlu0 %1457
      %1460 = vset.pattern.permute.xlu0 8
      %1461 = vperm.xlu0 %1460, %v285
      %v1462 = vpop.permute.xlu0 %1461
      %1464 = vset.pattern.permute.xlu0 8
      %1465 = vperm.xlu0 %1464, %v286
      %v1466 = vpop.permute.xlu0 %1465
      %1468 = vset.pattern.permute.xlu0 8
      %1469 = vperm.xlu0 %1468, %v287
      %v1470 = vpop.permute.xlu0 %1469
      %v1472 = vmul.f32 %v1410, %v1136
      %v1473 = vmul.f32 %v1414, %v1137
      %v1474 = vmul.f32 %v1418, %v1138
      %v1475 = vmul.f32 %v1422, %v1139
      %v1476 = vmul.f32 %v1426, %v1140
      %v1477 = vmul.f32 %v1430, %v1141
      %v1478 = vmul.f32 %v1434, %v1142
      %v1479 = vmul.f32 %v1438, %v1143
      %v1480 = vmul.f32 %v1442, %v1144
      %v1481 = vmul.f32 %v1446, %v1145
      %v1482 = vmul.f32 %v1450, %v1146
      %v1483 = vmul.f32 %v1454, %v1147
      %v1484 = vmul.f32 %v1458, %v1148
      %v1485 = vmul.f32 %v1462, %v1149
      %v1486 = vmul.f32 %v1466, %v1150
      %v1487 = vmul.f32 %v1470, %v1151
      %1504 = vrot.lane.b32.xlu0 %v1472, 126
      %v1505 = vpop.permute.xlu0 %1504
      %1506 = vrot.lane.b32.xlu0 %v1473, 126
      %v1507 = vpop.permute.xlu0 %1506
      %1508 = vrot.lane.b32.xlu0 %v1474, 126
      %v1509 = vpop.permute.xlu0 %1508
      %1510 = vrot.lane.b32.xlu0 %v1475, 126
      %v1511 = vpop.permute.xlu0 %1510
      %1512 = vrot.lane.b32.xlu0 %v1476, 126
      %v1513 = vpop.permute.xlu0 %1512
      %1514 = vrot.lane.b32.xlu0 %v1477, 126
      %v1515 = vpop.permute.xlu0 %1514
      %1516 = vrot.lane.b32.xlu0 %v1478, 126
      %v1517 = vpop.permute.xlu0 %1516
      %1518 = vrot.lane.b32.xlu0 %v1479, 126
      %v1519 = vpop.permute.xlu0 %1518
      %1520 = vrot.lane.b32.xlu0 %v1480, 126
      %v1521 = vpop.permute.xlu0 %1520
      %1522 = vrot.lane.b32.xlu0 %v1481, 126
      %v1523 = vpop.permute.xlu0 %1522
      %1524 = vrot.lane.b32.xlu0 %v1482, 126
      %v1525 = vpop.permute.xlu0 %1524
      %1526 = vrot.lane.b32.xlu0 %v1483, 126
      %v1527 = vpop.permute.xlu0 %1526
      %1528 = vrot.lane.b32.xlu0 %v1484, 126
      %v1529 = vpop.permute.xlu0 %1528
      %1530 = vrot.lane.b32.xlu0 %v1485, 126
      %v1531 = vpop.permute.xlu0 %1530
      %1532 = vrot.lane.b32.xlu0 %v1486, 126
      %v1533 = vpop.permute.xlu0 %1532
      %1534 = vrot.lane.b32.xlu0 %v1487, 126
      %v1535 = vpop.permute.xlu0 %1534
      %v1552 = vadd.f32 %v1392, %v1505
      %v1553 = vadd.f32 %v1393, %v1507
      %v1554 = vadd.f32 %v1394, %v1509
      %v1555 = vadd.f32 %v1395, %v1511
      %v1556 = vadd.f32 %v1396, %v1513
      %v1557 = vadd.f32 %v1397, %v1515
      %v1558 = vadd.f32 %v1398, %v1517
      %v1559 = vadd.f32 %v1399, %v1519
      %v1560 = vadd.f32 %v1400, %v1521
      %v1561 = vadd.f32 %v1401, %v1523
      %v1562 = vadd.f32 %v1402, %v1525
      %v1563 = vadd.f32 %v1403, %v1527
      %v1564 = vadd.f32 %v1404, %v1529
      %v1565 = vadd.f32 %v1405, %v1531
      %v1566 = vadd.f32 %v1406, %v1533
      %v1567 = vadd.f32 %v1407, %v1535
      %v1568 = vld [vmem:[%s227] sm:$0xff]
      %v1569 = vld [vmem:[%s227 + $0x8] sm:$0xff]
      %v1570 = vld [vmem:[%s227 + $0x10] sm:$0xff]
      %v1571 = vld [vmem:[%s227 + $0x18] sm:$0xff]
      %v1572 = vld [vmem:[%s227 + $0x20] sm:$0xff]
      %v1573 = vld [vmem:[%s227 + $0x28] sm:$0xff]
      %v1574 = vld [vmem:[%s227 + $0x30] sm:$0xff]
      %v1575 = vld [vmem:[%s227 + $0x38] sm:$0xff]
      %v1576 = vld [vmem:[%s227 + $0x40] sm:$0xff]
      %v1577 = vld [vmem:[%s227 + $0x48] sm:$0xff]
      %v1578 = vld [vmem:[%s227 + $0x50] sm:$0xff]
      %v1579 = vld [vmem:[%s227 + $0x58] sm:$0xff]
      %v1580 = vld [vmem:[%s227 + $0x60] sm:$0xff]
      %v1581 = vld [vmem:[%s227 + $0x68] sm:$0xff]
      %v1582 = vld [vmem:[%s227 + $0x70] sm:$0xff]
      %v1583 = vld [vmem:[%s227 + $0x78] sm:$0xff]
      %v1584 = vadd.f32 %v1552, %v1568
      %v1585 = vadd.f32 %v1553, %v1569
      %v1586 = vadd.f32 %v1554, %v1570
      %v1587 = vadd.f32 %v1555, %v1571
      %v1588 = vadd.f32 %v1556, %v1572
      %v1589 = vadd.f32 %v1557, %v1573
      %v1590 = vadd.f32 %v1558, %v1574
      %v1591 = vadd.f32 %v1559, %v1575
      %v1592 = vadd.f32 %v1560, %v1576
      %v1593 = vadd.f32 %v1561, %v1577
      %v1594 = vadd.f32 %v1562, %v1578
      %v1595 = vadd.f32 %v1563, %v1579
      %v1596 = vadd.f32 %v1564, %v1580
      %v1597 = vadd.f32 %v1565, %v1581
      %v1598 = vadd.f32 %v1566, %v1582
      %v1599 = vadd.f32 %v1567, %v1583
      %v1600 = vld [vmem:[%s232] sm:$0xff]
      %v1601 = vld [vmem:[%s232 + $0x8] sm:$0xff]
      %v1602 = vld [vmem:[%s232 + $0x10] sm:$0xff]
      %v1603 = vld [vmem:[%s232 + $0x18] sm:$0xff]
      %v1604 = vld [vmem:[%s232 + $0x20] sm:$0xff]
      %v1605 = vld [vmem:[%s232 + $0x28] sm:$0xff]
      %v1606 = vld [vmem:[%s232 + $0x30] sm:$0xff]
      %v1607 = vld [vmem:[%s232 + $0x38] sm:$0xff]
      %v1608 = vld [vmem:[%s232 + $0x40] sm:$0xff]
      %v1609 = vld [vmem:[%s232 + $0x48] sm:$0xff]
      %v1610 = vld [vmem:[%s232 + $0x50] sm:$0xff]
      %v1611 = vld [vmem:[%s232 + $0x58] sm:$0xff]
      %v1612 = vld [vmem:[%s232 + $0x60] sm:$0xff]
      %v1613 = vld [vmem:[%s232 + $0x68] sm:$0xff]
      %v1614 = vld [vmem:[%s232 + $0x70] sm:$0xff]
      %v1615 = vld [vmem:[%s232 + $0x78] sm:$0xff]
      %v1616 = vadd.f32 %v1584, %v1600
      %v1617 = vadd.f32 %v1585, %v1601
      %v1618 = vadd.f32 %v1586, %v1602
      %v1619 = vadd.f32 %v1587, %v1603
      %v1620 = vadd.f32 %v1588, %v1604
      %v1621 = vadd.f32 %v1589, %v1605
      %v1622 = vadd.f32 %v1590, %v1606
      %v1623 = vadd.f32 %v1591, %v1607
      %v1624 = vadd.f32 %v1592, %v1608
      %v1625 = vadd.f32 %v1593, %v1609
      %v1626 = vadd.f32 %v1594, %v1610
      %v1627 = vadd.f32 %v1595, %v1611
      %v1628 = vadd.f32 %v1596, %v1612
      %v1629 = vadd.f32 %v1597, %v1613
      %v1630 = vadd.f32 %v1598, %v1614
      %v1631 = vadd.f32 %v1599, %v1615
      %vm1632 = vcmask 64512
      %1633 = vst.msk [vmem:[%s237] sm:$0xff] %vm1632, %v1616
      %1634 = vst.msk [vmem:[%s237 + $0x8] sm:$0xff] %vm1632, %v1617
      %1635 = vst.msk [vmem:[%s237 + $0x10] sm:$0xff] %vm1632, %v1618
      %1636 = vst.msk [vmem:[%s237 + $0x18] sm:$0xff] %vm1632, %v1619
      %1637 = vst.msk [vmem:[%s237 + $0x20] sm:$0xff] %vm1632, %v1620
      %1638 = vst.msk [vmem:[%s237 + $0x28] sm:$0xff] %vm1632, %v1621
      %1639 = vst.msk [vmem:[%s237 + $0x30] sm:$0xff] %vm1632, %v1622
      %1640 = vst.msk [vmem:[%s237 + $0x38] sm:$0xff] %vm1632, %v1623
      %1641 = vst.msk [vmem:[%s237 + $0x40] sm:$0xff] %vm1632, %v1624
      %1642 = vst.msk [vmem:[%s237 + $0x48] sm:$0xff] %vm1632, %v1625
      %1643 = vst.msk [vmem:[%s237 + $0x50] sm:$0xff] %vm1632, %v1626
      %1644 = vst.msk [vmem:[%s237 + $0x58] sm:$0xff] %vm1632, %v1627
      %1645 = vst.msk [vmem:[%s237 + $0x60] sm:$0xff] %vm1632, %v1628
      %1646 = vst.msk [vmem:[%s237 + $0x68] sm:$0xff] %vm1632, %v1629
      %1647 = vst.msk [vmem:[%s237 + $0x70] sm:$0xff] %vm1632, %v1630
      %1648 = vst.msk [vmem:[%s237 + $0x78] sm:$0xff] %vm1632, %v1631
      %p1649 = scmp.lt.s32.totalorder %s15, 1
      %s1650 = scalar_select %p1649, %s15, 1
      %s1651 = smul.addr %s1650, 16
      %s1652 = smul.addr %s1651, 8
      %s1653 = scalar_lea.vmem %s4, %s1652
      // Predicated region
      $region37: #{mlsif_forward.8} parent=35 // pred_check
        %p1654 = pneg %p132
      $region38: #{mlsif_forward.8} parent=35 // pred_check_branch
        %1656 = sbr.rel (%p1654) target = $region40
      $region39: #{mlsif_forward.8} parent=35 // pred_region
        _
      $region40: #{mlsif_forward.8} parent=35 // pred_fallthru
        _
    $region36: #{mlsif_forward.8} parent=5 // pred_fallthru
      _
    %p1657 = scmp.le.s32.totalorder 2, %s10
    // Predicated region
    $region41: #{mlsif_forward.8} parent=5 // pred_check
      %p1658 = pneg %p1657
    $region42: #{mlsif_forward.8} parent=5 // pred_check_branch
      %1660 = sbr.rel (%p1658) target = $region44
    $region43: #{mlsif_forward.8} parent=5 // pred_region
      %s1661 = ssub.s32 %s10, 2
      // Predicated region
      $region45: #{mlsif_forward.8} parent=43 // pred_check
        %p1662 = pneg %p138
      $region46: #{mlsif_forward.8} parent=43 // pred_check_branch
        %1664 = sbr.rel (%p1662) target = $region48
      $region47: #{mlsif_forward.8} parent=43 // pred_region
        %p1665 = scmp.lt.s32.totalorder %s16, 1
        %s1666 = scalar_select %p1665, %s16, 1
        %s1667 = smul.addr %s1666, 16
        %s1668 = smul.addr %s1667, 8
        %s1669 = scalar_lea.vmem %s4, %s1668
      $region48: #{mlsif_forward.8} parent=43 // pred_fallthru
        _
    $region44: #{mlsif_forward.8} parent=5 // pred_fallthru
      _
  $region6: #{mlsif_forward.8} parent=0 // loop_footer
    %s14 = sadd.s32 1, %s10
  $region7: #{mlsif_forward.8} parent=0 // loop_footer_branch
    %9 = sbr.rel target = $region3
  $region8: #{mlsif_forward.8} parent=0 // loop_exit
    _

// kernel: mlsif_forward.7
$region0: #{mlsif_forward.7}
  #allocation0 [shape = 'u32[]', space=smem, size = 0x4, offset = 0x4, fixed_abs, tag = 'smem constant byte address 0x4 - core index']
  #allocation1 [shape = 'u32[72,128]{1,0:T(1,128)}', space=vmem, size = 0x9000, scoped, tag = 'internal scratch']
  %s0 = inlined_call_operand.vmem [shape: f32[2,16,10,10], index: 0, kind: input, shape index: {}]
  %s1 = inlined_call_operand.vmem [shape: f32[16,9], index: 1, kind: input, shape index: {}]
  %s2 = inlined_call_operand.vmem [shape: f32[2,16,8,8], index: 2, kind: output, shape index: {}]
  %s3 = sld [smem:[#allocation0]]
  $region41: #{mlsif_forward.7} parent=0
    _
  %s5 = ssub.s32 1, %s3
  %s6 = scalar_select 0, %s5, %s3
  loop: start=0, step=1, limit=4
  $region2: #{mlsif_forward.7} parent=0 // loop_pre_header
    _
  $region3: #{mlsif_forward.7} parent=0 // loop_header
    %s8 = sphi 0, %s12
    %p9 = scmp.ge.s32.totalorder %s8, 4
    %s18 = sphi 0, %s20
    %s21 = sphi 0, %s18
    %s22 = sphi 0, %s21
    %s38 = sphi 0, %s22
    %s42 = sphi 0, %s42
    %s44 = sphi 0, %s42
    %s45 = sphi 0, %s44
    %s59 = sphi 0, %s45
    %s65 = sphi 0, %s67
    %s68 = sphi 0, %s65
    %s69 = sphi 0, %s68
    %s85 = sphi 0, %s69
  $region4: #{mlsif_forward.7} parent=0 // loop_header_branch
    %11 = sbr.rel (%p9) target = $region8
  $region5: #{mlsif_forward.7} parent=0 // loop_body
    %s13 = ssub.s32 %s8, 1
    %s14 = ssub.s32 %s8, 2
    %s15 = sadd.s32 %s8, 1
    %s16 = ssub.s32 %s8, %s15
    %p17 = scmp.eq.s32.totalorder %s16, 0
    %s19 = sadd.s32 %s18, 1
    %s20 = scalar_select %p17, %s18, %s19
    %p23 = pneg %p17
    %p24 = scmp.eq.s32.totalorder %s8, 1
    %p25 = por %p23, %p24
    %p26 = scmp.ne.s32.totalorder %s18, %s21
    %p27 = scmp.eq.s32.totalorder %s8, 0
    %p28 = por %p26, %p27
    %p29 = scmp.ne.s32.totalorder %s18, %s21
    %p30 = scmp.eq.s32.totalorder %s13, 1
    %p31 = por %p29, %p30
    %p32 = scmp.ne.s32.totalorder %s21, %s22
    %p33 = scmp.eq.s32.totalorder %s13, 0
    %p34 = por %p32, %p33
    %p35 = scmp.ne.s32.totalorder %s21, %s22
    %p36 = scmp.eq.s32.totalorder %s14, 1
    %p37 = por %p35, %p36
    %p39 = scmp.ne.s32.totalorder %s22, %s38
    %p40 = scmp.eq.s32.totalorder %s14, 0
    %p41 = por %p39, %p40
    %s43 = sadd.s32 %s42, 1
    %p46 = scmp.eq.s32.totalorder %s8, 1
    %p47 = scmp.ne.s32.totalorder %s42, %s44
    %p48 = scmp.eq.s32.totalorder %s8, 0
    %p49 = por %p47, %p48
    %p50 = scmp.ne.s32.totalorder %s42, %s44
    %p51 = scmp.eq.s32.totalorder %s13, 1
    %p52 = por %p50, %p51
    %p53 = scmp.ne.s32.totalorder %s44, %s45
    %p54 = scmp.eq.s32.totalorder %s13, 0
    %p55 = por %p53, %p54
    %p56 = scmp.ne.s32.totalorder %s44, %s45
    %p57 = scmp.eq.s32.totalorder %s14, 1
    %p58 = por %p56, %p57
    %p60 = scmp.ne.s32.totalorder %s45, %s59
    %p61 = scmp.eq.s32.totalorder %s14, 0
    %p62 = por %p60, %p61
    %s63 = ssub.s32 %s8, %s15
    %p64 = scmp.eq.s32.totalorder %s63, 0
    %s66 = sadd.s32 %s65, 1
    %s67 = scalar_select %p64, %s65, %s66
    %p70 = pneg %p64
    %p71 = scmp.eq.s32.totalorder %s8, 1
    %p72 = por %p70, %p71
    %p73 = scmp.ne.s32.totalorder %s65, %s68
    %p74 = scmp.eq.s32.totalorder %s8, 0
    %p75 = por %p73, %p74
    %p76 = scmp.ne.s32.totalorder %s65, %s68
    %p77 = scmp.eq.s32.totalorder %s13, 1
    %p78 = por %p76, %p77
    %p79 = scmp.ne.s32.totalorder %s68, %s69
    %p80 = scmp.eq.s32.totalorder %s13, 0
    %p81 = por %p79, %p80
    %p82 = scmp.ne.s32.totalorder %s68, %s69
    %p83 = scmp.eq.s32.totalorder %s14, 1
    %p84 = por %p82, %p83
    %p86 = scmp.ne.s32.totalorder %s69, %s85
    %p87 = scmp.eq.s32.totalorder %s14, 0
    %p88 = por %p86, %p87
    %p89 = scmp.le.s32.totalorder 1, %s8
    %p90 = scmp.lt.s32.totalorder %s8, 3
    %p91 = pnand %p89, %p90
    %p92 = pneg %p91
    // Predicated region
    $region9: #{mlsif_forward.7} parent=5 // pred_check
      _
    $region10: #{mlsif_forward.7} parent=5 // pred_check_branch
      %94 = sbr.rel (%p91) target = $region12
    $region11: #{mlsif_forward.7} parent=5 // pred_region
      %s95 = ssub.s32 %s8, 1
      // Predicated region
      $region13: #{mlsif_forward.7} parent=11 // pred_check
        %p96 = pneg %p55
      $region14: #{mlsif_forward.7} parent=11 // pred_check_branch
        %98 = sbr.rel (%p96) target = $region16
      $region15: #{mlsif_forward.7} parent=11 // pred_region
        _
      $region16: #{mlsif_forward.7} parent=11 // pred_fallthru
        _
    $region12: #{mlsif_forward.7} parent=5 // pred_fallthru
      _
    %p99 = scmp.lt.s32.totalorder %s8, 2
    // Predicated region
    $region17: #{mlsif_forward.7} parent=5 // pred_check
      %p100 = pneg %p99
    $region18: #{mlsif_forward.7} parent=5 // pred_check_branch
      %102 = sbr.rel (%p100) target = $region20
    $region19: #{mlsif_forward.7} parent=5 // pred_region
      // Predicated region
      $region21: #{mlsif_forward.7} parent=19 // pred_check
        %p103 = pneg %p28
      $region22: #{mlsif_forward.7} parent=19 // pred_check_branch
        %105 = sbr.rel (%p103) target = $region24
      $region23: #{mlsif_forward.7} parent=19 // pred_region
        %p106 = scmp.lt.s32.totalorder %s8, 1
        %s107 = scalar_select %p106, %s8, 1
        %s108 = smul.addr %s107, 32
        %s109 = smul.addr %s108, 8
        %s110 = scalar_lea.vmem %s0, %s109
      $region24: #{mlsif_forward.7} parent=19 // pred_fallthru
        _
    $region20: #{mlsif_forward.7} parent=5 // pred_fallthru
      _
    %p111 = scmp.le.s32.totalorder 1, %s8
    %p112 = scmp.lt.s32.totalorder %s8, 3
    %p113 = pnand %p111, %p112
    %p114 = pneg %p113
    // Predicated region
    $region25: #{mlsif_forward.7} parent=5 // pred_check
      _
    $region26: #{mlsif_forward.7} parent=5 // pred_check_branch
      %116 = sbr.rel (%p113) target = $region28
    $region27: #{mlsif_forward.7} parent=5 // pred_region
      %s117 = ssub.s32 %s8, 1
      %p118 = scmp.lt.s32.totalorder %s13, 1
      %s119 = scalar_select %p118, %s13, 1
      %s120 = smul.addr %s119, 32
      %s121 = smul.addr %s120, 8
      %s122 = scalar_lea.vmem %s0, %s121
      %p123 = pneg %p34
      %p124 = pneg %p31
      %p125 = pneg %p55
      %p126 = pneg %p52
      %p127 = pneg %p81
      %p128 = pneg %p78
      %p129 = scmp.lt.s32.totalorder %s13, 1
      %s130 = scalar_select %p129, %s13, 1
      %s131 = smul.addr %s130, 16
      %s132 = smul.addr %s131, 8
      %s133 = scalar_lea.vmem %s2, %s132
      %p134 = scmp.lt.s32.totalorder %s13, 1
      %s135 = scalar_select %p134, %s13, 1
      %s136 = smul.addr %s135, 32
      %s137 = smul.addr %s136, 8
      %s138 = scalar_lea.vmem %s0, %s137
      %p139 = scmp.lt.s32.totalorder %s13, 1
      %s140 = scalar_select %p139, %s13, 1
      %s141 = smul.addr %s140, 16
      %s142 = smul.addr %s141, 8
      %s143 = scalar_lea.vmem %s2, %s142
      %v144 = vld [vmem:[%s1] sm:$0xff]
      %v145 = vld [vmem:[%s1 + $0x8] sm:$0xff]
      %v148 = vrot.slane %v144, 1
      %v149 = vrot.slane %v144, 2
      %v150 = vrot.slane %v144, 3
      %v151 = vrot.slane %v144, 4
      %v152 = vrot.slane %v144, 5
      %v153 = vrot.slane %v144, 6
      %v154 = vrot.slane %v144, 7
      %v155 = vrot.slane %v145, 1
      %v156 = vrot.slane %v145, 2
      %v157 = vrot.slane %v145, 3
      %v158 = vrot.slane %v145, 4
      %v159 = vrot.slane %v145, 5
      %v160 = vrot.slane %v145, 6
      %v161 = vrot.slane %v145, 7
      %v162 = vld [vmem:[%s138] sm:$0xff]
      %v163 = vld [vmem:[%s138 + $0x10] sm:$0xff]
      %v164 = vld [vmem:[%s138 + $0x20] sm:$0xff]
      %v165 = vld [vmem:[%s138 + $0x30] sm:$0xff]
      %v166 = vld [vmem:[%s138 + $0x40] sm:$0xff]
      %v167 = vld [vmem:[%s138 + $0x50] sm:$0xff]
      %v168 = vld [vmem:[%s138 + $0x60] sm:$0xff]
      %v169 = vld [vmem:[%s138 + $0x70] sm:$0xff]
      %v170 = vld [vmem:[%s138 + $0x80] sm:$0xff]
      %v171 = vld [vmem:[%s138 + $0x90] sm:$0xff]
      %v172 = vld [vmem:[%s138 + $0xa0] sm:$0xff]
      %v173 = vld [vmem:[%s138 + $0xb0] sm:$0xff]
      %v174 = vld [vmem:[%s138 + $0xc0] sm:$0xff]
      %v175 = vld [vmem:[%s138 + $0xd0] sm:$0xff]
      %v176 = vld [vmem:[%s138 + $0xe0] sm:$0xff]
      %v177 = vld [vmem:[%s138 + $0xf0] sm:$0xff]
      %v178 = vperm.slane %v144, 0
      %v179 = vperm.slane %v148, 0
      %v180 = vperm.slane %v149, 0
      %v181 = vperm.slane %v150, 0
      %v182 = vperm.slane %v151, 0
      %v183 = vperm.slane %v152, 0
      %v184 = vperm.slane %v153, 0
      %v185 = vperm.slane %v154, 0
      %v186 = vperm.slane %v145, 0
      %v187 = vperm.slane %v155, 0
      %v188 = vperm.slane %v156, 0
      %v189 = vperm.slane %v157, 0
      %v190 = vperm.slane %v158, 0
      %v191 = vperm.slane %v159, 0
      %v192 = vperm.slane %v160, 0
      %v193 = vperm.slane %v161, 0
      %194 = vset.pattern.permute.xlu0 0
      %195 = vperm.xlu0 %194, %v178
      %v196 = vpop.permute.xlu0 %195
      %198 = vset.pattern.permute.xlu0 0
      %199 = vperm.xlu0 %198, %v179
      %v200 = vpop.permute.xlu0 %199
      %202 = vset.pattern.permute.xlu0 0
      %203 = vperm.xlu0 %202, %v180
      %v204 = vpop.permute.xlu0 %203
      %206 = vset.pattern.permute.xlu0 0
      %207 = vperm.xlu0 %206, %v181
      %v208 = vpop.permute.xlu0 %207
      %210 = vset.pattern.permute.xlu0 0
      %211 = vperm.xlu0 %210, %v182
      %v212 = vpop.permute.xlu0 %211
      %214 = vset.pattern.permute.xlu0 0
      %215 = vperm.xlu0 %214, %v183
      %v216 = vpop.permute.xlu0 %215
      %218 = vset.pattern.permute.xlu0 0
      %219 = vperm.xlu0 %218, %v184
      %v220 = vpop.permute.xlu0 %219
      %222 = vset.pattern.permute.xlu0 0
      %223 = vperm.xlu0 %222, %v185
      %v224 = vpop.permute.xlu0 %223
      %226 = vset.pattern.permute.xlu0 0
      %227 = vperm.xlu0 %226, %v186
      %v228 = vpop.permute.xlu0 %227
      %230 = vset.pattern.permute.xlu0 0
      %231 = vperm.xlu0 %230, %v187
      %v232 = vpop.permute.xlu0 %231
      %234 = vset.pattern.permute.xlu0 0
      %235 = vperm.xlu0 %234, %v188
      %v236 = vpop.permute.xlu0 %235
      %238 = vset.pattern.permute.xlu0 0
      %239 = vperm.xlu0 %238, %v189
      %v240 = vpop.permute.xlu0 %239
      %242 = vset.pattern.permute.xlu0 0
      %243 = vperm.xlu0 %242, %v190
      %v244 = vpop.permute.xlu0 %243
      %246 = vset.pattern.permute.xlu0 0
      %247 = vperm.xlu0 %246, %v191
      %v248 = vpop.permute.xlu0 %247
      %250 = vset.pattern.permute.xlu0 0
      %251 = vperm.xlu0 %250, %v192
      %v252 = vpop.permute.xlu0 %251
      %254 = vset.pattern.permute.xlu0 0
      %255 = vperm.xlu0 %254, %v193
      %v256 = vpop.permute.xlu0 %255
      %v258 = vmul.f32 %v196, %v162
      %v259 = vmul.f32 %v200, %v163
      %v260 = vmul.f32 %v204, %v164
      %v261 = vmul.f32 %v208, %v165
      %v262 = vmul.f32 %v212, %v166
      %v263 = vmul.f32 %v216, %v167
      %v264 = vmul.f32 %v220, %v168
      %v265 = vmul.f32 %v224, %v169
      %v266 = vmul.f32 %v228, %v170
      %v267 = vmul.f32 %v232, %v171
      %v268 = vmul.f32 %v236, %v172
      %v269 = vmul.f32 %v240, %v173
      %v270 = vmul.f32 %v244, %v174
      %v271 = vmul.f32 %v248, %v175
      %v272 = vmul.f32 %v252, %v176
      %v273 = vmul.f32 %v256, %v177
      %v274 = vadd.f32 %v258, 0.0
      %v275 = vadd.f32 %v259, 0.0
      %v276 = vadd.f32 %v260, 0.0
      %v277 = vadd.f32 %v261, 0.0
      %v278 = vadd.f32 %v262, 0.0
      %v279 = vadd.f32 %v263, 0.0
      %v280 = vadd.f32 %v264, 0.0
      %v281 = vadd.f32 %v265, 0.0
      %v282 = vadd.f32 %v266, 0.0
      %v283 = vadd.f32 %v267, 0.0
      %v284 = vadd.f32 %v268, 0.0
      %v285 = vadd.f32 %v269, 0.0
      %v286 = vadd.f32 %v270, 0.0
      %v287 = vadd.f32 %v271, 0.0
      %v288 = vadd.f32 %v272, 0.0
      %v289 = vadd.f32 %v273, 0.0
      %290 = vset.pattern.permute.xlu0 1
      %291 = vperm.xlu0 %290, %v178
      %v292 = vpop.permute.xlu0 %291
      %294 = vset.pattern.permute.xlu0 1
      %295 = vperm.xlu0 %294, %v179
      %v296 = vpop.permute.xlu0 %295
      %298 = vset.pattern.permute.xlu0 1
      %299 = vperm.xlu0 %298, %v180
      %v300 = vpop.permute.xlu0 %299
      %302 = vset.pattern.permute.xlu0 1
      %303 = vperm.xlu0 %302, %v181
      %v304 = vpop.permute.xlu0 %303
      %306 = vset.pattern.permute.xlu0 1
      %307 = vperm.xlu0 %306, %v182
      %v308 = vpop.permute.xlu0 %307
      %310 = vset.pattern.permute.xlu0 1
      %311 = vperm.xlu0 %310, %v183
      %v312 = vpop.permute.xlu0 %311
      %314 = vset.pattern.permute.xlu0 1
      %315 = vperm.xlu0 %314, %v184
      %v316 = vpop.permute.xlu0 %315
      %318 = vset.pattern.permute.xlu0 1
      %319 = vperm.xlu0 %318, %v185
      %v320 = vpop.permute.xlu0 %319
      %322 = vset.pattern.permute.xlu0 1
      %323 = vperm.xlu0 %322, %v186
      %v324 = vpop.permute.xlu0 %323
      %326 = vset.pattern.permute.xlu0 1
      %327 = vperm.xlu0 %326, %v187
      %v328 = vpop.permute.xlu0 %327
      %330 = vset.pattern.permute.xlu0 1
      %331 = vperm.xlu0 %330, %v188
      %v332 = vpop.permute.xlu0 %331
      %334 = vset.pattern.permute.xlu0 1
      %335 = vperm.xlu0 %334, %v189
      %v336 = vpop.permute.xlu0 %335
      %338 = vset.pattern.permute.xlu0 1
      %339 = vperm.xlu0 %338, %v190
      %v340 = vpop.permute.xlu0 %339
      %342 = vset.pattern.permute.xlu0 1
      %343 = vperm.xlu0 %342, %v191
      %v344 = vpop.permute.xlu0 %343
      %346 = vset.pattern.permute.xlu0 1
      %347 = vperm.xlu0 %346, %v192
      %v348 = vpop.permute.xlu0 %347
      %350 = vset.pattern.permute.xlu0 1
      %351 = vperm.xlu0 %350, %v193
      %v352 = vpop.permute.xlu0 %351
      %v354 = vmul.f32 %v292, %v162
      %v355 = vmul.f32 %v296, %v163
      %v356 = vmul.f32 %v300, %v164
      %v357 = vmul.f32 %v304, %v165
      %v358 = vmul.f32 %v308, %v166
      %v359 = vmul.f32 %v312, %v167
      %v360 = vmul.f32 %v316, %v168
      %v361 = vmul.f32 %v320, %v169
      %v362 = vmul.f32 %v324, %v170
      %v363 = vmul.f32 %v328, %v171
      %v364 = vmul.f32 %v332, %v172
      %v365 = vmul.f32 %v336, %v173
      %v366 = vmul.f32 %v340, %v174
      %v367 = vmul.f32 %v344, %v175
      %v368 = vmul.f32 %v348, %v176
      %v369 = vmul.f32 %v352, %v177
      %386 = vrot.lane.b32.xlu0 %v354, 127
      %v387 = vpop.permute.xlu0 %386
      %388 = vrot.lane.b32.xlu0 %v355, 127
      %v389 = vpop.permute.xlu0 %388
      %390 = vrot.lane.b32.xlu0 %v356, 127
      %v391 = vpop.permute.xlu0 %390
      %392 = vrot.lane.b32.xlu0 %v357, 127
      %v393 = vpop.permute.xlu0 %392
      %394 = vrot.lane.b32.xlu0 %v358, 127
      %v395 = vpop.permute.xlu0 %394
      %396 = vrot.lane.b32.xlu0 %v359, 127
      %v397 = vpop.permute.xlu0 %396
      %398 = vrot.lane.b32.xlu0 %v360, 127
      %v399 = vpop.permute.xlu0 %398
      %400 = vrot.lane.b32.xlu0 %v361, 127
      %v401 = vpop.permute.xlu0 %400
      %402 = vrot.lane.b32.xlu0 %v362, 127
      %v403 = vpop.permute.xlu0 %402
      %404 = vrot.lane.b32.xlu0 %v363, 127
      %v405 = vpop.permute.xlu0 %404
      %406 = vrot.lane.b32.xlu0 %v364, 127
      %v407 = vpop.permute.xlu0 %406
      %408 = vrot.lane.b32.xlu0 %v365, 127
      %v409 = vpop.permute.xlu0 %408
      %410 = vrot.lane.b32.xlu0 %v366, 127
      %v411 = vpop.permute.xlu0 %410
      %412 = vrot.lane.b32.xlu0 %v367, 127
      %v413 = vpop.permute.xlu0 %412
      %414 = vrot.lane.b32.xlu0 %v368, 127
      %v415 = vpop.permute.xlu0 %414
      %416 = vrot.lane.b32.xlu0 %v369, 127
      %v417 = vpop.permute.xlu0 %416
      %v434 = vadd.f32 %v274, %v387
      %v435 = vadd.f32 %v275, %v389
      %v436 = vadd.f32 %v276, %v391
      %v437 = vadd.f32 %v277, %v393
      %v438 = vadd.f32 %v278, %v395
      %v439 = vadd.f32 %v279, %v397
      %v440 = vadd.f32 %v280, %v399
      %v441 = vadd.f32 %v281, %v401
      %v442 = vadd.f32 %v282, %v403
      %v443 = vadd.f32 %v283, %v405
      %v444 = vadd.f32 %v284, %v407
      %v445 = vadd.f32 %v285, %v409
      %v446 = vadd.f32 %v286, %v411
      %v447 = vadd.f32 %v287, %v413
      %v448 = vadd.f32 %v288, %v415
      %v449 = vadd.f32 %v289, %v417
      %450 = vset.pattern.permute.xlu0 2
      %451 = vperm.xlu0 %450, %v178
      %v452 = vpop.permute.xlu0 %451
      %454 = vset.pattern.permute.xlu0 2
      %455 = vperm.xlu0 %454, %v179
      %v456 = vpop.permute.xlu0 %455
      %458 = vset.pattern.permute.xlu0 2
      %459 = vperm.xlu0 %458, %v180
      %v460 = vpop.permute.xlu0 %459
      %462 = vset.pattern.permute.xlu0 2
      %463 = vperm.xlu0 %462, %v181
      %v464 = vpop.permute.xlu0 %463
      %466 = vset.pattern.permute.xlu0 2
      %467 = vperm.xlu0 %466, %v182
      %v468 = vpop.permute.xlu0 %467
      %470 = vset.pattern.permute.xlu0 2
      %471 = vperm.xlu0 %470, %v183
      %v472 = vpop.permute.xlu0 %471
      %474 = vset.pattern.permute.xlu0 2
      %475 = vperm.xlu0 %474, %v184
      %v476 = vpop.permute.xlu0 %475
      %478 = vset.pattern.permute.xlu0 2
      %479 = vperm.xlu0 %478, %v185
      %v480 = vpop.permute.xlu0 %479
      %482 = vset.pattern.permute.xlu0 2
      %483 = vperm.xlu0 %482, %v186
      %v484 = vpop.permute.xlu0 %483
      %486 = vset.pattern.permute.xlu0 2
      %487 = vperm.xlu0 %486, %v187
      %v488 = vpop.permute.xlu0 %487
      %490 = vset.pattern.permute.xlu0 2
      %491 = vperm.xlu0 %490, %v188
      %v492 = vpop.permute.xlu0 %491
      %494 = vset.pattern.permute.xlu0 2
      %495 = vperm.xlu0 %494, %v189
      %v496 = vpop.permute.xlu0 %495
      %498 = vset.pattern.permute.xlu0 2
      %499 = vperm.xlu0 %498, %v190
      %v500 = vpop.permute.xlu0 %499
      %502 = vset.pattern.permute.xlu0 2
      %503 = vperm.xlu0 %502, %v191
      %v504 = vpop.permute.xlu0 %503
      %506 = vset.pattern.permute.xlu0 2
      %507 = vperm.xlu0 %506, %v192
      %v508 = vpop.permute.xlu0 %507
      %510 = vset.pattern.permute.xlu0 2
      %511 = vperm.xlu0 %510, %v193
      %v512 = vpop.permute.xlu0 %511
      %v514 = vmul.f32 %v452, %v162
      %v515 = vmul.f32 %v456, %v163
      %v516 = vmul.f32 %v460, %v164
      %v517 = vmul.f32 %v464, %v165
      %v518 = vmul.f32 %v468, %v166
      %v519 = vmul.f32 %v472, %v167
      %v520 = vmul.f32 %v476, %v168
      %v521 = vmul.f32 %v480, %v169
      %v522 = vmul.f32 %v484, %v170
      %v523 = vmul.f32 %v488, %v171
      %v524 = vmul.f32 %v492, %v172
      %v525 = vmul.f32 %v496, %v173
      %v526 = vmul.f32 %v500, %v174
      %v527 = vmul.f32 %v504, %v175
      %v528 = vmul.f32 %v508, %v176
      %v529 = vmul.f32 %v512, %v177
      %546 = vrot.lane.b32.xlu0 %v514, 126
      %v547 = vpop.permute.xlu0 %546
      %548 = vrot.lane.b32.xlu0 %v515, 126
      %v549 = vpop.permute.xlu0 %548
      %550 = vrot.lane.b32.xlu0 %v516, 126
      %v551 = vpop.permute.xlu0 %550
      %552 = vrot.lane.b32.xlu0 %v517, 126
      %v553 = vpop.permute.xlu0 %552
      %554 = vrot.lane.b32.xlu0 %v518, 126
      %v555 = vpop.permute.xlu0 %554
      %556 = vrot.lane.b32.xlu0 %v519, 126
      %v557 = vpop.permute.xlu0 %556
      %558 = vrot.lane.b32.xlu0 %v520, 126
      %v559 = vpop.permute.xlu0 %558
      %560 = vrot.lane.b32.xlu0 %v521, 126
      %v561 = vpop.permute.xlu0 %560
      %562 = vrot.lane.b32.xlu0 %v522, 126
      %v563 = vpop.permute.xlu0 %562
      %564 = vrot.lane.b32.xlu0 %v523, 126
      %v565 = vpop.permute.xlu0 %564
      %566 = vrot.lane.b32.xlu0 %v524, 126
      %v567 = vpop.permute.xlu0 %566
      %568 = vrot.lane.b32.xlu0 %v525, 126
      %v569 = vpop.permute.xlu0 %568
      %570 = vrot.lane.b32.xlu0 %v526, 126
      %v571 = vpop.permute.xlu0 %570
      %572 = vrot.lane.b32.xlu0 %v527, 126
      %v573 = vpop.permute.xlu0 %572
      %574 = vrot.lane.b32.xlu0 %v528, 126
      %v575 = vpop.permute.xlu0 %574
      %576 = vrot.lane.b32.xlu0 %v529, 126
      %v577 = vpop.permute.xlu0 %576
      %v594 = vadd.f32 %v434, %v547
      %v595 = vadd.f32 %v435, %v549
      %v596 = vadd.f32 %v436, %v551
      %v597 = vadd.f32 %v437, %v553
      %v598 = vadd.f32 %v438, %v555
      %v599 = vadd.f32 %v439, %v557
      %v600 = vadd.f32 %v440, %v559
      %v601 = vadd.f32 %v441, %v561
      %v602 = vadd.f32 %v442, %v563
      %v603 = vadd.f32 %v443, %v565
      %v604 = vadd.f32 %v444, %v567
      %v605 = vadd.f32 %v445, %v569
      %v606 = vadd.f32 %v446, %v571
      %v607 = vadd.f32 %v447, %v573
      %v608 = vadd.f32 %v448, %v575
      %v609 = vadd.f32 %v449, %v577
      %v610 = vld [vmem:[%s138 + $0x1] sm:$0xff]
      %v611 = vld [vmem:[%s138 + $0x11] sm:$0xff]
      %v612 = vld [vmem:[%s138 + $0x21] sm:$0xff]
      %v613 = vld [vmem:[%s138 + $0x31] sm:$0xff]
      %v614 = vld [vmem:[%s138 + $0x41] sm:$0xff]
      %v615 = vld [vmem:[%s138 + $0x51] sm:$0xff]
      %v616 = vld [vmem:[%s138 + $0x61] sm:$0xff]
      %v617 = vld [vmem:[%s138 + $0x71] sm:$0xff]
      %v618 = vld [vmem:[%s138 + $0x81] sm:$0xff]
      %v619 = vld [vmem:[%s138 + $0x91] sm:$0xff]
      %v620 = vld [vmem:[%s138 + $0xa1] sm:$0xff]
      %v621 = vld [vmem:[%s138 + $0xb1] sm:$0xff]
      %v622 = vld [vmem:[%s138 + $0xc1] sm:$0xff]
      %v623 = vld [vmem:[%s138 + $0xd1] sm:$0xff]
      %v624 = vld [vmem:[%s138 + $0xe1] sm:$0xff]
      %v625 = vld [vmem:[%s138 + $0xf1] sm:$0xff]
      %626 = vset.pattern.permute.xlu0 3
      %627 = vperm.xlu0 %626, %v178
      %v628 = vpop.permute.xlu0 %627
      %630 = vset.pattern.permute.xlu0 3
      %631 = vperm.xlu0 %630, %v179
      %v632 = vpop.permute.xlu0 %631
      %634 = vset.pattern.permute.xlu0 3
      %635 = vperm.xlu0 %634, %v180
      %v636 = vpop.permute.xlu0 %635
      %638 = vset.pattern.permute.xlu0 3
      %639 = vperm.xlu0 %638, %v181
      %v640 = vpop.permute.xlu0 %639
      %642 = vset.pattern.permute.xlu0 3
      %643 = vperm.xlu0 %642, %v182
      %v644 = vpop.permute.xlu0 %643
      %646 = vset.pattern.permute.xlu0 3
      %647 = vperm.xlu0 %646, %v183
      %v648 = vpop.permute.xlu0 %647
      %650 = vset.pattern.permute.xlu0 3
      %651 = vperm.xlu0 %650, %v184
      %v652 = vpop.permute.xlu0 %651
      %654 = vset.pattern.permute.xlu0 3
      %655 = vperm.xlu0 %654, %v185
      %v656 = vpop.permute.xlu0 %655
      %658 = vset.pattern.permute.xlu0 3
      %659 = vperm.xlu0 %658, %v186
      %v660 = vpop.permute.xlu0 %659
      %662 = vset.pattern.permute.xlu0 3
      %663 = vperm.xlu0 %662, %v187
      %v664 = vpop.permute.xlu0 %663
      %666 = vset.pattern.permute.xlu0 3
      %667 = vperm.xlu0 %666, %v188
      %v668 = vpop.permute.xlu0 %667
      %670 = vset.pattern.permute.xlu0 3
      %671 = vperm.xlu0 %670, %v189
      %v672 = vpop.permute.xlu0 %671
      %674 = vset.pattern.permute.xlu0 3
      %675 = vperm.xlu0 %674, %v190
      %v676 = vpop.permute.xlu0 %675
      %678 = vset.pattern.permute.xlu0 3
      %679 = vperm.xlu0 %678, %v191
      %v680 = vpop.permute.xlu0 %679
      %682 = vset.pattern.permute.xlu0 3
      %683 = vperm.xlu0 %682, %v192
      %v684 = vpop.permute.xlu0 %683
      %686 = vset.pattern.permute.xlu0 3
      %687 = vperm.xlu0 %686, %v193
      %v688 = vpop.permute.xlu0 %687
      %v690 = vmul.f32 %v628, %v610
      %v691 = vmul.f32 %v632, %v611
      %v692 = vmul.f32 %v636, %v612
      %v693 = vmul.f32 %v640, %v613
      %v694 = vmul.f32 %v644, %v614
      %v695 = vmul.f32 %v648, %v615
      %v696 = vmul.f32 %v652, %v616
      %v697 = vmul.f32 %v656, %v617
      %v698 = vmul.f32 %v660, %v618
      %v699 = vmul.f32 %v664, %v619
      %v700 = vmul.f32 %v668, %v620
      %v701 = vmul.f32 %v672, %v621
      %v702 = vmul.f32 %v676, %v622
      %v703 = vmul.f32 %v680, %v623
      %v704 = vmul.f32 %v684, %v624
      %v705 = vmul.f32 %v688, %v625
      %v706 = vadd.f32 %v594, %v690
      %v707 = vadd.f32 %v595, %v691
      %v708 = vadd.f32 %v596, %v692
      %v709 = vadd.f32 %v597, %v693
      %v710 = vadd.f32 %v598, %v694
      %v711 = vadd.f32 %v599, %v695
      %v712 = vadd.f32 %v600, %v696
      %v713 = vadd.f32 %v601, %v697
      %v714 = vadd.f32 %v602, %v698
      %v715 = vadd.f32 %v603, %v699
      %v716 = vadd.f32 %v604, %v700
      %v717 = vadd.f32 %v605, %v701
      %v718 = vadd.f32 %v606, %v702
      %v719 = vadd.f32 %v607, %v703
      %v720 = vadd.f32 %v608, %v704
      %v721 = vadd.f32 %v609, %v705
      %722 = vset.pattern.permute.xlu0 4
      %723 = vperm.xlu0 %722, %v178
      %v724 = vpop.permute.xlu0 %723
      %726 = vset.pattern.permute.xlu0 4
      %727 = vperm.xlu0 %726, %v179
      %v728 = vpop.permute.xlu0 %727
      %730 = vset.pattern.permute.xlu0 4
      %731 = vperm.xlu0 %730, %v180
      %v732 = vpop.permute.xlu0 %731
      %734 = vset.pattern.permute.xlu0 4
      %735 = vperm.xlu0 %734, %v181
      %v736 = vpop.permute.xlu0 %735
      %738 = vset.pattern.permute.xlu0 4
      %739 = vperm.xlu0 %738, %v182
      %v740 = vpop.permute.xlu0 %739
      %742 = vset.pattern.permute.xlu0 4
      %743 = vperm.xlu0 %742, %v183
      %v744 = vpop.permute.xlu0 %743
      %746 = vset.pattern.permute.xlu0 4
      %747 = vperm.xlu0 %746, %v184
      %v748 = vpop.permute.xlu0 %747
      %750 = vset.pattern.permute.xlu0 4
      %751 = vperm.xlu0 %750, %v185
      %v752 = vpop.permute.xlu0 %751
      %754 = vset.pattern.permute.xlu0 4
      %755 = vperm.xlu0 %754, %v186
      %v756 = vpop.permute.xlu0 %755
      %758 = vset.pattern.permute.xlu0 4
      %759 = vperm.xlu0 %758, %v187
      %v760 = vpop.permute.xlu0 %759
      %762 = vset.pattern.permute.xlu0 4
      %763 = vperm.xlu0 %762, %v188
      %v764 = vpop.permute.xlu0 %763
      %766 = vset.pattern.permute.xlu0 4
      %767 = vperm.xlu0 %766, %v189
      %v768 = vpop.permute.xlu0 %767
      %770 = vset.pattern.permute.xlu0 4
      %771 = vperm.xlu0 %770, %v190
      %v772 = vpop.permute.xlu0 %771
      %774 = vset.pattern.permute.xlu0 4
      %775 = vperm.xlu0 %774, %v191
      %v776 = vpop.permute.xlu0 %775
      %778 = vset.pattern.permute.xlu0 4
      %779 = vperm.xlu0 %778, %v192
      %v780 = vpop.permute.xlu0 %779
      %782 = vset.pattern.permute.xlu0 4
      %783 = vperm.xlu0 %782, %v193
      %v784 = vpop.permute.xlu0 %783
      %v786 = vmul.f32 %v724, %v610
      %v787 = vmul.f32 %v728, %v611
      %v788 = vmul.f32 %v732, %v612
      %v789 = vmul.f32 %v736, %v613
      %v790 = vmul.f32 %v740, %v614
      %v791 = vmul.f32 %v744, %v615
      %v792 = vmul.f32 %v748, %v616
      %v793 = vmul.f32 %v752, %v617
      %v794 = vmul.f32 %v756, %v618
      %v795 = vmul.f32 %v760, %v619
      %v796 = vmul.f32 %v764, %v620
      %v797 = vmul.f32 %v768, %v621
      %v798 = vmul.f32 %v772, %v622
      %v799 = vmul.f32 %v776, %v623
      %v800 = vmul.f32 %v780, %v624
      %v801 = vmul.f32 %v784, %v625
      %818 = vrot.lane.b32.xlu0 %v786, 127
      %v819 = vpop.permute.xlu0 %818
      %820 = vrot.lane.b32.xlu0 %v787, 127
      %v821 = vpop.permute.xlu0 %820
      %822 = vrot.lane.b32.xlu0 %v788, 127
      %v823 = vpop.permute.xlu0 %822
      %824 = vrot.lane.b32.xlu0 %v789, 127
      %v825 = vpop.permute.xlu0 %824
      %826 = vrot.lane.b32.xlu0 %v790, 127
      %v827 = vpop.permute.xlu0 %826
      %828 = vrot.lane.b32.xlu0 %v791, 127
      %v829 = vpop.permute.xlu0 %828
      %830 = vrot.lane.b32.xlu0 %v792, 127
      %v831 = vpop.permute.xlu0 %830
      %832 = vrot.lane.b32.xlu0 %v793, 127
      %v833 = vpop.permute.xlu0 %832
      %834 = vrot.lane.b32.xlu0 %v794, 127
      %v835 = vpop.permute.xlu0 %834
      %836 = vrot.lane.b32.xlu0 %v795, 127
      %v837 = vpop.permute.xlu0 %836
      %838 = vrot.lane.b32.xlu0 %v796, 127
      %v839 = vpop.permute.xlu0 %838
      %840 = vrot.lane.b32.xlu0 %v797, 127
      %v841 = vpop.permute.xlu0 %840
      %842 = vrot.lane.b32.xlu0 %v798, 127
      %v843 = vpop.permute.xlu0 %842
      %844 = vrot.lane.b32.xlu0 %v799, 127
      %v845 = vpop.permute.xlu0 %844
      %846 = vrot.lane.b32.xlu0 %v800, 127
      %v847 = vpop.permute.xlu0 %846
      %848 = vrot.lane.b32.xlu0 %v801, 127
      %v849 = vpop.permute.xlu0 %848
      %v866 = vadd.f32 %v706, %v819
      %v867 = vadd.f32 %v707, %v821
      %v868 = vadd.f32 %v708, %v823
      %v869 = vadd.f32 %v709, %v825
      %v870 = vadd.f32 %v710, %v827
      %v871 = vadd.f32 %v711, %v829
      %v872 = vadd.f32 %v712, %v831
      %v873 = vadd.f32 %v713, %v833
      %v874 = vadd.f32 %v714, %v835
      %v875 = vadd.f32 %v715, %v837
      %v876 = vadd.f32 %v716, %v839
      %v877 = vadd.f32 %v717, %v841
      %v878 = vadd.f32 %v718, %v843
      %v879 = vadd.f32 %v719, %v845
      %v880 = vadd.f32 %v720, %v847
      %v881 = vadd.f32 %v721, %v849
      %882 = vset.pattern.permute.xlu0 5
      %883 = vperm.xlu0 %882, %v178
      %v884 = vpop.permute.xlu0 %883
      %886 = vset.pattern.permute.xlu0 5
      %887 = vperm.xlu0 %886, %v179
      %v888 = vpop.permute.xlu0 %887
      %890 = vset.pattern.permute.xlu0 5
      %891 = vperm.xlu0 %890, %v180
      %v892 = vpop.permute.xlu0 %891
      %894 = vset.pattern.permute.xlu0 5
      %895 = vperm.xlu0 %894, %v181
      %v896 = vpop.permute.xlu0 %895
      %898 = vset.pattern.permute.xlu0 5
      %899 = vperm.xlu0 %898, %v182
      %v900 = vpop.permute.xlu0 %899
      %902 = vset.pattern.permute.xlu0 5
      %903 = vperm.xlu0 %902, %v183
      %v904 = vpop.permute.xlu0 %903
      %906 = vset.pattern.permute.xlu0 5
      %907 = vperm.xlu0 %906, %v184
      %v908 = vpop.permute.xlu0 %907
      %910 = vset.pattern.permute.xlu0 5
      %911 = vperm.xlu0 %910, %v185
      %v912 = vpop.permute.xlu0 %911
      %914 = vset.pattern.permute.xlu0 5
      %915 = vperm.xlu0 %914, %v186
      %v916 = vpop.permute.xlu0 %915
      %918 = vset.pattern.permute.xlu0 5
      %919 = vperm.xlu0 %918, %v187
      %v920 = vpop.permute.xlu0 %919
      %922 = vset.pattern.permute.xlu0 5
      %923 = vperm.xlu0 %922, %v188
      %v924 = vpop.permute.xlu0 %923
      %926 = vset.pattern.permute.xlu0 5
      %927 = vperm.xlu0 %926, %v189
      %v928 = vpop.permute.xlu0 %927
      %930 = vset.pattern.permute.xlu0 5
      %931 = vperm.xlu0 %930, %v190
      %v932 = vpop.permute.xlu0 %931
      %934 = vset.pattern.permute.xlu0 5
      %935 = vperm.xlu0 %934, %v191
      %v936 = vpop.permute.xlu0 %935
      %938 = vset.pattern.permute.xlu0 5
      %939 = vperm.xlu0 %938, %v192
      %v940 = vpop.permute.xlu0 %939
      %942 = vset.pattern.permute.xlu0 5
      %943 = vperm.xlu0 %942, %v193
      %v944 = vpop.permute.xlu0 %943
      %v946 = vmul.f32 %v884, %v610
      %v947 = vmul.f32 %v888, %v611
      %v948 = vmul.f32 %v892, %v612
      %v949 = vmul.f32 %v896, %v613
      %v950 = vmul.f32 %v900, %v614
      %v951 = vmul.f32 %v904, %v615
      %v952 = vmul.f32 %v908, %v616
      %v953 = vmul.f32 %v912, %v617
      %v954 = vmul.f32 %v916, %v618
      %v955 = vmul.f32 %v920, %v619
      %v956 = vmul.f32 %v924, %v620
      %v957 = vmul.f32 %v928, %v621
      %v958 = vmul.f32 %v932, %v622
      %v959 = vmul.f32 %v936, %v623
      %v960 = vmul.f32 %v940, %v624
      %v961 = vmul.f32 %v944, %v625
      %978 = vrot.lane.b32.xlu0 %v946, 126
      %v979 = vpop.permute.xlu0 %978
      %980 = vrot.lane.b32.xlu0 %v947, 126
      %v981 = vpop.permute.xlu0 %980
      %982 = vrot.lane.b32.xlu0 %v948, 126
      %v983 = vpop.permute.xlu0 %982
      %984 = vrot.lane.b32.xlu0 %v949, 126
      %v985 = vpop.permute.xlu0 %984
      %986 = vrot.lane.b32.xlu0 %v950, 126
      %v987 = vpop.permute.xlu0 %986
      %988 = vrot.lane.b32.xlu0 %v951, 126
      %v989 = vpop.permute.xlu0 %988
      %990 = vrot.lane.b32.xlu0 %v952, 126
      %v991 = vpop.permute.xlu0 %990
      %992 = vrot.lane.b32.xlu0 %v953, 126
      %v993 = vpop.permute.xlu0 %992
      %994 = vrot.lane.b32.xlu0 %v954, 126
      %v995 = vpop.permute.xlu0 %994
      %996 = vrot.lane.b32.xlu0 %v955, 126
      %v997 = vpop.permute.xlu0 %996
      %998 = vrot.lane.b32.xlu0 %v956, 126
      %v999 = vpop.permute.xlu0 %998
      %1000 = vrot.lane.b32.xlu0 %v957, 126
      %v1001 = vpop.permute.xlu0 %1000
      %1002 = vrot.lane.b32.xlu0 %v958, 126
      %v1003 = vpop.permute.xlu0 %1002
      %1004 = vrot.lane.b32.xlu0 %v959, 126
      %v1005 = vpop.permute.xlu0 %1004
      %1006 = vrot.lane.b32.xlu0 %v960, 126
      %v1007 = vpop.permute.xlu0 %1006
      %1008 = vrot.lane.b32.xlu0 %v961, 126
      %v1009 = vpop.permute.xlu0 %1008
      %v1026 = vadd.f32 %v866, %v979
      %v1027 = vadd.f32 %v867, %v981
      %v1028 = vadd.f32 %v868, %v983
      %v1029 = vadd.f32 %v869, %v985
      %v1030 = vadd.f32 %v870, %v987
      %v1031 = vadd.f32 %v871, %v989
      %v1032 = vadd.f32 %v872, %v991
      %v1033 = vadd.f32 %v873, %v993
      %v1034 = vadd.f32 %v874, %v995
      %v1035 = vadd.f32 %v875, %v997
      %v1036 = vadd.f32 %v876, %v999
      %v1037 = vadd.f32 %v877, %v1001
      %v1038 = vadd.f32 %v878, %v1003
      %v1039 = vadd.f32 %v879, %v1005
      %v1040 = vadd.f32 %v880, %v1007
      %v1041 = vadd.f32 %v881, %v1009
      %v1042 = vld [vmem:[%s138 + $0x2] sm:$0xff]
      %v1043 = vld [vmem:[%s138 + $0x12] sm:$0xff]
      %v1044 = vld [vmem:[%s138 + $0x22] sm:$0xff]
      %v1045 = vld [vmem:[%s138 + $0x32] sm:$0xff]
      %v1046 = vld [vmem:[%s138 + $0x42] sm:$0xff]
      %v1047 = vld [vmem:[%s138 + $0x52] sm:$0xff]
      %v1048 = vld [vmem:[%s138 + $0x62] sm:$0xff]
      %v1049 = vld [vmem:[%s138 + $0x72] sm:$0xff]
      %v1050 = vld [vmem:[%s138 + $0x82] sm:$0xff]
      %v1051 = vld [vmem:[%s138 + $0x92] sm:$0xff]
      %v1052 = vld [vmem:[%s138 + $0xa2] sm:$0xff]
      %v1053 = vld [vmem:[%s138 + $0xb2] sm:$0xff]
      %v1054 = vld [vmem:[%s138 + $0xc2] sm:$0xff]
      %v1055 = vld [vmem:[%s138 + $0xd2] sm:$0xff]
      %v1056 = vld [vmem:[%s138 + $0xe2] sm:$0xff]
      %v1057 = vld [vmem:[%s138 + $0xf2] sm:$0xff]
      %1058 = vset.pattern.permute.xlu0 6
      %1059 = vperm.xlu0 %1058, %v178
      %v1060 = vpop.permute.xlu0 %1059
      %1062 = vset.pattern.permute.xlu0 6
      %1063 = vperm.xlu0 %1062, %v179
      %v1064 = vpop.permute.xlu0 %1063
      %1066 = vset.pattern.permute.xlu0 6
      %1067 = vperm.xlu0 %1066, %v180
      %v1068 = vpop.permute.xlu0 %1067
      %1070 = vset.pattern.permute.xlu0 6
      %1071 = vperm.xlu0 %1070, %v181
      %v1072 = vpop.permute.xlu0 %1071
      %1074 = vset.pattern.permute.xlu0 6
      %1075 = vperm.xlu0 %1074, %v182
      %v1076 = vpop.permute.xlu0 %1075
      %1078 = vset.pattern.permute.xlu0 6
      %1079 = vperm.xlu0 %1078, %v183
      %v1080 = vpop.permute.xlu0 %1079
      %1082 = vset.pattern.permute.xlu0 6
      %1083 = vperm.xlu0 %1082, %v184
      %v1084 = vpop.permute.xlu0 %1083
      %1086 = vset.pattern.permute.xlu0 6
      %1087 = vperm.xlu0 %1086, %v185
      %v1088 = vpop.permute.xlu0 %1087
      %1090 = vset.pattern.permute.xlu0 6
      %1091 = vperm.xlu0 %1090, %v186
      %v1092 = vpop.permute.xlu0 %1091
      %1094 = vset.pattern.permute.xlu0 6
      %1095 = vperm.xlu0 %1094, %v187
      %v1096 = vpop.permute.xlu0 %1095
      %1098 = vset.pattern.permute.xlu0 6
      %1099 = vperm.xlu0 %1098, %v188
      %v1100 = vpop.permute.xlu0 %1099
      %1102 = vset.pattern.permute.xlu0 6
      %1103 = vperm.xlu0 %1102, %v189
      %v1104 = vpop.permute.xlu0 %1103
      %1106 = vset.pattern.permute.xlu0 6
      %1107 = vperm.xlu0 %1106, %v190
      %v1108 = vpop.permute.xlu0 %1107
      %1110 = vset.pattern.permute.xlu0 6
      %1111 = vperm.xlu0 %1110, %v191
      %v1112 = vpop.permute.xlu0 %1111
      %1114 = vset.pattern.permute.xlu0 6
      %1115 = vperm.xlu0 %1114, %v192
      %v1116 = vpop.permute.xlu0 %1115
      %1118 = vset.pattern.permute.xlu0 6
      %1119 = vperm.xlu0 %1118, %v193
      %v1120 = vpop.permute.xlu0 %1119
      %v1122 = vmul.f32 %v1060, %v1042
      %v1123 = vmul.f32 %v1064, %v1043
      %v1124 = vmul.f32 %v1068, %v1044
      %v1125 = vmul.f32 %v1072, %v1045
      %v1126 = vmul.f32 %v1076, %v1046
      %v1127 = vmul.f32 %v1080, %v1047
      %v1128 = vmul.f32 %v1084, %v1048
      %v1129 = vmul.f32 %v1088, %v1049
      %v1130 = vmul.f32 %v1092, %v1050
      %v1131 = vmul.f32 %v1096, %v1051
      %v1132 = vmul.f32 %v1100, %v1052
      %v1133 = vmul.f32 %v1104, %v1053
      %v1134 = vmul.f32 %v1108, %v1054
      %v1135 = vmul.f32 %v1112, %v1055
      %v1136 = vmul.f32 %v1116, %v1056
      %v1137 = vmul.f32 %v1120, %v1057
      %v1138 = vadd.f32 %v1026, %v1122
      %v1139 = vadd.f32 %v1027, %v1123
      %v1140 = vadd.f32 %v1028, %v1124
      %v1141 = vadd.f32 %v1029, %v1125
      %v1142 = vadd.f32 %v1030, %v1126
      %v1143 = vadd.f32 %v1031, %v1127
      %v1144 = vadd.f32 %v1032, %v1128
      %v1145 = vadd.f32 %v1033, %v1129
      %v1146 = vadd.f32 %v1034, %v1130
      %v1147 = vadd.f32 %v1035, %v1131
      %v1148 = vadd.f32 %v1036, %v1132
      %v1149 = vadd.f32 %v1037, %v1133
      %v1150 = vadd.f32 %v1038, %v1134
      %v1151 = vadd.f32 %v1039, %v1135
      %v1152 = vadd.f32 %v1040, %v1136
      %v1153 = vadd.f32 %v1041, %v1137
      %1154 = vset.pattern.permute.xlu0 7
      %1155 = vperm.xlu0 %1154, %v178
      %v1156 = vpop.permute.xlu0 %1155
      %1158 = vset.pattern.permute.xlu0 7
      %1159 = vperm.xlu0 %1158, %v179
      %v1160 = vpop.permute.xlu0 %1159
      %1162 = vset.pattern.permute.xlu0 7
      %1163 = vperm.xlu0 %1162, %v180
      %v1164 = vpop.permute.xlu0 %1163
      %1166 = vset.pattern.permute.xlu0 7
      %1167 = vperm.xlu0 %1166, %v181
      %v1168 = vpop.permute.xlu0 %1167
      %1170 = vset.pattern.permute.xlu0 7
      %1171 = vperm.xlu0 %1170, %v182
      %v1172 = vpop.permute.xlu0 %1171
      %1174 = vset.pattern.permute.xlu0 7
      %1175 = vperm.xlu0 %1174, %v183
      %v1176 = vpop.permute.xlu0 %1175
      %1178 = vset.pattern.permute.xlu0 7
      %1179 = vperm.xlu0 %1178, %v184
      %v1180 = vpop.permute.xlu0 %1179
      %1182 = vset.pattern.permute.xlu0 7
      %1183 = vperm.xlu0 %1182, %v185
      %v1184 = vpop.permute.xlu0 %1183
      %1186 = vset.pattern.permute.xlu0 7
      %1187 = vperm.xlu0 %1186, %v186
      %v1188 = vpop.permute.xlu0 %1187
      %1190 = vset.pattern.permute.xlu0 7
      %1191 = vperm.xlu0 %1190, %v187
      %v1192 = vpop.permute.xlu0 %1191
      %1194 = vset.pattern.permute.xlu0 7
      %1195 = vperm.xlu0 %1194, %v188
      %v1196 = vpop.permute.xlu0 %1195
      %1198 = vset.pattern.permute.xlu0 7
      %1199 = vperm.xlu0 %1198, %v189
      %v1200 = vpop.permute.xlu0 %1199
      %1202 = vset.pattern.permute.xlu0 7
      %1203 = vperm.xlu0 %1202, %v190
      %v1204 = vpop.permute.xlu0 %1203
      %1206 = vset.pattern.permute.xlu0 7
      %1207 = vperm.xlu0 %1206, %v191
      %v1208 = vpop.permute.xlu0 %1207
      %1210 = vset.pattern.permute.xlu0 7
      %1211 = vperm.xlu0 %1210, %v192
      %v1212 = vpop.permute.xlu0 %1211
      %1214 = vset.pattern.permute.xlu0 7
      %1215 = vperm.xlu0 %1214, %v193
      %v1216 = vpop.permute.xlu0 %1215
      %v1218 = vmul.f32 %v1156, %v1042
      %v1219 = vmul.f32 %v1160, %v1043
      %v1220 = vmul.f32 %v1164, %v1044
      %v1221 = vmul.f32 %v1168, %v1045
      %v1222 = vmul.f32 %v1172, %v1046
      %v1223 = vmul.f32 %v1176, %v1047
      %v1224 = vmul.f32 %v1180, %v1048
      %v1225 = vmul.f32 %v1184, %v1049
      %v1226 = vmul.f32 %v1188, %v1050
      %v1227 = vmul.f32 %v1192, %v1051
      %v1228 = vmul.f32 %v1196, %v1052
      %v1229 = vmul.f32 %v1200, %v1053
      %v1230 = vmul.f32 %v1204, %v1054
      %v1231 = vmul.f32 %v1208, %v1055
      %v1232 = vmul.f32 %v1212, %v1056
      %v1233 = vmul.f32 %v1216, %v1057
      %1250 = vrot.lane.b32.xlu0 %v1218, 127
      %v1251 = vpop.permute.xlu0 %1250
      %1252 = vrot.lane.b32.xlu0 %v1219, 127
      %v1253 = vpop.permute.xlu0 %1252
      %1254 = vrot.lane.b32.xlu0 %v1220, 127
      %v1255 = vpop.permute.xlu0 %1254
      %1256 = vrot.lane.b32.xlu0 %v1221, 127
      %v1257 = vpop.permute.xlu0 %1256
      %1258 = vrot.lane.b32.xlu0 %v1222, 127
      %v1259 = vpop.permute.xlu0 %1258
      %1260 = vrot.lane.b32.xlu0 %v1223, 127
      %v1261 = vpop.permute.xlu0 %1260
      %1262 = vrot.lane.b32.xlu0 %v1224, 127
      %v1263 = vpop.permute.xlu0 %1262
      %1264 = vrot.lane.b32.xlu0 %v1225, 127
      %v1265 = vpop.permute.xlu0 %1264
      %1266 = vrot.lane.b32.xlu0 %v1226, 127
      %v1267 = vpop.permute.xlu0 %1266
      %1268 = vrot.lane.b32.xlu0 %v1227, 127
      %v1269 = vpop.permute.xlu0 %1268
      %1270 = vrot.lane.b32.xlu0 %v1228, 127
      %v1271 = vpop.permute.xlu0 %1270
      %1272 = vrot.lane.b32.xlu0 %v1229, 127
      %v1273 = vpop.permute.xlu0 %1272
      %1274 = vrot.lane.b32.xlu0 %v1230, 127
      %v1275 = vpop.permute.xlu0 %1274
      %1276 = vrot.lane.b32.xlu0 %v1231, 127
      %v1277 = vpop.permute.xlu0 %1276
      %1278 = vrot.lane.b32.xlu0 %v1232, 127
      %v1279 = vpop.permute.xlu0 %1278
      %1280 = vrot.lane.b32.xlu0 %v1233, 127
      %v1281 = vpop.permute.xlu0 %1280
      %v1298 = vadd.f32 %v1138, %v1251
      %v1299 = vadd.f32 %v1139, %v1253
      %v1300 = vadd.f32 %v1140, %v1255
      %v1301 = vadd.f32 %v1141, %v1257
      %v1302 = vadd.f32 %v1142, %v1259
      %v1303 = vadd.f32 %v1143, %v1261
      %v1304 = vadd.f32 %v1144, %v1263
      %v1305 = vadd.f32 %v1145, %v1265
      %v1306 = vadd.f32 %v1146, %v1267
      %v1307 = vadd.f32 %v1147, %v1269
      %v1308 = vadd.f32 %v1148, %v1271
      %v1309 = vadd.f32 %v1149, %v1273
      %v1310 = vadd.f32 %v1150, %v1275
      %v1311 = vadd.f32 %v1151, %v1277
      %v1312 = vadd.f32 %v1152, %v1279
      %v1313 = vadd.f32 %v1153, %v1281
      %1314 = vset.pattern.permute.xlu0 8
      %1315 = vperm.xlu0 %1314, %v178
      %v1316 = vpop.permute.xlu0 %1315
      %1318 = vset.pattern.permute.xlu0 8
      %1319 = vperm.xlu0 %1318, %v179
      %v1320 = vpop.permute.xlu0 %1319
      %1322 = vset.pattern.permute.xlu0 8
      %1323 = vperm.xlu0 %1322, %v180
      %v1324 = vpop.permute.xlu0 %1323
      %1326 = vset.pattern.permute.xlu0 8
      %1327 = vperm.xlu0 %1326, %v181
      %v1328 = vpop.permute.xlu0 %1327
      %1330 = vset.pattern.permute.xlu0 8
      %1331 = vperm.xlu0 %1330, %v182
      %v1332 = vpop.permute.xlu0 %1331
      %1334 = vset.pattern.permute.xlu0 8
      %1335 = vperm.xlu0 %1334, %v183
      %v1336 = vpop.permute.xlu0 %1335
      %1338 = vset.pattern.permute.xlu0 8
      %1339 = vperm.xlu0 %1338, %v184
      %v1340 = vpop.permute.xlu0 %1339
      %1342 = vset.pattern.permute.xlu0 8
      %1343 = vperm.xlu0 %1342, %v185
      %v1344 = vpop.permute.xlu0 %1343
      %1346 = vset.pattern.permute.xlu0 8
      %1347 = vperm.xlu0 %1346, %v186
      %v1348 = vpop.permute.xlu0 %1347
      %1350 = vset.pattern.permute.xlu0 8
      %1351 = vperm.xlu0 %1350, %v187
      %v1352 = vpop.permute.xlu0 %1351
      %1354 = vset.pattern.permute.xlu0 8
      %1355 = vperm.xlu0 %1354, %v188
      %v1356 = vpop.permute.xlu0 %1355
      %1358 = vset.pattern.permute.xlu0 8
      %1359 = vperm.xlu0 %1358, %v189
      %v1360 = vpop.permute.xlu0 %1359
      %1362 = vset.pattern.permute.xlu0 8
      %1363 = vperm.xlu0 %1362, %v190
      %v1364 = vpop.permute.xlu0 %1363
      %1366 = vset.pattern.permute.xlu0 8
      %1367 = vperm.xlu0 %1366, %v191
      %v1368 = vpop.permute.xlu0 %1367
      %1370 = vset.pattern.permute.xlu0 8
      %1371 = vperm.xlu0 %1370, %v192
      %v1372 = vpop.permute.xlu0 %1371
      %1374 = vset.pattern.permute.xlu0 8
      %1375 = vperm.xlu0 %1374, %v193
      %v1376 = vpop.permute.xlu0 %1375
      %v1378 = vmul.f32 %v1316, %v1042
      %v1379 = vmul.f32 %v1320, %v1043
      %v1380 = vmul.f32 %v1324, %v1044
      %v1381 = vmul.f32 %v1328, %v1045
      %v1382 = vmul.f32 %v1332, %v1046
      %v1383 = vmul.f32 %v1336, %v1047
      %v1384 = vmul.f32 %v1340, %v1048
      %v1385 = vmul.f32 %v1344, %v1049
      %v1386 = vmul.f32 %v1348, %v1050
      %v1387 = vmul.f32 %v1352, %v1051
      %v1388 = vmul.f32 %v1356, %v1052
      %v1389 = vmul.f32 %v1360, %v1053
      %v1390 = vmul.f32 %v1364, %v1054
      %v1391 = vmul.f32 %v1368, %v1055
      %v1392 = vmul.f32 %v1372, %v1056
      %v1393 = vmul.f32 %v1376, %v1057
      %1410 = vrot.lane.b32.xlu0 %v1378, 126
      %v1411 = vpop.permute.xlu0 %1410
      %1412 = vrot.lane.b32.xlu0 %v1379, 126
      %v1413 = vpop.permute.xlu0 %1412
      %1414 = vrot.lane.b32.xlu0 %v1380, 126
      %v1415 = vpop.permute.xlu0 %1414
      %1416 = vrot.lane.b32.xlu0 %v1381, 126
      %v1417 = vpop.permute.xlu0 %1416
      %1418 = vrot.lane.b32.xlu0 %v1382, 126
      %v1419 = vpop.permute.xlu0 %1418
      %1420 = vrot.lane.b32.xlu0 %v1383, 126
      %v1421 = vpop.permute.xlu0 %1420
      %1422 = vrot.lane.b32.xlu0 %v1384, 126
      %v1423 = vpop.permute.xlu0 %1422
      %1424 = vrot.lane.b32.xlu0 %v1385, 126
      %v1425 = vpop.permute.xlu0 %1424
      %1426 = vrot.lane.b32.xlu0 %v1386, 126
      %v1427 = vpop.permute.xlu0 %1426
      %1428 = vrot.lane.b32.xlu0 %v1387, 126
      %v1429 = vpop.permute.xlu0 %1428
      %1430 = vrot.lane.b32.xlu0 %v1388, 126
      %v1431 = vpop.permute.xlu0 %1430
      %1432 = vrot.lane.b32.xlu0 %v1389, 126
      %v1433 = vpop.permute.xlu0 %1432
      %1434 = vrot.lane.b32.xlu0 %v1390, 126
      %v1435 = vpop.permute.xlu0 %1434
      %1436 = vrot.lane.b32.xlu0 %v1391, 126
      %v1437 = vpop.permute.xlu0 %1436
      %1438 = vrot.lane.b32.xlu0 %v1392, 126
      %v1439 = vpop.permute.xlu0 %1438
      %1440 = vrot.lane.b32.xlu0 %v1393, 126
      %v1441 = vpop.permute.xlu0 %1440
      %v1458 = vadd.f32 %v1298, %v1411
      %v1459 = vadd.f32 %v1299, %v1413
      %v1460 = vadd.f32 %v1300, %v1415
      %v1461 = vadd.f32 %v1301, %v1417
      %v1462 = vadd.f32 %v1302, %v1419
      %v1463 = vadd.f32 %v1303, %v1421
      %v1464 = vadd.f32 %v1304, %v1423
      %v1465 = vadd.f32 %v1305, %v1425
      %v1466 = vadd.f32 %v1306, %v1427
      %v1467 = vadd.f32 %v1307, %v1429
      %v1468 = vadd.f32 %v1308, %v1431
      %v1469 = vadd.f32 %v1309, %v1433
      %v1470 = vadd.f32 %v1310, %v1435
      %v1471 = vadd.f32 %v1311, %v1437
      %v1472 = vadd.f32 %v1312, %v1439
      %v1473 = vadd.f32 %v1313, %v1441
      %v1474 = vmul.f32 %v1458, 0.5
      %v1475 = vmul.f32 %v1459, 0.5
      %v1476 = vmul.f32 %v1460, 0.5
      %v1477 = vmul.f32 %v1461, 0.5
      %v1478 = vmul.f32 %v1462, 0.5
      %v1479 = vmul.f32 %v1463, 0.5
      %v1480 = vmul.f32 %v1464, 0.5
      %v1481 = vmul.f32 %v1465, 0.5
      %v1482 = vmul.f32 %v1466, 0.5
      %v1483 = vmul.f32 %v1467, 0.5
      %v1484 = vmul.f32 %v1468, 0.5
      %v1485 = vmul.f32 %v1469, 0.5
      %v1486 = vmul.f32 %v1470, 0.5
      %v1487 = vmul.f32 %v1471, 0.5
      %v1488 = vmul.f32 %v1472, 0.5
      %v1489 = vmul.f32 %v1473, 0.5
      %v1490 = vmul.f32 %v1458, 0.044715
      %v1491 = vmul.f32 %v1459, 0.044715
      %v1492 = vmul.f32 %v1460, 0.044715
      %v1493 = vmul.f32 %v1461, 0.044715
      %v1494 = vmul.f32 %v1462, 0.044715
      %v1495 = vmul.f32 %v1463, 0.044715
      %v1496 = vmul.f32 %v1464, 0.044715
      %v1497 = vmul.f32 %v1465, 0.044715
      %v1498 = vmul.f32 %v1466, 0.044715
      %v1499 = vmul.f32 %v1467, 0.044715
      %v1500 = vmul.f32 %v1468, 0.044715
      %v1501 = vmul.f32 %v1469, 0.044715
      %v1502 = vmul.f32 %v1470, 0.044715
      %v1503 = vmul.f32 %v1471, 0.044715
      %v1504 = vmul.f32 %v1472, 0.044715
      %v1505 = vmul.f32 %v1473, 0.044715
      %v1506 = vmul.f32 %v1490, %v1458
      %v1507 = vmul.f32 %v1491, %v1459
      %v1508 = vmul.f32 %v1492, %v1460
      %v1509 = vmul.f32 %v1493, %v1461
      %v1510 = vmul.f32 %v1494, %v1462
      %v1511 = vmul.f32 %v1495, %v1463
      %v1512 = vmul.f32 %v1496, %v1464
      %v1513 = vmul.f32 %v1497, %v1465
      %v1514 = vmul.f32 %v1498, %v1466
      %v1515 = vmul.f32 %v1499, %v1467
      %v1516 = vmul.f32 %v1500, %v1468
      %v1517 = vmul.f32 %v1501, %v1469
      %v1518 = vmul.f32 %v1502, %v1470
      %v1519 = vmul.f32 %v1503, %v1471
      %v1520 = vmul.f32 %v1504, %v1472
      %v1521 = vmul.f32 %v1505, %v1473
      %v1522 = vmul.f32 %v1506, %v1458
      %v1523 = vmul.f32 %v1507, %v1459
      %v1524 = vmul.f32 %v1508, %v1460
      %v1525 = vmul.f32 %v1509, %v1461
      %v1526 = vmul.f32 %v1510, %v1462
      %v1527 = vmul.f32 %v1511, %v1463
      %v1528 = vmul.f32 %v1512, %v1464
      %v1529 = vmul.f32 %v1513, %v1465
      %v1530 = vmul.f32 %v1514, %v1466
      %v1531 = vmul.f32 %v1515, %v1467
      %v1532 = vmul.f32 %v1516, %v1468
      %v1533 = vmul.f32 %v1517, %v1469
      %v1534 = vmul.f32 %v1518, %v1470
      %v1535 = vmul.f32 %v1519, %v1471
      %v1536 = vmul.f32 %v1520, %v1472
      %v1537 = vmul.f32 %v1521, %v1473
      %v1538 = vadd.f32 %v1458, %v1522
      %v1539 = vadd.f32 %v1459, %v1523
      %v1540 = vadd.f32 %v1460, %v1524
      %v1541 = vadd.f32 %v1461, %v1525
      %v1542 = vadd.f32 %v1462, %v1526
      %v1543 = vadd.f32 %v1463, %v1527
      %v1544 = vadd.f32 %v1464, %v1528
      %v1545 = vadd.f32 %v1465, %v1529
      %v1546 = vadd.f32 %v1466, %v1530
      %v1547 = vadd.f32 %v1467, %v1531
      %v1548 = vadd.f32 %v1468, %v1532
      %v1549 = vadd.f32 %v1469, %v1533
      %v1550 = vadd.f32 %v1470, %v1534
      %v1551 = vadd.f32 %v1471, %v1535
      %v1552 = vadd.f32 %v1472, %v1536
      %v1553 = vadd.f32 %v1473, %v1537
      %v1554 = vmul.f32 %v1538, 0.7978846
      %v1555 = vmul.f32 %v1539, 0.7978846
      %v1556 = vmul.f32 %v1540, 0.7978846
      %v1557 = vmul.f32 %v1541, 0.7978846
      %v1558 = vmul.f32 %v1542, 0.7978846
      %v1559 = vmul.f32 %v1543, 0.7978846
      %v1560 = vmul.f32 %v1544, 0.7978846
      %v1561 = vmul.f32 %v1545, 0.7978846
      %v1562 = vmul.f32 %v1546, 0.7978846
      %v1563 = vmul.f32 %v1547, 0.7978846
      %v1564 = vmul.f32 %v1548, 0.7978846
      %v1565 = vmul.f32 %v1549, 0.7978846
      %v1566 = vmul.f32 %v1550, 0.7978846
      %v1567 = vmul.f32 %v1551, 0.7978846
      %v1568 = vmul.f32 %v1552, 0.7978846
      %v1569 = vmul.f32 %v1553, 0.7978846
      %v1570 = vtanh.pop %v1554
      %v1571 = vtanh.pop %v1555
      %v1572 = vtanh.pop %v1556
      %v1573 = vtanh.pop %v1557
      %v1574 = vtanh.pop %v1558
      %v1575 = vtanh.pop %v1559
      %v1576 = vtanh.pop %v1560
      %v1577 = vtanh.pop %v1561
      %v1578 = vtanh.pop %v1562
      %v1579 = vtanh.pop %v1563
      %v1580 = vtanh.pop %v1564
      %v1581 = vtanh.pop %v1565
      %v1582 = vtanh.pop %v1566
      %v1583 = vtanh.pop %v1567
      %v1584 = vtanh.pop %v1568
      %v1585 = vtanh.pop %v1569
      %v1586 = vadd.f32 %v1570, 1.0
      %v1587 = vadd.f32 %v1571, 1.0
      %v1588 = vadd.f32 %v1572, 1.0
      %v1589 = vadd.f32 %v1573, 1.0
      %v1590 = vadd.f32 %v1574, 1.0
      %v1591 = vadd.f32 %v1575, 1.0
      %v1592 = vadd.f32 %v1576, 1.0
      %v1593 = vadd.f32 %v1577, 1.0
      %v1594 = vadd.f32 %v1578, 1.0
      %v1595 = vadd.f32 %v1579, 1.0
      %v1596 = vadd.f32 %v1580, 1.0
      %v1597 = vadd.f32 %v1581, 1.0
      %v1598 = vadd.f32 %v1582, 1.0
      %v1599 = vadd.f32 %v1583, 1.0
      %v1600 = vadd.f32 %v1584, 1.0
      %v1601 = vadd.f32 %v1585, 1.0
      %v1602 = vmul.f32 %v1474, %v1586
      %v1603 = vmul.f32 %v1475, %v1587
      %v1604 = vmul.f32 %v1476, %v1588
      %v1605 = vmul.f32 %v1477, %v1589
      %v1606 = vmul.f32 %v1478, %v1590
      %v1607 = vmul.f32 %v1479, %v1591
      %v1608 = vmul.f32 %v1480, %v1592
      %v1609 = vmul.f32 %v1481, %v1593
      %v1610 = vmul.f32 %v1482, %v1594
      %v1611 = vmul.f32 %v1483, %v1595
      %v1612 = vmul.f32 %v1484, %v1596
      %v1613 = vmul.f32 %v1485, %v1597
      %v1614 = vmul.f32 %v1486, %v1598
      %v1615 = vmul.f32 %v1487, %v1599
      %v1616 = vmul.f32 %v1488, %v1600
      %v1617 = vmul.f32 %v1489, %v1601
      %vm1618 = vcmask 64512
      %1619 = vst.msk [vmem:[%s143] sm:$0xff] %vm1618, %v1602
      %1620 = vst.msk [vmem:[%s143 + $0x8] sm:$0xff] %vm1618, %v1603
      %1621 = vst.msk [vmem:[%s143 + $0x10] sm:$0xff] %vm1618, %v1604
      %1622 = vst.msk [vmem:[%s143 + $0x18] sm:$0xff] %vm1618, %v1605
      %1623 = vst.msk [vmem:[%s143 + $0x20] sm:$0xff] %vm1618, %v1606
      %1624 = vst.msk [vmem:[%s143 + $0x28] sm:$0xff] %vm1618, %v1607
      %1625 = vst.msk [vmem:[%s143 + $0x30] sm:$0xff] %vm1618, %v1608
      %1626 = vst.msk [vmem:[%s143 + $0x38] sm:$0xff] %vm1618, %v1609
      %1627 = vst.msk [vmem:[%s143 + $0x40] sm:$0xff] %vm1618, %v1610
      %1628 = vst.msk [vmem:[%s143 + $0x48] sm:$0xff] %vm1618, %v1611
      %1629 = vst.msk [vmem:[%s143 + $0x50] sm:$0xff] %vm1618, %v1612
      %1630 = vst.msk [vmem:[%s143 + $0x58] sm:$0xff] %vm1618, %v1613
      %1631 = vst.msk [vmem:[%s143 + $0x60] sm:$0xff] %vm1618, %v1614
      %1632 = vst.msk [vmem:[%s143 + $0x68] sm:$0xff] %vm1618, %v1615
      %1633 = vst.msk [vmem:[%s143 + $0x70] sm:$0xff] %vm1618, %v1616
      %1634 = vst.msk [vmem:[%s143 + $0x78] sm:$0xff] %vm1618, %v1617
      %p1635 = scmp.lt.s32.totalorder %s13, 1
      %s1636 = scalar_select %p1635, %s13, 1
      %s1637 = smul.addr %s1636, 16
      %s1638 = smul.addr %s1637, 8
      %s1639 = scalar_lea.vmem %s2, %s1638
      // Predicated region
      $region29: #{mlsif_forward.7} parent=27 // pred_check
        %p1640 = pneg %p78
      $region30: #{mlsif_forward.7} parent=27 // pred_check_branch
        %1642 = sbr.rel (%p1640) target = $region32
      $region31: #{mlsif_forward.7} parent=27 // pred_region
        _
      $region32: #{mlsif_forward.7} parent=27 // pred_fallthru
        _
    $region28: #{mlsif_forward.7} parent=5 // pred_fallthru
      _
    %p1643 = scmp.le.s32.totalorder 2, %s8
    // Predicated region
    $region33: #{mlsif_forward.7} parent=5 // pred_check
      %p1644 = pneg %p1643
    $region34: #{mlsif_forward.7} parent=5 // pred_check_branch
      %1646 = sbr.rel (%p1644) target = $region36
    $region35: #{mlsif_forward.7} parent=5 // pred_region
      %s1647 = ssub.s32 %s8, 2
      // Predicated region
      $region37: #{mlsif_forward.7} parent=35 // pred_check
        %p1648 = pneg %p84
      $region38: #{mlsif_forward.7} parent=35 // pred_check_branch
        %1650 = sbr.rel (%p1648) target = $region40
      $region39: #{mlsif_forward.7} parent=35 // pred_region
        %p1651 = scmp.lt.s32.totalorder %s14, 1
        %s1652 = scalar_select %p1651, %s14, 1
        %s1653 = smul.addr %s1652, 16
        %s1654 = smul.addr %s1653, 8
        %s1655 = scalar_lea.vmem %s2, %s1654
      $region40: #{mlsif_forward.7} parent=35 // pred_fallthru
        _
    $region36: #{mlsif_forward.7} parent=5 // pred_fallthru
      _
  $region6: #{mlsif_forward.7} parent=0 // loop_footer
    %s12 = sadd.s32 1, %s8
  $region7: #{mlsif_forward.7} parent=0 // loop_footer_branch
    %7 = sbr.rel target = $region3
  $region8: #{mlsif_forward.7} parent=0 // loop_exit
    _

// kernel: mlsif_forward.9
$region0: #{mlsif_forward.9}
  #allocation0 [shape = 'u32[]', space=smem, size = 0x4, offset = 0x4, fixed_abs, tag = 'smem constant byte address 0x4 - core index']
  #allocation1 [shape = 'u32[72,128]{1,0:T(1,128)}', space=vmem, size = 0x9000, scoped, tag = 'internal scratch']
  %s0 = inlined_call_operand.vmem [shape: f32[2,16,64], index: 0, kind: input, shape index: {}]
  %s1 = inlined_call_operand.vmem [shape: f32[16,1], index: 1, kind: input, shape index: {}]
  %s2 = inlined_call_operand.vmem [shape: f32[16,1], index: 2, kind: input, shape index: {}]
  %s3 = inlined_call_operand.vmem [shape: f32[64,16], index: 3, kind: input, shape index: {}]
  %s4 = inlined_call_operand.vmem [shape: f32[2,64,64], index: 4, kind: output, shape index: {}]
  %s5 = sld [smem:[#allocation0]]
  $region49: #{mlsif_forward.9} parent=0
    _
  %s7 = ssub.s32 1, %s5
  %s8 = scalar_select 0, %s7, %s5
  loop: start=0, step=1, limit=4
  $region2: #{mlsif_forward.9} parent=0 // loop_pre_header
    _
  $region3: #{mlsif_forward.9} parent=0 // loop_header
    %s10 = sphi 0, %s14
    %p11 = scmp.ge.s32.totalorder %s10, 4
    %s20 = sphi 0, %s22
    %s23 = sphi 0, %s20
    %s24 = sphi 0, %s23
    %s40 = sphi 0, %s24
    %s44 = sphi 0, %s44
    %s46 = sphi 0, %s44
    %s47 = sphi 0, %s46
    %s61 = sphi 0, %s47
    %s65 = sphi 0, %s65
    %s67 = sphi 0, %s65
    %s68 = sphi 0, %s67
    %s82 = sphi 0, %s68
    %s86 = sphi 0, %s86
    %s88 = sphi 0, %s86
    %s89 = sphi 0, %s88
    %s103 = sphi 0, %s89
    %s109 = sphi 0, %s111
    %s112 = sphi 0, %s109
    %s113 = sphi 0, %s112
    %s129 = sphi 0, %s113
  $region4: #{mlsif_forward.9} parent=0 // loop_header_branch
    %13 = sbr.rel (%p11) target = $region8
  $region5: #{mlsif_forward.9} parent=0 // loop_body
    %s15 = ssub.s32 %s10, 1
    %s16 = ssub.s32 %s10, 2
    %s17 = sadd.s32 %s10, 1
    %s18 = ssub.s32 %s10, %s17
    %p19 = scmp.eq.s32.totalorder %s18, 0
    %s21 = sadd.s32 %s20, 1
    %s22 = scalar_select %p19, %s20, %s21
    %p25 = pneg %p19
    %p26 = scmp.eq.s32.totalorder %s10, 1
    %p27 = por %p25, %p26
    %p28 = scmp.ne.s32.totalorder %s20, %s23
    %p29 = scmp.eq.s32.totalorder %s10, 0
    %p30 = por %p28, %p29
    %p31 = scmp.ne.s32.totalorder %s20, %s23
    %p32 = scmp.eq.s32.totalorder %s15, 1
    %p33 = por %p31, %p32
    %p34 = scmp.ne.s32.totalorder %s23, %s24
    %p35 = scmp.eq.s32.totalorder %s15, 0
    %p36 = por %p34, %p35
    %p37 = scmp.ne.s32.totalorder %s23, %s24
    %p38 = scmp.eq.s32.totalorder %s16, 1
    %p39 = por %p37, %p38
    %p41 = scmp.ne.s32.totalorder %s24, %s40
    %p42 = scmp.eq.s32.totalorder %s16, 0
    %p43 = por %p41, %p42
    %s45 = sadd.s32 %s44, 1
    %p48 = scmp.eq.s32.totalorder %s10, 1
    %p49 = scmp.ne.s32.totalorder %s44, %s46
    %p50 = scmp.eq.s32.totalorder %s10, 0
    %p51 = por %p49, %p50
    %p52 = scmp.ne.s32.totalorder %s44, %s46
    %p53 = scmp.eq.s32.totalorder %s15, 1
    %p54 = por %p52, %p53
    %p55 = scmp.ne.s32.totalorder %s46, %s47
    %p56 = scmp.eq.s32.totalorder %s15, 0
    %p57 = por %p55, %p56
    %p58 = scmp.ne.s32.totalorder %s46, %s47
    %p59 = scmp.eq.s32.totalorder %s16, 1
    %p60 = por %p58, %p59
    %p62 = scmp.ne.s32.totalorder %s47, %s61
    %p63 = scmp.eq.s32.totalorder %s16, 0
    %p64 = por %p62, %p63
    %s66 = sadd.s32 %s65, 1
    %p69 = scmp.eq.s32.totalorder %s10, 1
    %p70 = scmp.ne.s32.totalorder %s65, %s67
    %p71 = scmp.eq.s32.totalorder %s10, 0
    %p72 = por %p70, %p71
    %p73 = scmp.ne.s32.totalorder %s65, %s67
    %p74 = scmp.eq.s32.totalorder %s15, 1
    %p75 = por %p73, %p74
    %p76 = scmp.ne.s32.totalorder %s67, %s68
    %p77 = scmp.eq.s32.totalorder %s15, 0
    %p78 = por %p76, %p77
    %p79 = scmp.ne.s32.totalorder %s67, %s68
    %p80 = scmp.eq.s32.totalorder %s16, 1
    %p81 = por %p79, %p80
    %p83 = scmp.ne.s32.totalorder %s68, %s82
    %p84 = scmp.eq.s32.totalorder %s16, 0
    %p85 = por %p83, %p84
    %s87 = sadd.s32 %s86, 1
    %p90 = scmp.eq.s32.totalorder %s10, 1
    %p91 = scmp.ne.s32.totalorder %s86, %s88
    %p92 = scmp.eq.s32.totalorder %s10, 0
    %p93 = por %p91, %p92
    %p94 = scmp.ne.s32.totalorder %s86, %s88
    %p95 = scmp.eq.s32.totalorder %s15, 1
    %p96 = por %p94, %p95
    %p97 = scmp.ne.s32.totalorder %s88, %s89
    %p98 = scmp.eq.s32.totalorder %s15, 0
    %p99 = por %p97, %p98
    %p100 = scmp.ne.s32.totalorder %s88, %s89
    %p101 = scmp.eq.s32.totalorder %s16, 1
    %p102 = por %p100, %p101
    %p104 = scmp.ne.s32.totalorder %s89, %s103
    %p105 = scmp.eq.s32.totalorder %s16, 0
    %p106 = por %p104, %p105
    %s107 = ssub.s32 %s10, %s17
    %p108 = scmp.eq.s32.totalorder %s107, 0
    %s110 = sadd.s32 %s109, 1
    %s111 = scalar_select %p108, %s109, %s110
    %p114 = pneg %p108
    %p115 = scmp.eq.s32.totalorder %s10, 1
    %p116 = por %p114, %p115
    %p117 = scmp.ne.s32.totalorder %s109, %s112
    %p118 = scmp.eq.s32.totalorder %s10, 0
    %p119 = por %p117, %p118
    %p120 = scmp.ne.s32.totalorder %s109, %s112
    %p121 = scmp.eq.s32.totalorder %s15, 1
    %p122 = por %p120, %p121
    %p123 = scmp.ne.s32.totalorder %s112, %s113
    %p124 = scmp.eq.s32.totalorder %s15, 0
    %p125 = por %p123, %p124
    %p126 = scmp.ne.s32.totalorder %s112, %s113
    %p127 = scmp.eq.s32.totalorder %s16, 1
    %p128 = por %p126, %p127
    %p130 = scmp.ne.s32.totalorder %s113, %s129
    %p131 = scmp.eq.s32.totalorder %s16, 0
    %p132 = por %p130, %p131
    %p133 = scmp.le.s32.totalorder 1, %s10
    %p134 = scmp.lt.s32.totalorder %s10, 3
    %p135 = pnand %p133, %p134
    %p136 = pneg %p135
    // Predicated region
    $region9: #{mlsif_forward.9} parent=5 // pred_check
      _
    $region10: #{mlsif_forward.9} parent=5 // pred_check_branch
      %138 = sbr.rel (%p135) target = $region12
    $region11: #{mlsif_forward.9} parent=5 // pred_region
      %s139 = ssub.s32 %s10, 1
      // Predicated region
      $region13: #{mlsif_forward.9} parent=11 // pred_check
        %p140 = pneg %p57
      $region14: #{mlsif_forward.9} parent=11 // pred_check_branch
        %142 = sbr.rel (%p140) target = $region16
      $region15: #{mlsif_forward.9} parent=11 // pred_region
        _
      $region16: #{mlsif_forward.9} parent=11 // pred_fallthru
        _
      // Predicated region
      $region17: #{mlsif_forward.9} parent=11 // pred_check
        %p143 = pneg %p78
      $region18: #{mlsif_forward.9} parent=11 // pred_check_branch
        %145 = sbr.rel (%p143) target = $region20
      $region19: #{mlsif_forward.9} parent=11 // pred_region
        _
      $region20: #{mlsif_forward.9} parent=11 // pred_fallthru
        _
      // Predicated region
      $region21: #{mlsif_forward.9} parent=11 // pred_check
        %p146 = pneg %p99
      $region22: #{mlsif_forward.9} parent=11 // pred_check_branch
        %148 = sbr.rel (%p146) target = $region24
      $region23: #{mlsif_forward.9} parent=11 // pred_region
        _
      $region24: #{mlsif_forward.9} parent=11 // pred_fallthru
        _
    $region12: #{mlsif_forward.9} parent=5 // pred_fallthru
      _
    %p149 = scmp.lt.s32.totalorder %s10, 2
    // Predicated region
    $region25: #{mlsif_forward.9} parent=5 // pred_check
      %p150 = pneg %p149
    $region26: #{mlsif_forward.9} parent=5 // pred_check_branch
      %152 = sbr.rel (%p150) target = $region28
    $region27: #{mlsif_forward.9} parent=5 // pred_region
      // Predicated region
      $region29: #{mlsif_forward.9} parent=27 // pred_check
        %p153 = pneg %p30
      $region30: #{mlsif_forward.9} parent=27 // pred_check_branch
        %155 = sbr.rel (%p153) target = $region32
      $region31: #{mlsif_forward.9} parent=27 // pred_region
        %p156 = scmp.lt.s32.totalorder %s10, 1
        %s157 = scalar_select %p156, %s10, 1
        %s158 = smul.addr %s157, 2
        %s159 = smul.addr %s158, 8
        %s160 = scalar_lea.vmem %s0, %s159
      $region32: #{mlsif_forward.9} parent=27 // pred_fallthru
        _
    $region28: #{mlsif_forward.9} parent=5 // pred_fallthru
      _
    %p161 = scmp.le.s32.totalorder 1, %s10
    %p162 = scmp.lt.s32.totalorder %s10, 3
    %p163 = pnand %p161, %p162
    %p164 = pneg %p163
    // Predicated region
    $region33: #{mlsif_forward.9} parent=5 // pred_check
      _
    $region34: #{mlsif_forward.9} parent=5 // pred_check_branch
      %166 = sbr.rel (%p163) target = $region36
    $region35: #{mlsif_forward.9} parent=5 // pred_region
      %s167 = ssub.s32 %s10, 1
      %p168 = scmp.lt.s32.totalorder %s15, 1
      %s169 = scalar_select %p168, %s15, 1
      %s170 = smul.addr %s169, 2
      %s171 = smul.addr %s170, 8
      %s172 = scalar_lea.vmem %s0, %s171
      %p173 = pneg %p36
      %p174 = pneg %p33
      %p175 = pneg %p57
      %p176 = pneg %p54
      %p177 = pneg %p78
      %p178 = pneg %p75
      %p179 = pneg %p99
      %p180 = pneg %p96
      %p181 = pneg %p125
      %p182 = pneg %p122
      %p183 = scmp.lt.s32.totalorder %s15, 1
      %s184 = scalar_select %p183, %s15, 1
      %s185 = smul.addr %s184, 8
      %s186 = smul.addr %s185, 8
      %s187 = scalar_lea.vmem %s4, %s186
      %p188 = scmp.lt.s32.totalorder %s15, 1
      %s189 = scalar_select %p188, %s15, 1
      %s190 = smul.addr %s189, 2
      %s191 = smul.addr %s190, 8
      %s192 = scalar_lea.vmem %s0, %s191
      %p193 = scmp.lt.s32.totalorder %s15, 1
      %s194 = scalar_select %p193, %s15, 1
      %s195 = smul.addr %s194, 8
      %s196 = smul.addr %s195, 8
      %s197 = scalar_lea.vmem %s4, %s196
      %v198 = vld [vmem:[%s192] sm:$0xff]
      %v199 = vld [vmem:[%s192 + $0x8] sm:$0xff]
      %vm200 = vcmask 523264
      %v201 = vsel %vm200, %v198, 0.0
      %v202 = vsel %vm200, %v199, 0.0
      %v203 = vadd.f32 %v201, %v202
      %v204 = vrot.slane %v203, 4
      %v205 = vadd.f32 %v203, %v204
      %v206 = vrot.slane %v205, 2
      %v207 = vadd.f32 %v205, %v206
      %v208 = vrot.slane %v207, 1
      %v209 = vadd.f32 %v207, %v208
      %v210 = vrcp.pop 16.0
      %v211 = vmul.f32 16.0, %v210
      %v212 = vsub.f32 1.0, %v211
      %v213 = vmul.f32 %v210, %v212
      %v214 = vadd.f32 %v210, %v213
      %vm215 = vweird.f32 %v210
      %v216 = vsel %vm215, %v210, %v214
      %v217 = vmul.f32 %v209, %v216
      %v218 = vsub.f32 %v198, %v217
      %v219 = vsub.f32 %v199, %v217
      %v220 = vmul.f32 %v218, %v218
      %v221 = vmul.f32 %v219, %v219
      %v222 = vsel %vm200, %v220, 0.0
      %v223 = vsel %vm200, %v221, 0.0
      %v224 = vadd.f32 %v222, %v223
      %v225 = vrot.slane %v224, 4
      %v226 = vadd.f32 %v224, %v225
      %v227 = vrot.slane %v226, 2
      %v228 = vadd.f32 %v226, %v227
      %v229 = vrot.slane %v228, 1
      %v230 = vadd.f32 %v228, %v229
      %v231 = vmul.f32 %v230, %v216
      %v232 = vadd.f32 %v231, 1e-05
      %v233 = vrsqrt.pop %v232
      %v234 = vmul.f32 %v233, %v232
      %v235 = vmul.f32 %v234, %v233
      %v236 = vmul.f32 0.5, %v235
      %v237 = vsub.f32 1.5, %v236
      %v238 = vmul.f32 %v233, %v237
      %vm239 = vweird.f32 %v232
      %vm240 = vweird.f32 %v233
      %vm241 = vmor %vm239, %vm240
      %v242 = vsel %vm241, %v233, %v238
      %v243 = vmul.f32 %v218, %v242
      %v244 = vmul.f32 %v219, %v242
      %v245 = vld [vmem:[%s1] sm:$0xff]
      %v246 = vld [vmem:[%s1 + $0x8] sm:$0xff]
      %248 = vset.pattern.permute.xlu0 0
      %249 = vperm.xlu0 %248, %v245
      %v250 = vpop.permute.xlu0 %249
      %253 = vset.pattern.permute.xlu0 0
      %254 = vperm.xlu0 %253, %v246
      %v255 = vpop.permute.xlu0 %254
      %v257 = vmul.f32 %v243, %v250
      %v258 = vmul.f32 %v244, %v255
      %v259 = vld [vmem:[%s2] sm:$0xff]
      %v260 = vld [vmem:[%s2 + $0x8] sm:$0xff]
      %262 = vset.pattern.permute.xlu0 0
      %263 = vperm.xlu0 %262, %v259
      %v264 = vpop.permute.xlu0 %263
      %267 = vset.pattern.permute.xlu0 0
      %268 = vperm.xlu0 %267, %v260
      %v269 = vpop.permute.xlu0 %268
      %v271 = vadd.f32 %v257, %v264
      %v272 = vadd.f32 %v258, %v269
      %v273 = vld [vmem:[%s3] sm:$0xff]
      %v274 = vld [vmem:[%s3 + $0x8] sm:$0xff]
      %v275 = vld [vmem:[%s3 + $0x10] sm:$0xff]
      %v276 = vld [vmem:[%s3 + $0x18] sm:$0xff]
      %v277 = vld [vmem:[%s3 + $0x20] sm:$0xff]
      %v278 = vld [vmem:[%s3 + $0x28] sm:$0xff]
      %v279 = vld [vmem:[%s3 + $0x30] sm:$0xff]
      %v280 = vld [vmem:[%s3 + $0x38] sm:$0xff]
      %vm281 = vcmask 130048
      %v283 = vsel %vm281, %v273, 0
      %v286 = vsel %vm281, %v274, 0
      %v289 = vsel %vm281, %v275, 0
      %v292 = vsel %vm281, %v276, 0
      %v295 = vsel %vm281, %v277, 0
      %v298 = vsel %vm281, %v278, 0
      %v301 = vsel %vm281, %v279, 0
      %v304 = vsel %vm281, %v280, 0
      %306 = vmatpush.msra.mxu0 0.0
      %307 = vmatpush.msra.mxu0 0.0
      %308 = vmatpush.msra.mxu0 0.0
      %309 = vmatpush.msra.mxu0 0.0
      %310 = vmatpush.msra.mxu0 0.0
      %311 = vmatpush.msra.mxu0 0.0
      %312 = vmatpush.msra.mxu0 0.0
      %313 = vmatpush.msra.mxu0 0.0
      %314 = vmatpush.msra.mxu0 0.0
      %315 = vmatpush.msra.mxu0 0.0
      %316 = vmatpush.msra.mxu0 0.0
      %317 = vmatpush.msra.mxu0 0.0
      %318 = vmatpush.msra.mxu0 0.0
      %319 = vmatpush.msra.mxu0 0.0
      %320 = vmatpush.msra.mxu0 %v272
      %321 = vmatpush.msra.mxu0 %v271
      %322 = vmatmul.f32.gmra.mxu0 %v283
      %v323 = vpop.f32.mrf.mxu0
      %v324 = vadd.f32 0.0, %v323
      %325 = vmatmul.f32.gmra.mxu0 %v286
      %v326 = vpop.f32.mrf.mxu0
      %v327 = vadd.f32 0.0, %v326
      %328 = vmatmul.f32.gmra.mxu0 %v289
      %v329 = vpop.f32.mrf.mxu0
      %v330 = vadd.f32 0.0, %v329
      %331 = vmatmul.f32.gmra.mxu0 %v292
      %v332 = vpop.f32.mrf.mxu0
      %v333 = vadd.f32 0.0, %v332
      %334 = vmatmul.f32.gmra.mxu0 %v295
      %v335 = vpop.f32.mrf.mxu0
      %v336 = vadd.f32 0.0, %v335
      %337 = vmatmul.f32.gmra.mxu0 %v298
      %v338 = vpop.f32.mrf.mxu0
      %v339 = vadd.f32 0.0, %v338
      %340 = vmatmul.f32.gmra.mxu0 %v301
      %v341 = vpop.f32.mrf.mxu0
      %v342 = vadd.f32 0.0, %v341
      %343 = vmatmul.f32.gmra.mxu0 %v304
      %v344 = vpop.f32.mrf.mxu0
      %v345 = vadd.f32 0.0, %v344
      %346 = vdwg.mxu0
      %v347 = vmul.f32 %v324, 0.5
      %v348 = vmul.f32 %v327, 0.5
      %v349 = vmul.f32 %v330, 0.5
      %v350 = vmul.f32 %v333, 0.5
      %v351 = vmul.f32 %v336, 0.5
      %v352 = vmul.f32 %v339, 0.5
      %v353 = vmul.f32 %v342, 0.5
      %v354 = vmul.f32 %v345, 0.5
      %v355 = vmul.f32 %v324, 0.044715
      %v356 = vmul.f32 %v327, 0.044715
      %v357 = vmul.f32 %v330, 0.044715
      %v358 = vmul.f32 %v333, 0.044715
      %v359 = vmul.f32 %v336, 0.044715
      %v360 = vmul.f32 %v339, 0.044715
      %v361 = vmul.f32 %v342, 0.044715
      %v362 = vmul.f32 %v345, 0.044715
      %v363 = vmul.f32 %v355, %v324
      %v364 = vmul.f32 %v356, %v327
      %v365 = vmul.f32 %v357, %v330
      %v366 = vmul.f32 %v358, %v333
      %v367 = vmul.f32 %v359, %v336
      %v368 = vmul.f32 %v360, %v339
      %v369 = vmul.f32 %v361, %v342
      %v370 = vmul.f32 %v362, %v345
      %v371 = vmul.f32 %v363, %v324
      %v372 = vmul.f32 %v364, %v327
      %v373 = vmul.f32 %v365, %v330
      %v374 = vmul.f32 %v366, %v333
      %v375 = vmul.f32 %v367, %v336
      %v376 = vmul.f32 %v368, %v339
      %v377 = vmul.f32 %v369, %v342
      %v378 = vmul.f32 %v370, %v345
      %v379 = vadd.f32 %v324, %v371
      %v380 = vadd.f32 %v327, %v372
      %v381 = vadd.f32 %v330, %v373
      %v382 = vadd.f32 %v333, %v374
      %v383 = vadd.f32 %v336, %v375
      %v384 = vadd.f32 %v339, %v376
      %v385 = vadd.f32 %v342, %v377
      %v386 = vadd.f32 %v345, %v378
      %v387 = vmul.f32 %v379, 0.7978846
      %v388 = vmul.f32 %v380, 0.7978846
      %v389 = vmul.f32 %v381, 0.7978846
      %v390 = vmul.f32 %v382, 0.7978846
      %v391 = vmul.f32 %v383, 0.7978846
      %v392 = vmul.f32 %v384, 0.7978846
      %v393 = vmul.f32 %v385, 0.7978846
      %v394 = vmul.f32 %v386, 0.7978846
      %v395 = vtanh.pop %v387
      %v396 = vtanh.pop %v388
      %v397 = vtanh.pop %v389
      %v398 = vtanh.pop %v390
      %v399 = vtanh.pop %v391
      %v400 = vtanh.pop %v392
      %v401 = vtanh.pop %v393
      %v402 = vtanh.pop %v394
      %v403 = vadd.f32 %v395, 1.0
      %v404 = vadd.f32 %v396, 1.0
      %v405 = vadd.f32 %v397, 1.0
      %v406 = vadd.f32 %v398, 1.0
      %v407 = vadd.f32 %v399, 1.0
      %v408 = vadd.f32 %v400, 1.0
      %v409 = vadd.f32 %v401, 1.0
      %v410 = vadd.f32 %v402, 1.0
      %v411 = vmul.f32 %v347, %v403
      %v412 = vmul.f32 %v348, %v404
      %v413 = vmul.f32 %v349, %v405
      %v414 = vmul.f32 %v350, %v406
      %v415 = vmul.f32 %v351, %v407
      %v416 = vmul.f32 %v352, %v408
      %v417 = vmul.f32 %v353, %v409
      %v418 = vmul.f32 %v354, %v410
      %419 = vst.msk [vmem:[%s197] sm:$0xff] %vm200, %v411
      %420 = vst.msk [vmem:[%s197 + $0x8] sm:$0xff] %vm200, %v412
      %421 = vst.msk [vmem:[%s197 + $0x10] sm:$0xff] %vm200, %v413
      %422 = vst.msk [vmem:[%s197 + $0x18] sm:$0xff] %vm200, %v414
      %423 = vst.msk [vmem:[%s197 + $0x20] sm:$0xff] %vm200, %v415
      %424 = vst.msk [vmem:[%s197 + $0x28] sm:$0xff] %vm200, %v416
      %425 = vst.msk [vmem:[%s197 + $0x30] sm:$0xff] %vm200, %v417
      %426 = vst.msk [vmem:[%s197 + $0x38] sm:$0xff] %vm200, %v418
      %p427 = scmp.lt.s32.totalorder %s15, 1
      %s428 = scalar_select %p427, %s15, 1
      %s429 = smul.addr %s428, 8
      %s430 = smul.addr %s429, 8
      %s431 = scalar_lea.vmem %s4, %s430
      // Predicated region
      $region37: #{mlsif_forward.9} parent=35 // pred_check
        %p432 = pneg %p122
      $region38: #{mlsif_forward.9} parent=35 // pred_check_branch
        %434 = sbr.rel (%p432) target = $region40
      $region39: #{mlsif_forward.9} parent=35 // pred_region
        _
      $region40: #{mlsif_forward.9} parent=35 // pred_fallthru
        _
    $region36: #{mlsif_forward.9} parent=5 // pred_fallthru
      _
    %p435 = scmp.le.s32.totalorder 2, %s10
    // Predicated region
    $region41: #{mlsif_forward.9} parent=5 // pred_check
      %p436 = pneg %p435
    $region42: #{mlsif_forward.9} parent=5 // pred_check_branch
      %438 = sbr.rel (%p436) target = $region44
    $region43: #{mlsif_forward.9} parent=5 // pred_region
      %s439 = ssub.s32 %s10, 2
      // Predicated region
      $region45: #{mlsif_forward.9} parent=43 // pred_check
        %p440 = pneg %p128
      $region46: #{mlsif_forward.9} parent=43 // pred_check_branch
        %442 = sbr.rel (%p440) target = $region48
      $region47: #{mlsif_forward.9} parent=43 // pred_region
        %p443 = scmp.lt.s32.totalorder %s16, 1
        %s444 = scalar_select %p443, %s16, 1
        %s445 = smul.addr %s444, 8
        %s446 = smul.addr %s445, 8
        %s447 = scalar_lea.vmem %s4, %s446
      $region48: #{mlsif_forward.9} parent=43 // pred_fallthru
        _
    $region44: #{mlsif_forward.9} parent=5 // pred_fallthru
      _
  $region6: #{mlsif_forward.9} parent=0 // loop_footer
    %s14 = sadd.s32 1, %s10
  $region7: #{mlsif_forward.9} parent=0 // loop_footer_branch
    %9 = sbr.rel target = $region3
  $region8: #{mlsif_forward.9} parent=0 // loop_exit
    _

// kernel: mlsif_forward.11
$region0: #{mlsif_forward.11}
  #allocation0 [shape = 'u32[]', space=smem, size = 0x4, offset = 0x4, fixed_abs, tag = 'smem constant byte address 0x4 - core index']
  #allocation1 [shape = 'u32[72,128]{1,0:T(1,128)}', space=vmem, size = 0x9000, scoped, tag = 'internal scratch']
  %s0 = inlined_call_operand.vmem [shape: f32[2,64,64], index: 0, kind: input, shape index: {}]
  %s1 = inlined_call_operand.vmem [shape: f32[16,64], index: 1, kind: input, shape index: {}]
  %s2 = inlined_call_operand.vmem [shape: f32[2,16,64], index: 2, kind: input, shape index: {}]
  %s3 = inlined_call_operand.vmem [shape: f32[2,16,64], index: 3, kind: output, shape index: {}]
  %s4 = sld [smem:[#allocation0]]
  $region45: #{mlsif_forward.11} parent=0
    _
  %s6 = ssub.s32 1, %s4
  %s7 = scalar_select 0, %s6, %s4
  loop: start=0, step=1, limit=4
  $region2: #{mlsif_forward.11} parent=0 // loop_pre_header
    _
  $region3: #{mlsif_forward.11} parent=0 // loop_header
    %s9 = sphi 0, %s13
    %p10 = scmp.ge.s32.totalorder %s9, 4
    %s19 = sphi 0, %s21
    %s22 = sphi 0, %s19
    %s23 = sphi 0, %s22
    %s39 = sphi 0, %s23
    %s43 = sphi 0, %s43
    %s45 = sphi 0, %s43
    %s46 = sphi 0, %s45
    %s60 = sphi 0, %s46
    %s66 = sphi 0, %s68
    %s69 = sphi 0, %s66
    %s70 = sphi 0, %s69
    %s86 = sphi 0, %s70
    %s92 = sphi 0, %s94
    %s95 = sphi 0, %s92
    %s96 = sphi 0, %s95
    %s112 = sphi 0, %s96
  $region4: #{mlsif_forward.11} parent=0 // loop_header_branch
    %12 = sbr.rel (%p10) target = $region8
  $region5: #{mlsif_forward.11} parent=0 // loop_body
    %s14 = ssub.s32 %s9, 1
    %s15 = ssub.s32 %s9, 2
    %s16 = sadd.s32 %s9, 1
    %s17 = ssub.s32 %s9, %s16
    %p18 = scmp.eq.s32.totalorder %s17, 0
    %s20 = sadd.s32 %s19, 1
    %s21 = scalar_select %p18, %s19, %s20
    %p24 = pneg %p18
    %p25 = scmp.eq.s32.totalorder %s9, 1
    %p26 = por %p24, %p25
    %p27 = scmp.ne.s32.totalorder %s19, %s22
    %p28 = scmp.eq.s32.totalorder %s9, 0
    %p29 = por %p27, %p28
    %p30 = scmp.ne.s32.totalorder %s19, %s22
    %p31 = scmp.eq.s32.totalorder %s14, 1
    %p32 = por %p30, %p31
    %p33 = scmp.ne.s32.totalorder %s22, %s23
    %p34 = scmp.eq.s32.totalorder %s14, 0
    %p35 = por %p33, %p34
    %p36 = scmp.ne.s32.totalorder %s22, %s23
    %p37 = scmp.eq.s32.totalorder %s15, 1
    %p38 = por %p36, %p37
    %p40 = scmp.ne.s32.totalorder %s23, %s39
    %p41 = scmp.eq.s32.totalorder %s15, 0
    %p42 = por %p40, %p41
    %s44 = sadd.s32 %s43, 1
    %p47 = scmp.eq.s32.totalorder %s9, 1
    %p48 = scmp.ne.s32.totalorder %s43, %s45
    %p49 = scmp.eq.s32.totalorder %s9, 0
    %p50 = por %p48, %p49
    %p51 = scmp.ne.s32.totalorder %s43, %s45
    %p52 = scmp.eq.s32.totalorder %s14, 1
    %p53 = por %p51, %p52
    %p54 = scmp.ne.s32.totalorder %s45, %s46
    %p55 = scmp.eq.s32.totalorder %s14, 0
    %p56 = por %p54, %p55
    %p57 = scmp.ne.s32.totalorder %s45, %s46
    %p58 = scmp.eq.s32.totalorder %s15, 1
    %p59 = por %p57, %p58
    %p61 = scmp.ne.s32.totalorder %s46, %s60
    %p62 = scmp.eq.s32.totalorder %s15, 0
    %p63 = por %p61, %p62
    %s64 = ssub.s32 %s9, %s16
    %p65 = scmp.eq.s32.totalorder %s64, 0
    %s67 = sadd.s32 %s66, 1
    %s68 = scalar_select %p65, %s66, %s67
    %p71 = pneg %p65
    %p72 = scmp.eq.s32.totalorder %s9, 1
    %p73 = por %p71, %p72
    %p74 = scmp.ne.s32.totalorder %s66, %s69
    %p75 = scmp.eq.s32.totalorder %s9, 0
    %p76 = por %p74, %p75
    %p77 = scmp.ne.s32.totalorder %s66, %s69
    %p78 = scmp.eq.s32.totalorder %s14, 1
    %p79 = por %p77, %p78
    %p80 = scmp.ne.s32.totalorder %s69, %s70
    %p81 = scmp.eq.s32.totalorder %s14, 0
    %p82 = por %p80, %p81
    %p83 = scmp.ne.s32.totalorder %s69, %s70
    %p84 = scmp.eq.s32.totalorder %s15, 1
    %p85 = por %p83, %p84
    %p87 = scmp.ne.s32.totalorder %s70, %s86
    %p88 = scmp.eq.s32.totalorder %s15, 0
    %p89 = por %p87, %p88
    %s90 = ssub.s32 %s9, %s16
    %p91 = scmp.eq.s32.totalorder %s90, 0
    %s93 = sadd.s32 %s92, 1
    %s94 = scalar_select %p91, %s92, %s93
    %p97 = pneg %p91
    %p98 = scmp.eq.s32.totalorder %s9, 1
    %p99 = por %p97, %p98
    %p100 = scmp.ne.s32.totalorder %s92, %s95
    %p101 = scmp.eq.s32.totalorder %s9, 0
    %p102 = por %p100, %p101
    %p103 = scmp.ne.s32.totalorder %s92, %s95
    %p104 = scmp.eq.s32.totalorder %s14, 1
    %p105 = por %p103, %p104
    %p106 = scmp.ne.s32.totalorder %s95, %s96
    %p107 = scmp.eq.s32.totalorder %s14, 0
    %p108 = por %p106, %p107
    %p109 = scmp.ne.s32.totalorder %s95, %s96
    %p110 = scmp.eq.s32.totalorder %s15, 1
    %p111 = por %p109, %p110
    %p113 = scmp.ne.s32.totalorder %s96, %s112
    %p114 = scmp.eq.s32.totalorder %s15, 0
    %p115 = por %p113, %p114
    %p116 = scmp.le.s32.totalorder 1, %s9
    %p117 = scmp.lt.s32.totalorder %s9, 3
    %p118 = pnand %p116, %p117
    %p119 = pneg %p118
    // Predicated region
    $region9: #{mlsif_forward.11} parent=5 // pred_check
      _
    $region10: #{mlsif_forward.11} parent=5 // pred_check_branch
      %121 = sbr.rel (%p118) target = $region12
    $region11: #{mlsif_forward.11} parent=5 // pred_region
      %s122 = ssub.s32 %s9, 1
      // Predicated region
      $region13: #{mlsif_forward.11} parent=11 // pred_check
        %p123 = pneg %p56
      $region14: #{mlsif_forward.11} parent=11 // pred_check_branch
        %125 = sbr.rel (%p123) target = $region16
      $region15: #{mlsif_forward.11} parent=11 // pred_region
        _
      $region16: #{mlsif_forward.11} parent=11 // pred_fallthru
        _
    $region12: #{mlsif_forward.11} parent=5 // pred_fallthru
      _
    %p126 = scmp.lt.s32.totalorder %s9, 2
    // Predicated region
    $region17: #{mlsif_forward.11} parent=5 // pred_check
      %p127 = pneg %p126
    $region18: #{mlsif_forward.11} parent=5 // pred_check_branch
      %129 = sbr.rel (%p127) target = $region20
    $region19: #{mlsif_forward.11} parent=5 // pred_region
      // Predicated region
      $region21: #{mlsif_forward.11} parent=19 // pred_check
        %p130 = pneg %p29
      $region22: #{mlsif_forward.11} parent=19 // pred_check_branch
        %132 = sbr.rel (%p130) target = $region24
      $region23: #{mlsif_forward.11} parent=19 // pred_region
        %p133 = scmp.lt.s32.totalorder %s9, 1
        %s134 = scalar_select %p133, %s9, 1
        %s135 = smul.addr %s134, 8
        %s136 = smul.addr %s135, 8
        %s137 = scalar_lea.vmem %s0, %s136
      $region24: #{mlsif_forward.11} parent=19 // pred_fallthru
        _
      // Predicated region
      $region25: #{mlsif_forward.11} parent=19 // pred_check
        %p138 = pneg %p76
      $region26: #{mlsif_forward.11} parent=19 // pred_check_branch
        %140 = sbr.rel (%p138) target = $region28
      $region27: #{mlsif_forward.11} parent=19 // pred_region
        %p141 = scmp.lt.s32.totalorder %s9, 1
        %s142 = scalar_select %p141, %s9, 1
        %s143 = smul.addr %s142, 2
        %s144 = smul.addr %s143, 8
        %s145 = scalar_lea.vmem %s2, %s144
      $region28: #{mlsif_forward.11} parent=19 // pred_fallthru
        _
    $region20: #{mlsif_forward.11} parent=5 // pred_fallthru
      _
    %p146 = scmp.le.s32.totalorder 1, %s9
    %p147 = scmp.lt.s32.totalorder %s9, 3
    %p148 = pnand %p146, %p147
    %p149 = pneg %p148
    // Predicated region
    $region29: #{mlsif_forward.11} parent=5 // pred_check
      _
    $region30: #{mlsif_forward.11} parent=5 // pred_check_branch
      %151 = sbr.rel (%p148) target = $region32
    $region31: #{mlsif_forward.11} parent=5 // pred_region
      %s152 = ssub.s32 %s9, 1
      %p153 = scmp.lt.s32.totalorder %s14, 1
      %s154 = scalar_select %p153, %s14, 1
      %s155 = smul.addr %s154, 8
      %s156 = smul.addr %s155, 8
      %s157 = scalar_lea.vmem %s0, %s156
      %p158 = pneg %p35
      %p159 = pneg %p32
      %p160 = pneg %p56
      %p161 = pneg %p53
      %p162 = scmp.lt.s32.totalorder %s14, 1
      %s163 = scalar_select %p162, %s14, 1
      %s164 = smul.addr %s163, 2
      %s165 = smul.addr %s164, 8
      %s166 = scalar_lea.vmem %s2, %s165
      %p167 = pneg %p82
      %p168 = pneg %p79
      %p169 = pneg %p108
      %p170 = pneg %p105
      %p171 = scmp.lt.s32.totalorder %s14, 1
      %s172 = scalar_select %p171, %s14, 1
      %s173 = smul.addr %s172, 2
      %s174 = smul.addr %s173, 8
      %s175 = scalar_lea.vmem %s3, %s174
      %p176 = scmp.lt.s32.totalorder %s14, 1
      %s177 = scalar_select %p176, %s14, 1
      %s178 = smul.addr %s177, 8
      %s179 = smul.addr %s178, 8
      %s180 = scalar_lea.vmem %s0, %s179
      %p181 = scmp.lt.s32.totalorder %s14, 1
      %s182 = scalar_select %p181, %s14, 1
      %s183 = smul.addr %s182, 2
      %s184 = smul.addr %s183, 8
      %s185 = scalar_lea.vmem %s2, %s184
      %p186 = scmp.lt.s32.totalorder %s14, 1
      %s187 = scalar_select %p186, %s14, 1
      %s188 = smul.addr %s187, 2
      %s189 = smul.addr %s188, 8
      %s190 = scalar_lea.vmem %s3, %s189
      %v191 = vld [vmem:[%s1] sm:$0xff]
      %v192 = vld [vmem:[%s1 + $0x8] sm:$0xff]
      %v193 = vld [vmem:[%s180] sm:$0xff]
      %v194 = vld [vmem:[%s180 + $0x8] sm:$0xff]
      %v195 = vld [vmem:[%s180 + $0x10] sm:$0xff]
      %v196 = vld [vmem:[%s180 + $0x18] sm:$0xff]
      %v197 = vld [vmem:[%s180 + $0x20] sm:$0xff]
      %v198 = vld [vmem:[%s180 + $0x28] sm:$0xff]
      %v199 = vld [vmem:[%s180 + $0x30] sm:$0xff]
      %v200 = vld [vmem:[%s180 + $0x38] sm:$0xff]
      %v201 = vld [vmem:[%s185] sm:$0xff]
      %v202 = vld [vmem:[%s185 + $0x8] sm:$0xff]
      %vm203 = vcmask 523264
      %v205 = vsel %vm203, %v191, 0
      %v208 = vsel %vm203, %v192, 0
      %210 = vmatpush.msra.mxu0 0.0
      %211 = vmatpush.msra.mxu0 0.0
      %212 = vmatpush.msra.mxu0 0.0
      %213 = vmatpush.msra.mxu0 0.0
      %214 = vmatpush.msra.mxu0 0.0
      %215 = vmatpush.msra.mxu0 0.0
      %216 = vmatpush.msra.mxu0 0.0
      %217 = vmatpush.msra.mxu0 0.0
      %218 = vmatpush.msra.mxu0 %v200
      %219 = vmatpush.msra.mxu0 %v199
      %220 = vmatpush.msra.mxu0 %v198
      %221 = vmatpush.msra.mxu0 %v197
      %222 = vmatpush.msra.mxu0 %v196
      %223 = vmatpush.msra.mxu0 %v195
      %224 = vmatpush.msra.mxu0 %v194
      %225 = vmatpush.msra.mxu0 %v193
      %226 = vmatmul.f32.gmra.mxu0 %v205
      %v227 = vpop.f32.mrf.mxu0
      %v228 = vadd.f32 %v201, %v227
      %229 = vmatmul.f32.gmra.mxu0 %v208
      %v230 = vpop.f32.mrf.mxu0
      %v231 = vadd.f32 %v202, %v230
      %232 = vdwg.mxu0
      %233 = vst.msk [vmem:[%s190] sm:$0xff] %vm203, %v228
      %234 = vst.msk [vmem:[%s190 + $0x8] sm:$0xff] %vm203, %v231
      %p235 = scmp.lt.s32.totalorder %s14, 1
      %s236 = scalar_select %p235, %s14, 1
      %s237 = smul.addr %s236, 2
      %s238 = smul.addr %s237, 8
      %s239 = scalar_lea.vmem %s3, %s238
      // Predicated region
      $region33: #{mlsif_forward.11} parent=31 // pred_check
        %p240 = pneg %p105
      $region34: #{mlsif_forward.11} parent=31 // pred_check_branch
        %242 = sbr.rel (%p240) target = $region36
      $region35: #{mlsif_forward.11} parent=31 // pred_region
        _
      $region36: #{mlsif_forward.11} parent=31 // pred_fallthru
        _
    $region32: #{mlsif_forward.11} parent=5 // pred_fallthru
      _
    %p243 = scmp.le.s32.totalorder 2, %s9
    // Predicated region
    $region37: #{mlsif_forward.11} parent=5 // pred_check
      %p244 = pneg %p243
    $region38: #{mlsif_forward.11} parent=5 // pred_check_branch
      %246 = sbr.rel (%p244) target = $region40
    $region39: #{mlsif_forward.11} parent=5 // pred_region
      %s247 = ssub.s32 %s9, 2
      // Predicated region
      $region41: #{mlsif_forward.11} parent=39 // pred_check
        %p248 = pneg %p111
      $region42: #{mlsif_forward.11} parent=39 // pred_check_branch
        %250 = sbr.rel (%p248) target = $region44
      $region43: #{mlsif_forward.11} parent=39 // pred_region
        %p251 = scmp.lt.s32.totalorder %s15, 1
        %s252 = scalar_select %p251, %s15, 1
        %s253 = smul.addr %s252, 2
        %s254 = smul.addr %s253, 8
        %s255 = scalar_lea.vmem %s3, %s254
      $region44: #{mlsif_forward.11} parent=39 // pred_fallthru
        _
    $region40: #{mlsif_forward.11} parent=5 // pred_fallthru
      _
  $region6: #{mlsif_forward.11} parent=0 // loop_footer
    %s13 = sadd.s32 1, %s9
  $region7: #{mlsif_forward.11} parent=0 // loop_footer_branch
    %8 = sbr.rel target = $region3
  $region8: #{mlsif_forward.11} parent=0 // loop_exit
    _

// kernel: mlsif_forward.10
$region0: #{mlsif_forward.10}
  #allocation0 [shape = 'u32[]', space=smem, size = 0x4, offset = 0x4, fixed_abs, tag = 'smem constant byte address 0x4 - core index']
  #allocation1 [shape = 'u32[72,128]{1,0:T(1,128)}', space=vmem, size = 0x9000, scoped, tag = 'internal scratch']
  %s0 = inlined_call_operand.vmem [shape: f32[2,64,10,10], index: 0, kind: input, shape index: {}]
  %s1 = inlined_call_operand.vmem [shape: f32[64,9], index: 1, kind: input, shape index: {}]
  %s2 = inlined_call_operand.vmem [shape: f32[2,64,8,8], index: 2, kind: output, shape index: {}]
  %s3 = sld [smem:[#allocation0]]
  $region41: #{mlsif_forward.10} parent=0
    _
  %s5 = ssub.s32 1, %s3
  %s6 = scalar_select 0, %s5, %s3
  loop: start=0, step=1, limit=4
  $region2: #{mlsif_forward.10} parent=0 // loop_pre_header
    _
  $region3: #{mlsif_forward.10} parent=0 // loop_header
    %s8 = sphi 0, %s12
    %p9 = scmp.ge.s32.totalorder %s8, 4
    %s18 = sphi 0, %s20
    %s21 = sphi 0, %s18
    %s22 = sphi 0, %s21
    %s38 = sphi 0, %s22
    %s42 = sphi 0, %s42
    %s44 = sphi 0, %s42
    %s45 = sphi 0, %s44
    %s59 = sphi 0, %s45
    %s65 = sphi 0, %s67
    %s68 = sphi 0, %s65
    %s69 = sphi 0, %s68
    %s85 = sphi 0, %s69
  $region4: #{mlsif_forward.10} parent=0 // loop_header_branch
    %11 = sbr.rel (%p9) target = $region8
  $region5: #{mlsif_forward.10} parent=0 // loop_body
    %s13 = ssub.s32 %s8, 1
    %s14 = ssub.s32 %s8, 2
    %s15 = sadd.s32 %s8, 1
    %s16 = ssub.s32 %s8, %s15
    %p17 = scmp.eq.s32.totalorder %s16, 0
    %s19 = sadd.s32 %s18, 1
    %s20 = scalar_select %p17, %s18, %s19
    %p23 = pneg %p17
    %p24 = scmp.eq.s32.totalorder %s8, 1
    %p25 = por %p23, %p24
    %p26 = scmp.ne.s32.totalorder %s18, %s21
    %p27 = scmp.eq.s32.totalorder %s8, 0
    %p28 = por %p26, %p27
    %p29 = scmp.ne.s32.totalorder %s18, %s21
    %p30 = scmp.eq.s32.totalorder %s13, 1
    %p31 = por %p29, %p30
    %p32 = scmp.ne.s32.totalorder %s21, %s22
    %p33 = scmp.eq.s32.totalorder %s13, 0
    %p34 = por %p32, %p33
    %p35 = scmp.ne.s32.totalorder %s21, %s22
    %p36 = scmp.eq.s32.totalorder %s14, 1
    %p37 = por %p35, %p36
    %p39 = scmp.ne.s32.totalorder %s22, %s38
    %p40 = scmp.eq.s32.totalorder %s14, 0
    %p41 = por %p39, %p40
    %s43 = sadd.s32 %s42, 1
    %p46 = scmp.eq.s32.totalorder %s8, 1
    %p47 = scmp.ne.s32.totalorder %s42, %s44
    %p48 = scmp.eq.s32.totalorder %s8, 0
    %p49 = por %p47, %p48
    %p50 = scmp.ne.s32.totalorder %s42, %s44
    %p51 = scmp.eq.s32.totalorder %s13, 1
    %p52 = por %p50, %p51
    %p53 = scmp.ne.s32.totalorder %s44, %s45
    %p54 = scmp.eq.s32.totalorder %s13, 0
    %p55 = por %p53, %p54
    %p56 = scmp.ne.s32.totalorder %s44, %s45
    %p57 = scmp.eq.s32.totalorder %s14, 1
    %p58 = por %p56, %p57
    %p60 = scmp.ne.s32.totalorder %s45, %s59
    %p61 = scmp.eq.s32.totalorder %s14, 0
    %p62 = por %p60, %p61
    %s63 = ssub.s32 %s8, %s15
    %p64 = scmp.eq.s32.totalorder %s63, 0
    %s66 = sadd.s32 %s65, 1
    %s67 = scalar_select %p64, %s65, %s66
    %p70 = pneg %p64
    %p71 = scmp.eq.s32.totalorder %s8, 1
    %p72 = por %p70, %p71
    %p73 = scmp.ne.s32.totalorder %s65, %s68
    %p74 = scmp.eq.s32.totalorder %s8, 0
    %p75 = por %p73, %p74
    %p76 = scmp.ne.s32.totalorder %s65, %s68
    %p77 = scmp.eq.s32.totalorder %s13, 1
    %p78 = por %p76, %p77
    %p79 = scmp.ne.s32.totalorder %s68, %s69
    %p80 = scmp.eq.s32.totalorder %s13, 0
    %p81 = por %p79, %p80
    %p82 = scmp.ne.s32.totalorder %s68, %s69
    %p83 = scmp.eq.s32.totalorder %s14, 1
    %p84 = por %p82, %p83
    %p86 = scmp.ne.s32.totalorder %s69, %s85
    %p87 = scmp.eq.s32.totalorder %s14, 0
    %p88 = por %p86, %p87
    %p89 = scmp.le.s32.totalorder 1, %s8
    %p90 = scmp.lt.s32.totalorder %s8, 3
    %p91 = pnand %p89, %p90
    %p92 = pneg %p91
    // Predicated region
    $region9: #{mlsif_forward.10} parent=5 // pred_check
      _
    $region10: #{mlsif_forward.10} parent=5 // pred_check_branch
      %94 = sbr.rel (%p91) target = $region12
    $region11: #{mlsif_forward.10} parent=5 // pred_region
      %s95 = ssub.s32 %s8, 1
      // Predicated region
      $region13: #{mlsif_forward.10} parent=11 // pred_check
        %p96 = pneg %p55
      $region14: #{mlsif_forward.10} parent=11 // pred_check_branch
        %98 = sbr.rel (%p96) target = $region16
      $region15: #{mlsif_forward.10} parent=11 // pred_region
        _
      $region16: #{mlsif_forward.10} parent=11 // pred_fallthru
        _
    $region12: #{mlsif_forward.10} parent=5 // pred_fallthru
      _
    %p99 = scmp.lt.s32.totalorder %s8, 2
    // Predicated region
    $region17: #{mlsif_forward.10} parent=5 // pred_check
      %p100 = pneg %p99
    $region18: #{mlsif_forward.10} parent=5 // pred_check_branch
      %102 = sbr.rel (%p100) target = $region20
    $region19: #{mlsif_forward.10} parent=5 // pred_region
      // Predicated region
      $region21: #{mlsif_forward.10} parent=19 // pred_check
        %p103 = pneg %p28
      $region22: #{mlsif_forward.10} parent=19 // pred_check_branch
        %105 = sbr.rel (%p103) target = $region24
      $region23: #{mlsif_forward.10} parent=19 // pred_region
        %p106 = scmp.lt.s32.totalorder %s8, 1
        %s107 = scalar_select %p106, %s8, 1
        %s108 = smul.addr %s107, 128
        %s109 = smul.addr %s108, 8
        %s110 = scalar_lea.vmem %s0, %s109
      $region24: #{mlsif_forward.10} parent=19 // pred_fallthru
        _
    $region20: #{mlsif_forward.10} parent=5 // pred_fallthru
      _
    %p111 = scmp.le.s32.totalorder 1, %s8
    %p112 = scmp.lt.s32.totalorder %s8, 3
    %p113 = pnand %p111, %p112
    %p114 = pneg %p113
    // Predicated region
    $region25: #{mlsif_forward.10} parent=5 // pred_check
      _
    $region26: #{mlsif_forward.10} parent=5 // pred_check_branch
      %116 = sbr.rel (%p113) target = $region28
    $region27: #{mlsif_forward.10} parent=5 // pred_region
      %s117 = ssub.s32 %s8, 1
      %p118 = scmp.lt.s32.totalorder %s13, 1
      %s119 = scalar_select %p118, %s13, 1
      %s120 = smul.addr %s119, 128
      %s121 = smul.addr %s120, 8
      %s122 = scalar_lea.vmem %s0, %s121
      %p123 = pneg %p34
      %p124 = pneg %p31
      %p125 = pneg %p55
      %p126 = pneg %p52
      %p127 = pneg %p81
      %p128 = pneg %p78
      %p129 = scmp.lt.s32.totalorder %s13, 1
      %s130 = scalar_select %p129, %s13, 1
      %s131 = smul.addr %s130, 64
      %s132 = smul.addr %s131, 8
      %s133 = scalar_lea.vmem %s2, %s132
      %p134 = scmp.lt.s32.totalorder %s13, 1
      %s135 = scalar_select %p134, %s13, 1
      %s136 = smul.addr %s135, 128
      %s137 = smul.addr %s136, 8
      %s138 = scalar_lea.vmem %s0, %s137
      %p139 = scmp.lt.s32.totalorder %s13, 1
      %s140 = scalar_select %p139, %s13, 1
      %s141 = smul.addr %s140, 64
      %s142 = smul.addr %s141, 8
      %s143 = scalar_lea.vmem %s2, %s142
      %v144 = vld [vmem:[%s1] sm:$0xff]
      %v145 = vld [vmem:[%s1 + $0x8] sm:$0xff]
      %v146 = vld [vmem:[%s1 + $0x10] sm:$0xff]
      %v147 = vld [vmem:[%s1 + $0x18] sm:$0xff]
      %v148 = vld [vmem:[%s1 + $0x20] sm:$0xff]
      %v149 = vld [vmem:[%s1 + $0x28] sm:$0xff]
      %v150 = vld [vmem:[%s1 + $0x30] sm:$0xff]
      %v151 = vld [vmem:[%s1 + $0x38] sm:$0xff]
      %v160 = vrot.slane %v144, 1
      %v161 = vrot.slane %v144, 2
      %v162 = vrot.slane %v144, 3
      %v163 = vrot.slane %v144, 4
      %v164 = vrot.slane %v144, 5
      %v165 = vrot.slane %v144, 6
      %v166 = vrot.slane %v144, 7
      %v167 = vrot.slane %v145, 1
      %v168 = vrot.slane %v145, 2
      %v169 = vrot.slane %v145, 3
      %v170 = vrot.slane %v145, 4
      %v171 = vrot.slane %v145, 5
      %v172 = vrot.slane %v145, 6
      %v173 = vrot.slane %v145, 7
      %v174 = vrot.slane %v146, 1
      %v175 = vrot.slane %v146, 2
      %v176 = vrot.slane %v146, 3
      %v177 = vrot.slane %v146, 4
      %v178 = vrot.slane %v146, 5
      %v179 = vrot.slane %v146, 6
      %v180 = vrot.slane %v146, 7
      %v181 = vrot.slane %v147, 1
      %v182 = vrot.slane %v147, 2
      %v183 = vrot.slane %v147, 3
      %v184 = vrot.slane %v147, 4
      %v185 = vrot.slane %v147, 5
      %v186 = vrot.slane %v147, 6
      %v187 = vrot.slane %v147, 7
      %v188 = vrot.slane %v148, 1
      %v189 = vrot.slane %v148, 2
      %v190 = vrot.slane %v148, 3
      %v191 = vrot.slane %v148, 4
      %v192 = vrot.slane %v148, 5
      %v193 = vrot.slane %v148, 6
      %v194 = vrot.slane %v148, 7
      %v195 = vrot.slane %v149, 1
      %v196 = vrot.slane %v149, 2
      %v197 = vrot.slane %v149, 3
      %v198 = vrot.slane %v149, 4
      %v199 = vrot.slane %v149, 5
      %v200 = vrot.slane %v149, 6
      %v201 = vrot.slane %v149, 7
      %v202 = vrot.slane %v150, 1
      %v203 = vrot.slane %v150, 2
      %v204 = vrot.slane %v150, 3
      %v205 = vrot.slane %v150, 4
      %v206 = vrot.slane %v150, 5
      %v207 = vrot.slane %v150, 6
      %v208 = vrot.slane %v150, 7
      %v209 = vrot.slane %v151, 1
      %v210 = vrot.slane %v151, 2
      %v211 = vrot.slane %v151, 3
      %v212 = vrot.slane %v151, 4
      %v213 = vrot.slane %v151, 5
      %v214 = vrot.slane %v151, 6
      %v215 = vrot.slane %v151, 7
      %v216 = vld [vmem:[%s138] sm:$0xff]
      %v217 = vld [vmem:[%s138 + $0x10] sm:$0xff]
      %v218 = vld [vmem:[%s138 + $0x20] sm:$0xff]
      %v219 = vld [vmem:[%s138 + $0x30] sm:$0xff]
      %v220 = vld [vmem:[%s138 + $0x40] sm:$0xff]
      %v221 = vld [vmem:[%s138 + $0x50] sm:$0xff]
      %v222 = vld [vmem:[%s138 + $0x60] sm:$0xff]
      %v223 = vld [vmem:[%s138 + $0x70] sm:$0xff]
      %v224 = vld [vmem:[%s138 + $0x80] sm:$0xff]
      %v225 = vld [vmem:[%s138 + $0x90] sm:$0xff]
      %v226 = vld [vmem:[%s138 + $0xa0] sm:$0xff]
      %v227 = vld [vmem:[%s138 + $0xb0] sm:$0xff]
      %v228 = vld [vmem:[%s138 + $0xc0] sm:$0xff]
      %v229 = vld [vmem:[%s138 + $0xd0] sm:$0xff]
      %v230 = vld [vmem:[%s138 + $0xe0] sm:$0xff]
      %v231 = vld [vmem:[%s138 + $0xf0] sm:$0xff]
      %v232 = vld [vmem:[%s138 + $0x100] sm:$0xff]
      %v233 = vld [vmem:[%s138 + $0x110] sm:$0xff]
      %v234 = vld [vmem:[%s138 + $0x120] sm:$0xff]
      %v235 = vld [vmem:[%s138 + $0x130] sm:$0xff]
      %v236 = vld [vmem:[%s138 + $0x140] sm:$0xff]
      %v237 = vld [vmem:[%s138 + $0x150] sm:$0xff]
      %v238 = vld [vmem:[%s138 + $0x160] sm:$0xff]
      %v239 = vld [vmem:[%s138 + $0x170] sm:$0xff]
      %v240 = vld [vmem:[%s138 + $0x180] sm:$0xff]
      %v241 = vld [vmem:[%s138 + $0x190] sm:$0xff]
      %v242 = vld [vmem:[%s138 + $0x1a0] sm:$0xff]
      %v243 = vld [vmem:[%s138 + $0x1b0] sm:$0xff]
      %v244 = vld [vmem:[%s138 + $0x1c0] sm:$0xff]
      %v245 = vld [vmem:[%s138 + $0x1d0] sm:$0xff]
      %v246 = vld [vmem:[%s138 + $0x1e0] sm:$0xff]
      %v247 = vld [vmem:[%s138 + $0x1f0] sm:$0xff]
      %v248 = vld [vmem:[%s138 + $0x200] sm:$0xff]
      %v249 = vld [vmem:[%s138 + $0x210] sm:$0xff]
      %v250 = vld [vmem:[%s138 + $0x220] sm:$0xff]
      %v251 = vld [vmem:[%s138 + $0x230] sm:$0xff]
      %v252 = vld [vmem:[%s138 + $0x240] sm:$0xff]
      %v253 = vld [vmem:[%s138 + $0x250] sm:$0xff]
      %v254 = vld [vmem:[%s138 + $0x260] sm:$0xff]
      %v255 = vld [vmem:[%s138 + $0x270] sm:$0xff]
      %v256 = vld [vmem:[%s138 + $0x280] sm:$0xff]
      %v257 = vld [vmem:[%s138 + $0x290] sm:$0xff]
      %v258 = vld [vmem:[%s138 + $0x2a0] sm:$0xff]
      %v259 = vld [vmem:[%s138 + $0x2b0] sm:$0xff]
      %v260 = vld [vmem:[%s138 + $0x2c0] sm:$0xff]
      %v261 = vld [vmem:[%s138 + $0x2d0] sm:$0xff]
      %v262 = vld [vmem:[%s138 + $0x2e0] sm:$0xff]
      %v263 = vld [vmem:[%s138 + $0x2f0] sm:$0xff]
      %v264 = vld [vmem:[%s138 + $0x300] sm:$0xff]
      %v265 = vld [vmem:[%s138 + $0x310] sm:$0xff]
      %v266 = vld [vmem:[%s138 + $0x320] sm:$0xff]
      %v267 = vld [vmem:[%s138 + $0x330] sm:$0xff]
      %v268 = vld [vmem:[%s138 + $0x340] sm:$0xff]
      %v269 = vld [vmem:[%s138 + $0x350] sm:$0xff]
      %v270 = vld [vmem:[%s138 + $0x360] sm:$0xff]
      %v271 = vld [vmem:[%s138 + $0x370] sm:$0xff]
      %v272 = vld [vmem:[%s138 + $0x380] sm:$0xff]
      %v273 = vld [vmem:[%s138 + $0x390] sm:$0xff]
      %v274 = vld [vmem:[%s138 + $0x3a0] sm:$0xff]
      %v275 = vld [vmem:[%s138 + $0x3b0] sm:$0xff]
      %v276 = vld [vmem:[%s138 + $0x3c0] sm:$0xff]
      %v277 = vld [vmem:[%s138 + $0x3d0] sm:$0xff]
      %v278 = vld [vmem:[%s138 + $0x3e0] sm:$0xff]
      %v279 = vld [vmem:[%s138 + $0x3f0] sm:$0xff]
      %v280 = vperm.slane %v144, 0
      %v281 = vperm.slane %v160, 0
      %v282 = vperm.slane %v161, 0
      %v283 = vperm.slane %v162, 0
      %v284 = vperm.slane %v163, 0
      %v285 = vperm.slane %v164, 0
      %v286 = vperm.slane %v165, 0
      %v287 = vperm.slane %v166, 0
      %v288 = vperm.slane %v145, 0
      %v289 = vperm.slane %v167, 0
      %v290 = vperm.slane %v168, 0
      %v291 = vperm.slane %v169, 0
      %v292 = vperm.slane %v170, 0
      %v293 = vperm.slane %v171, 0
      %v294 = vperm.slane %v172, 0
      %v295 = vperm.slane %v173, 0
      %v296 = vperm.slane %v146, 0
      %v297 = vperm.slane %v174, 0
      %v298 = vperm.slane %v175, 0
      %v299 = vperm.slane %v176, 0
      %v300 = vperm.slane %v177, 0
      %v301 = vperm.slane %v178, 0
      %v302 = vperm.slane %v179, 0
      %v303 = vperm.slane %v180, 0
      %v304 = vperm.slane %v147, 0
      %v305 = vperm.slane %v181, 0
      %v306 = vperm.slane %v182, 0
      %v307 = vperm.slane %v183, 0
      %v308 = vperm.slane %v184, 0
      %v309 = vperm.slane %v185, 0
      %v310 = vperm.slane %v186, 0
      %v311 = vperm.slane %v187, 0
      %v312 = vperm.slane %v148, 0
      %v313 = vperm.slane %v188, 0
      %v314 = vperm.slane %v189, 0
      %v315 = vperm.slane %v190, 0
      %v316 = vperm.slane %v191, 0
      %v317 = vperm.slane %v192, 0
      %v318 = vperm.slane %v193, 0
      %v319 = vperm.slane %v194, 0
      %v320 = vperm.slane %v149, 0
      %v321 = vperm.slane %v195, 0
      %v322 = vperm.slane %v196, 0
      %v323 = vperm.slane %v197, 0
      %v324 = vperm.slane %v198, 0
      %v325 = vperm.slane %v199, 0
      %v326 = vperm.slane %v200, 0
      %v327 = vperm.slane %v201, 0
      %v328 = vperm.slane %v150, 0
      %v329 = vperm.slane %v202, 0
      %v330 = vperm.slane %v203, 0
      %v331 = vperm.slane %v204, 0
      %v332 = vperm.slane %v205, 0
      %v333 = vperm.slane %v206, 0
      %v334 = vperm.slane %v207, 0
      %v335 = vperm.slane %v208, 0
      %v336 = vperm.slane %v151, 0
      %v337 = vperm.slane %v209, 0
      %v338 = vperm.slane %v210, 0
      %v339 = vperm.slane %v211, 0
      %v340 = vperm.slane %v212, 0
      %v341 = vperm.slane %v213, 0
      %v342 = vperm.slane %v214, 0
      %v343 = vperm.slane %v215, 0
      %344 = vset.pattern.permute.xlu0 0
      %345 = vperm.xlu0 %344, %v280
      %v346 = vpop.permute.xlu0 %345
      %348 = vset.pattern.permute.xlu0 0
      %349 = vperm.xlu0 %348, %v281
      %v350 = vpop.permute.xlu0 %349
      %352 = vset.pattern.permute.xlu0 0
      %353 = vperm.xlu0 %352, %v282
      %v354 = vpop.permute.xlu0 %353
      %356 = vset.pattern.permute.xlu0 0
      %357 = vperm.xlu0 %356, %v283
      %v358 = vpop.permute.xlu0 %357
      %360 = vset.pattern.permute.xlu0 0
      %361 = vperm.xlu0 %360, %v284
      %v362 = vpop.permute.xlu0 %361
      %364 = vset.pattern.permute.xlu0 0
      %365 = vperm.xlu0 %364, %v285
      %v366 = vpop.permute.xlu0 %365
      %368 = vset.pattern.permute.xlu0 0
      %369 = vperm.xlu0 %368, %v286
      %v370 = vpop.permute.xlu0 %369
      %372 = vset.pattern.permute.xlu0 0
      %373 = vperm.xlu0 %372, %v287
      %v374 = vpop.permute.xlu0 %373
      %376 = vset.pattern.permute.xlu0 0
      %377 = vperm.xlu0 %376, %v288
      %v378 = vpop.permute.xlu0 %377
      %380 = vset.pattern.permute.xlu0 0
      %381 = vperm.xlu0 %380, %v289
      %v382 = vpop.permute.xlu0 %381
      %384 = vset.pattern.permute.xlu0 0
      %385 = vperm.xlu0 %384, %v290
      %v386 = vpop.permute.xlu0 %385
      %388 = vset.pattern.permute.xlu0 0
      %389 = vperm.xlu0 %388, %v291
      %v390 = vpop.permute.xlu0 %389
      %392 = vset.pattern.permute.xlu0 0
      %393 = vperm.xlu0 %392, %v292
      %v394 = vpop.permute.xlu0 %393
      %396 = vset.pattern.permute.xlu0 0
      %397 = vperm.xlu0 %396, %v293
      %v398 = vpop.permute.xlu0 %397
      %400 = vset.pattern.permute.xlu0 0
      %401 = vperm.xlu0 %400, %v294
      %v402 = vpop.permute.xlu0 %401
      %404 = vset.pattern.permute.xlu0 0
      %405 = vperm.xlu0 %404, %v295
      %v406 = vpop.permute.xlu0 %405
      %408 = vset.pattern.permute.xlu0 0
      %409 = vperm.xlu0 %408, %v296
      %v410 = vpop.permute.xlu0 %409
      %412 = vset.pattern.permute.xlu0 0
      %413 = vperm.xlu0 %412, %v297
      %v414 = vpop.permute.xlu0 %413
      %416 = vset.pattern.permute.xlu0 0
      %417 = vperm.xlu0 %416, %v298
      %v418 = vpop.permute.xlu0 %417
      %420 = vset.pattern.permute.xlu0 0
      %421 = vperm.xlu0 %420, %v299
      %v422 = vpop.permute.xlu0 %421
      %424 = vset.pattern.permute.xlu0 0
      %425 = vperm.xlu0 %424, %v300
      %v426 = vpop.permute.xlu0 %425
      %428 = vset.pattern.permute.xlu0 0
      %429 = vperm.xlu0 %428, %v301
      %v430 = vpop.permute.xlu0 %429
      %432 = vset.pattern.permute.xlu0 0
      %433 = vperm.xlu0 %432, %v302
      %v434 = vpop.permute.xlu0 %433
      %436 = vset.pattern.permute.xlu0 0
      %437 = vperm.xlu0 %436, %v303
      %v438 = vpop.permute.xlu0 %437
      %440 = vset.pattern.permute.xlu0 0
      %441 = vperm.xlu0 %440, %v304
      %v442 = vpop.permute.xlu0 %441
      %444 = vset.pattern.permute.xlu0 0
      %445 = vperm.xlu0 %444, %v305
      %v446 = vpop.permute.xlu0 %445
      %448 = vset.pattern.permute.xlu0 0
      %449 = vperm.xlu0 %448, %v306
      %v450 = vpop.permute.xlu0 %449
      %452 = vset.pattern.permute.xlu0 0
      %453 = vperm.xlu0 %452, %v307
      %v454 = vpop.permute.xlu0 %453
      %456 = vset.pattern.permute.xlu0 0
      %457 = vperm.xlu0 %456, %v308
      %v458 = vpop.permute.xlu0 %457
      %460 = vset.pattern.permute.xlu0 0
      %461 = vperm.xlu0 %460, %v309
      %v462 = vpop.permute.xlu0 %461
      %464 = vset.pattern.permute.xlu0 0
      %465 = vperm.xlu0 %464, %v310
      %v466 = vpop.permute.xlu0 %465
      %468 = vset.pattern.permute.xlu0 0
      %469 = vperm.xlu0 %468, %v311
      %v470 = vpop.permute.xlu0 %469
      %472 = vset.pattern.permute.xlu0 0
      %473 = vperm.xlu0 %472, %v312
      %v474 = vpop.permute.xlu0 %473
      %476 = vset.pattern.permute.xlu0 0
      %477 = vperm.xlu0 %476, %v313
      %v478 = vpop.permute.xlu0 %477
      %480 = vset.pattern.permute.xlu0 0
      %481 = vperm.xlu0 %480, %v314
      %v482 = vpop.permute.xlu0 %481
      %484 = vset.pattern.permute.xlu0 0
      %485 = vperm.xlu0 %484, %v315
      %v486 = vpop.permute.xlu0 %485
      %488 = vset.pattern.permute.xlu0 0
      %489 = vperm.xlu0 %488, %v316
      %v490 = vpop.permute.xlu0 %489
      %492 = vset.pattern.permute.xlu0 0
      %493 = vperm.xlu0 %492, %v317
      %v494 = vpop.permute.xlu0 %493
      %496 = vset.pattern.permute.xlu0 0
      %497 = vperm.xlu0 %496, %v318
      %v498 = vpop.permute.xlu0 %497
      %500 = vset.pattern.permute.xlu0 0
      %501 = vperm.xlu0 %500, %v319
      %v502 = vpop.permute.xlu0 %501
      %504 = vset.pattern.permute.xlu0 0
      %505 = vperm.xlu0 %504, %v320
      %v506 = vpop.permute.xlu0 %505
      %508 = vset.pattern.permute.xlu0 0
      %509 = vperm.xlu0 %508, %v321
      %v510 = vpop.permute.xlu0 %509
      %512 = vset.pattern.permute.xlu0 0
      %513 = vperm.xlu0 %512, %v322
      %v514 = vpop.permute.xlu0 %513
      %516 = vset.pattern.permute.xlu0 0
      %517 = vperm.xlu0 %516, %v323
      %v518 = vpop.permute.xlu0 %517
      %520 = vset.pattern.permute.xlu0 0
      %521 = vperm.xlu0 %520, %v324
      %v522 = vpop.permute.xlu0 %521
      %524 = vset.pattern.permute.xlu0 0
      %525 = vperm.xlu0 %524, %v325
      %v526 = vpop.permute.xlu0 %525
      %528 = vset.pattern.permute.xlu0 0
      %529 = vperm.xlu0 %528, %v326
      %v530 = vpop.permute.xlu0 %529
      %532 = vset.pattern.permute.xlu0 0
      %533 = vperm.xlu0 %532, %v327
      %v534 = vpop.permute.xlu0 %533
      %536 = vset.pattern.permute.xlu0 0
      %537 = vperm.xlu0 %536, %v328
      %v538 = vpop.permute.xlu0 %537
      %540 = vset.pattern.permute.xlu0 0
      %541 = vperm.xlu0 %540, %v329
      %v542 = vpop.permute.xlu0 %541
      %544 = vset.pattern.permute.xlu0 0
      %545 = vperm.xlu0 %544, %v330
      %v546 = vpop.permute.xlu0 %545
      %548 = vset.pattern.permute.xlu0 0
      %549 = vperm.xlu0 %548, %v331
      %v550 = vpop.permute.xlu0 %549
      %552 = vset.pattern.permute.xlu0 0
      %553 = vperm.xlu0 %552, %v332
      %v554 = vpop.permute.xlu0 %553
      %556 = vset.pattern.permute.xlu0 0
      %557 = vperm.xlu0 %556, %v333
      %v558 = vpop.permute.xlu0 %557
      %560 = vset.pattern.permute.xlu0 0
      %561 = vperm.xlu0 %560, %v334
      %v562 = vpop.permute.xlu0 %561
      %564 = vset.pattern.permute.xlu0 0
      %565 = vperm.xlu0 %564, %v335
      %v566 = vpop.permute.xlu0 %565
      %568 = vset.pattern.permute.xlu0 0
      %569 = vperm.xlu0 %568, %v336
      %v570 = vpop.permute.xlu0 %569
      %572 = vset.pattern.permute.xlu0 0
      %573 = vperm.xlu0 %572, %v337
      %v574 = vpop.permute.xlu0 %573
      %576 = vset.pattern.permute.xlu0 0
      %577 = vperm.xlu0 %576, %v338
      %v578 = vpop.permute.xlu0 %577
      %580 = vset.pattern.permute.xlu0 0
      %581 = vperm.xlu0 %580, %v339
      %v582 = vpop.permute.xlu0 %581
      %584 = vset.pattern.permute.xlu0 0
      %585 = vperm.xlu0 %584, %v340
      %v586 = vpop.permute.xlu0 %585
      %588 = vset.pattern.permute.xlu0 0
      %589 = vperm.xlu0 %588, %v341
      %v590 = vpop.permute.xlu0 %589
      %592 = vset.pattern.permute.xlu0 0
      %593 = vperm.xlu0 %592, %v342
      %v594 = vpop.permute.xlu0 %593
      %596 = vset.pattern.permute.xlu0 0
      %597 = vperm.xlu0 %596, %v343
      %v598 = vpop.permute.xlu0 %597
      %v600 = vmul.f32 %v346, %v216
      %v601 = vmul.f32 %v350, %v217
      %v602 = vmul.f32 %v354, %v218
      %v603 = vmul.f32 %v358, %v219
      %v604 = vmul.f32 %v362, %v220
      %v605 = vmul.f32 %v366, %v221
      %v606 = vmul.f32 %v370, %v222
      %v607 = vmul.f32 %v374, %v223
      %v608 = vmul.f32 %v378, %v224
      %v609 = vmul.f32 %v382, %v225
      %v610 = vmul.f32 %v386, %v226
      %v611 = vmul.f32 %v390, %v227
      %v612 = vmul.f32 %v394, %v228
      %v613 = vmul.f32 %v398, %v229
      %v614 = vmul.f32 %v402, %v230
      %v615 = vmul.f32 %v406, %v231
      %v616 = vmul.f32 %v410, %v232
      %v617 = vmul.f32 %v414, %v233
      %v618 = vmul.f32 %v418, %v234
      %v619 = vmul.f32 %v422, %v235
      %v620 = vmul.f32 %v426, %v236
      %v621 = vmul.f32 %v430, %v237
      %v622 = vmul.f32 %v434, %v238
      %v623 = vmul.f32 %v438, %v239
      %v624 = vmul.f32 %v442, %v240
      %v625 = vmul.f32 %v446, %v241
      %v626 = vmul.f32 %v450, %v242
      %v627 = vmul.f32 %v454, %v243
      %v628 = vmul.f32 %v458, %v244
      %v629 = vmul.f32 %v462, %v245
      %v630 = vmul.f32 %v466, %v246
      %v631 = vmul.f32 %v470, %v247
      %v632 = vmul.f32 %v474, %v248
      %v633 = vmul.f32 %v478, %v249
      %v634 = vmul.f32 %v482, %v250
      %v635 = vmul.f32 %v486, %v251
      %v636 = vmul.f32 %v490, %v252
      %v637 = vmul.f32 %v494, %v253
      %v638 = vmul.f32 %v498, %v254
      %v639 = vmul.f32 %v502, %v255
      %v640 = vmul.f32 %v506, %v256
      %v641 = vmul.f32 %v510, %v257
      %v642 = vmul.f32 %v514, %v258
      %v643 = vmul.f32 %v518, %v259
      %v644 = vmul.f32 %v522, %v260
      %v645 = vmul.f32 %v526, %v261
      %v646 = vmul.f32 %v530, %v262
      %v647 = vmul.f32 %v534, %v263
      %v648 = vmul.f32 %v538, %v264
      %v649 = vmul.f32 %v542, %v265
      %v650 = vmul.f32 %v546, %v266
      %v651 = vmul.f32 %v550, %v267
      %v652 = vmul.f32 %v554, %v268
      %v653 = vmul.f32 %v558, %v269
      %v654 = vmul.f32 %v562, %v270
      %v655 = vmul.f32 %v566, %v271
      %v656 = vmul.f32 %v570, %v272
      %v657 = vmul.f32 %v574, %v273
      %v658 = vmul.f32 %v578, %v274
      %v659 = vmul.f32 %v582, %v275
      %v660 = vmul.f32 %v586, %v276
      %v661 = vmul.f32 %v590, %v277
      %v662 = vmul.f32 %v594, %v278
      %v663 = vmul.f32 %v598, %v279
      %v664 = vadd.f32 %v600, 0.0
      %v665 = vadd.f32 %v601, 0.0
      %v666 = vadd.f32 %v602, 0.0
      %v667 = vadd.f32 %v603, 0.0
      %v668 = vadd.f32 %v604, 0.0
      %v669 = vadd.f32 %v605, 0.0
      %v670 = vadd.f32 %v606, 0.0
      %v671 = vadd.f32 %v607, 0.0
      %v672 = vadd.f32 %v608, 0.0
      %v673 = vadd.f32 %v609, 0.0
      %v674 = vadd.f32 %v610, 0.0
      %v675 = vadd.f32 %v611, 0.0
      %v676 = vadd.f32 %v612, 0.0
      %v677 = vadd.f32 %v613, 0.0
      %v678 = vadd.f32 %v614, 0.0
      %v679 = vadd.f32 %v615, 0.0
      %v680 = vadd.f32 %v616, 0.0
      %v681 = vadd.f32 %v617, 0.0
      %v682 = vadd.f32 %v618, 0.0
      %v683 = vadd.f32 %v619, 0.0
      %v684 = vadd.f32 %v620, 0.0
      %v685 = vadd.f32 %v621, 0.0
      %v686 = vadd.f32 %v622, 0.0
      %v687 = vadd.f32 %v623, 0.0
      %v688 = vadd.f32 %v624, 0.0
      %v689 = vadd.f32 %v625, 0.0
      %v690 = vadd.f32 %v626, 0.0
      %v691 = vadd.f32 %v627, 0.0
      %v692 = vadd.f32 %v628, 0.0
      %v693 = vadd.f32 %v629, 0.0
      %v694 = vadd.f32 %v630, 0.0
      %v695 = vadd.f32 %v631, 0.0
      %v696 = vadd.f32 %v632, 0.0
      %v697 = vadd.f32 %v633, 0.0
      %v698 = vadd.f32 %v634, 0.0
      %v699 = vadd.f32 %v635, 0.0
      %v700 = vadd.f32 %v636, 0.0
      %v701 = vadd.f32 %v637, 0.0
      %v702 = vadd.f32 %v638, 0.0
      %v703 = vadd.f32 %v639, 0.0
      %v704 = vadd.f32 %v640, 0.0
      %v705 = vadd.f32 %v641, 0.0
      %v706 = vadd.f32 %v642, 0.0
      %v707 = vadd.f32 %v643, 0.0
      %v708 = vadd.f32 %v644, 0.0
      %v709 = vadd.f32 %v645, 0.0
      %v710 = vadd.f32 %v646, 0.0
      %v711 = vadd.f32 %v647, 0.0
      %v712 = vadd.f32 %v648, 0.0
      %v713 = vadd.f32 %v649, 0.0
      %v714 = vadd.f32 %v650, 0.0
      %v715 = vadd.f32 %v651, 0.0
      %v716 = vadd.f32 %v652, 0.0
      %v717 = vadd.f32 %v653, 0.0
      %v718 = vadd.f32 %v654, 0.0
      %v719 = vadd.f32 %v655, 0.0
      %v720 = vadd.f32 %v656, 0.0
      %v721 = vadd.f32 %v657, 0.0
      %v722 = vadd.f32 %v658, 0.0
      %v723 = vadd.f32 %v659, 0.0
      %v724 = vadd.f32 %v660, 0.0
      %v725 = vadd.f32 %v661, 0.0
      %v726 = vadd.f32 %v662, 0.0
      %v727 = vadd.f32 %v663, 0.0
      %728 = vset.pattern.permute.xlu0 1
      %729 = vperm.xlu0 %728, %v280
      %v730 = vpop.permute.xlu0 %729
      %732 = vset.pattern.permute.xlu0 1
      %733 = vperm.xlu0 %732, %v281
      %v734 = vpop.permute.xlu0 %733
      %736 = vset.pattern.permute.xlu0 1
      %737 = vperm.xlu0 %736, %v282
      %v738 = vpop.permute.xlu0 %737
      %740 = vset.pattern.permute.xlu0 1
      %741 = vperm.xlu0 %740, %v283
      %v742 = vpop.permute.xlu0 %741
      %744 = vset.pattern.permute.xlu0 1
      %745 = vperm.xlu0 %744, %v284
      %v746 = vpop.permute.xlu0 %745
      %748 = vset.pattern.permute.xlu0 1
      %749 = vperm.xlu0 %748, %v285
      %v750 = vpop.permute.xlu0 %749
      %752 = vset.pattern.permute.xlu0 1
      %753 = vperm.xlu0 %752, %v286
      %v754 = vpop.permute.xlu0 %753
      %756 = vset.pattern.permute.xlu0 1
      %757 = vperm.xlu0 %756, %v287
      %v758 = vpop.permute.xlu0 %757
      %760 = vset.pattern.permute.xlu0 1
      %761 = vperm.xlu0 %760, %v288
      %v762 = vpop.permute.xlu0 %761
      %764 = vset.pattern.permute.xlu0 1
      %765 = vperm.xlu0 %764, %v289
      %v766 = vpop.permute.xlu0 %765
      %768 = vset.pattern.permute.xlu0 1
      %769 = vperm.xlu0 %768, %v290
      %v770 = vpop.permute.xlu0 %769
      %772 = vset.pattern.permute.xlu0 1
      %773 = vperm.xlu0 %772, %v291
      %v774 = vpop.permute.xlu0 %773
      %776 = vset.pattern.permute.xlu0 1
      %777 = vperm.xlu0 %776, %v292
      %v778 = vpop.permute.xlu0 %777
      %780 = vset.pattern.permute.xlu0 1
      %781 = vperm.xlu0 %780, %v293
      %v782 = vpop.permute.xlu0 %781
      %784 = vset.pattern.permute.xlu0 1
      %785 = vperm.xlu0 %784, %v294
      %v786 = vpop.permute.xlu0 %785
      %788 = vset.pattern.permute.xlu0 1
      %789 = vperm.xlu0 %788, %v295
      %v790 = vpop.permute.xlu0 %789
      %792 = vset.pattern.permute.xlu0 1
      %793 = vperm.xlu0 %792, %v296
      %v794 = vpop.permute.xlu0 %793
      %796 = vset.pattern.permute.xlu0 1
      %797 = vperm.xlu0 %796, %v297
      %v798 = vpop.permute.xlu0 %797
      %800 = vset.pattern.permute.xlu0 1
      %801 = vperm.xlu0 %800, %v298
      %v802 = vpop.permute.xlu0 %801
      %804 = vset.pattern.permute.xlu0 1
      %805 = vperm.xlu0 %804, %v299
      %v806 = vpop.permute.xlu0 %805
      %808 = vset.pattern.permute.xlu0 1
      %809 = vperm.xlu0 %808, %v300
      %v810 = vpop.permute.xlu0 %809
      %812 = vset.pattern.permute.xlu0 1
      %813 = vperm.xlu0 %812, %v301
      %v814 = vpop.permute.xlu0 %813
      %816 = vset.pattern.permute.xlu0 1
      %817 = vperm.xlu0 %816, %v302
      %v818 = vpop.permute.xlu0 %817
      %820 = vset.pattern.permute.xlu0 1
      %821 = vperm.xlu0 %820, %v303
      %v822 = vpop.permute.xlu0 %821
      %824 = vset.pattern.permute.xlu0 1
      %825 = vperm.xlu0 %824, %v304
      %v826 = vpop.permute.xlu0 %825
      %828 = vset.pattern.permute.xlu0 1
      %829 = vperm.xlu0 %828, %v305
      %v830 = vpop.permute.xlu0 %829
      %832 = vset.pattern.permute.xlu0 1
      %833 = vperm.xlu0 %832, %v306
      %v834 = vpop.permute.xlu0 %833
      %836 = vset.pattern.permute.xlu0 1
      %837 = vperm.xlu0 %836, %v307
      %v838 = vpop.permute.xlu0 %837
      %840 = vset.pattern.permute.xlu0 1
      %841 = vperm.xlu0 %840, %v308
      %v842 = vpop.permute.xlu0 %841
      %844 = vset.pattern.permute.xlu0 1
      %845 = vperm.xlu0 %844, %v309
      %v846 = vpop.permute.xlu0 %845
      %848 = vset.pattern.permute.xlu0 1
      %849 = vperm.xlu0 %848, %v310
      %v850 = vpop.permute.xlu0 %849
      %852 = vset.pattern.permute.xlu0 1
      %853 = vperm.xlu0 %852, %v311
      %v854 = vpop.permute.xlu0 %853
      %856 = vset.pattern.permute.xlu0 1
      %857 = vperm.xlu0 %856, %v312
      %v858 = vpop.permute.xlu0 %857
      %860 = vset.pattern.permute.xlu0 1
      %861 = vperm.xlu0 %860, %v313
      %v862 = vpop.permute.xlu0 %861
      %864 = vset.pattern.permute.xlu0 1
      %865 = vperm.xlu0 %864, %v314
      %v866 = vpop.permute.xlu0 %865
      %868 = vset.pattern.permute.xlu0 1
      %869 = vperm.xlu0 %868, %v315
      %v870 = vpop.permute.xlu0 %869
      %872 = vset.pattern.permute.xlu0 1
      %873 = vperm.xlu0 %872, %v316
      %v874 = vpop.permute.xlu0 %873
      %876 = vset.pattern.permute.xlu0 1
      %877 = vperm.xlu0 %876, %v317
      %v878 = vpop.permute.xlu0 %877
      %880 = vset.pattern.permute.xlu0 1
      %881 = vperm.xlu0 %880, %v318
      %v882 = vpop.permute.xlu0 %881
      %884 = vset.pattern.permute.xlu0 1
      %885 = vperm.xlu0 %884, %v319
      %v886 = vpop.permute.xlu0 %885
      %888 = vset.pattern.permute.xlu0 1
      %889 = vperm.xlu0 %888, %v320
      %v890 = vpop.permute.xlu0 %889
      %892 = vset.pattern.permute.xlu0 1
      %893 = vperm.xlu0 %892, %v321
      %v894 = vpop.permute.xlu0 %893
      %896 = vset.pattern.permute.xlu0 1
      %897 = vperm.xlu0 %896, %v322
      %v898 = vpop.permute.xlu0 %897
      %900 = vset.pattern.permute.xlu0 1
      %901 = vperm.xlu0 %900, %v323
      %v902 = vpop.permute.xlu0 %901
      %904 = vset.pattern.permute.xlu0 1
      %905 = vperm.xlu0 %904, %v324
      %v906 = vpop.permute.xlu0 %905
      %908 = vset.pattern.permute.xlu0 1
      %909 = vperm.xlu0 %908, %v325
      %v910 = vpop.permute.xlu0 %909
      %912 = vset.pattern.permute.xlu0 1
      %913 = vperm.xlu0 %912, %v326
      %v914 = vpop.permute.xlu0 %913
      %916 = vset.pattern.permute.xlu0 1
      %917 = vperm.xlu0 %916, %v327
      %v918 = vpop.permute.xlu0 %917
      %920 = vset.pattern.permute.xlu0 1
      %921 = vperm.xlu0 %920, %v328
      %v922 = vpop.permute.xlu0 %921
      %924 = vset.pattern.permute.xlu0 1
      %925 = vperm.xlu0 %924, %v329
      %v926 = vpop.permute.xlu0 %925
      %928 = vset.pattern.permute.xlu0 1
      %929 = vperm.xlu0 %928, %v330
      %v930 = vpop.permute.xlu0 %929
      %932 = vset.pattern.permute.xlu0 1
      %933 = vperm.xlu0 %932, %v331
      %v934 = vpop.permute.xlu0 %933
      %936 = vset.pattern.permute.xlu0 1
      %937 = vperm.xlu0 %936, %v332
      %v938 = vpop.permute.xlu0 %937
      %940 = vset.pattern.permute.xlu0 1
      %941 = vperm.xlu0 %940, %v333
      %v942 = vpop.permute.xlu0 %941
      %944 = vset.pattern.permute.xlu0 1
      %945 = vperm.xlu0 %944, %v334
      %v946 = vpop.permute.xlu0 %945
      %948 = vset.pattern.permute.xlu0 1
      %949 = vperm.xlu0 %948, %v335
      %v950 = vpop.permute.xlu0 %949
      %952 = vset.pattern.permute.xlu0 1
      %953 = vperm.xlu0 %952, %v336
      %v954 = vpop.permute.xlu0 %953
      %956 = vset.pattern.permute.xlu0 1
      %957 = vperm.xlu0 %956, %v337
      %v958 = vpop.permute.xlu0 %957
      %960 = vset.pattern.permute.xlu0 1
      %961 = vperm.xlu0 %960, %v338
      %v962 = vpop.permute.xlu0 %961
      %964 = vset.pattern.permute.xlu0 1
      %965 = vperm.xlu0 %964, %v339
      %v966 = vpop.permute.xlu0 %965
      %968 = vset.pattern.permute.xlu0 1
      %969 = vperm.xlu0 %968, %v340
      %v970 = vpop.permute.xlu0 %969
      %972 = vset.pattern.permute.xlu0 1
      %973 = vperm.xlu0 %972, %v341
      %v974 = vpop.permute.xlu0 %973
      %976 = vset.pattern.permute.xlu0 1
      %977 = vperm.xlu0 %976, %v342
      %v978 = vpop.permute.xlu0 %977
      %980 = vset.pattern.permute.xlu0 1
      %981 = vperm.xlu0 %980, %v343
      %v982 = vpop.permute.xlu0 %981
      %v984 = vmul.f32 %v730, %v216
      %v985 = vmul.f32 %v734, %v217
      %v986 = vmul.f32 %v738, %v218
      %v987 = vmul.f32 %v742, %v219
      %v988 = vmul.f32 %v746, %v220
      %v989 = vmul.f32 %v750, %v221
      %v990 = vmul.f32 %v754, %v222
      %v991 = vmul.f32 %v758, %v223
      %v992 = vmul.f32 %v762, %v224
      %v993 = vmul.f32 %v766, %v225
      %v994 = vmul.f32 %v770, %v226
      %v995 = vmul.f32 %v774, %v227
      %v996 = vmul.f32 %v778, %v228
      %v997 = vmul.f32 %v782, %v229
      %v998 = vmul.f32 %v786, %v230
      %v999 = vmul.f32 %v790, %v231
      %v1000 = vmul.f32 %v794, %v232
      %v1001 = vmul.f32 %v798, %v233
      %v1002 = vmul.f32 %v802, %v234
      %v1003 = vmul.f32 %v806, %v235
      %v1004 = vmul.f32 %v810, %v236
      %v1005 = vmul.f32 %v814, %v237
      %v1006 = vmul.f32 %v818, %v238
      %v1007 = vmul.f32 %v822, %v239
      %v1008 = vmul.f32 %v826, %v240
      %v1009 = vmul.f32 %v830, %v241
      %v1010 = vmul.f32 %v834, %v242
      %v1011 = vmul.f32 %v838, %v243
      %v1012 = vmul.f32 %v842, %v244
      %v1013 = vmul.f32 %v846, %v245
      %v1014 = vmul.f32 %v850, %v246
      %v1015 = vmul.f32 %v854, %v247
      %v1016 = vmul.f32 %v858, %v248
      %v1017 = vmul.f32 %v862, %v249
      %v1018 = vmul.f32 %v866, %v250
      %v1019 = vmul.f32 %v870, %v251
      %v1020 = vmul.f32 %v874, %v252
      %v1021 = vmul.f32 %v878, %v253
      %v1022 = vmul.f32 %v882, %v254
      %v1023 = vmul.f32 %v886, %v255
      %v1024 = vmul.f32 %v890, %v256
      %v1025 = vmul.f32 %v894, %v257
      %v1026 = vmul.f32 %v898, %v258
      %v1027 = vmul.f32 %v902, %v259
      %v1028 = vmul.f32 %v906, %v260
      %v1029 = vmul.f32 %v910, %v261
      %v1030 = vmul.f32 %v914, %v262
      %v1031 = vmul.f32 %v918, %v263
      %v1032 = vmul.f32 %v922, %v264
      %v1033 = vmul.f32 %v926, %v265
      %v1034 = vmul.f32 %v930, %v266
      %v1035 = vmul.f32 %v934, %v267
      %v1036 = vmul.f32 %v938, %v268
      %v1037 = vmul.f32 %v942, %v269
      %v1038 = vmul.f32 %v946, %v270
      %v1039 = vmul.f32 %v950, %v271
      %v1040 = vmul.f32 %v954, %v272
      %v1041 = vmul.f32 %v958, %v273
      %v1042 = vmul.f32 %v962, %v274
      %v1043 = vmul.f32 %v966, %v275
      %v1044 = vmul.f32 %v970, %v276
      %v1045 = vmul.f32 %v974, %v277
      %v1046 = vmul.f32 %v978, %v278
      %v1047 = vmul.f32 %v982, %v279
      %1112 = vrot.lane.b32.xlu0 %v984, 127
      %v1113 = vpop.permute.xlu0 %1112
      %1114 = vrot.lane.b32.xlu0 %v985, 127
      %v1115 = vpop.permute.xlu0 %1114
      %1116 = vrot.lane.b32.xlu0 %v986, 127
      %v1117 = vpop.permute.xlu0 %1116
      %1118 = vrot.lane.b32.xlu0 %v987, 127
      %v1119 = vpop.permute.xlu0 %1118
      %1120 = vrot.lane.b32.xlu0 %v988, 127
      %v1121 = vpop.permute.xlu0 %1120
      %1122 = vrot.lane.b32.xlu0 %v989, 127
      %v1123 = vpop.permute.xlu0 %1122
      %1124 = vrot.lane.b32.xlu0 %v990, 127
      %v1125 = vpop.permute.xlu0 %1124
      %1126 = vrot.lane.b32.xlu0 %v991, 127
      %v1127 = vpop.permute.xlu0 %1126
      %1128 = vrot.lane.b32.xlu0 %v992, 127
      %v1129 = vpop.permute.xlu0 %1128
      %1130 = vrot.lane.b32.xlu0 %v993, 127
      %v1131 = vpop.permute.xlu0 %1130
      %1132 = vrot.lane.b32.xlu0 %v994, 127
      %v1133 = vpop.permute.xlu0 %1132
      %1134 = vrot.lane.b32.xlu0 %v995, 127
      %v1135 = vpop.permute.xlu0 %1134
      %1136 = vrot.lane.b32.xlu0 %v996, 127
      %v1137 = vpop.permute.xlu0 %1136
      %1138 = vrot.lane.b32.xlu0 %v997, 127
      %v1139 = vpop.permute.xlu0 %1138
      %1140 = vrot.lane.b32.xlu0 %v998, 127
      %v1141 = vpop.permute.xlu0 %1140
      %1142 = vrot.lane.b32.xlu0 %v999, 127
      %v1143 = vpop.permute.xlu0 %1142
      %1144 = vrot.lane.b32.xlu0 %v1000, 127
      %v1145 = vpop.permute.xlu0 %1144
      %1146 = vrot.lane.b32.xlu0 %v1001, 127
      %v1147 = vpop.permute.xlu0 %1146
      %1148 = vrot.lane.b32.xlu0 %v1002, 127
      %v1149 = vpop.permute.xlu0 %1148
      %1150 = vrot.lane.b32.xlu0 %v1003, 127
      %v1151 = vpop.permute.xlu0 %1150
      %1152 = vrot.lane.b32.xlu0 %v1004, 127
      %v1153 = vpop.permute.xlu0 %1152
      %1154 = vrot.lane.b32.xlu0 %v1005, 127
      %v1155 = vpop.permute.xlu0 %1154
      %1156 = vrot.lane.b32.xlu0 %v1006, 127
      %v1157 = vpop.permute.xlu0 %1156
      %1158 = vrot.lane.b32.xlu0 %v1007, 127
      %v1159 = vpop.permute.xlu0 %1158
      %1160 = vrot.lane.b32.xlu0 %v1008, 127
      %v1161 = vpop.permute.xlu0 %1160
      %1162 = vrot.lane.b32.xlu0 %v1009, 127
      %v1163 = vpop.permute.xlu0 %1162
      %1164 = vrot.lane.b32.xlu0 %v1010, 127
      %v1165 = vpop.permute.xlu0 %1164
      %1166 = vrot.lane.b32.xlu0 %v1011, 127
      %v1167 = vpop.permute.xlu0 %1166
      %1168 = vrot.lane.b32.xlu0 %v1012, 127
      %v1169 = vpop.permute.xlu0 %1168
      %1170 = vrot.lane.b32.xlu0 %v1013, 127
      %v1171 = vpop.permute.xlu0 %1170
      %1172 = vrot.lane.b32.xlu0 %v1014, 127
      %v1173 = vpop.permute.xlu0 %1172
      %1174 = vrot.lane.b32.xlu0 %v1015, 127
      %v1175 = vpop.permute.xlu0 %1174
      %1176 = vrot.lane.b32.xlu0 %v1016, 127
      %v1177 = vpop.permute.xlu0 %1176
      %1178 = vrot.lane.b32.xlu0 %v1017, 127
      %v1179 = vpop.permute.xlu0 %1178
      %1180 = vrot.lane.b32.xlu0 %v1018, 127
      %v1181 = vpop.permute.xlu0 %1180
      %1182 = vrot.lane.b32.xlu0 %v1019, 127
      %v1183 = vpop.permute.xlu0 %1182
      %1184 = vrot.lane.b32.xlu0 %v1020, 127
      %v1185 = vpop.permute.xlu0 %1184
      %1186 = vrot.lane.b32.xlu0 %v1021, 127
      %v1187 = vpop.permute.xlu0 %1186
      %1188 = vrot.lane.b32.xlu0 %v1022, 127
      %v1189 = vpop.permute.xlu0 %1188
      %1190 = vrot.lane.b32.xlu0 %v1023, 127
      %v1191 = vpop.permute.xlu0 %1190
      %1192 = vrot.lane.b32.xlu0 %v1024, 127
      %v1193 = vpop.permute.xlu0 %1192
      %1194 = vrot.lane.b32.xlu0 %v1025, 127
      %v1195 = vpop.permute.xlu0 %1194
      %1196 = vrot.lane.b32.xlu0 %v1026, 127
      %v1197 = vpop.permute.xlu0 %1196
      %1198 = vrot.lane.b32.xlu0 %v1027, 127
      %v1199 = vpop.permute.xlu0 %1198
      %1200 = vrot.lane.b32.xlu0 %v1028, 127
      %v1201 = vpop.permute.xlu0 %1200
      %1202 = vrot.lane.b32.xlu0 %v1029, 127
      %v1203 = vpop.permute.xlu0 %1202
      %1204 = vrot.lane.b32.xlu0 %v1030, 127
      %v1205 = vpop.permute.xlu0 %1204
      %1206 = vrot.lane.b32.xlu0 %v1031, 127
      %v1207 = vpop.permute.xlu0 %1206
      %1208 = vrot.lane.b32.xlu0 %v1032, 127
      %v1209 = vpop.permute.xlu0 %1208
      %1210 = vrot.lane.b32.xlu0 %v1033, 127
      %v1211 = vpop.permute.xlu0 %1210
      %1212 = vrot.lane.b32.xlu0 %v1034, 127
      %v1213 = vpop.permute.xlu0 %1212
      %1214 = vrot.lane.b32.xlu0 %v1035, 127
      %v1215 = vpop.permute.xlu0 %1214
      %1216 = vrot.lane.b32.xlu0 %v1036, 127
      %v1217 = vpop.permute.xlu0 %1216
      %1218 = vrot.lane.b32.xlu0 %v1037, 127
      %v1219 = vpop.permute.xlu0 %1218
      %1220 = vrot.lane.b32.xlu0 %v1038, 127
      %v1221 = vpop.permute.xlu0 %1220
      %1222 = vrot.lane.b32.xlu0 %v1039, 127
      %v1223 = vpop.permute.xlu0 %1222
      %1224 = vrot.lane.b32.xlu0 %v1040, 127
      %v1225 = vpop.permute.xlu0 %1224
      %1226 = vrot.lane.b32.xlu0 %v1041, 127
      %v1227 = vpop.permute.xlu0 %1226
      %1228 = vrot.lane.b32.xlu0 %v1042, 127
      %v1229 = vpop.permute.xlu0 %1228
      %1230 = vrot.lane.b32.xlu0 %v1043, 127
      %v1231 = vpop.permute.xlu0 %1230
      %1232 = vrot.lane.b32.xlu0 %v1044, 127
      %v1233 = vpop.permute.xlu0 %1232
      %1234 = vrot.lane.b32.xlu0 %v1045, 127
      %v1235 = vpop.permute.xlu0 %1234
      %1236 = vrot.lane.b32.xlu0 %v1046, 127
      %v1237 = vpop.permute.xlu0 %1236
      %1238 = vrot.lane.b32.xlu0 %v1047, 127
      %v1239 = vpop.permute.xlu0 %1238
      %v1304 = vadd.f32 %v664, %v1113
      %v1305 = vadd.f32 %v665, %v1115
      %v1306 = vadd.f32 %v666, %v1117
      %v1307 = vadd.f32 %v667, %v1119
      %v1308 = vadd.f32 %v668, %v1121
      %v1309 = vadd.f32 %v669, %v1123
      %v1310 = vadd.f32 %v670, %v1125
      %v1311 = vadd.f32 %v671, %v1127
      %v1312 = vadd.f32 %v672, %v1129
      %v1313 = vadd.f32 %v673, %v1131
      %v1314 = vadd.f32 %v674, %v1133
      %v1315 = vadd.f32 %v675, %v1135
      %v1316 = vadd.f32 %v676, %v1137
      %v1317 = vadd.f32 %v677, %v1139
      %v1318 = vadd.f32 %v678, %v1141
      %v1319 = vadd.f32 %v679, %v1143
      %v1320 = vadd.f32 %v680, %v1145
      %v1321 = vadd.f32 %v681, %v1147
      %v1322 = vadd.f32 %v682, %v1149
      %v1323 = vadd.f32 %v683, %v1151
      %v1324 = vadd.f32 %v684, %v1153
      %v1325 = vadd.f32 %v685, %v1155
      %v1326 = vadd.f32 %v686, %v1157
      %v1327 = vadd.f32 %v687, %v1159
      %v1328 = vadd.f32 %v688, %v1161
      %v1329 = vadd.f32 %v689, %v1163
      %v1330 = vadd.f32 %v690, %v1165
      %v1331 = vadd.f32 %v691, %v1167
      %v1332 = vadd.f32 %v692, %v1169
      %v1333 = vadd.f32 %v693, %v1171
      %v1334 = vadd.f32 %v694, %v1173
      %v1335 = vadd.f32 %v695, %v1175
      %v1336 = vadd.f32 %v696, %v1177
      %v1337 = vadd.f32 %v697, %v1179
      %v1338 = vadd.f32 %v698, %v1181
      %v1339 = vadd.f32 %v699, %v1183
      %v1340 = vadd.f32 %v700, %v1185
      %v1341 = vadd.f32 %v701, %v1187
      %v1342 = vadd.f32 %v702, %v1189
      %v1343 = vadd.f32 %v703, %v1191
      %v1344 = vadd.f32 %v704, %v1193
      %v1345 = vadd.f32 %v705, %v1195
      %v1346 = vadd.f32 %v706, %v1197
      %v1347 = vadd.f32 %v707, %v1199
      %v1348 = vadd.f32 %v708, %v1201
      %v1349 = vadd.f32 %v709, %v1203
      %v1350 = vadd.f32 %v710, %v1205
      %v1351 = vadd.f32 %v711, %v1207
      %v1352 = vadd.f32 %v712, %v1209
      %v1353 = vadd.f32 %v713, %v1211
      %v1354 = vadd.f32 %v714, %v1213
      %v1355 = vadd.f32 %v715, %v1215
      %v1356 = vadd.f32 %v716, %v1217
      %v1357 = vadd.f32 %v717, %v1219
      %v1358 = vadd.f32 %v718, %v1221
      %v1359 = vadd.f32 %v719, %v1223
      %v1360 = vadd.f32 %v720, %v1225
      %v1361 = vadd.f32 %v721, %v1227
      %v1362 = vadd.f32 %v722, %v1229
      %v1363 = vadd.f32 %v723, %v1231
      %v1364 = vadd.f32 %v724, %v1233
      %v1365 = vadd.f32 %v725, %v1235
      %v1366 = vadd.f32 %v726, %v1237
      %v1367 = vadd.f32 %v727, %v1239
      %1368 = vset.pattern.permute.xlu0 2
      %1369 = vperm.xlu0 %1368, %v280
      %v1370 = vpop.permute.xlu0 %1369
      %1372 = vset.pattern.permute.xlu0 2
      %1373 = vperm.xlu0 %1372, %v281
      %v1374 = vpop.permute.xlu0 %1373
      %1376 = vset.pattern.permute.xlu0 2
      %1377 = vperm.xlu0 %1376, %v282
      %v1378 = vpop.permute.xlu0 %1377
      %1380 = vset.pattern.permute.xlu0 2
      %1381 = vperm.xlu0 %1380, %v283
      %v1382 = vpop.permute.xlu0 %1381
      %1384 = vset.pattern.permute.xlu0 2
      %1385 = vperm.xlu0 %1384, %v284
      %v1386 = vpop.permute.xlu0 %1385
      %1388 = vset.pattern.permute.xlu0 2
      %1389 = vperm.xlu0 %1388, %v285
      %v1390 = vpop.permute.xlu0 %1389
      %1392 = vset.pattern.permute.xlu0 2
      %1393 = vperm.xlu0 %1392, %v286
      %v1394 = vpop.permute.xlu0 %1393
      %1396 = vset.pattern.permute.xlu0 2
      %1397 = vperm.xlu0 %1396, %v287
      %v1398 = vpop.permute.xlu0 %1397
      %1400 = vset.pattern.permute.xlu0 2
      %1401 = vperm.xlu0 %1400, %v288
      %v1402 = vpop.permute.xlu0 %1401
      %1404 = vset.pattern.permute.xlu0 2
      %1405 = vperm.xlu0 %1404, %v289
      %v1406 = vpop.permute.xlu0 %1405
      %1408 = vset.pattern.permute.xlu0 2
      %1409 = vperm.xlu0 %1408, %v290
      %v1410 = vpop.permute.xlu0 %1409
      %1412 = vset.pattern.permute.xlu0 2
      %1413 = vperm.xlu0 %1412, %v291
      %v1414 = vpop.permute.xlu0 %1413
      %1416 = vset.pattern.permute.xlu0 2
      %1417 = vperm.xlu0 %1416, %v292
      %v1418 = vpop.permute.xlu0 %1417
      %1420 = vset.pattern.permute.xlu0 2
      %1421 = vperm.xlu0 %1420, %v293
      %v1422 = vpop.permute.xlu0 %1421
      %1424 = vset.pattern.permute.xlu0 2
      %1425 = vperm.xlu0 %1424, %v294
      %v1426 = vpop.permute.xlu0 %1425
      %1428 = vset.pattern.permute.xlu0 2
      %1429 = vperm.xlu0 %1428, %v295
      %v1430 = vpop.permute.xlu0 %1429
      %1432 = vset.pattern.permute.xlu0 2
      %1433 = vperm.xlu0 %1432, %v296
      %v1434 = vpop.permute.xlu0 %1433
      %1436 = vset.pattern.permute.xlu0 2
      %1437 = vperm.xlu0 %1436, %v297
      %v1438 = vpop.permute.xlu0 %1437
      %1440 = vset.pattern.permute.xlu0 2
      %1441 = vperm.xlu0 %1440, %v298
      %v1442 = vpop.permute.xlu0 %1441
      %1444 = vset.pattern.permute.xlu0 2
      %1445 = vperm.xlu0 %1444, %v299
      %v1446 = vpop.permute.xlu0 %1445
      %1448 = vset.pattern.permute.xlu0 2
      %1449 = vperm.xlu0 %1448, %v300
      %v1450 = vpop.permute.xlu0 %1449
      %1452 = vset.pattern.permute.xlu0 2
      %1453 = vperm.xlu0 %1452, %v301
      %v1454 = vpop.permute.xlu0 %1453
      %1456 = vset.pattern.permute.xlu0 2
      %1457 = vperm.xlu0 %1456, %v302
      %v1458 = vpop.permute.xlu0 %1457
      %1460 = vset.pattern.permute.xlu0 2
      %1461 = vperm.xlu0 %1460, %v303
      %v1462 = vpop.permute.xlu0 %1461
      %1464 = vset.pattern.permute.xlu0 2
      %1465 = vperm.xlu0 %1464, %v304
      %v1466 = vpop.permute.xlu0 %1465
      %1468 = vset.pattern.permute.xlu0 2
      %1469 = vperm.xlu0 %1468, %v305
      %v1470 = vpop.permute.xlu0 %1469
      %1472 = vset.pattern.permute.xlu0 2
      %1473 = vperm.xlu0 %1472, %v306
      %v1474 = vpop.permute.xlu0 %1473
      %1476 = vset.pattern.permute.xlu0 2
      %1477 = vperm.xlu0 %1476, %v307
      %v1478 = vpop.permute.xlu0 %1477
      %1480 = vset.pattern.permute.xlu0 2
      %1481 = vperm.xlu0 %1480, %v308
      %v1482 = vpop.permute.xlu0 %1481
      %1484 = vset.pattern.permute.xlu0 2
      %1485 = vperm.xlu0 %1484, %v309
      %v1486 = vpop.permute.xlu0 %1485
      %1488 = vset.pattern.permute.xlu0 2
      %1489 = vperm.xlu0 %1488, %v310
      %v1490 = vpop.permute.xlu0 %1489
      %1492 = vset.pattern.permute.xlu0 2
      %1493 = vperm.xlu0 %1492, %v311
      %v1494 = vpop.permute.xlu0 %1493
      %1496 = vset.pattern.permute.xlu0 2
      %1497 = vperm.xlu0 %1496, %v312
      %v1498 = vpop.permute.xlu0 %1497
      %1500 = vset.pattern.permute.xlu0 2
      %1501 = vperm.xlu0 %1500, %v313
      %v1502 = vpop.permute.xlu0 %1501
      %1504 = vset.pattern.permute.xlu0 2
      %1505 = vperm.xlu0 %1504, %v314
      %v1506 = vpop.permute.xlu0 %1505
      %1508 = vset.pattern.permute.xlu0 2
      %1509 = vperm.xlu0 %1508, %v315
      %v1510 = vpop.permute.xlu0 %1509
      %1512 = vset.pattern.permute.xlu0 2
      %1513 = vperm.xlu0 %1512, %v316
      %v1514 = vpop.permute.xlu0 %1513
      %1516 = vset.pattern.permute.xlu0 2
      %1517 = vperm.xlu0 %1516, %v317
      %v1518 = vpop.permute.xlu0 %1517
      %1520 = vset.pattern.permute.xlu0 2
      %1521 = vperm.xlu0 %1520, %v318
      %v1522 = vpop.permute.xlu0 %1521
      %1524 = vset.pattern.permute.xlu0 2
      %1525 = vperm.xlu0 %1524, %v319
      %v1526 = vpop.permute.xlu0 %1525
      %1528 = vset.pattern.permute.xlu0 2
      %1529 = vperm.xlu0 %1528, %v320
      %v1530 = vpop.permute.xlu0 %1529
      %1532 = vset.pattern.permute.xlu0 2
      %1533 = vperm.xlu0 %1532, %v321
      %v1534 = vpop.permute.xlu0 %1533
      %1536 = vset.pattern.permute.xlu0 2
      %1537 = vperm.xlu0 %1536, %v322
      %v1538 = vpop.permute.xlu0 %1537
      %1540 = vset.pattern.permute.xlu0 2
      %1541 = vperm.xlu0 %1540, %v323
      %v1542 = vpop.permute.xlu0 %1541
      %1544 = vset.pattern.permute.xlu0 2
      %1545 = vperm.xlu0 %1544, %v324
      %v1546 = vpop.permute.xlu0 %1545
      %1548 = vset.pattern.permute.xlu0 2
      %1549 = vperm.xlu0 %1548, %v325
      %v1550 = vpop.permute.xlu0 %1549
      %1552 = vset.pattern.permute.xlu0 2
      %1553 = vperm.xlu0 %1552, %v326
      %v1554 = vpop.permute.xlu0 %1553
      %1556 = vset.pattern.permute.xlu0 2
      %1557 = vperm.xlu0 %1556, %v327
      %v1558 = vpop.permute.xlu0 %1557
      %1560 = vset.pattern.permute.xlu0 2
      %1561 = vperm.xlu0 %1560, %v328
      %v1562 = vpop.permute.xlu0 %1561
      %1564 = vset.pattern.permute.xlu0 2
      %1565 = vperm.xlu0 %1564, %v329
      %v1566 = vpop.permute.xlu0 %1565
      %1568 = vset.pattern.permute.xlu0 2
      %1569 = vperm.xlu0 %1568, %v330
      %v1570 = vpop.permute.xlu0 %1569
      %1572 = vset.pattern.permute.xlu0 2
      %1573 = vperm.xlu0 %1572, %v331
      %v1574 = vpop.permute.xlu0 %1573
      %1576 = vset.pattern.permute.xlu0 2
      %1577 = vperm.xlu0 %1576, %v332
      %v1578 = vpop.permute.xlu0 %1577
      %1580 = vset.pattern.permute.xlu0 2
      %1581 = vperm.xlu0 %1580, %v333
      %v1582 = vpop.permute.xlu0 %1581
      %1584 = vset.pattern.permute.xlu0 2
      %1585 = vperm.xlu0 %1584, %v334
      %v1586 = vpop.permute.xlu0 %1585
      %1588 = vset.pattern.permute.xlu0 2
      %1589 = vperm.xlu0 %1588, %v335
      %v1590 = vpop.permute.xlu0 %1589
      %1592 = vset.pattern.permute.xlu0 2
      %1593 = vperm.xlu0 %1592, %v336
      %v1594 = vpop.permute.xlu0 %1593
      %1596 = vset.pattern.permute.xlu0 2
      %1597 = vperm.xlu0 %1596, %v337
      %v1598 = vpop.permute.xlu0 %1597
      %1600 = vset.pattern.permute.xlu0 2
      %1601 = vperm.xlu0 %1600, %v338
      %v1602 = vpop.permute.xlu0 %1601
      %1604 = vset.pattern.permute.xlu0 2
      %1605 = vperm.xlu0 %1604, %v339
      %v1606 = vpop.permute.xlu0 %1605
      %1608 = vset.pattern.permute.xlu0 2
      %1609 = vperm.xlu0 %1608, %v340
      %v1610 = vpop.permute.xlu0 %1609
      %1612 = vset.pattern.permute.xlu0 2
      %1613 = vperm.xlu0 %1612, %v341
      %v1614 = vpop.permute.xlu0 %1613
      %1616 = vset.pattern.permute.xlu0 2
      %1617 = vperm.xlu0 %1616, %v342
      %v1618 = vpop.permute.xlu0 %1617
      %1620 = vset.pattern.permute.xlu0 2
      %1621 = vperm.xlu0 %1620, %v343
      %v1622 = vpop.permute.xlu0 %1621
      %v1624 = vmul.f32 %v1370, %v216
      %v1625 = vmul.f32 %v1374, %v217
      %v1626 = vmul.f32 %v1378, %v218
      %v1627 = vmul.f32 %v1382, %v219
      %v1628 = vmul.f32 %v1386, %v220
      %v1629 = vmul.f32 %v1390, %v221
      %v1630 = vmul.f32 %v1394, %v222
      %v1631 = vmul.f32 %v1398, %v223
      %v1632 = vmul.f32 %v1402, %v224
      %v1633 = vmul.f32 %v1406, %v225
      %v1634 = vmul.f32 %v1410, %v226
      %v1635 = vmul.f32 %v1414, %v227
      %v1636 = vmul.f32 %v1418, %v228
      %v1637 = vmul.f32 %v1422, %v229
      %v1638 = vmul.f32 %v1426, %v230
      %v1639 = vmul.f32 %v1430, %v231
      %v1640 = vmul.f32 %v1434, %v232
      %v1641 = vmul.f32 %v1438, %v233
      %v1642 = vmul.f32 %v1442, %v234
      %v1643 = vmul.f32 %v1446, %v235
      %v1644 = vmul.f32 %v1450, %v236
      %v1645 = vmul.f32 %v1454, %v237
      %v1646 = vmul.f32 %v1458, %v238
      %v1647 = vmul.f32 %v1462, %v239
      %v1648 = vmul.f32 %v1466, %v240
      %v1649 = vmul.f32 %v1470, %v241
      %v1650 = vmul.f32 %v1474, %v242
      %v1651 = vmul.f32 %v1478, %v243
      %v1652 = vmul.f32 %v1482, %v244
      %v1653 = vmul.f32 %v1486, %v245
      %v1654 = vmul.f32 %v1490, %v246
      %v1655 = vmul.f32 %v1494, %v247
      %v1656 = vmul.f32 %v1498, %v248
      %v1657 = vmul.f32 %v1502, %v249
      %v1658 = vmul.f32 %v1506, %v250
      %v1659 = vmul.f32 %v1510, %v251
      %v1660 = vmul.f32 %v1514, %v252
      %v1661 = vmul.f32 %v1518, %v253
      %v1662 = vmul.f32 %v1522, %v254
      %v1663 = vmul.f32 %v1526, %v255
      %v1664 = vmul.f32 %v1530, %v256
      %v1665 = vmul.f32 %v1534, %v257
      %v1666 = vmul.f32 %v1538, %v258
      %v1667 = vmul.f32 %v1542, %v259
      %v1668 = vmul.f32 %v1546, %v260
      %v1669 = vmul.f32 %v1550, %v261
      %v1670 = vmul.f32 %v1554, %v262
      %v1671 = vmul.f32 %v1558, %v263
      %v1672 = vmul.f32 %v1562, %v264
      %v1673 = vmul.f32 %v1566, %v265
      %v1674 = vmul.f32 %v1570, %v266
      %v1675 = vmul.f32 %v1574, %v267
      %v1676 = vmul.f32 %v1578, %v268
      %v1677 = vmul.f32 %v1582, %v269
      %v1678 = vmul.f32 %v1586, %v270
      %v1679 = vmul.f32 %v1590, %v271
      %v1680 = vmul.f32 %v1594, %v272
      %v1681 = vmul.f32 %v1598, %v273
      %v1682 = vmul.f32 %v1602, %v274
      %v1683 = vmul.f32 %v1606, %v275
      %v1684 = vmul.f32 %v1610, %v276
      %v1685 = vmul.f32 %v1614, %v277
      %v1686 = vmul.f32 %v1618, %v278
      %v1687 = vmul.f32 %v1622, %v279
      %1752 = vrot.lane.b32.xlu0 %v1624, 126
      %v1753 = vpop.permute.xlu0 %1752
      %1754 = vrot.lane.b32.xlu0 %v1625, 126
      %v1755 = vpop.permute.xlu0 %1754
      %1756 = vrot.lane.b32.xlu0 %v1626, 126
      %v1757 = vpop.permute.xlu0 %1756
      %1758 = vrot.lane.b32.xlu0 %v1627, 126
      %v1759 = vpop.permute.xlu0 %1758
      %1760 = vrot.lane.b32.xlu0 %v1628, 126
      %v1761 = vpop.permute.xlu0 %1760
      %1762 = vrot.lane.b32.xlu0 %v1629, 126
      %v1763 = vpop.permute.xlu0 %1762
      %1764 = vrot.lane.b32.xlu0 %v1630, 126
      %v1765 = vpop.permute.xlu0 %1764
      %1766 = vrot.lane.b32.xlu0 %v1631, 126
      %v1767 = vpop.permute.xlu0 %1766
      %1768 = vrot.lane.b32.xlu0 %v1632, 126
      %v1769 = vpop.permute.xlu0 %1768
      %1770 = vrot.lane.b32.xlu0 %v1633, 126
      %v1771 = vpop.permute.xlu0 %1770
      %1772 = vrot.lane.b32.xlu0 %v1634, 126
      %v1773 = vpop.permute.xlu0 %1772
      %1774 = vrot.lane.b32.xlu0 %v1635, 126
      %v1775 = vpop.permute.xlu0 %1774
      %1776 = vrot.lane.b32.xlu0 %v1636, 126
      %v1777 = vpop.permute.xlu0 %1776
      %1778 = vrot.lane.b32.xlu0 %v1637, 126
      %v1779 = vpop.permute.xlu0 %1778
      %1780 = vrot.lane.b32.xlu0 %v1638, 126
      %v1781 = vpop.permute.xlu0 %1780
      %1782 = vrot.lane.b32.xlu0 %v1639, 126
      %v1783 = vpop.permute.xlu0 %1782
      %1784 = vrot.lane.b32.xlu0 %v1640, 126
      %v1785 = vpop.permute.xlu0 %1784
      %1786 = vrot.lane.b32.xlu0 %v1641, 126
      %v1787 = vpop.permute.xlu0 %1786
      %1788 = vrot.lane.b32.xlu0 %v1642, 126
      %v1789 = vpop.permute.xlu0 %1788
      %1790 = vrot.lane.b32.xlu0 %v1643, 126
      %v1791 = vpop.permute.xlu0 %1790
      %1792 = vrot.lane.b32.xlu0 %v1644, 126
      %v1793 = vpop.permute.xlu0 %1792
      %1794 = vrot.lane.b32.xlu0 %v1645, 126
      %v1795 = vpop.permute.xlu0 %1794
      %1796 = vrot.lane.b32.xlu0 %v1646, 126
      %v1797 = vpop.permute.xlu0 %1796
      %1798 = vrot.lane.b32.xlu0 %v1647, 126
      %v1799 = vpop.permute.xlu0 %1798
      %1800 = vrot.lane.b32.xlu0 %v1648, 126
      %v1801 = vpop.permute.xlu0 %1800
      %1802 = vrot.lane.b32.xlu0 %v1649, 126
      %v1803 = vpop.permute.xlu0 %1802
      %1804 = vrot.lane.b32.xlu0 %v1650, 126
      %v1805 = vpop.permute.xlu0 %1804
      %1806 = vrot.lane.b32.xlu0 %v1651, 126
      %v1807 = vpop.permute.xlu0 %1806
      %1808 = vrot.lane.b32.xlu0 %v1652, 126
      %v1809 = vpop.permute.xlu0 %1808
      %1810 = vrot.lane.b32.xlu0 %v1653, 126
      %v1811 = vpop.permute.xlu0 %1810
      %1812 = vrot.lane.b32.xlu0 %v1654, 126
      %v1813 = vpop.permute.xlu0 %1812
      %1814 = vrot.lane.b32.xlu0 %v1655, 126
      %v1815 = vpop.permute.xlu0 %1814
      %1816 = vrot.lane.b32.xlu0 %v1656, 126
      %v1817 = vpop.permute.xlu0 %1816
      %1818 = vrot.lane.b32.xlu0 %v1657, 126
      %v1819 = vpop.permute.xlu0 %1818
      %1820 = vrot.lane.b32.xlu0 %v1658, 126
      %v1821 = vpop.permute.xlu0 %1820
      %1822 = vrot.lane.b32.xlu0 %v1659, 126
      %v1823 = vpop.permute.xlu0 %1822
      %1824 = vrot.lane.b32.xlu0 %v1660, 126
      %v1825 = vpop.permute.xlu0 %1824
      %1826 = vrot.lane.b32.xlu0 %v1661, 126
      %v1827 = vpop.permute.xlu0 %1826
      %1828 = vrot.lane.b32.xlu0 %v1662, 126
      %v1829 = vpop.permute.xlu0 %1828
      %1830 = vrot.lane.b32.xlu0 %v1663, 126
      %v1831 = vpop.permute.xlu0 %1830
      %1832 = vrot.lane.b32.xlu0 %v1664, 126
      %v1833 = vpop.permute.xlu0 %1832
      %1834 = vrot.lane.b32.xlu0 %v1665, 126
      %v1835 = vpop.permute.xlu0 %1834
      %1836 = vrot.lane.b32.xlu0 %v1666, 126
      %v1837 = vpop.permute.xlu0 %1836
      %1838 = vrot.lane.b32.xlu0 %v1667, 126
      %v1839 = vpop.permute.xlu0 %1838
      %1840 = vrot.lane.b32.xlu0 %v1668, 126
      %v1841 = vpop.permute.xlu0 %1840
      %1842 = vrot.lane.b32.xlu0 %v1669, 126
      %v1843 = vpop.permute.xlu0 %1842
      %1844 = vrot.lane.b32.xlu0 %v1670, 126
      %v1845 = vpop.permute.xlu0 %1844
      %1846 = vrot.lane.b32.xlu0 %v1671, 126
      %v1847 = vpop.permute.xlu0 %1846
      %1848 = vrot.lane.b32.xlu0 %v1672, 126
      %v1849 = vpop.permute.xlu0 %1848
      %1850 = vrot.lane.b32.xlu0 %v1673, 126
      %v1851 = vpop.permute.xlu0 %1850
      %1852 = vrot.lane.b32.xlu0 %v1674, 126
      %v1853 = vpop.permute.xlu0 %1852
      %1854 = vrot.lane.b32.xlu0 %v1675, 126
      %v1855 = vpop.permute.xlu0 %1854
      %1856 = vrot.lane.b32.xlu0 %v1676, 126
      %v1857 = vpop.permute.xlu0 %1856
      %1858 = vrot.lane.b32.xlu0 %v1677, 126
      %v1859 = vpop.permute.xlu0 %1858
      %1860 = vrot.lane.b32.xlu0 %v1678, 126
      %v1861 = vpop.permute.xlu0 %1860
      %1862 = vrot.lane.b32.xlu0 %v1679, 126
      %v1863 = vpop.permute.xlu0 %1862
      %1864 = vrot.lane.b32.xlu0 %v1680, 126
      %v1865 = vpop.permute.xlu0 %1864
      %1866 = vrot.lane.b32.xlu0 %v1681, 126
      %v1867 = vpop.permute.xlu0 %1866
      %1868 = vrot.lane.b32.xlu0 %v1682, 126
      %v1869 = vpop.permute.xlu0 %1868
      %1870 = vrot.lane.b32.xlu0 %v1683, 126
      %v1871 = vpop.permute.xlu0 %1870
      %1872 = vrot.lane.b32.xlu0 %v1684, 126
      %v1873 = vpop.permute.xlu0 %1872
      %1874 = vrot.lane.b32.xlu0 %v1685, 126
      %v1875 = vpop.permute.xlu0 %1874
      %1876 = vrot.lane.b32.xlu0 %v1686, 126
      %v1877 = vpop.permute.xlu0 %1876
      %1878 = vrot.lane.b32.xlu0 %v1687, 126
      %v1879 = vpop.permute.xlu0 %1878
      %v1944 = vadd.f32 %v1304, %v1753
      %v1945 = vadd.f32 %v1305, %v1755
      %v1946 = vadd.f32 %v1306, %v1757
      %v1947 = vadd.f32 %v1307, %v1759
      %v1948 = vadd.f32 %v1308, %v1761
      %v1949 = vadd.f32 %v1309, %v1763
      %v1950 = vadd.f32 %v1310, %v1765
      %v1951 = vadd.f32 %v1311, %v1767
      %v1952 = vadd.f32 %v1312, %v1769
      %v1953 = vadd.f32 %v1313, %v1771
      %v1954 = vadd.f32 %v1314, %v1773
      %v1955 = vadd.f32 %v1315, %v1775
      %v1956 = vadd.f32 %v1316, %v1777
      %v1957 = vadd.f32 %v1317, %v1779
      %v1958 = vadd.f32 %v1318, %v1781
      %v1959 = vadd.f32 %v1319, %v1783
      %v1960 = vadd.f32 %v1320, %v1785
      %v1961 = vadd.f32 %v1321, %v1787
      %v1962 = vadd.f32 %v1322, %v1789
      %v1963 = vadd.f32 %v1323, %v1791
      %v1964 = vadd.f32 %v1324, %v1793
      %v1965 = vadd.f32 %v1325, %v1795
      %v1966 = vadd.f32 %v1326, %v1797
      %v1967 = vadd.f32 %v1327, %v1799
      %v1968 = vadd.f32 %v1328, %v1801
      %v1969 = vadd.f32 %v1329, %v1803
      %v1970 = vadd.f32 %v1330, %v1805
      %v1971 = vadd.f32 %v1331, %v1807
      %v1972 = vadd.f32 %v1332, %v1809
      %v1973 = vadd.f32 %v1333, %v1811
      %v1974 = vadd.f32 %v1334, %v1813
      %v1975 = vadd.f32 %v1335, %v1815
      %v1976 = vadd.f32 %v1336, %v1817
      %v1977 = vadd.f32 %v1337, %v1819
      %v1978 = vadd.f32 %v1338, %v1821
      %v1979 = vadd.f32 %v1339, %v1823
      %v1980 = vadd.f32 %v1340, %v1825
      %v1981 = vadd.f32 %v1341, %v1827
      %v1982 = vadd.f32 %v1342, %v1829
      %v1983 = vadd.f32 %v1343, %v1831
      %v1984 = vadd.f32 %v1344, %v1833
      %v1985 = vadd.f32 %v1345, %v1835
      %v1986 = vadd.f32 %v1346, %v1837
      %v1987 = vadd.f32 %v1347, %v1839
      %v1988 = vadd.f32 %v1348, %v1841
      %v1989 = vadd.f32 %v1349, %v1843
      %v1990 = vadd.f32 %v1350, %v1845
      %v1991 = vadd.f32 %v1351, %v1847
      %v1992 = vadd.f32 %v1352, %v1849
      %v1993 = vadd.f32 %v1353, %v1851
      %v1994 = vadd.f32 %v1354, %v1853
      %v1995 = vadd.f32 %v1355, %v1855
      %v1996 = vadd.f32 %v1356, %v1857
      %v1997 = vadd.f32 %v1357, %v1859
      %v1998 = vadd.f32 %v1358, %v1861
      %v1999 = vadd.f32 %v1359, %v1863
      %v2000 = vadd.f32 %v1360, %v1865
      %v2001 = vadd.f32 %v1361, %v1867
      %v2002 = vadd.f32 %v1362, %v1869
      %v2003 = vadd.f32 %v1363, %v1871
      %v2004 = vadd.f32 %v1364, %v1873
      %v2005 = vadd.f32 %v1365, %v1875
      %v2006 = vadd.f32 %v1366, %v1877
      %v2007 = vadd.f32 %v1367, %v1879
      %v2008 = vld [vmem:[%s138 + $0x1] sm:$0xff]
      %v2009 = vld [vmem:[%s138 + $0x11] sm:$0xff]
      %v2010 = vld [vmem:[%s138 + $0x21] sm:$0xff]
      %v2011 = vld [vmem:[%s138 + $0x31] sm:$0xff]
      %v2012 = vld [vmem:[%s138 + $0x41] sm:$0xff]
      %v2013 = vld [vmem:[%s138 + $0x51] sm:$0xff]
      %v2014 = vld [vmem:[%s138 + $0x61] sm:$0xff]
      %v2015 = vld [vmem:[%s138 + $0x71] sm:$0xff]
      %v2016 = vld [vmem:[%s138 + $0x81] sm:$0xff]
      %v2017 = vld [vmem:[%s138 + $0x91] sm:$0xff]
      %v2018 = vld [vmem:[%s138 + $0xa1] sm:$0xff]
      %v2019 = vld [vmem:[%s138 + $0xb1] sm:$0xff]
      %v2020 = vld [vmem:[%s138 + $0xc1] sm:$0xff]
      %v2021 = vld [vmem:[%s138 + $0xd1] sm:$0xff]
      %v2022 = vld [vmem:[%s138 + $0xe1] sm:$0xff]
      %v2023 = vld [vmem:[%s138 + $0xf1] sm:$0xff]
      %v2024 = vld [vmem:[%s138 + $0x101] sm:$0xff]
      %v2025 = vld [vmem:[%s138 + $0x111] sm:$0xff]
      %v2026 = vld [vmem:[%s138 + $0x121] sm:$0xff]
      %v2027 = vld [vmem:[%s138 + $0x131] sm:$0xff]
      %v2028 = vld [vmem:[%s138 + $0x141] sm:$0xff]
      %v2029 = vld [vmem:[%s138 + $0x151] sm:$0xff]
      %v2030 = vld [vmem:[%s138 + $0x161] sm:$0xff]
      %v2031 = vld [vmem:[%s138 + $0x171] sm:$0xff]
      %v2032 = vld [vmem:[%s138 + $0x181] sm:$0xff]
      %v2033 = vld [vmem:[%s138 + $0x191] sm:$0xff]
      %v2034 = vld [vmem:[%s138 + $0x1a1] sm:$0xff]
      %v2035 = vld [vmem:[%s138 + $0x1b1] sm:$0xff]
      %v2036 = vld [vmem:[%s138 + $0x1c1] sm:$0xff]
      %v2037 = vld [vmem:[%s138 + $0x1d1] sm:$0xff]
      %v2038 = vld [vmem:[%s138 + $0x1e1] sm:$0xff]
      %v2039 = vld [vmem:[%s138 + $0x1f1] sm:$0xff]
      %v2040 = vld [vmem:[%s138 + $0x201] sm:$0xff]
      %v2041 = vld [vmem:[%s138 + $0x211] sm:$0xff]
      %v2042 = vld [vmem:[%s138 + $0x221] sm:$0xff]
      %v2043 = vld [vmem:[%s138 + $0x231] sm:$0xff]
      %v2044 = vld [vmem:[%s138 + $0x241] sm:$0xff]
      %v2045 = vld [vmem:[%s138 + $0x251] sm:$0xff]
      %v2046 = vld [vmem:[%s138 + $0x261] sm:$0xff]
      %v2047 = vld [vmem:[%s138 + $0x271] sm:$0xff]
      %v2048 = vld [vmem:[%s138 + $0x281] sm:$0xff]
      %v2049 = vld [vmem:[%s138 + $0x291] sm:$0xff]
      %v2050 = vld [vmem:[%s138 + $0x2a1] sm:$0xff]
      %v2051 = vld [vmem:[%s138 + $0x2b1] sm:$0xff]
      %v2052 = vld [vmem:[%s138 + $0x2c1] sm:$0xff]
      %v2053 = vld [vmem:[%s138 + $0x2d1] sm:$0xff]
      %v2054 = vld [vmem:[%s138 + $0x2e1] sm:$0xff]
      %v2055 = vld [vmem:[%s138 + $0x2f1] sm:$0xff]
      %v2056 = vld [vmem:[%s138 + $0x301] sm:$0xff]
      %v2057 = vld [vmem:[%s138 + $0x311] sm:$0xff]
      %v2058 = vld [vmem:[%s138 + $0x321] sm:$0xff]
      %v2059 = vld [vmem:[%s138 + $0x331] sm:$0xff]
      %v2060 = vld [vmem:[%s138 + $0x341] sm:$0xff]
      %v2061 = vld [vmem:[%s138 + $0x351] sm:$0xff]
      %v2062 = vld [vmem:[%s138 + $0x361] sm:$0xff]
      %v2063 = vld [vmem:[%s138 + $0x371] sm:$0xff]
      %v2064 = vld [vmem:[%s138 + $0x381] sm:$0xff]
      %v2065 = vld [vmem:[%s138 + $0x391] sm:$0xff]
      %v2066 = vld [vmem:[%s138 + $0x3a1] sm:$0xff]
      %v2067 = vld [vmem:[%s138 + $0x3b1] sm:$0xff]
      %v2068 = vld [vmem:[%s138 + $0x3c1] sm:$0xff]
      %v2069 = vld [vmem:[%s138 + $0x3d1] sm:$0xff]
      %v2070 = vld [vmem:[%s138 + $0x3e1] sm:$0xff]
      %v2071 = vld [vmem:[%s138 + $0x3f1] sm:$0xff]
      %2072 = vset.pattern.permute.xlu0 3
      %2073 = vperm.xlu0 %2072, %v280
      %v2074 = vpop.permute.xlu0 %2073
      %2076 = vset.pattern.permute.xlu0 3
      %2077 = vperm.xlu0 %2076, %v281
      %v2078 = vpop.permute.xlu0 %2077
      %2080 = vset.pattern.permute.xlu0 3
      %2081 = vperm.xlu0 %2080, %v282
      %v2082 = vpop.permute.xlu0 %2081
      %2084 = vset.pattern.permute.xlu0 3
      %2085 = vperm.xlu0 %2084, %v283
      %v2086 = vpop.permute.xlu0 %2085
      %2088 = vset.pattern.permute.xlu0 3
      %2089 = vperm.xlu0 %2088, %v284
      %v2090 = vpop.permute.xlu0 %2089
      %2092 = vset.pattern.permute.xlu0 3
      %2093 = vperm.xlu0 %2092, %v285
      %v2094 = vpop.permute.xlu0 %2093
      %2096 = vset.pattern.permute.xlu0 3
      %2097 = vperm.xlu0 %2096, %v286
      %v2098 = vpop.permute.xlu0 %2097
      %2100 = vset.pattern.permute.xlu0 3
      %2101 = vperm.xlu0 %2100, %v287
      %v2102 = vpop.permute.xlu0 %2101
      %2104 = vset.pattern.permute.xlu0 3
      %2105 = vperm.xlu0 %2104, %v288
      %v2106 = vpop.permute.xlu0 %2105
      %2108 = vset.pattern.permute.xlu0 3
      %2109 = vperm.xlu0 %2108, %v289
      %v2110 = vpop.permute.xlu0 %2109
      %2112 = vset.pattern.permute.xlu0 3
      %2113 = vperm.xlu0 %2112, %v290
      %v2114 = vpop.permute.xlu0 %2113
      %2116 = vset.pattern.permute.xlu0 3
      %2117 = vperm.xlu0 %2116, %v291
      %v2118 = vpop.permute.xlu0 %2117
      %2120 = vset.pattern.permute.xlu0 3
      %2121 = vperm.xlu0 %2120, %v292
      %v2122 = vpop.permute.xlu0 %2121
      %2124 = vset.pattern.permute.xlu0 3
      %2125 = vperm.xlu0 %2124, %v293
      %v2126 = vpop.permute.xlu0 %2125
      %2128 = vset.pattern.permute.xlu0 3
      %2129 = vperm.xlu0 %2128, %v294
      %v2130 = vpop.permute.xlu0 %2129
      %2132 = vset.pattern.permute.xlu0 3
      %2133 = vperm.xlu0 %2132, %v295
      %v2134 = vpop.permute.xlu0 %2133
      %2136 = vset.pattern.permute.xlu0 3
      %2137 = vperm.xlu0 %2136, %v296
      %v2138 = vpop.permute.xlu0 %2137
      %2140 = vset.pattern.permute.xlu0 3
      %2141 = vperm.xlu0 %2140, %v297
      %v2142 = vpop.permute.xlu0 %2141
      %2144 = vset.pattern.permute.xlu0 3
      %2145 = vperm.xlu0 %2144, %v298
      %v2146 = vpop.permute.xlu0 %2145
      %2148 = vset.pattern.permute.xlu0 3
      %2149 = vperm.xlu0 %2148, %v299
      %v2150 = vpop.permute.xlu0 %2149
      %2152 = vset.pattern.permute.xlu0 3
      %2153 = vperm.xlu0 %2152, %v300
      %v2154 = vpop.permute.xlu0 %2153
      %2156 = vset.pattern.permute.xlu0 3
      %2157 = vperm.xlu0 %2156, %v301
      %v2158 = vpop.permute.xlu0 %2157
      %2160 = vset.pattern.permute.xlu0 3
      %2161 = vperm.xlu0 %2160, %v302
      %v2162 = vpop.permute.xlu0 %2161
      %2164 = vset.pattern.permute.xlu0 3
      %2165 = vperm.xlu0 %2164, %v303
      %v2166 = vpop.permute.xlu0 %2165
      %2168 = vset.pattern.permute.xlu0 3
      %2169 = vperm.xlu0 %2168, %v304
      %v2170 = vpop.permute.xlu0 %2169
      %2172 = vset.pattern.permute.xlu0 3
      %2173 = vperm.xlu0 %2172, %v305
      %v2174 = vpop.permute.xlu0 %2173
      %2176 = vset.pattern.permute.xlu0 3
      %2177 = vperm.xlu0 %2176, %v306
      %v2178 = vpop.permute.xlu0 %2177
      %2180 = vset.pattern.permute.xlu0 3
      %2181 = vperm.xlu0 %2180, %v307
      %v2182 = vpop.permute.xlu0 %2181
      %2184 = vset.pattern.permute.xlu0 3
      %2185 = vperm.xlu0 %2184, %v308
      %v2186 = vpop.permute.xlu0 %2185
      %2188 = vset.pattern.permute.xlu0 3
      %2189 = vperm.xlu0 %2188, %v309
      %v2190 = vpop.permute.xlu0 %2189
      %2192 = vset.pattern.permute.xlu0 3
      %2193 = vperm.xlu0 %2192, %v310
      %v2194 = vpop.permute.xlu0 %2193
      %2196 = vset.pattern.permute.xlu0 3
      %2197 = vperm.xlu0 %2196, %v311
      %v2198 = vpop.permute.xlu0 %2197
      %2200 = vset.pattern.permute.xlu0 3
      %2201 = vperm.xlu0 %2200, %v312
      %v2202 = vpop.permute.xlu0 %2201
      %2204 = vset.pattern.permute.xlu0 3
      %2205 = vperm.xlu0 %2204, %v313
      %v2206 = vpop.permute.xlu0 %2205
      %2208 = vset.pattern.permute.xlu0 3
      %2209 = vperm.xlu0 %2208, %v314
      %v2210 = vpop.permute.xlu0 %2209
      %2212 = vset.pattern.permute.xlu0 3
      %2213 = vperm.xlu0 %2212, %v315
      %v2214 = vpop.permute.xlu0 %2213
      %2216 = vset.pattern.permute.xlu0 3
      %2217 = vperm.xlu0 %2216, %v316
      %v2218 = vpop.permute.xlu0 %2217
      %2220 = vset.pattern.permute.xlu0 3
      %2221 = vperm.xlu0 %2220, %v317
      %v2222 = vpop.permute.xlu0 %2221
      %2224 = vset.pattern.permute.xlu0 3
      %2225 = vperm.xlu0 %2224, %v318
      %v2226 = vpop.permute.xlu0 %2225
      %2228 = vset.pattern.permute.xlu0 3
      %2229 = vperm.xlu0 %2228, %v319
      %v2230 = vpop.permute.xlu0 %2229
      %2232 = vset.pattern.permute.xlu0 3
      %2233 = vperm.xlu0 %2232, %v320
      %v2234 = vpop.permute.xlu0 %2233
      %2236 = vset.pattern.permute.xlu0 3
      %2237 = vperm.xlu0 %2236, %v321
      %v2238 = vpop.permute.xlu0 %2237
      %2240 = vset.pattern.permute.xlu0 3
      %2241 = vperm.xlu0 %2240, %v322
      %v2242 = vpop.permute.xlu0 %2241
      %2244 = vset.pattern.permute.xlu0 3
      %2245 = vperm.xlu0 %2244, %v323
      %v2246 = vpop.permute.xlu0 %2245
      %2248 = vset.pattern.permute.xlu0 3
      %2249 = vperm.xlu0 %2248, %v324
      %v2250 = vpop.permute.xlu0 %2249
      %2252 = vset.pattern.permute.xlu0 3
      %2253 = vperm.xlu0 %2252, %v325
      %v2254 = vpop.permute.xlu0 %2253
      %2256 = vset.pattern.permute.xlu0 3
      %2257 = vperm.xlu0 %2256, %v326
      %v2258 = vpop.permute.xlu0 %2257
      %2260 = vset.pattern.permute.xlu0 3
      %2261 = vperm.xlu0 %2260, %v327
      %v2262 = vpop.permute.xlu0 %2261
      %2264 = vset.pattern.permute.xlu0 3
      %2265 = vperm.xlu0 %2264, %v328
      %v2266 = vpop.permute.xlu0 %2265
      %2268 = vset.pattern.permute.xlu0 3
      %2269 = vperm.xlu0 %2268, %v329
      %v2270 = vpop.permute.xlu0 %2269
      %2272 = vset.pattern.permute.xlu0 3
      %2273 = vperm.xlu0 %2272, %v330
      %v2274 = vpop.permute.xlu0 %2273
      %2276 = vset.pattern.permute.xlu0 3
      %2277 = vperm.xlu0 %2276, %v331
      %v2278 = vpop.permute.xlu0 %2277
      %2280 = vset.pattern.permute.xlu0 3
      %2281 = vperm.xlu0 %2280, %v332
      %v2282 = vpop.permute.xlu0 %2281
      %2284 = vset.pattern.permute.xlu0 3
      %2285 = vperm.xlu0 %2284, %v333
      %v2286 = vpop.permute.xlu0 %2285
      %2288 = vset.pattern.permute.xlu0 3
      %2289 = vperm.xlu0 %2288, %v334
      %v2290 = vpop.permute.xlu0 %2289
      %2292 = vset.pattern.permute.xlu0 3
      %2293 = vperm.xlu0 %2292, %v335
      %v2294 = vpop.permute.xlu0 %2293
      %2296 = vset.pattern.permute.xlu0 3
      %2297 = vperm.xlu0 %2296, %v336
      %v2298 = vpop.permute.xlu0 %2297
      %2300 = vset.pattern.permute.xlu0 3
      %2301 = vperm.xlu0 %2300, %v337
      %v2302 = vpop.permute.xlu0 %2301
      %2304 = vset.pattern.permute.xlu0 3
      %2305 = vperm.xlu0 %2304, %v338
      %v2306 = vpop.permute.xlu0 %2305
      %2308 = vset.pattern.permute.xlu0 3
      %2309 = vperm.xlu0 %2308, %v339
      %v2310 = vpop.permute.xlu0 %2309
      %2312 = vset.pattern.permute.xlu0 3
      %2313 = vperm.xlu0 %2312, %v340
      %v2314 = vpop.permute.xlu0 %2313
      %2316 = vset.pattern.permute.xlu0 3
      %2317 = vperm.xlu0 %2316, %v341
      %v2318 = vpop.permute.xlu0 %2317
      %2320 = vset.pattern.permute.xlu0 3
      %2321 = vperm.xlu0 %2320, %v342
      %v2322 = vpop.permute.xlu0 %2321
      %2324 = vset.pattern.permute.xlu0 3
      %2325 = vperm.xlu0 %2324, %v343
      %v2326 = vpop.permute.xlu0 %2325
      %v2328 = vmul.f32 %v2074, %v2008
      %v2329 = vmul.f32 %v2078, %v2009
      %v2330 = vmul.f32 %v2082, %v2010
      %v2331 = vmul.f32 %v2086, %v2011
      %v2332 = vmul.f32 %v2090, %v2012
      %v2333 = vmul.f32 %v2094, %v2013
      %v2334 = vmul.f32 %v2098, %v2014
      %v2335 = vmul.f32 %v2102, %v2015
      %v2336 = vmul.f32 %v2106, %v2016
      %v2337 = vmul.f32 %v2110, %v2017
      %v2338 = vmul.f32 %v2114, %v2018
      %v2339 = vmul.f32 %v2118, %v2019
      %v2340 = vmul.f32 %v2122, %v2020
      %v2341 = vmul.f32 %v2126, %v2021
      %v2342 = vmul.f32 %v2130, %v2022
      %v2343 = vmul.f32 %v2134, %v2023
      %v2344 = vmul.f32 %v2138, %v2024
      %v2345 = vmul.f32 %v2142, %v2025
      %v2346 = vmul.f32 %v2146, %v2026
      %v2347 = vmul.f32 %v2150, %v2027
      %v2348 = vmul.f32 %v2154, %v2028
      %v2349 = vmul.f32 %v2158, %v2029
      %v2350 = vmul.f32 %v2162, %v2030
      %v2351 = vmul.f32 %v2166, %v2031
      %v2352 = vmul.f32 %v2170, %v2032
      %v2353 = vmul.f32 %v2174, %v2033
      %v2354 = vmul.f32 %v2178, %v2034
      %v2355 = vmul.f32 %v2182, %v2035
      %v2356 = vmul.f32 %v2186, %v2036
      %v2357 = vmul.f32 %v2190, %v2037
      %v2358 = vmul.f32 %v2194, %v2038
      %v2359 = vmul.f32 %v2198, %v2039
      %v2360 = vmul.f32 %v2202, %v2040
      %v2361 = vmul.f32 %v2206, %v2041
      %v2362 = vmul.f32 %v2210, %v2042
      %v2363 = vmul.f32 %v2214, %v2043
      %v2364 = vmul.f32 %v2218, %v2044
      %v2365 = vmul.f32 %v2222, %v2045
      %v2366 = vmul.f32 %v2226, %v2046
      %v2367 = vmul.f32 %v2230, %v2047
      %v2368 = vmul.f32 %v2234, %v2048
      %v2369 = vmul.f32 %v2238, %v2049
      %v2370 = vmul.f32 %v2242, %v2050
      %v2371 = vmul.f32 %v2246, %v2051
      %v2372 = vmul.f32 %v2250, %v2052
      %v2373 = vmul.f32 %v2254, %v2053
      %v2374 = vmul.f32 %v2258, %v2054
      %v2375 = vmul.f32 %v2262, %v2055
      %v2376 = vmul.f32 %v2266, %v2056
      %v2377 = vmul.f32 %v2270, %v2057
      %v2378 = vmul.f32 %v2274, %v2058
      %v2379 = vmul.f32 %v2278, %v2059
      %v2380 = vmul.f32 %v2282, %v2060
      %v2381 = vmul.f32 %v2286, %v2061
      %v2382 = vmul.f32 %v2290, %v2062
      %v2383 = vmul.f32 %v2294, %v2063
      %v2384 = vmul.f32 %v2298, %v2064
      %v2385 = vmul.f32 %v2302, %v2065
      %v2386 = vmul.f32 %v2306, %v2066
      %v2387 = vmul.f32 %v2310, %v2067
      %v2388 = vmul.f32 %v2314, %v2068
      %v2389 = vmul.f32 %v2318, %v2069
      %v2390 = vmul.f32 %v2322, %v2070
      %v2391 = vmul.f32 %v2326, %v2071
      %v2392 = vadd.f32 %v1944, %v2328
      %v2393 = vadd.f32 %v1945, %v2329
      %v2394 = vadd.f32 %v1946, %v2330
      %v2395 = vadd.f32 %v1947, %v2331
      %v2396 = vadd.f32 %v1948, %v2332
      %v2397 = vadd.f32 %v1949, %v2333
      %v2398 = vadd.f32 %v1950, %v2334
      %v2399 = vadd.f32 %v1951, %v2335
      %v2400 = vadd.f32 %v1952, %v2336
      %v2401 = vadd.f32 %v1953, %v2337
      %v2402 = vadd.f32 %v1954, %v2338
      %v2403 = vadd.f32 %v1955, %v2339
      %v2404 = vadd.f32 %v1956, %v2340
      %v2405 = vadd.f32 %v1957, %v2341
      %v2406 = vadd.f32 %v1958, %v2342
      %v2407 = vadd.f32 %v1959, %v2343
      %v2408 = vadd.f32 %v1960, %v2344
      %v2409 = vadd.f32 %v1961, %v2345
      %v2410 = vadd.f32 %v1962, %v2346
      %v2411 = vadd.f32 %v1963, %v2347
      %v2412 = vadd.f32 %v1964, %v2348
      %v2413 = vadd.f32 %v1965, %v2349
      %v2414 = vadd.f32 %v1966, %v2350
      %v2415 = vadd.f32 %v1967, %v2351
      %v2416 = vadd.f32 %v1968, %v2352
      %v2417 = vadd.f32 %v1969, %v2353
      %v2418 = vadd.f32 %v1970, %v2354
      %v2419 = vadd.f32 %v1971, %v2355
      %v2420 = vadd.f32 %v1972, %v2356
      %v2421 = vadd.f32 %v1973, %v2357
      %v2422 = vadd.f32 %v1974, %v2358
      %v2423 = vadd.f32 %v1975, %v2359
      %v2424 = vadd.f32 %v1976, %v2360
      %v2425 = vadd.f32 %v1977, %v2361
      %v2426 = vadd.f32 %v1978, %v2362
      %v2427 = vadd.f32 %v1979, %v2363
      %v2428 = vadd.f32 %v1980, %v2364
      %v2429 = vadd.f32 %v1981, %v2365
      %v2430 = vadd.f32 %v1982, %v2366
      %v2431 = vadd.f32 %v1983, %v2367
      %v2432 = vadd.f32 %v1984, %v2368
      %v2433 = vadd.f32 %v1985, %v2369
      %v2434 = vadd.f32 %v1986, %v2370
      %v2435 = vadd.f32 %v1987, %v2371
      %v2436 = vadd.f32 %v1988, %v2372
      %v2437 = vadd.f32 %v1989, %v2373
      %v2438 = vadd.f32 %v1990, %v2374
      %v2439 = vadd.f32 %v1991, %v2375
      %v2440 = vadd.f32 %v1992, %v2376
      %v2441 = vadd.f32 %v1993, %v2377
      %v2442 = vadd.f32 %v1994, %v2378
      %v2443 = vadd.f32 %v1995, %v2379
      %v2444 = vadd.f32 %v1996, %v2380
      %v2445 = vadd.f32 %v1997, %v2381
      %v2446 = vadd.f32 %v1998, %v2382
      %v2447 = vadd.f32 %v1999, %v2383
      %v2448 = vadd.f32 %v2000, %v2384
      %v2449 = vadd.f32 %v2001, %v2385
      %v2450 = vadd.f32 %v2002, %v2386
      %v2451 = vadd.f32 %v2003, %v2387
      %v2452 = vadd.f32 %v2004, %v2388
      %v2453 = vadd.f32 %v2005, %v2389
      %v2454 = vadd.f32 %v2006, %v2390
      %v2455 = vadd.f32 %v2007, %v2391
      %2456 = vset.pattern.permute.xlu0 4
      %2457 = vperm.xlu0 %2456, %v280
      %v2458 = vpop.permute.xlu0 %2457
      %2460 = vset.pattern.permute.xlu0 4
      %2461 = vperm.xlu0 %2460, %v281
      %v2462 = vpop.permute.xlu0 %2461
      %2464 = vset.pattern.permute.xlu0 4
      %2465 = vperm.xlu0 %2464, %v282
      %v2466 = vpop.permute.xlu0 %2465
      %2468 = vset.pattern.permute.xlu0 4
      %2469 = vperm.xlu0 %2468, %v283
      %v2470 = vpop.permute.xlu0 %2469
      %2472 = vset.pattern.permute.xlu0 4
      %2473 = vperm.xlu0 %2472, %v284
      %v2474 = vpop.permute.xlu0 %2473
      %2476 = vset.pattern.permute.xlu0 4
      %2477 = vperm.xlu0 %2476, %v285
      %v2478 = vpop.permute.xlu0 %2477
      %2480 = vset.pattern.permute.xlu0 4
      %2481 = vperm.xlu0 %2480, %v286
      %v2482 = vpop.permute.xlu0 %2481
      %2484 = vset.pattern.permute.xlu0 4
      %2485 = vperm.xlu0 %2484, %v287
      %v2486 = vpop.permute.xlu0 %2485
      %2488 = vset.pattern.permute.xlu0 4
      %2489 = vperm.xlu0 %2488, %v288
      %v2490 = vpop.permute.xlu0 %2489
      %2492 = vset.pattern.permute.xlu0 4
      %2493 = vperm.xlu0 %2492, %v289
      %v2494 = vpop.permute.xlu0 %2493
      %2496 = vset.pattern.permute.xlu0 4
      %2497 = vperm.xlu0 %2496, %v290
      %v2498 = vpop.permute.xlu0 %2497
      %2500 = vset.pattern.permute.xlu0 4
      %2501 = vperm.xlu0 %2500, %v291
      %v2502 = vpop.permute.xlu0 %2501
      %2504 = vset.pattern.permute.xlu0 4
      %2505 = vperm.xlu0 %2504, %v292
      %v2506 = vpop.permute.xlu0 %2505
      %2508 = vset.pattern.permute.xlu0 4
      %2509 = vperm.xlu0 %2508, %v293
      %v2510 = vpop.permute.xlu0 %2509
      %2512 = vset.pattern.permute.xlu0 4
      %2513 = vperm.xlu0 %2512, %v294
      %v2514 = vpop.permute.xlu0 %2513
      %2516 = vset.pattern.permute.xlu0 4
      %2517 = vperm.xlu0 %2516, %v295
      %v2518 = vpop.permute.xlu0 %2517
      %2520 = vset.pattern.permute.xlu0 4
      %2521 = vperm.xlu0 %2520, %v296
      %v2522 = vpop.permute.xlu0 %2521
      %2524 = vset.pattern.permute.xlu0 4
      %2525 = vperm.xlu0 %2524, %v297
      %v2526 = vpop.permute.xlu0 %2525
      %2528 = vset.pattern.permute.xlu0 4
      %2529 = vperm.xlu0 %2528, %v298
      %v2530 = vpop.permute.xlu0 %2529
      %2532 = vset.pattern.permute.xlu0 4
      %2533 = vperm.xlu0 %2532, %v299
      %v2534 = vpop.permute.xlu0 %2533
      %2536 = vset.pattern.permute.xlu0 4
      %2537 = vperm.xlu0 %2536, %v300
      %v2538 = vpop.permute.xlu0 %2537
      %2540 = vset.pattern.permute.xlu0 4
      %2541 = vperm.xlu0 %2540, %v301
      %v2542 = vpop.permute.xlu0 %2541
      %2544 = vset.pattern.permute.xlu0 4
      %2545 = vperm.xlu0 %2544, %v302
      %v2546 = vpop.permute.xlu0 %2545
      %2548 = vset.pattern.permute.xlu0 4
      %2549 = vperm.xlu0 %2548, %v303
      %v2550 = vpop.permute.xlu0 %2549
      %2552 = vset.pattern.permute.xlu0 4
      %2553 = vperm.xlu0 %2552, %v304
      %v2554 = vpop.permute.xlu0 %2553
      %2556 = vset.pattern.permute.xlu0 4
      %2557 = vperm.xlu0 %2556, %v305
      %v2558 = vpop.permute.xlu0 %2557
      %2560 = vset.pattern.permute.xlu0 4
      %2561 = vperm.xlu0 %2560, %v306
      %v2562 = vpop.permute.xlu0 %2561
      %2564 = vset.pattern.permute.xlu0 4
      %2565 = vperm.xlu0 %2564, %v307
      %v2566 = vpop.permute.xlu0 %2565
      %2568 = vset.pattern.permute.xlu0 4
      %2569 = vperm.xlu0 %2568, %v308
      %v2570 = vpop.permute.xlu0 %2569
      %2572 = vset.pattern.permute.xlu0 4
      %2573 = vperm.xlu0 %2572, %v309
      %v2574 = vpop.permute.xlu0 %2573
      %2576 = vset.pattern.permute.xlu0 4
      %2577 = vperm.xlu0 %2576, %v310
      %v2578 = vpop.permute.xlu0 %2577
      %2580 = vset.pattern.permute.xlu0 4
      %2581 = vperm.xlu0 %2580, %v311
      %v2582 = vpop.permute.xlu0 %2581
      %2584 = vset.pattern.permute.xlu0 4
      %2585 = vperm.xlu0 %2584, %v312
      %v2586 = vpop.permute.xlu0 %2585
      %2588 = vset.pattern.permute.xlu0 4
      %2589 = vperm.xlu0 %2588, %v313
      %v2590 = vpop.permute.xlu0 %2589
      %2592 = vset.pattern.permute.xlu0 4
      %2593 = vperm.xlu0 %2592, %v314
      %v2594 = vpop.permute.xlu0 %2593
      %2596 = vset.pattern.permute.xlu0 4
      %2597 = vperm.xlu0 %2596, %v315
      %v2598 = vpop.permute.xlu0 %2597
      %2600 = vset.pattern.permute.xlu0 4
      %2601 = vperm.xlu0 %2600, %v316
      %v2602 = vpop.permute.xlu0 %2601
      %2604 = vset.pattern.permute.xlu0 4
      %2605 = vperm.xlu0 %2604, %v317
      %v2606 = vpop.permute.xlu0 %2605
      %2608 = vset.pattern.permute.xlu0 4
      %2609 = vperm.xlu0 %2608, %v318
      %v2610 = vpop.permute.xlu0 %2609
      %2612 = vset.pattern.permute.xlu0 4
      %2613 = vperm.xlu0 %2612, %v319
      %v2614 = vpop.permute.xlu0 %2613
      %2616 = vset.pattern.permute.xlu0 4
      %2617 = vperm.xlu0 %2616, %v320
      %v2618 = vpop.permute.xlu0 %2617
      %2620 = vset.pattern.permute.xlu0 4
      %2621 = vperm.xlu0 %2620, %v321
      %v2622 = vpop.permute.xlu0 %2621
      %2624 = vset.pattern.permute.xlu0 4
      %2625 = vperm.xlu0 %2624, %v322
      %v2626 = vpop.permute.xlu0 %2625
      %2628 = vset.pattern.permute.xlu0 4
      %2629 = vperm.xlu0 %2628, %v323
      %v2630 = vpop.permute.xlu0 %2629
      %2632 = vset.pattern.permute.xlu0 4
      %2633 = vperm.xlu0 %2632, %v324
      %v2634 = vpop.permute.xlu0 %2633
      %2636 = vset.pattern.permute.xlu0 4
      %2637 = vperm.xlu0 %2636, %v325
      %v2638 = vpop.permute.xlu0 %2637
      %2640 = vset.pattern.permute.xlu0 4
      %2641 = vperm.xlu0 %2640, %v326
      %v2642 = vpop.permute.xlu0 %2641
      %2644 = vset.pattern.permute.xlu0 4
      %2645 = vperm.xlu0 %2644, %v327
      %v2646 = vpop.permute.xlu0 %2645
      %2648 = vset.pattern.permute.xlu0 4
      %2649 = vperm.xlu0 %2648, %v328
      %v2650 = vpop.permute.xlu0 %2649
      %2652 = vset.pattern.permute.xlu0 4
      %2653 = vperm.xlu0 %2652, %v329
      %v2654 = vpop.permute.xlu0 %2653
      %2656 = vset.pattern.permute.xlu0 4
      %2657 = vperm.xlu0 %2656, %v330
      %v2658 = vpop.permute.xlu0 %2657
      %2660 = vset.pattern.permute.xlu0 4
      %2661 = vperm.xlu0 %2660, %v331
      %v2662 = vpop.permute.xlu0 %2661
      %2664 = vset.pattern.permute.xlu0 4
      %2665 = vperm.xlu0 %2664, %v332
      %v2666 = vpop.permute.xlu0 %2665
      %2668 = vset.pattern.permute.xlu0 4
      %2669 = vperm.xlu0 %2668, %v333
      %v2670 = vpop.permute.xlu0 %2669
      %2672 = vset.pattern.permute.xlu0 4
      %2673 = vperm.xlu0 %2672, %v334
      %v2674 = vpop.permute.xlu0 %2673
      %2676 = vset.pattern.permute.xlu0 4
      %2677 = vperm.xlu0 %2676, %v335
      %v2678 = vpop.permute.xlu0 %2677
      %2680 = vset.pattern.permute.xlu0 4
      %2681 = vperm.xlu0 %2680, %v336
      %v2682 = vpop.permute.xlu0 %2681
      %2684 = vset.pattern.permute.xlu0 4
      %2685 = vperm.xlu0 %2684, %v337
      %v2686 = vpop.permute.xlu0 %2685
      %2688 = vset.pattern.permute.xlu0 4
      %2689 = vperm.xlu0 %2688, %v338
      %v2690 = vpop.permute.xlu0 %2689
      %2692 = vset.pattern.permute.xlu0 4
      %2693 = vperm.xlu0 %2692, %v339
      %v2694 = vpop.permute.xlu0 %2693
      %2696 = vset.pattern.permute.xlu0 4
      %2697 = vperm.xlu0 %2696, %v340
      %v2698 = vpop.permute.xlu0 %2697
      %2700 = vset.pattern.permute.xlu0 4
      %2701 = vperm.xlu0 %2700, %v341
      %v2702 = vpop.permute.xlu0 %2701
      %2704 = vset.pattern.permute.xlu0 4
      %2705 = vperm.xlu0 %2704, %v342
      %v2706 = vpop.permute.xlu0 %2705
      %2708 = vset.pattern.permute.xlu0 4
      %2709 = vperm.xlu0 %2708, %v343
      %v2710 = vpop.permute.xlu0 %2709
      %v2712 = vmul.f32 %v2458, %v2008
      %v2713 = vmul.f32 %v2462, %v2009
      %v2714 = vmul.f32 %v2466, %v2010
      %v2715 = vmul.f32 %v2470, %v2011
      %v2716 = vmul.f32 %v2474, %v2012
      %v2717 = vmul.f32 %v2478, %v2013
      %v2718 = vmul.f32 %v2482, %v2014
      %v2719 = vmul.f32 %v2486, %v2015
      %v2720 = vmul.f32 %v2490, %v2016
      %v2721 = vmul.f32 %v2494, %v2017
      %v2722 = vmul.f32 %v2498, %v2018
      %v2723 = vmul.f32 %v2502, %v2019
      %v2724 = vmul.f32 %v2506, %v2020
      %v2725 = vmul.f32 %v2510, %v2021
      %v2726 = vmul.f32 %v2514, %v2022
      %v2727 = vmul.f32 %v2518, %v2023
      %v2728 = vmul.f32 %v2522, %v2024
      %v2729 = vmul.f32 %v2526, %v2025
      %v2730 = vmul.f32 %v2530, %v2026
      %v2731 = vmul.f32 %v2534, %v2027
      %v2732 = vmul.f32 %v2538, %v2028
      %v2733 = vmul.f32 %v2542, %v2029
      %v2734 = vmul.f32 %v2546, %v2030
      %v2735 = vmul.f32 %v2550, %v2031
      %v2736 = vmul.f32 %v2554, %v2032
      %v2737 = vmul.f32 %v2558, %v2033
      %v2738 = vmul.f32 %v2562, %v2034
      %v2739 = vmul.f32 %v2566, %v2035
      %v2740 = vmul.f32 %v2570, %v2036
      %v2741 = vmul.f32 %v2574, %v2037
      %v2742 = vmul.f32 %v2578, %v2038
      %v2743 = vmul.f32 %v2582, %v2039
      %v2744 = vmul.f32 %v2586, %v2040
      %v2745 = vmul.f32 %v2590, %v2041
      %v2746 = vmul.f32 %v2594, %v2042
      %v2747 = vmul.f32 %v2598, %v2043
      %v2748 = vmul.f32 %v2602, %v2044
      %v2749 = vmul.f32 %v2606, %v2045
      %v2750 = vmul.f32 %v2610, %v2046
      %v2751 = vmul.f32 %v2614, %v2047
      %v2752 = vmul.f32 %v2618, %v2048
      %v2753 = vmul.f32 %v2622, %v2049
      %v2754 = vmul.f32 %v2626, %v2050
      %v2755 = vmul.f32 %v2630, %v2051
      %v2756 = vmul.f32 %v2634, %v2052
      %v2757 = vmul.f32 %v2638, %v2053
      %v2758 = vmul.f32 %v2642, %v2054
      %v2759 = vmul.f32 %v2646, %v2055
      %v2760 = vmul.f32 %v2650, %v2056
      %v2761 = vmul.f32 %v2654, %v2057
      %v2762 = vmul.f32 %v2658, %v2058
      %v2763 = vmul.f32 %v2662, %v2059
      %v2764 = vmul.f32 %v2666, %v2060
      %v2765 = vmul.f32 %v2670, %v2061
      %v2766 = vmul.f32 %v2674, %v2062
      %v2767 = vmul.f32 %v2678, %v2063
      %v2768 = vmul.f32 %v2682, %v2064
      %v2769 = vmul.f32 %v2686, %v2065
      %v2770 = vmul.f32 %v2690, %v2066
      %v2771 = vmul.f32 %v2694, %v2067
      %v2772 = vmul.f32 %v2698, %v2068
      %v2773 = vmul.f32 %v2702, %v2069
      %v2774 = vmul.f32 %v2706, %v2070
      %v2775 = vmul.f32 %v2710, %v2071
      %2840 = vrot.lane.b32.xlu0 %v2712, 127
      %v2841 = vpop.permute.xlu0 %2840
      %2842 = vrot.lane.b32.xlu0 %v2713, 127
      %v2843 = vpop.permute.xlu0 %2842
      %2844 = vrot.lane.b32.xlu0 %v2714, 127
      %v2845 = vpop.permute.xlu0 %2844
      %2846 = vrot.lane.b32.xlu0 %v2715, 127
      %v2847 = vpop.permute.xlu0 %2846
      %2848 = vrot.lane.b32.xlu0 %v2716, 127
      %v2849 = vpop.permute.xlu0 %2848
      %2850 = vrot.lane.b32.xlu0 %v2717, 127
      %v2851 = vpop.permute.xlu0 %2850
      %2852 = vrot.lane.b32.xlu0 %v2718, 127
      %v2853 = vpop.permute.xlu0 %2852
      %2854 = vrot.lane.b32.xlu0 %v2719, 127
      %v2855 = vpop.permute.xlu0 %2854
      %2856 = vrot.lane.b32.xlu0 %v2720, 127
      %v2857 = vpop.permute.xlu0 %2856
      %2858 = vrot.lane.b32.xlu0 %v2721, 127
      %v2859 = vpop.permute.xlu0 %2858
      %2860 = vrot.lane.b32.xlu0 %v2722, 127
      %v2861 = vpop.permute.xlu0 %2860
      %2862 = vrot.lane.b32.xlu0 %v2723, 127
      %v2863 = vpop.permute.xlu0 %2862
      %2864 = vrot.lane.b32.xlu0 %v2724, 127
      %v2865 = vpop.permute.xlu0 %2864
      %2866 = vrot.lane.b32.xlu0 %v2725, 127
      %v2867 = vpop.permute.xlu0 %2866
      %2868 = vrot.lane.b32.xlu0 %v2726, 127
      %v2869 = vpop.permute.xlu0 %2868
      %2870 = vrot.lane.b32.xlu0 %v2727, 127
      %v2871 = vpop.permute.xlu0 %2870
      %2872 = vrot.lane.b32.xlu0 %v2728, 127
      %v2873 = vpop.permute.xlu0 %2872
      %2874 = vrot.lane.b32.xlu0 %v2729, 127
      %v2875 = vpop.permute.xlu0 %2874
      %2876 = vrot.lane.b32.xlu0 %v2730, 127
      %v2877 = vpop.permute.xlu0 %2876
      %2878 = vrot.lane.b32.xlu0 %v2731, 127
      %v2879 = vpop.permute.xlu0 %2878
      %2880 = vrot.lane.b32.xlu0 %v2732, 127
      %v2881 = vpop.permute.xlu0 %2880
      %2882 = vrot.lane.b32.xlu0 %v2733, 127
      %v2883 = vpop.permute.xlu0 %2882
      %2884 = vrot.lane.b32.xlu0 %v2734, 127
      %v2885 = vpop.permute.xlu0 %2884
      %2886 = vrot.lane.b32.xlu0 %v2735, 127
      %v2887 = vpop.permute.xlu0 %2886
      %2888 = vrot.lane.b32.xlu0 %v2736, 127
      %v2889 = vpop.permute.xlu0 %2888
      %2890 = vrot.lane.b32.xlu0 %v2737, 127
      %v2891 = vpop.permute.xlu0 %2890
      %2892 = vrot.lane.b32.xlu0 %v2738, 127
      %v2893 = vpop.permute.xlu0 %2892
      %2894 = vrot.lane.b32.xlu0 %v2739, 127
      %v2895 = vpop.permute.xlu0 %2894
      %2896 = vrot.lane.b32.xlu0 %v2740, 127
      %v2897 = vpop.permute.xlu0 %2896
      %2898 = vrot.lane.b32.xlu0 %v2741, 127
      %v2899 = vpop.permute.xlu0 %2898
      %2900 = vrot.lane.b32.xlu0 %v2742, 127
      %v2901 = vpop.permute.xlu0 %2900
      %2902 = vrot.lane.b32.xlu0 %v2743, 127
      %v2903 = vpop.permute.xlu0 %2902
      %2904 = vrot.lane.b32.xlu0 %v2744, 127
      %v2905 = vpop.permute.xlu0 %2904
      %2906 = vrot.lane.b32.xlu0 %v2745, 127
      %v2907 = vpop.permute.xlu0 %2906
      %2908 = vrot.lane.b32.xlu0 %v2746, 127
      %v2909 = vpop.permute.xlu0 %2908
      %2910 = vrot.lane.b32.xlu0 %v2747, 127
      %v2911 = vpop.permute.xlu0 %2910
      %2912 = vrot.lane.b32.xlu0 %v2748, 127
      %v2913 = vpop.permute.xlu0 %2912
      %2914 = vrot.lane.b32.xlu0 %v2749, 127
      %v2915 = vpop.permute.xlu0 %2914
      %2916 = vrot.lane.b32.xlu0 %v2750, 127
      %v2917 = vpop.permute.xlu0 %2916
      %2918 = vrot.lane.b32.xlu0 %v2751, 127
      %v2919 = vpop.permute.xlu0 %2918
      %2920 = vrot.lane.b32.xlu0 %v2752, 127
      %v2921 = vpop.permute.xlu0 %2920
      %2922 = vrot.lane.b32.xlu0 %v2753, 127
      %v2923 = vpop.permute.xlu0 %2922
      %2924 = vrot.lane.b32.xlu0 %v2754, 127
      %v2925 = vpop.permute.xlu0 %2924
      %2926 = vrot.lane.b32.xlu0 %v2755, 127
      %v2927 = vpop.permute.xlu0 %2926
      %2928 = vrot.lane.b32.xlu0 %v2756, 127
      %v2929 = vpop.permute.xlu0 %2928
      %2930 = vrot.lane.b32.xlu0 %v2757, 127
      %v2931 = vpop.permute.xlu0 %2930
      %2932 = vrot.lane.b32.xlu0 %v2758, 127
      %v2933 = vpop.permute.xlu0 %2932
      %2934 = vrot.lane.b32.xlu0 %v2759, 127
      %v2935 = vpop.permute.xlu0 %2934
      %2936 = vrot.lane.b32.xlu0 %v2760, 127
      %v2937 = vpop.permute.xlu0 %2936
      %2938 = vrot.lane.b32.xlu0 %v2761, 127
      %v2939 = vpop.permute.xlu0 %2938
      %2940 = vrot.lane.b32.xlu0 %v2762, 127
      %v2941 = vpop.permute.xlu0 %2940
      %2942 = vrot.lane.b32.xlu0 %v2763, 127
      %v2943 = vpop.permute.xlu0 %2942
      %2944 = vrot.lane.b32.xlu0 %v2764, 127
      %v2945 = vpop.permute.xlu0 %2944
      %2946 = vrot.lane.b32.xlu0 %v2765, 127
      %v2947 = vpop.permute.xlu0 %2946
      %2948 = vrot.lane.b32.xlu0 %v2766, 127
      %v2949 = vpop.permute.xlu0 %2948
      %2950 = vrot.lane.b32.xlu0 %v2767, 127
      %v2951 = vpop.permute.xlu0 %2950
      %2952 = vrot.lane.b32.xlu0 %v2768, 127
      %v2953 = vpop.permute.xlu0 %2952
      %2954 = vrot.lane.b32.xlu0 %v2769, 127
      %v2955 = vpop.permute.xlu0 %2954
      %2956 = vrot.lane.b32.xlu0 %v2770, 127
      %v2957 = vpop.permute.xlu0 %2956
      %2958 = vrot.lane.b32.xlu0 %v2771, 127
      %v2959 = vpop.permute.xlu0 %2958
      %2960 = vrot.lane.b32.xlu0 %v2772, 127
      %v2961 = vpop.permute.xlu0 %2960
      %2962 = vrot.lane.b32.xlu0 %v2773, 127
      %v2963 = vpop.permute.xlu0 %2962
      %2964 = vrot.lane.b32.xlu0 %v2774, 127
      %v2965 = vpop.permute.xlu0 %2964
      %2966 = vrot.lane.b32.xlu0 %v2775, 127
      %v2967 = vpop.permute.xlu0 %2966
      %v3032 = vadd.f32 %v2392, %v2841
      %v3033 = vadd.f32 %v2393, %v2843
      %v3034 = vadd.f32 %v2394, %v2845
      %v3035 = vadd.f32 %v2395, %v2847
      %v3036 = vadd.f32 %v2396, %v2849
      %v3037 = vadd.f32 %v2397, %v2851
      %v3038 = vadd.f32 %v2398, %v2853
      %v3039 = vadd.f32 %v2399, %v2855
      %v3040 = vadd.f32 %v2400, %v2857
      %v3041 = vadd.f32 %v2401, %v2859
      %v3042 = vadd.f32 %v2402, %v2861
      %v3043 = vadd.f32 %v2403, %v2863
      %v3044 = vadd.f32 %v2404, %v2865
      %v3045 = vadd.f32 %v2405, %v2867
      %v3046 = vadd.f32 %v2406, %v2869
      %v3047 = vadd.f32 %v2407, %v2871
      %v3048 = vadd.f32 %v2408, %v2873
      %v3049 = vadd.f32 %v2409, %v2875
      %v3050 = vadd.f32 %v2410, %v2877
      %v3051 = vadd.f32 %v2411, %v2879
      %v3052 = vadd.f32 %v2412, %v2881
      %v3053 = vadd.f32 %v2413, %v2883
      %v3054 = vadd.f32 %v2414, %v2885
      %v3055 = vadd.f32 %v2415, %v2887
      %v3056 = vadd.f32 %v2416, %v2889
      %v3057 = vadd.f32 %v2417, %v2891
      %v3058 = vadd.f32 %v2418, %v2893
      %v3059 = vadd.f32 %v2419, %v2895
      %v3060 = vadd.f32 %v2420, %v2897
      %v3061 = vadd.f32 %v2421, %v2899
      %v3062 = vadd.f32 %v2422, %v2901
      %v3063 = vadd.f32 %v2423, %v2903
      %v3064 = vadd.f32 %v2424, %v2905
      %v3065 = vadd.f32 %v2425, %v2907
      %v3066 = vadd.f32 %v2426, %v2909
      %v3067 = vadd.f32 %v2427, %v2911
      %v3068 = vadd.f32 %v2428, %v2913
      %v3069 = vadd.f32 %v2429, %v2915
      %v3070 = vadd.f32 %v2430, %v2917
      %v3071 = vadd.f32 %v2431, %v2919
      %v3072 = vadd.f32 %v2432, %v2921
      %v3073 = vadd.f32 %v2433, %v2923
      %v3074 = vadd.f32 %v2434, %v2925
      %v3075 = vadd.f32 %v2435, %v2927
      %v3076 = vadd.f32 %v2436, %v2929
      %v3077 = vadd.f32 %v2437, %v2931
      %v3078 = vadd.f32 %v2438, %v2933
      %v3079 = vadd.f32 %v2439, %v2935
      %v3080 = vadd.f32 %v2440, %v2937
      %v3081 = vadd.f32 %v2441, %v2939
      %v3082 = vadd.f32 %v2442, %v2941
      %v3083 = vadd.f32 %v2443, %v2943
      %v3084 = vadd.f32 %v2444, %v2945
      %v3085 = vadd.f32 %v2445, %v2947
      %v3086 = vadd.f32 %v2446, %v2949
      %v3087 = vadd.f32 %v2447, %v2951
      %v3088 = vadd.f32 %v2448, %v2953
      %v3089 = vadd.f32 %v2449, %v2955
      %v3090 = vadd.f32 %v2450, %v2957
      %v3091 = vadd.f32 %v2451, %v2959
      %v3092 = vadd.f32 %v2452, %v2961
      %v3093 = vadd.f32 %v2453, %v2963
      %v3094 = vadd.f32 %v2454, %v2965
      %v3095 = vadd.f32 %v2455, %v2967
      %3096 = vset.pattern.permute.xlu0 5
      %3097 = vperm.xlu0 %3096, %v280
      %v3098 = vpop.permute.xlu0 %3097
      %3100 = vset.pattern.permute.xlu0 5
      %3101 = vperm.xlu0 %3100, %v281
      %v3102 = vpop.permute.xlu0 %3101
      %3104 = vset.pattern.permute.xlu0 5
      %3105 = vperm.xlu0 %3104, %v282
      %v3106 = vpop.permute.xlu0 %3105
      %3108 = vset.pattern.permute.xlu0 5
      %3109 = vperm.xlu0 %3108, %v283
      %v3110 = vpop.permute.xlu0 %3109
      %3112 = vset.pattern.permute.xlu0 5
      %3113 = vperm.xlu0 %3112, %v284
      %v3114 = vpop.permute.xlu0 %3113
      %3116 = vset.pattern.permute.xlu0 5
      %3117 = vperm.xlu0 %3116, %v285
      %v3118 = vpop.permute.xlu0 %3117
      %3120 = vset.pattern.permute.xlu0 5
      %3121 = vperm.xlu0 %3120, %v286
      %v3122 = vpop.permute.xlu0 %3121
      %3124 = vset.pattern.permute.xlu0 5
      %3125 = vperm.xlu0 %3124, %v287
      %v3126 = vpop.permute.xlu0 %3125
      %3128 = vset.pattern.permute.xlu0 5
      %3129 = vperm.xlu0 %3128, %v288
      %v3130 = vpop.permute.xlu0 %3129
      %3132 = vset.pattern.permute.xlu0 5
      %3133 = vperm.xlu0 %3132, %v289
      %v3134 = vpop.permute.xlu0 %3133
      %3136 = vset.pattern.permute.xlu0 5
      %3137 = vperm.xlu0 %3136, %v290
      %v3138 = vpop.permute.xlu0 %3137
      %3140 = vset.pattern.permute.xlu0 5
      %3141 = vperm.xlu0 %3140, %v291
      %v3142 = vpop.permute.xlu0 %3141
      %3144 = vset.pattern.permute.xlu0 5
      %3145 = vperm.xlu0 %3144, %v292
      %v3146 = vpop.permute.xlu0 %3145
      %3148 = vset.pattern.permute.xlu0 5
      %3149 = vperm.xlu0 %3148, %v293
      %v3150 = vpop.permute.xlu0 %3149
      %3152 = vset.pattern.permute.xlu0 5
      %3153 = vperm.xlu0 %3152, %v294
      %v3154 = vpop.permute.xlu0 %3153
      %3156 = vset.pattern.permute.xlu0 5
      %3157 = vperm.xlu0 %3156, %v295
      %v3158 = vpop.permute.xlu0 %3157
      %3160 = vset.pattern.permute.xlu0 5
      %3161 = vperm.xlu0 %3160, %v296
      %v3162 = vpop.permute.xlu0 %3161
      %3164 = vset.pattern.permute.xlu0 5
      %3165 = vperm.xlu0 %3164, %v297
      %v3166 = vpop.permute.xlu0 %3165
      %3168 = vset.pattern.permute.xlu0 5
      %3169 = vperm.xlu0 %3168, %v298
      %v3170 = vpop.permute.xlu0 %3169
      %3172 = vset.pattern.permute.xlu0 5
      %3173 = vperm.xlu0 %3172, %v299
      %v3174 = vpop.permute.xlu0 %3173
      %3176 = vset.pattern.permute.xlu0 5
      %3177 = vperm.xlu0 %3176, %v300
      %v3178 = vpop.permute.xlu0 %3177
      %3180 = vset.pattern.permute.xlu0 5
      %3181 = vperm.xlu0 %3180, %v301
      %v3182 = vpop.permute.xlu0 %3181
      %3184 = vset.pattern.permute.xlu0 5
      %3185 = vperm.xlu0 %3184, %v302
      %v3186 = vpop.permute.xlu0 %3185
      %3188 = vset.pattern.permute.xlu0 5
      %3189 = vperm.xlu0 %3188, %v303
      %v3190 = vpop.permute.xlu0 %3189
      %3192 = vset.pattern.permute.xlu0 5
      %3193 = vperm.xlu0 %3192, %v304
      %v3194 = vpop.permute.xlu0 %3193
      %3196 = vset.pattern.permute.xlu0 5
      %3197 = vperm.xlu0 %3196, %v305
      %v3198 = vpop.permute.xlu0 %3197
      %3200 = vset.pattern.permute.xlu0 5
      %3201 = vperm.xlu0 %3200, %v306
      %v3202 = vpop.permute.xlu0 %3201
      %3204 = vset.pattern.permute.xlu0 5
      %3205 = vperm.xlu0 %3204, %v307
      %v3206 = vpop.permute.xlu0 %3205
      %3208 = vset.pattern.permute.xlu0 5
      %3209 = vperm.xlu0 %3208, %v308
      %v3210 = vpop.permute.xlu0 %3209
      %3212 = vset.pattern.permute.xlu0 5
      %3213 = vperm.xlu0 %3212, %v309
      %v3214 = vpop.permute.xlu0 %3213
      %3216 = vset.pattern.permute.xlu0 5
      %3217 = vperm.xlu0 %3216, %v310
      %v3218 = vpop.permute.xlu0 %3217
      %3220 = vset.pattern.permute.xlu0 5
      %3221 = vperm.xlu0 %3220, %v311
      %v3222 = vpop.permute.xlu0 %3221
      %3224 = vset.pattern.permute.xlu0 5
      %3225 = vperm.xlu0 %3224, %v312
      %v3226 = vpop.permute.xlu0 %3225
      %3228 = vset.pattern.permute.xlu0 5
      %3229 = vperm.xlu0 %3228, %v313
      %v3230 = vpop.permute.xlu0 %3229
      %3232 = vset.pattern.permute.xlu0 5
      %3233 = vperm.xlu0 %3232, %v314
      %v3234 = vpop.permute.xlu0 %3233
      %3236 = vset.pattern.permute.xlu0 5
      %3237 = vperm.xlu0 %3236, %v315
      %v3238 = vpop.permute.xlu0 %3237
      %3240 = vset.pattern.permute.xlu0 5
      %3241 = vperm.xlu0 %3240, %v316
      %v3242 = vpop.permute.xlu0 %3241
      %3244 = vset.pattern.permute.xlu0 5
      %3245 = vperm.xlu0 %3244, %v317
      %v3246 = vpop.permute.xlu0 %3245
      %3248 = vset.pattern.permute.xlu0 5
      %3249 = vperm.xlu0 %3248, %v318
      %v3250 = vpop.permute.xlu0 %3249
      %3252 = vset.pattern.permute.xlu0 5
      %3253 = vperm.xlu0 %3252, %v319
      %v3254 = vpop.permute.xlu0 %3253
      %3256 = vset.pattern.permute.xlu0 5
      %3257 = vperm.xlu0 %3256, %v320
      %v3258 = vpop.permute.xlu0 %3257
      %3260 = vset.pattern.permute.xlu0 5
      %3261 = vperm.xlu0 %3260, %v321
      %v3262 = vpop.permute.xlu0 %3261
      %3264 = vset.pattern.permute.xlu0 5
      %3265 = vperm.xlu0 %3264, %v322
      %v3266 = vpop.permute.xlu0 %3265
      %3268 = vset.pattern.permute.xlu0 5
      %3269 = vperm.xlu0 %3268, %v323
      %v3270 = vpop.permute.xlu0 %3269
      %3272 = vset.pattern.permute.xlu0 5
      %3273 = vperm.xlu0 %3272, %v324
      %v3274 = vpop.permute.xlu0 %3273
      %3276 = vset.pattern.permute.xlu0 5
      %3277 = vperm.xlu0 %3276, %v325
      %v3278 = vpop.permute.xlu0 %3277
      %3280 = vset.pattern.permute.xlu0 5
      %3281 = vperm.xlu0 %3280, %v326
      %v3282 = vpop.permute.xlu0 %3281
      %3284 = vset.pattern.permute.xlu0 5
      %3285 = vperm.xlu0 %3284, %v327
      %v3286 = vpop.permute.xlu0 %3285
      %3288 = vset.pattern.permute.xlu0 5
      %3289 = vperm.xlu0 %3288, %v328
      %v3290 = vpop.permute.xlu0 %3289
      %3292 = vset.pattern.permute.xlu0 5
      %3293 = vperm.xlu0 %3292, %v329
      %v3294 = vpop.permute.xlu0 %3293
      %3296 = vset.pattern.permute.xlu0 5
      %3297 = vperm.xlu0 %3296, %v330
      %v3298 = vpop.permute.xlu0 %3297
      %3300 = vset.pattern.permute.xlu0 5
      %3301 = vperm.xlu0 %3300, %v331
      %v3302 = vpop.permute.xlu0 %3301
      %3304 = vset.pattern.permute.xlu0 5
      %3305 = vperm.xlu0 %3304, %v332
      %v3306 = vpop.permute.xlu0 %3305
      %3308 = vset.pattern.permute.xlu0 5
      %3309 = vperm.xlu0 %3308, %v333
      %v3310 = vpop.permute.xlu0 %3309
      %3312 = vset.pattern.permute.xlu0 5
      %3313 = vperm.xlu0 %3312, %v334
      %v3314 = vpop.permute.xlu0 %3313
      %3316 = vset.pattern.permute.xlu0 5
      %3317 = vperm.xlu0 %3316, %v335
      %v3318 = vpop.permute.xlu0 %3317
      %3320 = vset.pattern.permute.xlu0 5
      %3321 = vperm.xlu0 %3320, %v336
      %v3322 = vpop.permute.xlu0 %3321
      %3324 = vset.pattern.permute.xlu0 5
      %3325 = vperm.xlu0 %3324, %v337
      %v3326 = vpop.permute.xlu0 %3325
      %3328 = vset.pattern.permute.xlu0 5
      %3329 = vperm.xlu0 %3328, %v338
      %v3330 = vpop.permute.xlu0 %3329
      %3332 = vset.pattern.permute.xlu0 5
      %3333 = vperm.xlu0 %3332, %v339
      %v3334 = vpop.permute.xlu0 %3333
      %3336 = vset.pattern.permute.xlu0 5
      %3337 = vperm.xlu0 %3336, %v340
      %v3338 = vpop.permute.xlu0 %3337
      %3340 = vset.pattern.permute.xlu0 5
      %3341 = vperm.xlu0 %3340, %v341
      %v3342 = vpop.permute.xlu0 %3341
      %3344 = vset.pattern.permute.xlu0 5
      %3345 = vperm.xlu0 %3344, %v342
      %v3346 = vpop.permute.xlu0 %3345
      %3348 = vset.pattern.permute.xlu0 5
      %3349 = vperm.xlu0 %3348, %v343
      %v3350 = vpop.permute.xlu0 %3349
      %v3352 = vmul.f32 %v3098, %v2008
      %v3353 = vmul.f32 %v3102, %v2009
      %v3354 = vmul.f32 %v3106, %v2010
      %v3355 = vmul.f32 %v3110, %v2011
      %v3356 = vmul.f32 %v3114, %v2012
      %v3357 = vmul.f32 %v3118, %v2013
      %v3358 = vmul.f32 %v3122, %v2014
      %v3359 = vmul.f32 %v3126, %v2015
      %v3360 = vmul.f32 %v3130, %v2016
      %v3361 = vmul.f32 %v3134, %v2017
      %v3362 = vmul.f32 %v3138, %v2018
      %v3363 = vmul.f32 %v3142, %v2019
      %v3364 = vmul.f32 %v3146, %v2020
      %v3365 = vmul.f32 %v3150, %v2021
      %v3366 = vmul.f32 %v3154, %v2022
      %v3367 = vmul.f32 %v3158, %v2023
      %v3368 = vmul.f32 %v3162, %v2024
      %v3369 = vmul.f32 %v3166, %v2025
      %v3370 = vmul.f32 %v3170, %v2026
      %v3371 = vmul.f32 %v3174, %v2027
      %v3372 = vmul.f32 %v3178, %v2028
      %v3373 = vmul.f32 %v3182, %v2029
      %v3374 = vmul.f32 %v3186, %v2030
      %v3375 = vmul.f32 %v3190, %v2031
      %v3376 = vmul.f32 %v3194, %v2032
      %v3377 = vmul.f32 %v3198, %v2033
      %v3378 = vmul.f32 %v3202, %v2034
      %v3379 = vmul.f32 %v3206, %v2035
      %v3380 = vmul.f32 %v3210, %v2036
      %v3381 = vmul.f32 %v3214, %v2037
      %v3382 = vmul.f32 %v3218, %v2038
      %v3383 = vmul.f32 %v3222, %v2039
      %v3384 = vmul.f32 %v3226, %v2040
      %v3385 = vmul.f32 %v3230, %v2041
      %v3386 = vmul.f32 %v3234, %v2042
      %v3387 = vmul.f32 %v3238, %v2043
      %v3388 = vmul.f32 %v3242, %v2044
      %v3389 = vmul.f32 %v3246, %v2045
      %v3390 = vmul.f32 %v3250, %v2046
      %v3391 = vmul.f32 %v3254, %v2047
      %v3392 = vmul.f32 %v3258, %v2048
      %v3393 = vmul.f32 %v3262, %v2049
      %v3394 = vmul.f32 %v3266, %v2050
      %v3395 = vmul.f32 %v3270, %v2051
      %v3396 = vmul.f32 %v3274, %v2052
      %v3397 = vmul.f32 %v3278, %v2053
      %v3398 = vmul.f32 %v3282, %v2054
      %v3399 = vmul.f32 %v3286, %v2055
      %v3400 = vmul.f32 %v3290, %v2056
      %v3401 = vmul.f32 %v3294, %v2057
      %v3402 = vmul.f32 %v3298, %v2058
      %v3403 = vmul.f32 %v3302, %v2059
      %v3404 = vmul.f32 %v3306, %v2060
      %v3405 = vmul.f32 %v3310, %v2061
      %v3406 = vmul.f32 %v3314, %v2062
      %v3407 = vmul.f32 %v3318, %v2063
      %v3408 = vmul.f32 %v3322, %v2064
      %v3409 = vmul.f32 %v3326, %v2065
      %v3410 = vmul.f32 %v3330, %v2066
      %v3411 = vmul.f32 %v3334, %v2067
      %v3412 = vmul.f32 %v3338, %v2068
      %v3413 = vmul.f32 %v3342, %v2069
      %v3414 = vmul.f32 %v3346, %v2070
      %v3415 = vmul.f32 %v3350, %v2071
      %3480 = vrot.lane.b32.xlu0 %v3352, 126
      %v3481 = vpop.permute.xlu0 %3480
      %3482 = vrot.lane.b32.xlu0 %v3353, 126
      %v3483 = vpop.permute.xlu0 %3482
      %3484 = vrot.lane.b32.xlu0 %v3354, 126
      %v3485 = vpop.permute.xlu0 %3484
      %3486 = vrot.lane.b32.xlu0 %v3355, 126
      %v3487 = vpop.permute.xlu0 %3486
      %3488 = vrot.lane.b32.xlu0 %v3356, 126
      %v3489 = vpop.permute.xlu0 %3488
      %3490 = vrot.lane.b32.xlu0 %v3357, 126
      %v3491 = vpop.permute.xlu0 %3490
      %3492 = vrot.lane.b32.xlu0 %v3358, 126
      %v3493 = vpop.permute.xlu0 %3492
      %3494 = vrot.lane.b32.xlu0 %v3359, 126
      %v3495 = vpop.permute.xlu0 %3494
      %3496 = vrot.lane.b32.xlu0 %v3360, 126
      %v3497 = vpop.permute.xlu0 %3496
      %3498 = vrot.lane.b32.xlu0 %v3361, 126
      %v3499 = vpop.permute.xlu0 %3498
      %3500 = vrot.lane.b32.xlu0 %v3362, 126
      %v3501 = vpop.permute.xlu0 %3500
      %3502 = vrot.lane.b32.xlu0 %v3363, 126
      %v3503 = vpop.permute.xlu0 %3502
      %3504 = vrot.lane.b32.xlu0 %v3364, 126
      %v3505 = vpop.permute.xlu0 %3504
      %3506 = vrot.lane.b32.xlu0 %v3365, 126
      %v3507 = vpop.permute.xlu0 %3506
      %3508 = vrot.lane.b32.xlu0 %v3366, 126
      %v3509 = vpop.permute.xlu0 %3508
      %3510 = vrot.lane.b32.xlu0 %v3367, 126
      %v3511 = vpop.permute.xlu0 %3510
      %3512 = vrot.lane.b32.xlu0 %v3368, 126
      %v3513 = vpop.permute.xlu0 %3512
      %3514 = vrot.lane.b32.xlu0 %v3369, 126
      %v3515 = vpop.permute.xlu0 %3514
      %3516 = vrot.lane.b32.xlu0 %v3370, 126
      %v3517 = vpop.permute.xlu0 %3516
      %3518 = vrot.lane.b32.xlu0 %v3371, 126
      %v3519 = vpop.permute.xlu0 %3518
      %3520 = vrot.lane.b32.xlu0 %v3372, 126
      %v3521 = vpop.permute.xlu0 %3520
      %3522 = vrot.lane.b32.xlu0 %v3373, 126
      %v3523 = vpop.permute.xlu0 %3522
      %3524 = vrot.lane.b32.xlu0 %v3374, 126
      %v3525 = vpop.permute.xlu0 %3524
      %3526 = vrot.lane.b32.xlu0 %v3375, 126
      %v3527 = vpop.permute.xlu0 %3526
      %3528 = vrot.lane.b32.xlu0 %v3376, 126
      %v3529 = vpop.permute.xlu0 %3528
      %3530 = vrot.lane.b32.xlu0 %v3377, 126
      %v3531 = vpop.permute.xlu0 %3530
      %3532 = vrot.lane.b32.xlu0 %v3378, 126
      %v3533 = vpop.permute.xlu0 %3532
      %3534 = vrot.lane.b32.xlu0 %v3379, 126
      %v3535 = vpop.permute.xlu0 %3534
      %3536 = vrot.lane.b32.xlu0 %v3380, 126
      %v3537 = vpop.permute.xlu0 %3536
      %3538 = vrot.lane.b32.xlu0 %v3381, 126
      %v3539 = vpop.permute.xlu0 %3538
      %3540 = vrot.lane.b32.xlu0 %v3382, 126
      %v3541 = vpop.permute.xlu0 %3540
      %3542 = vrot.lane.b32.xlu0 %v3383, 126
      %v3543 = vpop.permute.xlu0 %3542
      %3544 = vrot.lane.b32.xlu0 %v3384, 126
      %v3545 = vpop.permute.xlu0 %3544
      %3546 = vrot.lane.b32.xlu0 %v3385, 126
      %v3547 = vpop.permute.xlu0 %3546
      %3548 = vrot.lane.b32.xlu0 %v3386, 126
      %v3549 = vpop.permute.xlu0 %3548
      %3550 = vrot.lane.b32.xlu0 %v3387, 126
      %v3551 = vpop.permute.xlu0 %3550
      %3552 = vrot.lane.b32.xlu0 %v3388, 126
      %v3553 = vpop.permute.xlu0 %3552
      %3554 = vrot.lane.b32.xlu0 %v3389, 126
      %v3555 = vpop.permute.xlu0 %3554
      %3556 = vrot.lane.b32.xlu0 %v3390, 126
      %v3557 = vpop.permute.xlu0 %3556
      %3558 = vrot.lane.b32.xlu0 %v3391, 126
      %v3559 = vpop.permute.xlu0 %3558
      %3560 = vrot.lane.b32.xlu0 %v3392, 126
      %v3561 = vpop.permute.xlu0 %3560
      %3562 = vrot.lane.b32.xlu0 %v3393, 126
      %v3563 = vpop.permute.xlu0 %3562
      %3564 = vrot.lane.b32.xlu0 %v3394, 126
      %v3565 = vpop.permute.xlu0 %3564
      %3566 = vrot.lane.b32.xlu0 %v3395, 126
      %v3567 = vpop.permute.xlu0 %3566
      %3568 = vrot.lane.b32.xlu0 %v3396, 126
      %v3569 = vpop.permute.xlu0 %3568
      %3570 = vrot.lane.b32.xlu0 %v3397, 126
      %v3571 = vpop.permute.xlu0 %3570
      %3572 = vrot.lane.b32.xlu0 %v3398, 126
      %v3573 = vpop.permute.xlu0 %3572
      %3574 = vrot.lane.b32.xlu0 %v3399, 126
      %v3575 = vpop.permute.xlu0 %3574
      %3576 = vrot.lane.b32.xlu0 %v3400, 126
      %v3577 = vpop.permute.xlu0 %3576
      %3578 = vrot.lane.b32.xlu0 %v3401, 126
      %v3579 = vpop.permute.xlu0 %3578
      %3580 = vrot.lane.b32.xlu0 %v3402, 126
      %v3581 = vpop.permute.xlu0 %3580
      %3582 = vrot.lane.b32.xlu0 %v3403, 126
      %v3583 = vpop.permute.xlu0 %3582
      %3584 = vrot.lane.b32.xlu0 %v3404, 126
      %v3585 = vpop.permute.xlu0 %3584
      %3586 = vrot.lane.b32.xlu0 %v3405, 126
      %v3587 = vpop.permute.xlu0 %3586
      %3588 = vrot.lane.b32.xlu0 %v3406, 126
      %v3589 = vpop.permute.xlu0 %3588
      %3590 = vrot.lane.b32.xlu0 %v3407, 126
      %v3591 = vpop.permute.xlu0 %3590
      %3592 = vrot.lane.b32.xlu0 %v3408, 126
      %v3593 = vpop.permute.xlu0 %3592
      %3594 = vrot.lane.b32.xlu0 %v3409, 126
      %v3595 = vpop.permute.xlu0 %3594
      %3596 = vrot.lane.b32.xlu0 %v3410, 126
      %v3597 = vpop.permute.xlu0 %3596
      %3598 = vrot.lane.b32.xlu0 %v3411, 126
      %v3599 = vpop.permute.xlu0 %3598
      %3600 = vrot.lane.b32.xlu0 %v3412, 126
      %v3601 = vpop.permute.xlu0 %3600
      %3602 = vrot.lane.b32.xlu0 %v3413, 126
      %v3603 = vpop.permute.xlu0 %3602
      %3604 = vrot.lane.b32.xlu0 %v3414, 126
      %v3605 = vpop.permute.xlu0 %3604
      %3606 = vrot.lane.b32.xlu0 %v3415, 126
      %v3607 = vpop.permute.xlu0 %3606
      %v3672 = vadd.f32 %v3032, %v3481
      %v3673 = vadd.f32 %v3033, %v3483
      %v3674 = vadd.f32 %v3034, %v3485
      %v3675 = vadd.f32 %v3035, %v3487
      %v3676 = vadd.f32 %v3036, %v3489
      %v3677 = vadd.f32 %v3037, %v3491
      %v3678 = vadd.f32 %v3038, %v3493
      %v3679 = vadd.f32 %v3039, %v3495
      %v3680 = vadd.f32 %v3040, %v3497
      %v3681 = vadd.f32 %v3041, %v3499
      %v3682 = vadd.f32 %v3042, %v3501
      %v3683 = vadd.f32 %v3043, %v3503
      %v3684 = vadd.f32 %v3044, %v3505
      %v3685 = vadd.f32 %v3045, %v3507
      %v3686 = vadd.f32 %v3046, %v3509
      %v3687 = vadd.f32 %v3047, %v3511
      %v3688 = vadd.f32 %v3048, %v3513
      %v3689 = vadd.f32 %v3049, %v3515
      %v3690 = vadd.f32 %v3050, %v3517
      %v3691 = vadd.f32 %v3051, %v3519
      %v3692 = vadd.f32 %v3052, %v3521
      %v3693 = vadd.f32 %v3053, %v3523
      %v3694 = vadd.f32 %v3054, %v3525
      %v3695 = vadd.f32 %v3055, %v3527
      %v3696 = vadd.f32 %v3056, %v3529
      %v3697 = vadd.f32 %v3057, %v3531
      %v3698 = vadd.f32 %v3058, %v3533
      %v3699 = vadd.f32 %v3059, %v3535
      %v3700 = vadd.f32 %v3060, %v3537
      %v3701 = vadd.f32 %v3061, %v3539
      %v3702 = vadd.f32 %v3062, %v3541
      %v3703 = vadd.f32 %v3063, %v3543
      %v3704 = vadd.f32 %v3064, %v3545
      %v3705 = vadd.f32 %v3065, %v3547
      %v3706 = vadd.f32 %v3066, %v3549
      %v3707 = vadd.f32 %v3067, %v3551
      %v3708 = vadd.f32 %v3068, %v3553
      %v3709 = vadd.f32 %v3069, %v3555
      %v3710 = vadd.f32 %v3070, %v3557
      %v3711 = vadd.f32 %v3071, %v3559
      %v3712 = vadd.f32 %v3072, %v3561
      %v3713 = vadd.f32 %v3073, %v3563
      %v3714 = vadd.f32 %v3074, %v3565
      %v3715 = vadd.f32 %v3075, %v3567
      %v3716 = vadd.f32 %v3076, %v3569
      %v3717 = vadd.f32 %v3077, %v3571
      %v3718 = vadd.f32 %v3078, %v3573
      %v3719 = vadd.f32 %v3079, %v3575
      %v3720 = vadd.f32 %v3080, %v3577
      %v3721 = vadd.f32 %v3081, %v3579
      %v3722 = vadd.f32 %v3082, %v3581
      %v3723 = vadd.f32 %v3083, %v3583
      %v3724 = vadd.f32 %v3084, %v3585
      %v3725 = vadd.f32 %v3085, %v3587
      %v3726 = vadd.f32 %v3086, %v3589
      %v3727 = vadd.f32 %v3087, %v3591
      %v3728 = vadd.f32 %v3088, %v3593
      %v3729 = vadd.f32 %v3089, %v3595
      %v3730 = vadd.f32 %v3090, %v3597
      %v3731 = vadd.f32 %v3091, %v3599
      %v3732 = vadd.f32 %v3092, %v3601
      %v3733 = vadd.f32 %v3093, %v3603
      %v3734 = vadd.f32 %v3094, %v3605
      %v3735 = vadd.f32 %v3095, %v3607
      %v3736 = vld [vmem:[%s138 + $0x2] sm:$0xff]
      %v3737 = vld [vmem:[%s138 + $0x12] sm:$0xff]
      %v3738 = vld [vmem:[%s138 + $0x22] sm:$0xff]
      %v3739 = vld [vmem:[%s138 + $0x32] sm:$0xff]
      %v3740 = vld [vmem:[%s138 + $0x42] sm:$0xff]
      %v3741 = vld [vmem:[%s138 + $0x52] sm:$0xff]
      %v3742 = vld [vmem:[%s138 + $0x62] sm:$0xff]
      %v3743 = vld [vmem:[%s138 + $0x72] sm:$0xff]
      %v3744 = vld [vmem:[%s138 + $0x82] sm:$0xff]
      %v3745 = vld [vmem:[%s138 + $0x92] sm:$0xff]
      %v3746 = vld [vmem:[%s138 + $0xa2] sm:$0xff]
      %v3747 = vld [vmem:[%s138 + $0xb2] sm:$0xff]
      %v3748 = vld [vmem:[%s138 + $0xc2] sm:$0xff]
      %v3749 = vld [vmem:[%s138 + $0xd2] sm:$0xff]
      %v3750 = vld [vmem:[%s138 + $0xe2] sm:$0xff]
      %v3751 = vld [vmem:[%s138 + $0xf2] sm:$0xff]
      %v3752 = vld [vmem:[%s138 + $0x102] sm:$0xff]
      %v3753 = vld [vmem:[%s138 + $0x112] sm:$0xff]
      %v3754 = vld [vmem:[%s138 + $0x122] sm:$0xff]
      %v3755 = vld [vmem:[%s138 + $0x132] sm:$0xff]
      %v3756 = vld [vmem:[%s138 + $0x142] sm:$0xff]
      %v3757 = vld [vmem:[%s138 + $0x152] sm:$0xff]
      %v3758 = vld [vmem:[%s138 + $0x162] sm:$0xff]
      %v3759 = vld [vmem:[%s138 + $0x172] sm:$0xff]
      %v3760 = vld [vmem:[%s138 + $0x182] sm:$0xff]
      %v3761 = vld [vmem:[%s138 + $0x192] sm:$0xff]
      %v3762 = vld [vmem:[%s138 + $0x1a2] sm:$0xff]
      %v3763 = vld [vmem:[%s138 + $0x1b2] sm:$0xff]
      %v3764 = vld [vmem:[%s138 + $0x1c2] sm:$0xff]
      %v3765 = vld [vmem:[%s138 + $0x1d2] sm:$0xff]
      %v3766 = vld [vmem:[%s138 + $0x1e2] sm:$0xff]
      %v3767 = vld [vmem:[%s138 + $0x1f2] sm:$0xff]
      %v3768 = vld [vmem:[%s138 + $0x202] sm:$0xff]
      %v3769 = vld [vmem:[%s138 + $0x212] sm:$0xff]
      %v3770 = vld [vmem:[%s138 + $0x222] sm:$0xff]
      %v3771 = vld [vmem:[%s138 + $0x232] sm:$0xff]
      %v3772 = vld [vmem:[%s138 + $0x242] sm:$0xff]
      %v3773 = vld [vmem:[%s138 + $0x252] sm:$0xff]
      %v3774 = vld [vmem:[%s138 + $0x262] sm:$0xff]
      %v3775 = vld [vmem:[%s138 + $0x272] sm:$0xff]
      %v3776 = vld [vmem:[%s138 + $0x282] sm:$0xff]
      %v3777 = vld [vmem:[%s138 + $0x292] sm:$0xff]
      %v3778 = vld [vmem:[%s138 + $0x2a2] sm:$0xff]
      %v3779 = vld [vmem:[%s138 + $0x2b2] sm:$0xff]
      %v3780 = vld [vmem:[%s138 + $0x2c2] sm:$0xff]
      %v3781 = vld [vmem:[%s138 + $0x2d2] sm:$0xff]
      %v3782 = vld [vmem:[%s138 + $0x2e2] sm:$0xff]
      %v3783 = vld [vmem:[%s138 + $0x2f2] sm:$0xff]
      %v3784 = vld [vmem:[%s138 + $0x302] sm:$0xff]
      %v3785 = vld [vmem:[%s138 + $0x312] sm:$0xff]
      %v3786 = vld [vmem:[%s138 + $0x322] sm:$0xff]
      %v3787 = vld [vmem:[%s138 + $0x332] sm:$0xff]
      %v3788 = vld [vmem:[%s138 + $0x342] sm:$0xff]
      %v3789 = vld [vmem:[%s138 + $0x352] sm:$0xff]
      %v3790 = vld [vmem:[%s138 + $0x362] sm:$0xff]
      %v3791 = vld [vmem:[%s138 + $0x372] sm:$0xff]
      %v3792 = vld [vmem:[%s138 + $0x382] sm:$0xff]
      %v3793 = vld [vmem:[%s138 + $0x392] sm:$0xff]
      %v3794 = vld [vmem:[%s138 + $0x3a2] sm:$0xff]
      %v3795 = vld [vmem:[%s138 + $0x3b2] sm:$0xff]
      %v3796 = vld [vmem:[%s138 + $0x3c2] sm:$0xff]
      %v3797 = vld [vmem:[%s138 + $0x3d2] sm:$0xff]
      %v3798 = vld [vmem:[%s138 + $0x3e2] sm:$0xff]
      %v3799 = vld [vmem:[%s138 + $0x3f2] sm:$0xff]
      %3800 = vset.pattern.permute.xlu0 6
      %3801 = vperm.xlu0 %3800, %v280
      %v3802 = vpop.permute.xlu0 %3801
      %3804 = vset.pattern.permute.xlu0 6
      %3805 = vperm.xlu0 %3804, %v281
      %v3806 = vpop.permute.xlu0 %3805
      %3808 = vset.pattern.permute.xlu0 6
      %3809 = vperm.xlu0 %3808, %v282
      %v3810 = vpop.permute.xlu0 %3809
      %3812 = vset.pattern.permute.xlu0 6
      %3813 = vperm.xlu0 %3812, %v283
      %v3814 = vpop.permute.xlu0 %3813
      %3816 = vset.pattern.permute.xlu0 6
      %3817 = vperm.xlu0 %3816, %v284
      %v3818 = vpop.permute.xlu0 %3817
      %3820 = vset.pattern.permute.xlu0 6
      %3821 = vperm.xlu0 %3820, %v285
      %v3822 = vpop.permute.xlu0 %3821
      %3824 = vset.pattern.permute.xlu0 6
      %3825 = vperm.xlu0 %3824, %v286
      %v3826 = vpop.permute.xlu0 %3825
      %3828 = vset.pattern.permute.xlu0 6
      %3829 = vperm.xlu0 %3828, %v287
      %v3830 = vpop.permute.xlu0 %3829
      %3832 = vset.pattern.permute.xlu0 6
      %3833 = vperm.xlu0 %3832, %v288
      %v3834 = vpop.permute.xlu0 %3833
      %3836 = vset.pattern.permute.xlu0 6
      %3837 = vperm.xlu0 %3836, %v289
      %v3838 = vpop.permute.xlu0 %3837
      %3840 = vset.pattern.permute.xlu0 6
      %3841 = vperm.xlu0 %3840, %v290
      %v3842 = vpop.permute.xlu0 %3841
      %3844 = vset.pattern.permute.xlu0 6
      %3845 = vperm.xlu0 %3844, %v291
      %v3846 = vpop.permute.xlu0 %3845
      %3848 = vset.pattern.permute.xlu0 6
      %3849 = vperm.xlu0 %3848, %v292
      %v3850 = vpop.permute.xlu0 %3849
      %3852 = vset.pattern.permute.xlu0 6
      %3853 = vperm.xlu0 %3852, %v293
      %v3854 = vpop.permute.xlu0 %3853
      %3856 = vset.pattern.permute.xlu0 6
      %3857 = vperm.xlu0 %3856, %v294
      %v3858 = vpop.permute.xlu0 %3857
      %3860 = vset.pattern.permute.xlu0 6
      %3861 = vperm.xlu0 %3860, %v295
      %v3862 = vpop.permute.xlu0 %3861
      %3864 = vset.pattern.permute.xlu0 6
      %3865 = vperm.xlu0 %3864, %v296
      %v3866 = vpop.permute.xlu0 %3865
      %3868 = vset.pattern.permute.xlu0 6
      %3869 = vperm.xlu0 %3868, %v297
      %v3870 = vpop.permute.xlu0 %3869
      %3872 = vset.pattern.permute.xlu0 6
      %3873 = vperm.xlu0 %3872, %v298
      %v3874 = vpop.permute.xlu0 %3873
      %3876 = vset.pattern.permute.xlu0 6
      %3877 = vperm.xlu0 %3876, %v299
      %v3878 = vpop.permute.xlu0 %3877
      %3880 = vset.pattern.permute.xlu0 6
      %3881 = vperm.xlu0 %3880, %v300
      %v3882 = vpop.permute.xlu0 %3881
      %3884 = vset.pattern.permute.xlu0 6
      %3885 = vperm.xlu0 %3884, %v301
      %v3886 = vpop.permute.xlu0 %3885
      %3888 = vset.pattern.permute.xlu0 6
      %3889 = vperm.xlu0 %3888, %v302
      %v3890 = vpop.permute.xlu0 %3889
      %3892 = vset.pattern.permute.xlu0 6
      %3893 = vperm.xlu0 %3892, %v303
      %v3894 = vpop.permute.xlu0 %3893
      %3896 = vset.pattern.permute.xlu0 6
      %3897 = vperm.xlu0 %3896, %v304
      %v3898 = vpop.permute.xlu0 %3897
      %3900 = vset.pattern.permute.xlu0 6
      %3901 = vperm.xlu0 %3900, %v305
      %v3902 = vpop.permute.xlu0 %3901
      %3904 = vset.pattern.permute.xlu0 6
      %3905 = vperm.xlu0 %3904, %v306
      %v3906 = vpop.permute.xlu0 %3905
      %3908 = vset.pattern.permute.xlu0 6
      %3909 = vperm.xlu0 %3908, %v307
      %v3910 = vpop.permute.xlu0 %3909
      %3912 = vset.pattern.permute.xlu0 6
      %3913 = vperm.xlu0 %3912, %v308
      %v3914 = vpop.permute.xlu0 %3913
      %3916 = vset.pattern.permute.xlu0 6
      %3917 = vperm.xlu0 %3916, %v309
      %v3918 = vpop.permute.xlu0 %3917
      %3920 = vset.pattern.permute.xlu0 6
      %3921 = vperm.xlu0 %3920, %v310
      %v3922 = vpop.permute.xlu0 %3921
      %3924 = vset.pattern.permute.xlu0 6
      %3925 = vperm.xlu0 %3924, %v311
      %v3926 = vpop.permute.xlu0 %3925
      %3928 = vset.pattern.permute.xlu0 6
      %3929 = vperm.xlu0 %3928, %v312
      %v3930 = vpop.permute.xlu0 %3929
      %3932 = vset.pattern.permute.xlu0 6
      %3933 = vperm.xlu0 %3932, %v313
      %v3934 = vpop.permute.xlu0 %3933
      %3936 = vset.pattern.permute.xlu0 6
      %3937 = vperm.xlu0 %3936, %v314
      %v3938 = vpop.permute.xlu0 %3937
      %3940 = vset.pattern.permute.xlu0 6
      %3941 = vperm.xlu0 %3940, %v315
      %v3942 = vpop.permute.xlu0 %3941
      %3944 = vset.pattern.permute.xlu0 6
      %3945 = vperm.xlu0 %3944, %v316
      %v3946 = vpop.permute.xlu0 %3945
      %3948 = vset.pattern.permute.xlu0 6
      %3949 = vperm.xlu0 %3948, %v317
      %v3950 = vpop.permute.xlu0 %3949
      %3952 = vset.pattern.permute.xlu0 6
      %3953 = vperm.xlu0 %3952, %v318
      %v3954 = vpop.permute.xlu0 %3953
      %3956 = vset.pattern.permute.xlu0 6
      %3957 = vperm.xlu0 %3956, %v319
      %v3958 = vpop.permute.xlu0 %3957
      %3960 = vset.pattern.permute.xlu0 6
      %3961 = vperm.xlu0 %3960, %v320
      %v3962 = vpop.permute.xlu0 %3961
      %3964 = vset.pattern.permute.xlu0 6
      %3965 = vperm.xlu0 %3964, %v321
      %v3966 = vpop.permute.xlu0 %3965
      %3968 = vset.pattern.permute.xlu0 6
      %3969 = vperm.xlu0 %3968, %v322
      %v3970 = vpop.permute.xlu0 %3969
      %3972 = vset.pattern.permute.xlu0 6
      %3973 = vperm.xlu0 %3972, %v323
      %v3974 = vpop.permute.xlu0 %3973
      %3976 = vset.pattern.permute.xlu0 6
      %3977 = vperm.xlu0 %3976, %v324
      %v3978 = vpop.permute.xlu0 %3977
      %3980 = vset.pattern.permute.xlu0 6
      %3981 = vperm.xlu0 %3980, %v325
      %v3982 = vpop.permute.xlu0 %3981
      %3984 = vset.pattern.permute.xlu0 6
      %3985 = vperm.xlu0 %3984, %v326
      %v3986 = vpop.permute.xlu0 %3985
      %3988 = vset.pattern.permute.xlu0 6
      %3989 = vperm.xlu0 %3988, %v327
      %v3990 = vpop.permute.xlu0 %3989
      %3992 = vset.pattern.permute.xlu0 6
      %3993 = vperm.xlu0 %3992, %v328
      %v3994 = vpop.permute.xlu0 %3993
      %3996 = vset.pattern.permute.xlu0 6
      %3997 = vperm.xlu0 %3996, %v329
      %v3998 = vpop.permute.xlu0 %3997
      %4000 = vset.pattern.permute.xlu0 6
      %4001 = vperm.xlu0 %4000, %v330
      %v4002 = vpop.permute.xlu0 %4001
      %4004 = vset.pattern.permute.xlu0 6
      %4005 = vperm.xlu0 %4004, %v331
      %v4006 = vpop.permute.xlu0 %4005
      %4008 = vset.pattern.permute.xlu0 6
      %4009 = vperm.xlu0 %4008, %v332
      %v4010 = vpop.permute.xlu0 %4009
      %4012 = vset.pattern.permute.xlu0 6
      %4013 = vperm.xlu0 %4012, %v333
      %v4014 = vpop.permute.xlu0 %4013
      %4016 = vset.pattern.permute.xlu0 6
      %4017 = vperm.xlu0 %4016, %v334
      %v4018 = vpop.permute.xlu0 %4017
      %4020 = vset.pattern.permute.xlu0 6
      %4021 = vperm.xlu0 %4020, %v335
      %v4022 = vpop.permute.xlu0 %4021
      %4024 = vset.pattern.permute.xlu0 6
      %4025 = vperm.xlu0 %4024, %v336
      %v4026 = vpop.permute.xlu0 %4025
      %4028 = vset.pattern.permute.xlu0 6
      %4029 = vperm.xlu0 %4028, %v337
      %v4030 = vpop.permute.xlu0 %4029
      %4032 = vset.pattern.permute.xlu0 6
      %4033 = vperm.xlu0 %4032, %v338
      %v4034 = vpop.permute.xlu0 %4033
      %4036 = vset.pattern.permute.xlu0 6
      %4037 = vperm.xlu0 %4036, %v339
      %v4038 = vpop.permute.xlu0 %4037
      %4040 = vset.pattern.permute.xlu0 6
      %4041 = vperm.xlu0 %4040, %v340
      %v4042 = vpop.permute.xlu0 %4041
      %4044 = vset.pattern.permute.xlu0 6
      %4045 = vperm.xlu0 %4044, %v341
      %v4046 = vpop.permute.xlu0 %4045
      %4048 = vset.pattern.permute.xlu0 6
      %4049 = vperm.xlu0 %4048, %v342
      %v4050 = vpop.permute.xlu0 %4049
      %4052 = vset.pattern.permute.xlu0 6
      %4053 = vperm.xlu0 %4052, %v343
      %v4054 = vpop.permute.xlu0 %4053
      %v4056 = vmul.f32 %v3802, %v3736
      %v4057 = vmul.f32 %v3806, %v3737
      %v4058 = vmul.f32 %v3810, %v3738
      %v4059 = vmul.f32 %v3814, %v3739
      %v4060 = vmul.f32 %v3818, %v3740
      %v4061 = vmul.f32 %v3822, %v3741
      %v4062 = vmul.f32 %v3826, %v3742
      %v4063 = vmul.f32 %v3830, %v3743
      %v4064 = vmul.f32 %v3834, %v3744
      %v4065 = vmul.f32 %v3838, %v3745
      %v4066 = vmul.f32 %v3842, %v3746
      %v4067 = vmul.f32 %v3846, %v3747
      %v4068 = vmul.f32 %v3850, %v3748
      %v4069 = vmul.f32 %v3854, %v3749
      %v4070 = vmul.f32 %v3858, %v3750
      %v4071 = vmul.f32 %v3862, %v3751
      %v4072 = vmul.f32 %v3866, %v3752
      %v4073 = vmul.f32 %v3870, %v3753
      %v4074 = vmul.f32 %v3874, %v3754
      %v4075 = vmul.f32 %v3878, %v3755
      %v4076 = vmul.f32 %v3882, %v3756
      %v4077 = vmul.f32 %v3886, %v3757
      %v4078 = vmul.f32 %v3890, %v3758
      %v4079 = vmul.f32 %v3894, %v3759
      %v4080 = vmul.f32 %v3898, %v3760
      %v4081 = vmul.f32 %v3902, %v3761
      %v4082 = vmul.f32 %v3906, %v3762
      %v4083 = vmul.f32 %v3910, %v3763
      %v4084 = vmul.f32 %v3914, %v3764
      %v4085 = vmul.f32 %v3918, %v3765
      %v4086 = vmul.f32 %v3922, %v3766
      %v4087 = vmul.f32 %v3926, %v3767
      %v4088 = vmul.f32 %v3930, %v3768
      %v4089 = vmul.f32 %v3934, %v3769
      %v4090 = vmul.f32 %v3938, %v3770
      %v4091 = vmul.f32 %v3942, %v3771
      %v4092 = vmul.f32 %v3946, %v3772
      %v4093 = vmul.f32 %v3950, %v3773
      %v4094 = vmul.f32 %v3954, %v3774
      %v4095 = vmul.f32 %v3958, %v3775
      %v4096 = vmul.f32 %v3962, %v3776
      %v4097 = vmul.f32 %v3966, %v3777
      %v4098 = vmul.f32 %v3970, %v3778
      %v4099 = vmul.f32 %v3974, %v3779
      %v4100 = vmul.f32 %v3978, %v3780
      %v4101 = vmul.f32 %v3982, %v3781
      %v4102 = vmul.f32 %v3986, %v3782
      %v4103 = vmul.f32 %v3990, %v3783
      %v4104 = vmul.f32 %v3994, %v3784
      %v4105 = vmul.f32 %v3998, %v3785
      %v4106 = vmul.f32 %v4002, %v3786
      %v4107 = vmul.f32 %v4006, %v3787
      %v4108 = vmul.f32 %v4010, %v3788
      %v4109 = vmul.f32 %v4014, %v3789
      %v4110 = vmul.f32 %v4018, %v3790
      %v4111 = vmul.f32 %v4022, %v3791
      %v4112 = vmul.f32 %v4026, %v3792
      %v4113 = vmul.f32 %v4030, %v3793
      %v4114 = vmul.f32 %v4034, %v3794
      %v4115 = vmul.f32 %v4038, %v3795
      %v4116 = vmul.f32 %v4042, %v3796
      %v4117 = vmul.f32 %v4046, %v3797
      %v4118 = vmul.f32 %v4050, %v3798
      %v4119 = vmul.f32 %v4054, %v3799
      %v4120 = vadd.f32 %v3672, %v4056
      %v4121 = vadd.f32 %v3673, %v4057
      %v4122 = vadd.f32 %v3674, %v4058
      %v4123 = vadd.f32 %v3675, %v4059
      %v4124 = vadd.f32 %v3676, %v4060
      %v4125 = vadd.f32 %v3677, %v4061
      %v4126 = vadd.f32 %v3678, %v4062
      %v4127 = vadd.f32 %v3679, %v4063
      %v4128 = vadd.f32 %v3680, %v4064
      %v4129 = vadd.f32 %v3681, %v4065
      %v4130 = vadd.f32 %v3682, %v4066
      %v4131 = vadd.f32 %v3683, %v4067
      %v4132 = vadd.f32 %v3684, %v4068
      %v4133 = vadd.f32 %v3685, %v4069
      %v4134 = vadd.f32 %v3686, %v4070
      %v4135 = vadd.f32 %v3687, %v4071
      %v4136 = vadd.f32 %v3688, %v4072
      %v4137 = vadd.f32 %v3689, %v4073
      %v4138 = vadd.f32 %v3690, %v4074
      %v4139 = vadd.f32 %v3691, %v4075
      %v4140 = vadd.f32 %v3692, %v4076
      %v4141 = vadd.f32 %v3693, %v4077
      %v4142 = vadd.f32 %v3694, %v4078
      %v4143 = vadd.f32 %v3695, %v4079
      %v4144 = vadd.f32 %v3696, %v4080
      %v4145 = vadd.f32 %v3697, %v4081
      %v4146 = vadd.f32 %v3698, %v4082
      %v4147 = vadd.f32 %v3699, %v4083
      %v4148 = vadd.f32 %v3700, %v4084
      %v4149 = vadd.f32 %v3701, %v4085
      %v4150 = vadd.f32 %v3702, %v4086
      %v4151 = vadd.f32 %v3703, %v4087
      %v4152 = vadd.f32 %v3704, %v4088
      %v4153 = vadd.f32 %v3705, %v4089
      %v4154 = vadd.f32 %v3706, %v4090
      %v4155 = vadd.f32 %v3707, %v4091
      %v4156 = vadd.f32 %v3708, %v4092
      %v4157 = vadd.f32 %v3709, %v4093
      %v4158 = vadd.f32 %v3710, %v4094
      %v4159 = vadd.f32 %v3711, %v4095
      %v4160 = vadd.f32 %v3712, %v4096
      %v4161 = vadd.f32 %v3713, %v4097
      %v4162 = vadd.f32 %v3714, %v4098
      %v4163 = vadd.f32 %v3715, %v4099
      %v4164 = vadd.f32 %v3716, %v4100
      %v4165 = vadd.f32 %v3717, %v4101
      %v4166 = vadd.f32 %v3718, %v4102
      %v4167 = vadd.f32 %v3719, %v4103
      %v4168 = vadd.f32 %v3720, %v4104
      %v4169 = vadd.f32 %v3721, %v4105
      %v4170 = vadd.f32 %v3722, %v4106
      %v4171 = vadd.f32 %v3723, %v4107
      %v4172 = vadd.f32 %v3724, %v4108
      %v4173 = vadd.f32 %v3725, %v4109
      %v4174 = vadd.f32 %v3726, %v4110
      %v4175 = vadd.f32 %v3727, %v4111
      %v4176 = vadd.f32 %v3728, %v4112
      %v4177 = vadd.f32 %v3729, %v4113
      %v4178 = vadd.f32 %v3730, %v4114
      %v4179 = vadd.f32 %v3731, %v4115
      %v4180 = vadd.f32 %v3732, %v4116
      %v4181 = vadd.f32 %v3733, %v4117
      %v4182 = vadd.f32 %v3734, %v4118
      %v4183 = vadd.f32 %v3735, %v4119
      %4184 = vset.pattern.permute.xlu0 7
      %4185 = vperm.xlu0 %4184, %v280
      %v4186 = vpop.permute.xlu0 %4185
      %4188 = vset.pattern.permute.xlu0 7
      %4189 = vperm.xlu0 %4188, %v281
      %v4190 = vpop.permute.xlu0 %4189
      %4192 = vset.pattern.permute.xlu0 7
      %4193 = vperm.xlu0 %4192, %v282
      %v4194 = vpop.permute.xlu0 %4193
      %4196 = vset.pattern.permute.xlu0 7
      %4197 = vperm.xlu0 %4196, %v283
      %v4198 = vpop.permute.xlu0 %4197
      %4200 = vset.pattern.permute.xlu0 7
      %4201 = vperm.xlu0 %4200, %v284
      %v4202 = vpop.permute.xlu0 %4201
      %4204 = vset.pattern.permute.xlu0 7
      %4205 = vperm.xlu0 %4204, %v285
      %v4206 = vpop.permute.xlu0 %4205
      %4208 = vset.pattern.permute.xlu0 7
      %4209 = vperm.xlu0 %4208, %v286
      %v4210 = vpop.permute.xlu0 %4209
      %4212 = vset.pattern.permute.xlu0 7
      %4213 = vperm.xlu0 %4212, %v287
      %v4214 = vpop.permute.xlu0 %4213
      %4216 = vset.pattern.permute.xlu0 7
      %4217 = vperm.xlu0 %4216, %v288
      %v4218 = vpop.permute.xlu0 %4217
      %4220 = vset.pattern.permute.xlu0 7
      %4221 = vperm.xlu0 %4220, %v289
      %v4222 = vpop.permute.xlu0 %4221
      %4224 = vset.pattern.permute.xlu0 7
      %4225 = vperm.xlu0 %4224, %v290
      %v4226 = vpop.permute.xlu0 %4225
      %4228 = vset.pattern.permute.xlu0 7
      %4229 = vperm.xlu0 %4228, %v291
      %v4230 = vpop.permute.xlu0 %4229
      %4232 = vset.pattern.permute.xlu0 7
      %4233 = vperm.xlu0 %4232, %v292
      %v4234 = vpop.permute.xlu0 %4233
      %4236 = vset.pattern.permute.xlu0 7
      %4237 = vperm.xlu0 %4236, %v293
      %v4238 = vpop.permute.xlu0 %4237
      %4240 = vset.pattern.permute.xlu0 7
      %4241 = vperm.xlu0 %4240, %v294
      %v4242 = vpop.permute.xlu0 %4241
      %4244 = vset.pattern.permute.xlu0 7
      %4245 = vperm.xlu0 %4244, %v295
      %v4246 = vpop.permute.xlu0 %4245
      %4248 = vset.pattern.permute.xlu0 7
      %4249 = vperm.xlu0 %4248, %v296
      %v4250 = vpop.permute.xlu0 %4249
      %4252 = vset.pattern.permute.xlu0 7
      %4253 = vperm.xlu0 %4252, %v297
      %v4254 = vpop.permute.xlu0 %4253
      %4256 = vset.pattern.permute.xlu0 7
      %4257 = vperm.xlu0 %4256, %v298
      %v4258 = vpop.permute.xlu0 %4257
      %4260 = vset.pattern.permute.xlu0 7
      %4261 = vperm.xlu0 %4260, %v299
      %v4262 = vpop.permute.xlu0 %4261
      %4264 = vset.pattern.permute.xlu0 7
      %4265 = vperm.xlu0 %4264, %v300
      %v4266 = vpop.permute.xlu0 %4265
      %4268 = vset.pattern.permute.xlu0 7
      %4269 = vperm.xlu0 %4268, %v301
      %v4270 = vpop.permute.xlu0 %4269
      %4272 = vset.pattern.permute.xlu0 7
      %4273 = vperm.xlu0 %4272, %v302
      %v4274 = vpop.permute.xlu0 %4273
      %4276 = vset.pattern.permute.xlu0 7
      %4277 = vperm.xlu0 %4276, %v303
      %v4278 = vpop.permute.xlu0 %4277
      %4280 = vset.pattern.permute.xlu0 7
      %4281 = vperm.xlu0 %4280, %v304
      %v4282 = vpop.permute.xlu0 %4281
      %4284 = vset.pattern.permute.xlu0 7
      %4285 = vperm.xlu0 %4284, %v305
      %v4286 = vpop.permute.xlu0 %4285
      %4288 = vset.pattern.permute.xlu0 7
      %4289 = vperm.xlu0 %4288, %v306
      %v4290 = vpop.permute.xlu0 %4289
      %4292 = vset.pattern.permute.xlu0 7
      %4293 = vperm.xlu0 %4292, %v307
      %v4294 = vpop.permute.xlu0 %4293
      %4296 = vset.pattern.permute.xlu0 7
      %4297 = vperm.xlu0 %4296, %v308
      %v4298 = vpop.permute.xlu0 %4297
      %4300 = vset.pattern.permute.xlu0 7
      %4301 = vperm.xlu0 %4300, %v309
      %v4302 = vpop.permute.xlu0 %4301
      %4304 = vset.pattern.permute.xlu0 7
      %4305 = vperm.xlu0 %4304, %v310
      %v4306 = vpop.permute.xlu0 %4305
      %4308 = vset.pattern.permute.xlu0 7
      %4309 = vperm.xlu0 %4308, %v311
      %v4310 = vpop.permute.xlu0 %4309
      %4312 = vset.pattern.permute.xlu0 7
      %4313 = vperm.xlu0 %4312, %v312
      %v4314 = vpop.permute.xlu0 %4313
      %4316 = vset.pattern.permute.xlu0 7
      %4317 = vperm.xlu0 %4316, %v313
      %v4318 = vpop.permute.xlu0 %4317
      %4320 = vset.pattern.permute.xlu0 7
      %4321 = vperm.xlu0 %4320, %v314
      %v4322 = vpop.permute.xlu0 %4321
      %4324 = vset.pattern.permute.xlu0 7
      %4325 = vperm.xlu0 %4324, %v315
      %v4326 = vpop.permute.xlu0 %4325
      %4328 = vset.pattern.permute.xlu0 7
      %4329 = vperm.xlu0 %4328, %v316
      %v4330 = vpop.permute.xlu0 %4329
      %4332 = vset.pattern.permute.xlu0 7
      %4333 = vperm.xlu0 %4332, %v317
      %v4334 = vpop.permute.xlu0 %4333
      %4336 = vset.pattern.permute.xlu0 7
      %4337 = vperm.xlu0 %4336, %v318
      %v4338 = vpop.permute.xlu0 %4337
      %4340 = vset.pattern.permute.xlu0 7
      %4341 = vperm.xlu0 %4340, %v319
      %v4342 = vpop.permute.xlu0 %4341
      %4344 = vset.pattern.permute.xlu0 7
      %4345 = vperm.xlu0 %4344, %v320
      %v4346 = vpop.permute.xlu0 %4345
      %4348 = vset.pattern.permute.xlu0 7
      %4349 = vperm.xlu0 %4348, %v321
      %v4350 = vpop.permute.xlu0 %4349
      %4352 = vset.pattern.permute.xlu0 7
      %4353 = vperm.xlu0 %4352, %v322
      %v4354 = vpop.permute.xlu0 %4353
      %4356 = vset.pattern.permute.xlu0 7
      %4357 = vperm.xlu0 %4356, %v323
      %v4358 = vpop.permute.xlu0 %4357
      %4360 = vset.pattern.permute.xlu0 7
      %4361 = vperm.xlu0 %4360, %v324
      %v4362 = vpop.permute.xlu0 %4361
      %4364 = vset.pattern.permute.xlu0 7
      %4365 = vperm.xlu0 %4364, %v325
      %v4366 = vpop.permute.xlu0 %4365
      %4368 = vset.pattern.permute.xlu0 7
      %4369 = vperm.xlu0 %4368, %v326
      %v4370 = vpop.permute.xlu0 %4369
      %4372 = vset.pattern.permute.xlu0 7
      %4373 = vperm.xlu0 %4372, %v327
      %v4374 = vpop.permute.xlu0 %4373
      %4376 = vset.pattern.permute.xlu0 7
      %4377 = vperm.xlu0 %4376, %v328
      %v4378 = vpop.permute.xlu0 %4377
      %4380 = vset.pattern.permute.xlu0 7
      %4381 = vperm.xlu0 %4380, %v329
      %v4382 = vpop.permute.xlu0 %4381
      %4384 = vset.pattern.permute.xlu0 7
      %4385 = vperm.xlu0 %4384, %v330
      %v4386 = vpop.permute.xlu0 %4385
      %4388 = vset.pattern.permute.xlu0 7
      %4389 = vperm.xlu0 %4388, %v331
      %v4390 = vpop.permute.xlu0 %4389
      %4392 = vset.pattern.permute.xlu0 7
      %4393 = vperm.xlu0 %4392, %v332
      %v4394 = vpop.permute.xlu0 %4393
      %4396 = vset.pattern.permute.xlu0 7
      %4397 = vperm.xlu0 %4396, %v333
      %v4398 = vpop.permute.xlu0 %4397
      %4400 = vset.pattern.permute.xlu0 7
      %4401 = vperm.xlu0 %4400, %v334
      %v4402 = vpop.permute.xlu0 %4401
      %4404 = vset.pattern.permute.xlu0 7
      %4405 = vperm.xlu0 %4404, %v335
      %v4406 = vpop.permute.xlu0 %4405
      %4408 = vset.pattern.permute.xlu0 7
      %4409 = vperm.xlu0 %4408, %v336
      %v4410 = vpop.permute.xlu0 %4409
      %4412 = vset.pattern.permute.xlu0 7
      %4413 = vperm.xlu0 %4412, %v337
      %v4414 = vpop.permute.xlu0 %4413
      %4416 = vset.pattern.permute.xlu0 7
      %4417 = vperm.xlu0 %4416, %v338
      %v4418 = vpop.permute.xlu0 %4417
      %4420 = vset.pattern.permute.xlu0 7
      %4421 = vperm.xlu0 %4420, %v339
      %v4422 = vpop.permute.xlu0 %4421
      %4424 = vset.pattern.permute.xlu0 7
      %4425 = vperm.xlu0 %4424, %v340
      %v4426 = vpop.permute.xlu0 %4425
      %4428 = vset.pattern.permute.xlu0 7
      %4429 = vperm.xlu0 %4428, %v341
      %v4430 = vpop.permute.xlu0 %4429
      %4432 = vset.pattern.permute.xlu0 7
      %4433 = vperm.xlu0 %4432, %v342
      %v4434 = vpop.permute.xlu0 %4433
      %4436 = vset.pattern.permute.xlu0 7
      %4437 = vperm.xlu0 %4436, %v343
      %v4438 = vpop.permute.xlu0 %4437
      %v4440 = vmul.f32 %v4186, %v3736
      %v4441 = vmul.f32 %v4190, %v3737
      %v4442 = vmul.f32 %v4194, %v3738
      %v4443 = vmul.f32 %v4198, %v3739
      %v4444 = vmul.f32 %v4202, %v3740
      %v4445 = vmul.f32 %v4206, %v3741
      %v4446 = vmul.f32 %v4210, %v3742
      %v4447 = vmul.f32 %v4214, %v3743
      %v4448 = vmul.f32 %v4218, %v3744
      %v4449 = vmul.f32 %v4222, %v3745
      %v4450 = vmul.f32 %v4226, %v3746
      %v4451 = vmul.f32 %v4230, %v3747
      %v4452 = vmul.f32 %v4234, %v3748
      %v4453 = vmul.f32 %v4238, %v3749
      %v4454 = vmul.f32 %v4242, %v3750
      %v4455 = vmul.f32 %v4246, %v3751
      %v4456 = vmul.f32 %v4250, %v3752
      %v4457 = vmul.f32 %v4254, %v3753
      %v4458 = vmul.f32 %v4258, %v3754
      %v4459 = vmul.f32 %v4262, %v3755
      %v4460 = vmul.f32 %v4266, %v3756
      %v4461 = vmul.f32 %v4270, %v3757
      %v4462 = vmul.f32 %v4274, %v3758
      %v4463 = vmul.f32 %v4278, %v3759
      %v4464 = vmul.f32 %v4282, %v3760
      %v4465 = vmul.f32 %v4286, %v3761
      %v4466 = vmul.f32 %v4290, %v3762
      %v4467 = vmul.f32 %v4294, %v3763
      %v4468 = vmul.f32 %v4298, %v3764
      %v4469 = vmul.f32 %v4302, %v3765
      %v4470 = vmul.f32 %v4306, %v3766
      %v4471 = vmul.f32 %v4310, %v3767
      %v4472 = vmul.f32 %v4314, %v3768
      %v4473 = vmul.f32 %v4318, %v3769
      %v4474 = vmul.f32 %v4322, %v3770
      %v4475 = vmul.f32 %v4326, %v3771
      %v4476 = vmul.f32 %v4330, %v3772
      %v4477 = vmul.f32 %v4334, %v3773
      %v4478 = vmul.f32 %v4338, %v3774
      %v4479 = vmul.f32 %v4342, %v3775
      %v4480 = vmul.f32 %v4346, %v3776
      %v4481 = vmul.f32 %v4350, %v3777
      %v4482 = vmul.f32 %v4354, %v3778
      %v4483 = vmul.f32 %v4358, %v3779
      %v4484 = vmul.f32 %v4362, %v3780
      %v4485 = vmul.f32 %v4366, %v3781
      %v4486 = vmul.f32 %v4370, %v3782
      %v4487 = vmul.f32 %v4374, %v3783
      %v4488 = vmul.f32 %v4378, %v3784
      %v4489 = vmul.f32 %v4382, %v3785
      %v4490 = vmul.f32 %v4386, %v3786
      %v4491 = vmul.f32 %v4390, %v3787
      %v4492 = vmul.f32 %v4394, %v3788
      %v4493 = vmul.f32 %v4398, %v3789
      %v4494 = vmul.f32 %v4402, %v3790
      %v4495 = vmul.f32 %v4406, %v3791
      %v4496 = vmul.f32 %v4410, %v3792
      %v4497 = vmul.f32 %v4414, %v3793
      %v4498 = vmul.f32 %v4418, %v3794
      %v4499 = vmul.f32 %v4422, %v3795
      %v4500 = vmul.f32 %v4426, %v3796
      %v4501 = vmul.f32 %v4430, %v3797
      %v4502 = vmul.f32 %v4434, %v3798
      %v4503 = vmul.f32 %v4438, %v3799
      %4568 = vrot.lane.b32.xlu0 %v4440, 127
      %v4569 = vpop.permute.xlu0 %4568
      %4570 = vrot.lane.b32.xlu0 %v4441, 127
      %v4571 = vpop.permute.xlu0 %4570
      %4572 = vrot.lane.b32.xlu0 %v4442, 127
      %v4573 = vpop.permute.xlu0 %4572
      %4574 = vrot.lane.b32.xlu0 %v4443, 127
      %v4575 = vpop.permute.xlu0 %4574
      %4576 = vrot.lane.b32.xlu0 %v4444, 127
      %v4577 = vpop.permute.xlu0 %4576
      %4578 = vrot.lane.b32.xlu0 %v4445, 127
      %v4579 = vpop.permute.xlu0 %4578
      %4580 = vrot.lane.b32.xlu0 %v4446, 127
      %v4581 = vpop.permute.xlu0 %4580
      %4582 = vrot.lane.b32.xlu0 %v4447, 127
      %v4583 = vpop.permute.xlu0 %4582
      %4584 = vrot.lane.b32.xlu0 %v4448, 127
      %v4585 = vpop.permute.xlu0 %4584
      %4586 = vrot.lane.b32.xlu0 %v4449, 127
      %v4587 = vpop.permute.xlu0 %4586
      %4588 = vrot.lane.b32.xlu0 %v4450, 127
      %v4589 = vpop.permute.xlu0 %4588
      %4590 = vrot.lane.b32.xlu0 %v4451, 127
      %v4591 = vpop.permute.xlu0 %4590
      %4592 = vrot.lane.b32.xlu0 %v4452, 127
      %v4593 = vpop.permute.xlu0 %4592
      %4594 = vrot.lane.b32.xlu0 %v4453, 127
      %v4595 = vpop.permute.xlu0 %4594
      %4596 = vrot.lane.b32.xlu0 %v4454, 127
      %v4597 = vpop.permute.xlu0 %4596
      %4598 = vrot.lane.b32.xlu0 %v4455, 127
      %v4599 = vpop.permute.xlu0 %4598
      %4600 = vrot.lane.b32.xlu0 %v4456, 127
      %v4601 = vpop.permute.xlu0 %4600
      %4602 = vrot.lane.b32.xlu0 %v4457, 127
      %v4603 = vpop.permute.xlu0 %4602
      %4604 = vrot.lane.b32.xlu0 %v4458, 127
      %v4605 = vpop.permute.xlu0 %4604
      %4606 = vrot.lane.b32.xlu0 %v4459, 127
      %v4607 = vpop.permute.xlu0 %4606
      %4608 = vrot.lane.b32.xlu0 %v4460, 127
      %v4609 = vpop.permute.xlu0 %4608
      %4610 = vrot.lane.b32.xlu0 %v4461, 127
      %v4611 = vpop.permute.xlu0 %4610
      %4612 = vrot.lane.b32.xlu0 %v4462, 127
      %v4613 = vpop.permute.xlu0 %4612
      %4614 = vrot.lane.b32.xlu0 %v4463, 127
      %v4615 = vpop.permute.xlu0 %4614
      %4616 = vrot.lane.b32.xlu0 %v4464, 127
      %v4617 = vpop.permute.xlu0 %4616
      %4618 = vrot.lane.b32.xlu0 %v4465, 127
      %v4619 = vpop.permute.xlu0 %4618
      %4620 = vrot.lane.b32.xlu0 %v4466, 127
      %v4621 = vpop.permute.xlu0 %4620
      %4622 = vrot.lane.b32.xlu0 %v4467, 127
      %v4623 = vpop.permute.xlu0 %4622
      %4624 = vrot.lane.b32.xlu0 %v4468, 127
      %v4625 = vpop.permute.xlu0 %4624
      %4626 = vrot.lane.b32.xlu0 %v4469, 127
      %v4627 = vpop.permute.xlu0 %4626
      %4628 = vrot.lane.b32.xlu0 %v4470, 127
      %v4629 = vpop.permute.xlu0 %4628
      %4630 = vrot.lane.b32.xlu0 %v4471, 127
      %v4631 = vpop.permute.xlu0 %4630
      %4632 = vrot.lane.b32.xlu0 %v4472, 127
      %v4633 = vpop.permute.xlu0 %4632
      %4634 = vrot.lane.b32.xlu0 %v4473, 127
      %v4635 = vpop.permute.xlu0 %4634
      %4636 = vrot.lane.b32.xlu0 %v4474, 127
      %v4637 = vpop.permute.xlu0 %4636
      %4638 = vrot.lane.b32.xlu0 %v4475, 127
      %v4639 = vpop.permute.xlu0 %4638
      %4640 = vrot.lane.b32.xlu0 %v4476, 127
      %v4641 = vpop.permute.xlu0 %4640
      %4642 = vrot.lane.b32.xlu0 %v4477, 127
      %v4643 = vpop.permute.xlu0 %4642
      %4644 = vrot.lane.b32.xlu0 %v4478, 127
      %v4645 = vpop.permute.xlu0 %4644
      %4646 = vrot.lane.b32.xlu0 %v4479, 127
      %v4647 = vpop.permute.xlu0 %4646
      %4648 = vrot.lane.b32.xlu0 %v4480, 127
      %v4649 = vpop.permute.xlu0 %4648
      %4650 = vrot.lane.b32.xlu0 %v4481, 127
      %v4651 = vpop.permute.xlu0 %4650
      %4652 = vrot.lane.b32.xlu0 %v4482, 127
      %v4653 = vpop.permute.xlu0 %4652
      %4654 = vrot.lane.b32.xlu0 %v4483, 127
      %v4655 = vpop.permute.xlu0 %4654
      %4656 = vrot.lane.b32.xlu0 %v4484, 127
      %v4657 = vpop.permute.xlu0 %4656
      %4658 = vrot.lane.b32.xlu0 %v4485, 127
      %v4659 = vpop.permute.xlu0 %4658
      %4660 = vrot.lane.b32.xlu0 %v4486, 127
      %v4661 = vpop.permute.xlu0 %4660
      %4662 = vrot.lane.b32.xlu0 %v4487, 127
      %v4663 = vpop.permute.xlu0 %4662
      %4664 = vrot.lane.b32.xlu0 %v4488, 127
      %v4665 = vpop.permute.xlu0 %4664
      %4666 = vrot.lane.b32.xlu0 %v4489, 127
      %v4667 = vpop.permute.xlu0 %4666
      %4668 = vrot.lane.b32.xlu0 %v4490, 127
      %v4669 = vpop.permute.xlu0 %4668
      %4670 = vrot.lane.b32.xlu0 %v4491, 127
      %v4671 = vpop.permute.xlu0 %4670
      %4672 = vrot.lane.b32.xlu0 %v4492, 127
      %v4673 = vpop.permute.xlu0 %4672
      %4674 = vrot.lane.b32.xlu0 %v4493, 127
      %v4675 = vpop.permute.xlu0 %4674
      %4676 = vrot.lane.b32.xlu0 %v4494, 127
      %v4677 = vpop.permute.xlu0 %4676
      %4678 = vrot.lane.b32.xlu0 %v4495, 127
      %v4679 = vpop.permute.xlu0 %4678
      %4680 = vrot.lane.b32.xlu0 %v4496, 127
      %v4681 = vpop.permute.xlu0 %4680
      %4682 = vrot.lane.b32.xlu0 %v4497, 127
      %v4683 = vpop.permute.xlu0 %4682
      %4684 = vrot.lane.b32.xlu0 %v4498, 127
      %v4685 = vpop.permute.xlu0 %4684
      %4686 = vrot.lane.b32.xlu0 %v4499, 127
      %v4687 = vpop.permute.xlu0 %4686
      %4688 = vrot.lane.b32.xlu0 %v4500, 127
      %v4689 = vpop.permute.xlu0 %4688
      %4690 = vrot.lane.b32.xlu0 %v4501, 127
      %v4691 = vpop.permute.xlu0 %4690
      %4692 = vrot.lane.b32.xlu0 %v4502, 127
      %v4693 = vpop.permute.xlu0 %4692
      %4694 = vrot.lane.b32.xlu0 %v4503, 127
      %v4695 = vpop.permute.xlu0 %4694
      %v4760 = vadd.f32 %v4120, %v4569
      %v4761 = vadd.f32 %v4121, %v4571
      %v4762 = vadd.f32 %v4122, %v4573
      %v4763 = vadd.f32 %v4123, %v4575
      %v4764 = vadd.f32 %v4124, %v4577
      %v4765 = vadd.f32 %v4125, %v4579
      %v4766 = vadd.f32 %v4126, %v4581
      %v4767 = vadd.f32 %v4127, %v4583
      %v4768 = vadd.f32 %v4128, %v4585
      %v4769 = vadd.f32 %v4129, %v4587
      %v4770 = vadd.f32 %v4130, %v4589
      %v4771 = vadd.f32 %v4131, %v4591
      %v4772 = vadd.f32 %v4132, %v4593
      %v4773 = vadd.f32 %v4133, %v4595
      %v4774 = vadd.f32 %v4134, %v4597
      %v4775 = vadd.f32 %v4135, %v4599
      %v4776 = vadd.f32 %v4136, %v4601
      %v4777 = vadd.f32 %v4137, %v4603
      %v4778 = vadd.f32 %v4138, %v4605
      %v4779 = vadd.f32 %v4139, %v4607
      %v4780 = vadd.f32 %v4140, %v4609
      %v4781 = vadd.f32 %v4141, %v4611
      %v4782 = vadd.f32 %v4142, %v4613
      %v4783 = vadd.f32 %v4143, %v4615
      %v4784 = vadd.f32 %v4144, %v4617
      %v4785 = vadd.f32 %v4145, %v4619
      %v4786 = vadd.f32 %v4146, %v4621
      %v4787 = vadd.f32 %v4147, %v4623
      %v4788 = vadd.f32 %v4148, %v4625
      %v4789 = vadd.f32 %v4149, %v4627
      %v4790 = vadd.f32 %v4150, %v4629
      %v4791 = vadd.f32 %v4151, %v4631
      %v4792 = vadd.f32 %v4152, %v4633
      %v4793 = vadd.f32 %v4153, %v4635
      %v4794 = vadd.f32 %v4154, %v4637
      %v4795 = vadd.f32 %v4155, %v4639
      %v4796 = vadd.f32 %v4156, %v4641
      %v4797 = vadd.f32 %v4157, %v4643
      %v4798 = vadd.f32 %v4158, %v4645
      %v4799 = vadd.f32 %v4159, %v4647
      %v4800 = vadd.f32 %v4160, %v4649
      %v4801 = vadd.f32 %v4161, %v4651
      %v4802 = vadd.f32 %v4162, %v4653
      %v4803 = vadd.f32 %v4163, %v4655
      %v4804 = vadd.f32 %v4164, %v4657
      %v4805 = vadd.f32 %v4165, %v4659
      %v4806 = vadd.f32 %v4166, %v4661
      %v4807 = vadd.f32 %v4167, %v4663
      %v4808 = vadd.f32 %v4168, %v4665
      %v4809 = vadd.f32 %v4169, %v4667
      %v4810 = vadd.f32 %v4170, %v4669
      %v4811 = vadd.f32 %v4171, %v4671
      %v4812 = vadd.f32 %v4172, %v4673
      %v4813 = vadd.f32 %v4173, %v4675
      %v4814 = vadd.f32 %v4174, %v4677
      %v4815 = vadd.f32 %v4175, %v4679
      %v4816 = vadd.f32 %v4176, %v4681
      %v4817 = vadd.f32 %v4177, %v4683
      %v4818 = vadd.f32 %v4178, %v4685
      %v4819 = vadd.f32 %v4179, %v4687
      %v4820 = vadd.f32 %v4180, %v4689
      %v4821 = vadd.f32 %v4181, %v4691
      %v4822 = vadd.f32 %v4182, %v4693
      %v4823 = vadd.f32 %v4183, %v4695
      %4824 = vset.pattern.permute.xlu0 8
      %4825 = vperm.xlu0 %4824, %v280
      %v4826 = vpop.permute.xlu0 %4825
      %4828 = vset.pattern.permute.xlu0 8
      %4829 = vperm.xlu0 %4828, %v281
      %v4830 = vpop.permute.xlu0 %4829
      %4832 = vset.pattern.permute.xlu0 8
      %4833 = vperm.xlu0 %4832, %v282
      %v4834 = vpop.permute.xlu0 %4833
      %4836 = vset.pattern.permute.xlu0 8
      %4837 = vperm.xlu0 %4836, %v283
      %v4838 = vpop.permute.xlu0 %4837
      %4840 = vset.pattern.permute.xlu0 8
      %4841 = vperm.xlu0 %4840, %v284
      %v4842 = vpop.permute.xlu0 %4841
      %4844 = vset.pattern.permute.xlu0 8
      %4845 = vperm.xlu0 %4844, %v285
      %v4846 = vpop.permute.xlu0 %4845
      %4848 = vset.pattern.permute.xlu0 8
      %4849 = vperm.xlu0 %4848, %v286
      %v4850 = vpop.permute.xlu0 %4849
      %4852 = vset.pattern.permute.xlu0 8
      %4853 = vperm.xlu0 %4852, %v287
      %v4854 = vpop.permute.xlu0 %4853
      %4856 = vset.pattern.permute.xlu0 8
      %4857 = vperm.xlu0 %4856, %v288
      %v4858 = vpop.permute.xlu0 %4857
      %4860 = vset.pattern.permute.xlu0 8
      %4861 = vperm.xlu0 %4860, %v289
      %v4862 = vpop.permute.xlu0 %4861
      %4864 = vset.pattern.permute.xlu0 8
      %4865 = vperm.xlu0 %4864, %v290
      %v4866 = vpop.permute.xlu0 %4865
      %4868 = vset.pattern.permute.xlu0 8
      %4869 = vperm.xlu0 %4868, %v291
      %v4870 = vpop.permute.xlu0 %4869
      %4872 = vset.pattern.permute.xlu0 8
      %4873 = vperm.xlu0 %4872, %v292
      %v4874 = vpop.permute.xlu0 %4873
      %4876 = vset.pattern.permute.xlu0 8
      %4877 = vperm.xlu0 %4876, %v293
      %v4878 = vpop.permute.xlu0 %4877
      %4880 = vset.pattern.permute.xlu0 8
      %4881 = vperm.xlu0 %4880, %v294
      %v4882 = vpop.permute.xlu0 %4881
      %4884 = vset.pattern.permute.xlu0 8
      %4885 = vperm.xlu0 %4884, %v295
      %v4886 = vpop.permute.xlu0 %4885
      %4888 = vset.pattern.permute.xlu0 8
      %4889 = vperm.xlu0 %4888, %v296
      %v4890 = vpop.permute.xlu0 %4889
      %4892 = vset.pattern.permute.xlu0 8
      %4893 = vperm.xlu0 %4892, %v297
      %v4894 = vpop.permute.xlu0 %4893
      %4896 = vset.pattern.permute.xlu0 8
      %4897 = vperm.xlu0 %4896, %v298
      %v4898 = vpop.permute.xlu0 %4897
      %4900 = vset.pattern.permute.xlu0 8
      %4901 = vperm.xlu0 %4900, %v299
      %v4902 = vpop.permute.xlu0 %4901
      %4904 = vset.pattern.permute.xlu0 8
      %4905 = vperm.xlu0 %4904, %v300
      %v4906 = vpop.permute.xlu0 %4905
      %4908 = vset.pattern.permute.xlu0 8
      %4909 = vperm.xlu0 %4908, %v301
      %v4910 = vpop.permute.xlu0 %4909
      %4912 = vset.pattern.permute.xlu0 8
      %4913 = vperm.xlu0 %4912, %v302
      %v4914 = vpop.permute.xlu0 %4913
      %4916 = vset.pattern.permute.xlu0 8
      %4917 = vperm.xlu0 %4916, %v303
      %v4918 = vpop.permute.xlu0 %4917
      %4920 = vset.pattern.permute.xlu0 8
      %4921 = vperm.xlu0 %4920, %v304
      %v4922 = vpop.permute.xlu0 %4921
      %4924 = vset.pattern.permute.xlu0 8
      %4925 = vperm.xlu0 %4924, %v305
      %v4926 = vpop.permute.xlu0 %4925
      %4928 = vset.pattern.permute.xlu0 8
      %4929 = vperm.xlu0 %4928, %v306
      %v4930 = vpop.permute.xlu0 %4929
      %4932 = vset.pattern.permute.xlu0 8
      %4933 = vperm.xlu0 %4932, %v307
      %v4934 = vpop.permute.xlu0 %4933
      %4936 = vset.pattern.permute.xlu0 8
      %4937 = vperm.xlu0 %4936, %v308
      %v4938 = vpop.permute.xlu0 %4937
      %4940 = vset.pattern.permute.xlu0 8
      %4941 = vperm.xlu0 %4940, %v309
      %v4942 = vpop.permute.xlu0 %4941
      %4944 = vset.pattern.permute.xlu0 8
      %4945 = vperm.xlu0 %4944, %v310
      %v4946 = vpop.permute.xlu0 %4945
      %4948 = vset.pattern.permute.xlu0 8
      %4949 = vperm.xlu0 %4948, %v311
      %v4950 = vpop.permute.xlu0 %4949
      %4952 = vset.pattern.permute.xlu0 8
      %4953 = vperm.xlu0 %4952, %v312
      %v4954 = vpop.permute.xlu0 %4953
      %4956 = vset.pattern.permute.xlu0 8
      %4957 = vperm.xlu0 %4956, %v313
      %v4958 = vpop.permute.xlu0 %4957
      %4960 = vset.pattern.permute.xlu0 8
      %4961 = vperm.xlu0 %4960, %v314
      %v4962 = vpop.permute.xlu0 %4961
      %4964 = vset.pattern.permute.xlu0 8
      %4965 = vperm.xlu0 %4964, %v315
      %v4966 = vpop.permute.xlu0 %4965
      %4968 = vset.pattern.permute.xlu0 8
      %4969 = vperm.xlu0 %4968, %v316
      %v4970 = vpop.permute.xlu0 %4969
      %4972 = vset.pattern.permute.xlu0 8
      %4973 = vperm.xlu0 %4972, %v317
      %v4974 = vpop.permute.xlu0 %4973
      %4976 = vset.pattern.permute.xlu0 8
      %4977 = vperm.xlu0 %4976, %v318
      %v4978 = vpop.permute.xlu0 %4977
      %4980 = vset.pattern.permute.xlu0 8
      %4981 = vperm.xlu0 %4980, %v319
      %v4982 = vpop.permute.xlu0 %4981
      %4984 = vset.pattern.permute.xlu0 8
      %4985 = vperm.xlu0 %4984, %v320
      %v4986 = vpop.permute.xlu0 %4985
      %4988 = vset.pattern.permute.xlu0 8
      %4989 = vperm.xlu0 %4988, %v321
      %v4990 = vpop.permute.xlu0 %4989
      %4992 = vset.pattern.permute.xlu0 8
      %4993 = vperm.xlu0 %4992, %v322
      %v4994 = vpop.permute.xlu0 %4993
      %4996 = vset.pattern.permute.xlu0 8
      %4997 = vperm.xlu0 %4996, %v323
      %v4998 = vpop.permute.xlu0 %4997
      %5000 = vset.pattern.permute.xlu0 8
      %5001 = vperm.xlu0 %5000, %v324
      %v5002 = vpop.permute.xlu0 %5001
      %5004 = vset.pattern.permute.xlu0 8
      %5005 = vperm.xlu0 %5004, %v325
      %v5006 = vpop.permute.xlu0 %5005
      %5008 = vset.pattern.permute.xlu0 8
      %5009 = vperm.xlu0 %5008, %v326
      %v5010 = vpop.permute.xlu0 %5009
      %5012 = vset.pattern.permute.xlu0 8
      %5013 = vperm.xlu0 %5012, %v327
      %v5014 = vpop.permute.xlu0 %5013
      %5016 = vset.pattern.permute.xlu0 8
      %5017 = vperm.xlu0 %5016, %v328
      %v5018 = vpop.permute.xlu0 %5017
      %5020 = vset.pattern.permute.xlu0 8
      %5021 = vperm.xlu0 %5020, %v329
      %v5022 = vpop.permute.xlu0 %5021
      %5024 = vset.pattern.permute.xlu0 8
      %5025 = vperm.xlu0 %5024, %v330
      %v5026 = vpop.permute.xlu0 %5025
      %5028 = vset.pattern.permute.xlu0 8
      %5029 = vperm.xlu0 %5028, %v331
      %v5030 = vpop.permute.xlu0 %5029
      %5032 = vset.pattern.permute.xlu0 8
      %5033 = vperm.xlu0 %5032, %v332
      %v5034 = vpop.permute.xlu0 %5033
      %5036 = vset.pattern.permute.xlu0 8
      %5037 = vperm.xlu0 %5036, %v333
      %v5038 = vpop.permute.xlu0 %5037
      %5040 = vset.pattern.permute.xlu0 8
      %5041 = vperm.xlu0 %5040, %v334
      %v5042 = vpop.permute.xlu0 %5041
      %5044 = vset.pattern.permute.xlu0 8
      %5045 = vperm.xlu0 %5044, %v335
      %v5046 = vpop.permute.xlu0 %5045
      %5048 = vset.pattern.permute.xlu0 8
      %5049 = vperm.xlu0 %5048, %v336
      %v5050 = vpop.permute.xlu0 %5049
      %5052 = vset.pattern.permute.xlu0 8
      %5053 = vperm.xlu0 %5052, %v337
      %v5054 = vpop.permute.xlu0 %5053
      %5056 = vset.pattern.permute.xlu0 8
      %5057 = vperm.xlu0 %5056, %v338
      %v5058 = vpop.permute.xlu0 %5057
      %5060 = vset.pattern.permute.xlu0 8
      %5061 = vperm.xlu0 %5060, %v339
      %v5062 = vpop.permute.xlu0 %5061
      %5064 = vset.pattern.permute.xlu0 8
      %5065 = vperm.xlu0 %5064, %v340
      %v5066 = vpop.permute.xlu0 %5065
      %5068 = vset.pattern.permute.xlu0 8
      %5069 = vperm.xlu0 %5068, %v341
      %v5070 = vpop.permute.xlu0 %5069
      %5072 = vset.pattern.permute.xlu0 8
      %5073 = vperm.xlu0 %5072, %v342
      %v5074 = vpop.permute.xlu0 %5073
      %5076 = vset.pattern.permute.xlu0 8
      %5077 = vperm.xlu0 %5076, %v343
      %v5078 = vpop.permute.xlu0 %5077
      %v5080 = vmul.f32 %v4826, %v3736
      %v5081 = vmul.f32 %v4830, %v3737
      %v5082 = vmul.f32 %v4834, %v3738
      %v5083 = vmul.f32 %v4838, %v3739
      %v5084 = vmul.f32 %v4842, %v3740
      %v5085 = vmul.f32 %v4846, %v3741
      %v5086 = vmul.f32 %v4850, %v3742
      %v5087 = vmul.f32 %v4854, %v3743
      %v5088 = vmul.f32 %v4858, %v3744
      %v5089 = vmul.f32 %v4862, %v3745
      %v5090 = vmul.f32 %v4866, %v3746
      %v5091 = vmul.f32 %v4870, %v3747
      %v5092 = vmul.f32 %v4874, %v3748
      %v5093 = vmul.f32 %v4878, %v3749
      %v5094 = vmul.f32 %v4882, %v3750
      %v5095 = vmul.f32 %v4886, %v3751
      %v5096 = vmul.f32 %v4890, %v3752
      %v5097 = vmul.f32 %v4894, %v3753
      %v5098 = vmul.f32 %v4898, %v3754
      %v5099 = vmul.f32 %v4902, %v3755
      %v5100 = vmul.f32 %v4906, %v3756
      %v5101 = vmul.f32 %v4910, %v3757
      %v5102 = vmul.f32 %v4914, %v3758
      %v5103 = vmul.f32 %v4918, %v3759
      %v5104 = vmul.f32 %v4922, %v3760
      %v5105 = vmul.f32 %v4926, %v3761
      %v5106 = vmul.f32 %v4930, %v3762
      %v5107 = vmul.f32 %v4934, %v3763
      %v5108 = vmul.f32 %v4938, %v3764
      %v5109 = vmul.f32 %v4942, %v3765
      %v5110 = vmul.f32 %v4946, %v3766
      %v5111 = vmul.f32 %v4950, %v3767
      %v5112 = vmul.f32 %v4954, %v3768
      %v5113 = vmul.f32 %v4958, %v3769
      %v5114 = vmul.f32 %v4962, %v3770
      %v5115 = vmul.f32 %v4966, %v3771
      %v5116 = vmul.f32 %v4970, %v3772
      %v5117 = vmul.f32 %v4974, %v3773
      %v5118 = vmul.f32 %v4978, %v3774
      %v5119 = vmul.f32 %v4982, %v3775
      %v5120 = vmul.f32 %v4986, %v3776
      %v5121 = vmul.f32 %v4990, %v3777
      %v5122 = vmul.f32 %v4994, %v3778
      %v5123 = vmul.f32 %v4998, %v3779
      %v5124 = vmul.f32 %v5002, %v3780
      %v5125 = vmul.f32 %v5006, %v3781
      %v5126 = vmul.f32 %v5010, %v3782
      %v5127 = vmul.f32 %v5014, %v3783
      %v5128 = vmul.f32 %v5018, %v3784
      %v5129 = vmul.f32 %v5022, %v3785
      %v5130 = vmul.f32 %v5026, %v3786
      %v5131 = vmul.f32 %v5030, %v3787
      %v5132 = vmul.f32 %v5034, %v3788
      %v5133 = vmul.f32 %v5038, %v3789
      %v5134 = vmul.f32 %v5042, %v3790
      %v5135 = vmul.f32 %v5046, %v3791
      %v5136 = vmul.f32 %v5050, %v3792
      %v5137 = vmul.f32 %v5054, %v3793
      %v5138 = vmul.f32 %v5058, %v3794
      %v5139 = vmul.f32 %v5062, %v3795
      %v5140 = vmul.f32 %v5066, %v3796
      %v5141 = vmul.f32 %v5070, %v3797
      %v5142 = vmul.f32 %v5074, %v3798
      %v5143 = vmul.f32 %v5078, %v3799
      %5208 = vrot.lane.b32.xlu0 %v5080, 126
      %v5209 = vpop.permute.xlu0 %5208
      %5210 = vrot.lane.b32.xlu0 %v5081, 126
      %v5211 = vpop.permute.xlu0 %5210
      %5212 = vrot.lane.b32.xlu0 %v5082, 126
      %v5213 = vpop.permute.xlu0 %5212
      %5214 = vrot.lane.b32.xlu0 %v5083, 126
      %v5215 = vpop.permute.xlu0 %5214
      %5216 = vrot.lane.b32.xlu0 %v5084, 126
      %v5217 = vpop.permute.xlu0 %5216
      %5218 = vrot.lane.b32.xlu0 %v5085, 126
      %v5219 = vpop.permute.xlu0 %5218
      %5220 = vrot.lane.b32.xlu0 %v5086, 126
      %v5221 = vpop.permute.xlu0 %5220
      %5222 = vrot.lane.b32.xlu0 %v5087, 126
      %v5223 = vpop.permute.xlu0 %5222
      %5224 = vrot.lane.b32.xlu0 %v5088, 126
      %v5225 = vpop.permute.xlu0 %5224
      %5226 = vrot.lane.b32.xlu0 %v5089, 126
      %v5227 = vpop.permute.xlu0 %5226
      %5228 = vrot.lane.b32.xlu0 %v5090, 126
      %v5229 = vpop.permute.xlu0 %5228
      %5230 = vrot.lane.b32.xlu0 %v5091, 126
      %v5231 = vpop.permute.xlu0 %5230
      %5232 = vrot.lane.b32.xlu0 %v5092, 126
      %v5233 = vpop.permute.xlu0 %5232
      %5234 = vrot.lane.b32.xlu0 %v5093, 126
      %v5235 = vpop.permute.xlu0 %5234
      %5236 = vrot.lane.b32.xlu0 %v5094, 126
      %v5237 = vpop.permute.xlu0 %5236
      %5238 = vrot.lane.b32.xlu0 %v5095, 126
      %v5239 = vpop.permute.xlu0 %5238
      %5240 = vrot.lane.b32.xlu0 %v5096, 126
      %v5241 = vpop.permute.xlu0 %5240
      %5242 = vrot.lane.b32.xlu0 %v5097, 126
      %v5243 = vpop.permute.xlu0 %5242
      %5244 = vrot.lane.b32.xlu0 %v5098, 126
      %v5245 = vpop.permute.xlu0 %5244
      %5246 = vrot.lane.b32.xlu0 %v5099, 126
      %v5247 = vpop.permute.xlu0 %5246
      %5248 = vrot.lane.b32.xlu0 %v5100, 126
      %v5249 = vpop.permute.xlu0 %5248
      %5250 = vrot.lane.b32.xlu0 %v5101, 126
      %v5251 = vpop.permute.xlu0 %5250
      %5252 = vrot.lane.b32.xlu0 %v5102, 126
      %v5253 = vpop.permute.xlu0 %5252
      %5254 = vrot.lane.b32.xlu0 %v5103, 126
      %v5255 = vpop.permute.xlu0 %5254
      %5256 = vrot.lane.b32.xlu0 %v5104, 126
      %v5257 = vpop.permute.xlu0 %5256
      %5258 = vrot.lane.b32.xlu0 %v5105, 126
      %v5259 = vpop.permute.xlu0 %5258
      %5260 = vrot.lane.b32.xlu0 %v5106, 126
      %v5261 = vpop.permute.xlu0 %5260
      %5262 = vrot.lane.b32.xlu0 %v5107, 126
      %v5263 = vpop.permute.xlu0 %5262
      %5264 = vrot.lane.b32.xlu0 %v5108, 126
      %v5265 = vpop.permute.xlu0 %5264
      %5266 = vrot.lane.b32.xlu0 %v5109, 126
      %v5267 = vpop.permute.xlu0 %5266
      %5268 = vrot.lane.b32.xlu0 %v5110, 126
      %v5269 = vpop.permute.xlu0 %5268
      %5270 = vrot.lane.b32.xlu0 %v5111, 126
      %v5271 = vpop.permute.xlu0 %5270
      %5272 = vrot.lane.b32.xlu0 %v5112, 126
      %v5273 = vpop.permute.xlu0 %5272
      %5274 = vrot.lane.b32.xlu0 %v5113, 126
      %v5275 = vpop.permute.xlu0 %5274
      %5276 = vrot.lane.b32.xlu0 %v5114, 126
      %v5277 = vpop.permute.xlu0 %5276
      %5278 = vrot.lane.b32.xlu0 %v5115, 126
      %v5279 = vpop.permute.xlu0 %5278
      %5280 = vrot.lane.b32.xlu0 %v5116, 126
      %v5281 = vpop.permute.xlu0 %5280
      %5282 = vrot.lane.b32.xlu0 %v5117, 126
      %v5283 = vpop.permute.xlu0 %5282
      %5284 = vrot.lane.b32.xlu0 %v5118, 126
      %v5285 = vpop.permute.xlu0 %5284
      %5286 = vrot.lane.b32.xlu0 %v5119, 126
      %v5287 = vpop.permute.xlu0 %5286
      %5288 = vrot.lane.b32.xlu0 %v5120, 126
      %v5289 = vpop.permute.xlu0 %5288
      %5290 = vrot.lane.b32.xlu0 %v5121, 126
      %v5291 = vpop.permute.xlu0 %5290
      %5292 = vrot.lane.b32.xlu0 %v5122, 126
      %v5293 = vpop.permute.xlu0 %5292
      %5294 = vrot.lane.b32.xlu0 %v5123, 126
      %v5295 = vpop.permute.xlu0 %5294
      %5296 = vrot.lane.b32.xlu0 %v5124, 126
      %v5297 = vpop.permute.xlu0 %5296
      %5298 = vrot.lane.b32.xlu0 %v5125, 126
      %v5299 = vpop.permute.xlu0 %5298
      %5300 = vrot.lane.b32.xlu0 %v5126, 126
      %v5301 = vpop.permute.xlu0 %5300
      %5302 = vrot.lane.b32.xlu0 %v5127, 126
      %v5303 = vpop.permute.xlu0 %5302
      %5304 = vrot.lane.b32.xlu0 %v5128, 126
      %v5305 = vpop.permute.xlu0 %5304
      %5306 = vrot.lane.b32.xlu0 %v5129, 126
      %v5307 = vpop.permute.xlu0 %5306
      %5308 = vrot.lane.b32.xlu0 %v5130, 126
      %v5309 = vpop.permute.xlu0 %5308
      %5310 = vrot.lane.b32.xlu0 %v5131, 126
      %v5311 = vpop.permute.xlu0 %5310
      %5312 = vrot.lane.b32.xlu0 %v5132, 126
      %v5313 = vpop.permute.xlu0 %5312
      %5314 = vrot.lane.b32.xlu0 %v5133, 126
      %v5315 = vpop.permute.xlu0 %5314
      %5316 = vrot.lane.b32.xlu0 %v5134, 126
      %v5317 = vpop.permute.xlu0 %5316
      %5318 = vrot.lane.b32.xlu0 %v5135, 126
      %v5319 = vpop.permute.xlu0 %5318
      %5320 = vrot.lane.b32.xlu0 %v5136, 126
      %v5321 = vpop.permute.xlu0 %5320
      %5322 = vrot.lane.b32.xlu0 %v5137, 126
      %v5323 = vpop.permute.xlu0 %5322
      %5324 = vrot.lane.b32.xlu0 %v5138, 126
      %v5325 = vpop.permute.xlu0 %5324
      %5326 = vrot.lane.b32.xlu0 %v5139, 126
      %v5327 = vpop.permute.xlu0 %5326
      %5328 = vrot.lane.b32.xlu0 %v5140, 126
      %v5329 = vpop.permute.xlu0 %5328
      %5330 = vrot.lane.b32.xlu0 %v5141, 126
      %v5331 = vpop.permute.xlu0 %5330
      %5332 = vrot.lane.b32.xlu0 %v5142, 126
      %v5333 = vpop.permute.xlu0 %5332
      %5334 = vrot.lane.b32.xlu0 %v5143, 126
      %v5335 = vpop.permute.xlu0 %5334
      %v5400 = vadd.f32 %v4760, %v5209
      %v5401 = vadd.f32 %v4761, %v5211
      %v5402 = vadd.f32 %v4762, %v5213
      %v5403 = vadd.f32 %v4763, %v5215
      %v5404 = vadd.f32 %v4764, %v5217
      %v5405 = vadd.f32 %v4765, %v5219
      %v5406 = vadd.f32 %v4766, %v5221
      %v5407 = vadd.f32 %v4767, %v5223
      %v5408 = vadd.f32 %v4768, %v5225
      %v5409 = vadd.f32 %v4769, %v5227
      %v5410 = vadd.f32 %v4770, %v5229
      %v5411 = vadd.f32 %v4771, %v5231
      %v5412 = vadd.f32 %v4772, %v5233
      %v5413 = vadd.f32 %v4773, %v5235
      %v5414 = vadd.f32 %v4774, %v5237
      %v5415 = vadd.f32 %v4775, %v5239
      %v5416 = vadd.f32 %v4776, %v5241
      %v5417 = vadd.f32 %v4777, %v5243
      %v5418 = vadd.f32 %v4778, %v5245
      %v5419 = vadd.f32 %v4779, %v5247
      %v5420 = vadd.f32 %v4780, %v5249
      %v5421 = vadd.f32 %v4781, %v5251
      %v5422 = vadd.f32 %v4782, %v5253
      %v5423 = vadd.f32 %v4783, %v5255
      %v5424 = vadd.f32 %v4784, %v5257
      %v5425 = vadd.f32 %v4785, %v5259
      %v5426 = vadd.f32 %v4786, %v5261
      %v5427 = vadd.f32 %v4787, %v5263
      %v5428 = vadd.f32 %v4788, %v5265
      %v5429 = vadd.f32 %v4789, %v5267
      %v5430 = vadd.f32 %v4790, %v5269
      %v5431 = vadd.f32 %v4791, %v5271
      %v5432 = vadd.f32 %v4792, %v5273
      %v5433 = vadd.f32 %v4793, %v5275
      %v5434 = vadd.f32 %v4794, %v5277
      %v5435 = vadd.f32 %v4795, %v5279
      %v5436 = vadd.f32 %v4796, %v5281
      %v5437 = vadd.f32 %v4797, %v5283
      %v5438 = vadd.f32 %v4798, %v5285
      %v5439 = vadd.f32 %v4799, %v5287
      %v5440 = vadd.f32 %v4800, %v5289
      %v5441 = vadd.f32 %v4801, %v5291
      %v5442 = vadd.f32 %v4802, %v5293
      %v5443 = vadd.f32 %v4803, %v5295
      %v5444 = vadd.f32 %v4804, %v5297
      %v5445 = vadd.f32 %v4805, %v5299
      %v5446 = vadd.f32 %v4806, %v5301
      %v5447 = vadd.f32 %v4807, %v5303
      %v5448 = vadd.f32 %v4808, %v5305
      %v5449 = vadd.f32 %v4809, %v5307
      %v5450 = vadd.f32 %v4810, %v5309
      %v5451 = vadd.f32 %v4811, %v5311
      %v5452 = vadd.f32 %v4812, %v5313
      %v5453 = vadd.f32 %v4813, %v5315
      %v5454 = vadd.f32 %v4814, %v5317
      %v5455 = vadd.f32 %v4815, %v5319
      %v5456 = vadd.f32 %v4816, %v5321
      %v5457 = vadd.f32 %v4817, %v5323
      %v5458 = vadd.f32 %v4818, %v5325
      %v5459 = vadd.f32 %v4819, %v5327
      %v5460 = vadd.f32 %v4820, %v5329
      %v5461 = vadd.f32 %v4821, %v5331
      %v5462 = vadd.f32 %v4822, %v5333
      %v5463 = vadd.f32 %v4823, %v5335
      %v5464 = vmul.f32 %v5400, 0.5
      %v5465 = vmul.f32 %v5401, 0.5
      %v5466 = vmul.f32 %v5402, 0.5
      %v5467 = vmul.f32 %v5403, 0.5
      %v5468 = vmul.f32 %v5404, 0.5
      %v5469 = vmul.f32 %v5405, 0.5
      %v5470 = vmul.f32 %v5406, 0.5
      %v5471 = vmul.f32 %v5407, 0.5
      %v5472 = vmul.f32 %v5408, 0.5
      %v5473 = vmul.f32 %v5409, 0.5
      %v5474 = vmul.f32 %v5410, 0.5
      %v5475 = vmul.f32 %v5411, 0.5
      %v5476 = vmul.f32 %v5412, 0.5
      %v5477 = vmul.f32 %v5413, 0.5
      %v5478 = vmul.f32 %v5414, 0.5
      %v5479 = vmul.f32 %v5415, 0.5
      %v5480 = vmul.f32 %v5416, 0.5
      %v5481 = vmul.f32 %v5417, 0.5
      %v5482 = vmul.f32 %v5418, 0.5
      %v5483 = vmul.f32 %v5419, 0.5
      %v5484 = vmul.f32 %v5420, 0.5
      %v5485 = vmul.f32 %v5421, 0.5
      %v5486 = vmul.f32 %v5422, 0.5
      %v5487 = vmul.f32 %v5423, 0.5
      %v5488 = vmul.f32 %v5424, 0.5
      %v5489 = vmul.f32 %v5425, 0.5
      %v5490 = vmul.f32 %v5426, 0.5
      %v5491 = vmul.f32 %v5427, 0.5
      %v5492 = vmul.f32 %v5428, 0.5
      %v5493 = vmul.f32 %v5429, 0.5
      %v5494 = vmul.f32 %v5430, 0.5
      %v5495 = vmul.f32 %v5431, 0.5
      %v5496 = vmul.f32 %v5432, 0.5
      %v5497 = vmul.f32 %v5433, 0.5
      %v5498 = vmul.f32 %v5434, 0.5
      %v5499 = vmul.f32 %v5435, 0.5
      %v5500 = vmul.f32 %v5436, 0.5
      %v5501 = vmul.f32 %v5437, 0.5
      %v5502 = vmul.f32 %v5438, 0.5
      %v5503 = vmul.f32 %v5439, 0.5
      %v5504 = vmul.f32 %v5440, 0.5
      %v5505 = vmul.f32 %v5441, 0.5
      %v5506 = vmul.f32 %v5442, 0.5
      %v5507 = vmul.f32 %v5443, 0.5
      %v5508 = vmul.f32 %v5444, 0.5
      %v5509 = vmul.f32 %v5445, 0.5
      %v5510 = vmul.f32 %v5446, 0.5
      %v5511 = vmul.f32 %v5447, 0.5
      %v5512 = vmul.f32 %v5448, 0.5
      %v5513 = vmul.f32 %v5449, 0.5
      %v5514 = vmul.f32 %v5450, 0.5
      %v5515 = vmul.f32 %v5451, 0.5
      %v5516 = vmul.f32 %v5452, 0.5
      %v5517 = vmul.f32 %v5453, 0.5
      %v5518 = vmul.f32 %v5454, 0.5
      %v5519 = vmul.f32 %v5455, 0.5
      %v5520 = vmul.f32 %v5456, 0.5
      %v5521 = vmul.f32 %v5457, 0.5
      %v5522 = vmul.f32 %v5458, 0.5
      %v5523 = vmul.f32 %v5459, 0.5
      %v5524 = vmul.f32 %v5460, 0.5
      %v5525 = vmul.f32 %v5461, 0.5
      %v5526 = vmul.f32 %v5462, 0.5
      %v5527 = vmul.f32 %v5463, 0.5
      %v5528 = vmul.f32 %v5400, 0.044715
      %v5529 = vmul.f32 %v5401, 0.044715
      %v5530 = vmul.f32 %v5402, 0.044715
      %v5531 = vmul.f32 %v5403, 0.044715
      %v5532 = vmul.f32 %v5404, 0.044715
      %v5533 = vmul.f32 %v5405, 0.044715
      %v5534 = vmul.f32 %v5406, 0.044715
      %v5535 = vmul.f32 %v5407, 0.044715
      %v5536 = vmul.f32 %v5408, 0.044715
      %v5537 = vmul.f32 %v5409, 0.044715
      %v5538 = vmul.f32 %v5410, 0.044715
      %v5539 = vmul.f32 %v5411, 0.044715
      %v5540 = vmul.f32 %v5412, 0.044715
      %v5541 = vmul.f32 %v5413, 0.044715
      %v5542 = vmul.f32 %v5414, 0.044715
      %v5543 = vmul.f32 %v5415, 0.044715
      %v5544 = vmul.f32 %v5416, 0.044715
      %v5545 = vmul.f32 %v5417, 0.044715
      %v5546 = vmul.f32 %v5418, 0.044715
      %v5547 = vmul.f32 %v5419, 0.044715
      %v5548 = vmul.f32 %v5420, 0.044715
      %v5549 = vmul.f32 %v5421, 0.044715
      %v5550 = vmul.f32 %v5422, 0.044715
      %v5551 = vmul.f32 %v5423, 0.044715
      %v5552 = vmul.f32 %v5424, 0.044715
      %v5553 = vmul.f32 %v5425, 0.044715
      %v5554 = vmul.f32 %v5426, 0.044715
      %v5555 = vmul.f32 %v5427, 0.044715
      %v5556 = vmul.f32 %v5428, 0.044715
      %v5557 = vmul.f32 %v5429, 0.044715
      %v5558 = vmul.f32 %v5430, 0.044715
      %v5559 = vmul.f32 %v5431, 0.044715
      %v5560 = vmul.f32 %v5432, 0.044715
      %v5561 = vmul.f32 %v5433, 0.044715
      %v5562 = vmul.f32 %v5434, 0.044715
      %v5563 = vmul.f32 %v5435, 0.044715
      %v5564 = vmul.f32 %v5436, 0.044715
      %v5565 = vmul.f32 %v5437, 0.044715
      %v5566 = vmul.f32 %v5438, 0.044715
      %v5567 = vmul.f32 %v5439, 0.044715
      %v5568 = vmul.f32 %v5440, 0.044715
      %v5569 = vmul.f32 %v5441, 0.044715
      %v5570 = vmul.f32 %v5442, 0.044715
      %v5571 = vmul.f32 %v5443, 0.044715
      %v5572 = vmul.f32 %v5444, 0.044715
      %v5573 = vmul.f32 %v5445, 0.044715
      %v5574 = vmul.f32 %v5446, 0.044715
      %v5575 = vmul.f32 %v5447, 0.044715
      %v5576 = vmul.f32 %v5448, 0.044715
      %v5577 = vmul.f32 %v5449, 0.044715
      %v5578 = vmul.f32 %v5450, 0.044715
      %v5579 = vmul.f32 %v5451, 0.044715
      %v5580 = vmul.f32 %v5452, 0.044715
      %v5581 = vmul.f32 %v5453, 0.044715
      %v5582 = vmul.f32 %v5454, 0.044715
      %v5583 = vmul.f32 %v5455, 0.044715
      %v5584 = vmul.f32 %v5456, 0.044715
      %v5585 = vmul.f32 %v5457, 0.044715
      %v5586 = vmul.f32 %v5458, 0.044715
      %v5587 = vmul.f32 %v5459, 0.044715
      %v5588 = vmul.f32 %v5460, 0.044715
      %v5589 = vmul.f32 %v5461, 0.044715
      %v5590 = vmul.f32 %v5462, 0.044715
      %v5591 = vmul.f32 %v5463, 0.044715
      %v5592 = vmul.f32 %v5528, %v5400
      %v5593 = vmul.f32 %v5529, %v5401
      %v5594 = vmul.f32 %v5530, %v5402
      %v5595 = vmul.f32 %v5531, %v5403
      %v5596 = vmul.f32 %v5532, %v5404
      %v5597 = vmul.f32 %v5533, %v5405
      %v5598 = vmul.f32 %v5534, %v5406
      %v5599 = vmul.f32 %v5535, %v5407
      %v5600 = vmul.f32 %v5536, %v5408
      %v5601 = vmul.f32 %v5537, %v5409
      %v5602 = vmul.f32 %v5538, %v5410
      %v5603 = vmul.f32 %v5539, %v5411
      %v5604 = vmul.f32 %v5540, %v5412
      %v5605 = vmul.f32 %v5541, %v5413
      %v5606 = vmul.f32 %v5542, %v5414
      %v5607 = vmul.f32 %v5543, %v5415
      %v5608 = vmul.f32 %v5544, %v5416
      %v5609 = vmul.f32 %v5545, %v5417
      %v5610 = vmul.f32 %v5546, %v5418
      %v5611 = vmul.f32 %v5547, %v5419
      %v5612 = vmul.f32 %v5548, %v5420
      %v5613 = vmul.f32 %v5549, %v5421
      %v5614 = vmul.f32 %v5550, %v5422
      %v5615 = vmul.f32 %v5551, %v5423
      %v5616 = vmul.f32 %v5552, %v5424
      %v5617 = vmul.f32 %v5553, %v5425
      %v5618 = vmul.f32 %v5554, %v5426
      %v5619 = vmul.f32 %v5555, %v5427
      %v5620 = vmul.f32 %v5556, %v5428
      %v5621 = vmul.f32 %v5557, %v5429
      %v5622 = vmul.f32 %v5558, %v5430
      %v5623 = vmul.f32 %v5559, %v5431
      %v5624 = vmul.f32 %v5560, %v5432
      %v5625 = vmul.f32 %v5561, %v5433
      %v5626 = vmul.f32 %v5562, %v5434
      %v5627 = vmul.f32 %v5563, %v5435
      %v5628 = vmul.f32 %v5564, %v5436
      %v5629 = vmul.f32 %v5565, %v5437
      %v5630 = vmul.f32 %v5566, %v5438
      %v5631 = vmul.f32 %v5567, %v5439
      %v5632 = vmul.f32 %v5568, %v5440
      %v5633 = vmul.f32 %v5569, %v5441
      %v5634 = vmul.f32 %v5570, %v5442
      %v5635 = vmul.f32 %v5571, %v5443
      %v5636 = vmul.f32 %v5572, %v5444
      %v5637 = vmul.f32 %v5573, %v5445
      %v5638 = vmul.f32 %v5574, %v5446
      %v5639 = vmul.f32 %v5575, %v5447
      %v5640 = vmul.f32 %v5576, %v5448
      %v5641 = vmul.f32 %v5577, %v5449
      %v5642 = vmul.f32 %v5578, %v5450
      %v5643 = vmul.f32 %v5579, %v5451
      %v5644 = vmul.f32 %v5580, %v5452
      %v5645 = vmul.f32 %v5581, %v5453
      %v5646 = vmul.f32 %v5582, %v5454
      %v5647 = vmul.f32 %v5583, %v5455
      %v5648 = vmul.f32 %v5584, %v5456
      %v5649 = vmul.f32 %v5585, %v5457
      %v5650 = vmul.f32 %v5586, %v5458
      %v5651 = vmul.f32 %v5587, %v5459
      %v5652 = vmul.f32 %v5588, %v5460
      %v5653 = vmul.f32 %v5589, %v5461
      %v5654 = vmul.f32 %v5590, %v5462
      %v5655 = vmul.f32 %v5591, %v5463
      %v5656 = vmul.f32 %v5592, %v5400
      %v5657 = vmul.f32 %v5593, %v5401
      %v5658 = vmul.f32 %v5594, %v5402
      %v5659 = vmul.f32 %v5595, %v5403
      %v5660 = vmul.f32 %v5596, %v5404
      %v5661 = vmul.f32 %v5597, %v5405
      %v5662 = vmul.f32 %v5598, %v5406
      %v5663 = vmul.f32 %v5599, %v5407
      %v5664 = vmul.f32 %v5600, %v5408
      %v5665 = vmul.f32 %v5601, %v5409
      %v5666 = vmul.f32 %v5602, %v5410
      %v5667 = vmul.f32 %v5603, %v5411
      %v5668 = vmul.f32 %v5604, %v5412
      %v5669 = vmul.f32 %v5605, %v5413
      %v5670 = vmul.f32 %v5606, %v5414
      %v5671 = vmul.f32 %v5607, %v5415
      %v5672 = vmul.f32 %v5608, %v5416
      %v5673 = vmul.f32 %v5609, %v5417
      %v5674 = vmul.f32 %v5610, %v5418
      %v5675 = vmul.f32 %v5611, %v5419
      %v5676 = vmul.f32 %v5612, %v5420
      %v5677 = vmul.f32 %v5613, %v5421
      %v5678 = vmul.f32 %v5614, %v5422
      %v5679 = vmul.f32 %v5615, %v5423
      %v5680 = vmul.f32 %v5616, %v5424
      %v5681 = vmul.f32 %v5617, %v5425
      %v5682 = vmul.f32 %v5618, %v5426
      %v5683 = vmul.f32 %v5619, %v5427
      %v5684 = vmul.f32 %v5620, %v5428
      %v5685 = vmul.f32 %v5621, %v5429
      %v5686 = vmul.f32 %v5622, %v5430
      %v5687 = vmul.f32 %v5623, %v5431
      %v5688 = vmul.f32 %v5624, %v5432
      %v5689 = vmul.f32 %v5625, %v5433
      %v5690 = vmul.f32 %v5626, %v5434
      %v5691 = vmul.f32 %v5627, %v5435
      %v5692 = vmul.f32 %v5628, %v5436
      %v5693 = vmul.f32 %v5629, %v5437
      %v5694 = vmul.f32 %v5630, %v5438
      %v5695 = vmul.f32 %v5631, %v5439
      %v5696 = vmul.f32 %v5632, %v5440
      %v5697 = vmul.f32 %v5633, %v5441
      %v5698 = vmul.f32 %v5634, %v5442
      %v5699 = vmul.f32 %v5635, %v5443
      %v5700 = vmul.f32 %v5636, %v5444
      %v5701 = vmul.f32 %v5637, %v5445
      %v5702 = vmul.f32 %v5638, %v5446
      %v5703 = vmul.f32 %v5639, %v5447
      %v5704 = vmul.f32 %v5640, %v5448
      %v5705 = vmul.f32 %v5641, %v5449
      %v5706 = vmul.f32 %v5642, %v5450
      %v5707 = vmul.f32 %v5643, %v5451
      %v5708 = vmul.f32 %v5644, %v5452
      %v5709 = vmul.f32 %v5645, %v5453
      %v5710 = vmul.f32 %v5646, %v5454
      %v5711 = vmul.f32 %v5647, %v5455
      %v5712 = vmul.f32 %v5648, %v5456
      %v5713 = vmul.f32 %v5649, %v5457
      %v5714 = vmul.f32 %v5650, %v5458
      %v5715 = vmul.f32 %v5651, %v5459
      %v5716 = vmul.f32 %v5652, %v5460
      %v5717 = vmul.f32 %v5653, %v5461
      %v5718 = vmul.f32 %v5654, %v5462
      %v5719 = vmul.f32 %v5655, %v5463
      %v5720 = vadd.f32 %v5400, %v5656
      %v5721 = vadd.f32 %v5401, %v5657
      %v5722 = vadd.f32 %v5402, %v5658
      %v5723 = vadd.f32 %v5403, %v5659
      %v5724 = vadd.f32 %v5404, %v5660
      %v5725 = vadd.f32 %v5405, %v5661
      %v5726 = vadd.f32 %v5406, %v5662
      %v5727 = vadd.f32 %v5407, %v5663
      %v5728 = vadd.f32 %v5408, %v5664
      %v5729 = vadd.f32 %v5409, %v5665
      %v5730 = vadd.f32 %v5410, %v5666
      %v5731 = vadd.f32 %v5411, %v5667
      %v5732 = vadd.f32 %v5412, %v5668
      %v5733 = vadd.f32 %v5413, %v5669
      %v5734 = vadd.f32 %v5414, %v5670
      %v5735 = vadd.f32 %v5415, %v5671
      %v5736 = vadd.f32 %v5416, %v5672
      %v5737 = vadd.f32 %v5417, %v5673
      %v5738 = vadd.f32 %v5418, %v5674
      %v5739 = vadd.f32 %v5419, %v5675
      %v5740 = vadd.f32 %v5420, %v5676
      %v5741 = vadd.f32 %v5421, %v5677
      %v5742 = vadd.f32 %v5422, %v5678
      %v5743 = vadd.f32 %v5423, %v5679
      %v5744 = vadd.f32 %v5424, %v5680
      %v5745 = vadd.f32 %v5425, %v5681
      %v5746 = vadd.f32 %v5426, %v5682
      %v5747 = vadd.f32 %v5427, %v5683
      %v5748 = vadd.f32 %v5428, %v5684
      %v5749 = vadd.f32 %v5429, %v5685
      %v5750 = vadd.f32 %v5430, %v5686
      %v5751 = vadd.f32 %v5431, %v5687
      %v5752 = vadd.f32 %v5432, %v5688
      %v5753 = vadd.f32 %v5433, %v5689
      %v5754 = vadd.f32 %v5434, %v5690
      %v5755 = vadd.f32 %v5435, %v5691
      %v5756 = vadd.f32 %v5436, %v5692
      %v5757 = vadd.f32 %v5437, %v5693
      %v5758 = vadd.f32 %v5438, %v5694
      %v5759 = vadd.f32 %v5439, %v5695
      %v5760 = vadd.f32 %v5440, %v5696
      %v5761 = vadd.f32 %v5441, %v5697
      %v5762 = vadd.f32 %v5442, %v5698
      %v5763 = vadd.f32 %v5443, %v5699
      %v5764 = vadd.f32 %v5444, %v5700
      %v5765 = vadd.f32 %v5445, %v5701
      %v5766 = vadd.f32 %v5446, %v5702
      %v5767 = vadd.f32 %v5447, %v5703
      %v5768 = vadd.f32 %v5448, %v5704
      %v5769 = vadd.f32 %v5449, %v5705
      %v5770 = vadd.f32 %v5450, %v5706
      %v5771 = vadd.f32 %v5451, %v5707
      %v5772 = vadd.f32 %v5452, %v5708
      %v5773 = vadd.f32 %v5453, %v5709
      %v5774 = vadd.f32 %v5454, %v5710
      %v5775 = vadd.f32 %v5455, %v5711
      %v5776 = vadd.f32 %v5456, %v5712
      %v5777 = vadd.f32 %v5457, %v5713
      %v5778 = vadd.f32 %v5458, %v5714
      %v5779 = vadd.f32 %v5459, %v5715
      %v5780 = vadd.f32 %v5460, %v5716
      %v5781 = vadd.f32 %v5461, %v5717
      %v5782 = vadd.f32 %v5462, %v5718
      %v5783 = vadd.f32 %v5463, %v5719
      %v5784 = vmul.f32 %v5720, 0.7978846
      %v5785 = vmul.f32 %v5721, 0.7978846
      %v5786 = vmul.f32 %v5722, 0.7978846
      %v5787 = vmul.f32 %v5723, 0.7978846
      %v5788 = vmul.f32 %v5724, 0.7978846
      %v5789 = vmul.f32 %v5725, 0.7978846
      %v5790 = vmul.f32 %v5726, 0.7978846
      %v5791 = vmul.f32 %v5727, 0.7978846
      %v5792 = vmul.f32 %v5728, 0.7978846
      %v5793 = vmul.f32 %v5729, 0.7978846
      %v5794 = vmul.f32 %v5730, 0.7978846
      %v5795 = vmul.f32 %v5731, 0.7978846
      %v5796 = vmul.f32 %v5732, 0.7978846
      %v5797 = vmul.f32 %v5733, 0.7978846
      %v5798 = vmul.f32 %v5734, 0.7978846
      %v5799 = vmul.f32 %v5735, 0.7978846
      %v5800 = vmul.f32 %v5736, 0.7978846
      %v5801 = vmul.f32 %v5737, 0.7978846
      %v5802 = vmul.f32 %v5738, 0.7978846
      %v5803 = vmul.f32 %v5739, 0.7978846
      %v5804 = vmul.f32 %v5740, 0.7978846
      %v5805 = vmul.f32 %v5741, 0.7978846
      %v5806 = vmul.f32 %v5742, 0.7978846
      %v5807 = vmul.f32 %v5743, 0.7978846
      %v5808 = vmul.f32 %v5744, 0.7978846
      %v5809 = vmul.f32 %v5745, 0.7978846
      %v5810 = vmul.f32 %v5746, 0.7978846
      %v5811 = vmul.f32 %v5747, 0.7978846
      %v5812 = vmul.f32 %v5748, 0.7978846
      %v5813 = vmul.f32 %v5749, 0.7978846
      %v5814 = vmul.f32 %v5750, 0.7978846
      %v5815 = vmul.f32 %v5751, 0.7978846
      %v5816 = vmul.f32 %v5752, 0.7978846
      %v5817 = vmul.f32 %v5753, 0.7978846
      %v5818 = vmul.f32 %v5754, 0.7978846
      %v5819 = vmul.f32 %v5755, 0.7978846
      %v5820 = vmul.f32 %v5756, 0.7978846
      %v5821 = vmul.f32 %v5757, 0.7978846
      %v5822 = vmul.f32 %v5758, 0.7978846
      %v5823 = vmul.f32 %v5759, 0.7978846
      %v5824 = vmul.f32 %v5760, 0.7978846
      %v5825 = vmul.f32 %v5761, 0.7978846
      %v5826 = vmul.f32 %v5762, 0.7978846
      %v5827 = vmul.f32 %v5763, 0.7978846
      %v5828 = vmul.f32 %v5764, 0.7978846
      %v5829 = vmul.f32 %v5765, 0.7978846
      %v5830 = vmul.f32 %v5766, 0.7978846
      %v5831 = vmul.f32 %v5767, 0.7978846
      %v5832 = vmul.f32 %v5768, 0.7978846
      %v5833 = vmul.f32 %v5769, 0.7978846
      %v5834 = vmul.f32 %v5770, 0.7978846
      %v5835 = vmul.f32 %v5771, 0.7978846
      %v5836 = vmul.f32 %v5772, 0.7978846
      %v5837 = vmul.f32 %v5773, 0.7978846
      %v5838 = vmul.f32 %v5774, 0.7978846
      %v5839 = vmul.f32 %v5775, 0.7978846
      %v5840 = vmul.f32 %v5776, 0.7978846
      %v5841 = vmul.f32 %v5777, 0.7978846
      %v5842 = vmul.f32 %v5778, 0.7978846
      %v5843 = vmul.f32 %v5779, 0.7978846
      %v5844 = vmul.f32 %v5780, 0.7978846
      %v5845 = vmul.f32 %v5781, 0.7978846
      %v5846 = vmul.f32 %v5782, 0.7978846
      %v5847 = vmul.f32 %v5783, 0.7978846
      %v5848 = vtanh.pop %v5784
      %v5849 = vtanh.pop %v5785
      %v5850 = vtanh.pop %v5786
      %v5851 = vtanh.pop %v5787
      %v5852 = vtanh.pop %v5788
      %v5853 = vtanh.pop %v5789
      %v5854 = vtanh.pop %v5790
      %v5855 = vtanh.pop %v5791
      %v5856 = vtanh.pop %v5792
      %v5857 = vtanh.pop %v5793
      %v5858 = vtanh.pop %v5794
      %v5859 = vtanh.pop %v5795
      %v5860 = vtanh.pop %v5796
      %v5861 = vtanh.pop %v5797
      %v5862 = vtanh.pop %v5798
      %v5863 = vtanh.pop %v5799
      %v5864 = vtanh.pop %v5800
      %v5865 = vtanh.pop %v5801
      %v5866 = vtanh.pop %v5802
      %v5867 = vtanh.pop %v5803
      %v5868 = vtanh.pop %v5804
      %v5869 = vtanh.pop %v5805
      %v5870 = vtanh.pop %v5806
      %v5871 = vtanh.pop %v5807
      %v5872 = vtanh.pop %v5808
      %v5873 = vtanh.pop %v5809
      %v5874 = vtanh.pop %v5810
      %v5875 = vtanh.pop %v5811
      %v5876 = vtanh.pop %v5812
      %v5877 = vtanh.pop %v5813
      %v5878 = vtanh.pop %v5814
      %v5879 = vtanh.pop %v5815
      %v5880 = vtanh.pop %v5816
      %v5881 = vtanh.pop %v5817
      %v5882 = vtanh.pop %v5818
      %v5883 = vtanh.pop %v5819
      %v5884 = vtanh.pop %v5820
      %v5885 = vtanh.pop %v5821
      %v5886 = vtanh.pop %v5822
      %v5887 = vtanh.pop %v5823
      %v5888 = vtanh.pop %v5824
      %v5889 = vtanh.pop %v5825
      %v5890 = vtanh.pop %v5826
      %v5891 = vtanh.pop %v5827
      %v5892 = vtanh.pop %v5828
      %v5893 = vtanh.pop %v5829
      %v5894 = vtanh.pop %v5830
      %v5895 = vtanh.pop %v5831
      %v5896 = vtanh.pop %v5832
      %v5897 = vtanh.pop %v5833
      %v5898 = vtanh.pop %v5834
      %v5899 = vtanh.pop %v5835
      %v5900 = vtanh.pop %v5836
      %v5901 = vtanh.pop %v5837
      %v5902 = vtanh.pop %v5838
      %v5903 = vtanh.pop %v5839
      %v5904 = vtanh.pop %v5840
      %v5905 = vtanh.pop %v5841
      %v5906 = vtanh.pop %v5842
      %v5907 = vtanh.pop %v5843
      %v5908 = vtanh.pop %v5844
      %v5909 = vtanh.pop %v5845
      %v5910 = vtanh.pop %v5846
      %v5911 = vtanh.pop %v5847
      %v5912 = vadd.f32 %v5848, 1.0
      %v5913 = vadd.f32 %v5849, 1.0
      %v5914 = vadd.f32 %v5850, 1.0
      %v5915 = vadd.f32 %v5851, 1.0
      %v5916 = vadd.f32 %v5852, 1.0
      %v5917 = vadd.f32 %v5853, 1.0
      %v5918 = vadd.f32 %v5854, 1.0
      %v5919 = vadd.f32 %v5855, 1.0
      %v5920 = vadd.f32 %v5856, 1.0
      %v5921 = vadd.f32 %v5857, 1.0
      %v5922 = vadd.f32 %v5858, 1.0
      %v5923 = vadd.f32 %v5859, 1.0
      %v5924 = vadd.f32 %v5860, 1.0
      %v5925 = vadd.f32 %v5861, 1.0
      %v5926 = vadd.f32 %v5862, 1.0
      %v5927 = vadd.f32 %v5863, 1.0
      %v5928 = vadd.f32 %v5864, 1.0
      %v5929 = vadd.f32 %v5865, 1.0
      %v5930 = vadd.f32 %v5866, 1.0
      %v5931 = vadd.f32 %v5867, 1.0
      %v5932 = vadd.f32 %v5868, 1.0
      %v5933 = vadd.f32 %v5869, 1.0
      %v5934 = vadd.f32 %v5870, 1.0
      %v5935 = vadd.f32 %v5871, 1.0
      %v5936 = vadd.f32 %v5872, 1.0
      %v5937 = vadd.f32 %v5873, 1.0
      %v5938 = vadd.f32 %v5874, 1.0
      %v5939 = vadd.f32 %v5875, 1.0
      %v5940 = vadd.f32 %v5876, 1.0
      %v5941 = vadd.f32 %v5877, 1.0
      %v5942 = vadd.f32 %v5878, 1.0
      %v5943 = vadd.f32 %v5879, 1.0
      %v5944 = vadd.f32 %v5880, 1.0
      %v5945 = vadd.f32 %v5881, 1.0
      %v5946 = vadd.f32 %v5882, 1.0
      %v5947 = vadd.f32 %v5883, 1.0
      %v5948 = vadd.f32 %v5884, 1.0
      %v5949 = vadd.f32 %v5885, 1.0
      %v5950 = vadd.f32 %v5886, 1.0
      %v5951 = vadd.f32 %v5887, 1.0
      %v5952 = vadd.f32 %v5888, 1.0
      %v5953 = vadd.f32 %v5889, 1.0
      %v5954 = vadd.f32 %v5890, 1.0
      %v5955 = vadd.f32 %v5891, 1.0
      %v5956 = vadd.f32 %v5892, 1.0
      %v5957 = vadd.f32 %v5893, 1.0
      %v5958 = vadd.f32 %v5894, 1.0
      %v5959 = vadd.f32 %v5895, 1.0
      %v5960 = vadd.f32 %v5896, 1.0
      %v5961 = vadd.f32 %v5897, 1.0
      %v5962 = vadd.f32 %v5898, 1.0
      %v5963 = vadd.f32 %v5899, 1.0
      %v5964 = vadd.f32 %v5900, 1.0
      %v5965 = vadd.f32 %v5901, 1.0
      %v5966 = vadd.f32 %v5902, 1.0
      %v5967 = vadd.f32 %v5903, 1.0
      %v5968 = vadd.f32 %v5904, 1.0
      %v5969 = vadd.f32 %v5905, 1.0
      %v5970 = vadd.f32 %v5906, 1.0
      %v5971 = vadd.f32 %v5907, 1.0
      %v5972 = vadd.f32 %v5908, 1.0
      %v5973 = vadd.f32 %v5909, 1.0
      %v5974 = vadd.f32 %v5910, 1.0
      %v5975 = vadd.f32 %v5911, 1.0
      %v5976 = vmul.f32 %v5464, %v5912
      %v5977 = vmul.f32 %v5465, %v5913
      %v5978 = vmul.f32 %v5466, %v5914
      %v5979 = vmul.f32 %v5467, %v5915
      %v5980 = vmul.f32 %v5468, %v5916
      %v5981 = vmul.f32 %v5469, %v5917
      %v5982 = vmul.f32 %v5470, %v5918
      %v5983 = vmul.f32 %v5471, %v5919
      %v5984 = vmul.f32 %v5472, %v5920
      %v5985 = vmul.f32 %v5473, %v5921
      %v5986 = vmul.f32 %v5474, %v5922
      %v5987 = vmul.f32 %v5475, %v5923
      %v5988 = vmul.f32 %v5476, %v5924
      %v5989 = vmul.f32 %v5477, %v5925
      %v5990 = vmul.f32 %v5478, %v5926
      %v5991 = vmul.f32 %v5479, %v5927
      %v5992 = vmul.f32 %v5480, %v5928
      %v5993 = vmul.f32 %v5481, %v5929
      %v5994 = vmul.f32 %v5482, %v5930
      %v5995 = vmul.f32 %v5483, %v5931
      %v5996 = vmul.f32 %v5484, %v5932
      %v5997 = vmul.f32 %v5485, %v5933
      %v5998 = vmul.f32 %v5486, %v5934
      %v5999 = vmul.f32 %v5487, %v5935
      %v6000 = vmul.f32 %v5488, %v5936
      %v6001 = vmul.f32 %v5489, %v5937
      %v6002 = vmul.f32 %v5490, %v5938
      %v6003 = vmul.f32 %v5491, %v5939
      %v6004 = vmul.f32 %v5492, %v5940
      %v6005 = vmul.f32 %v5493, %v5941
      %v6006 = vmul.f32 %v5494, %v5942
      %v6007 = vmul.f32 %v5495, %v5943
      %v6008 = vmul.f32 %v5496, %v5944
      %v6009 = vmul.f32 %v5497, %v5945
      %v6010 = vmul.f32 %v5498, %v5946
      %v6011 = vmul.f32 %v5499, %v5947
      %v6012 = vmul.f32 %v5500, %v5948
      %v6013 = vmul.f32 %v5501, %v5949
      %v6014 = vmul.f32 %v5502, %v5950
      %v6015 = vmul.f32 %v5503, %v5951
      %v6016 = vmul.f32 %v5504, %v5952
      %v6017 = vmul.f32 %v5505, %v5953
      %v6018 = vmul.f32 %v5506, %v5954
      %v6019 = vmul.f32 %v5507, %v5955
      %v6020 = vmul.f32 %v5508, %v5956
      %v6021 = vmul.f32 %v5509, %v5957
      %v6022 = vmul.f32 %v5510, %v5958
      %v6023 = vmul.f32 %v5511, %v5959
      %v6024 = vmul.f32 %v5512, %v5960
      %v6025 = vmul.f32 %v5513, %v5961
      %v6026 = vmul.f32 %v5514, %v5962
      %v6027 = vmul.f32 %v5515, %v5963
      %v6028 = vmul.f32 %v5516, %v5964
      %v6029 = vmul.f32 %v5517, %v5965
      %v6030 = vmul.f32 %v5518, %v5966
      %v6031 = vmul.f32 %v5519, %v5967
      %v6032 = vmul.f32 %v5520, %v5968
      %v6033 = vmul.f32 %v5521, %v5969
      %v6034 = vmul.f32 %v5522, %v5970
      %v6035 = vmul.f32 %v5523, %v5971
      %v6036 = vmul.f32 %v5524, %v5972
      %v6037 = vmul.f32 %v5525, %v5973
      %v6038 = vmul.f32 %v5526, %v5974
      %v6039 = vmul.f32 %v5527, %v5975
      %vm6040 = vcmask 64512
      %6041 = vst.msk [vmem:[%s143] sm:$0xff] %vm6040, %v5976
      %6042 = vst.msk [vmem:[%s143 + $0x8] sm:$0xff] %vm6040, %v5977
      %6043 = vst.msk [vmem:[%s143 + $0x10] sm:$0xff] %vm6040, %v5978
      %6044 = vst.msk [vmem:[%s143 + $0x18] sm:$0xff] %vm6040, %v5979
      %6045 = vst.msk [vmem:[%s143 + $0x20] sm:$0xff] %vm6040, %v5980
      %6046 = vst.msk [vmem:[%s143 + $0x28] sm:$0xff] %vm6040, %v5981
      %6047 = vst.msk [vmem:[%s143 + $0x30] sm:$0xff] %vm6040, %v5982
      %6048 = vst.msk [vmem:[%s143 + $0x38] sm:$0xff] %vm6040, %v5983
      %6049 = vst.msk [vmem:[%s143 + $0x40] sm:$0xff] %vm6040, %v5984
      %6050 = vst.msk [vmem:[%s143 + $0x48] sm:$0xff] %vm6040, %v5985
      %6051 = vst.msk [vmem:[%s143 + $0x50] sm:$0xff] %vm6040, %v5986
      %6052 = vst.msk [vmem:[%s143 + $0x58] sm:$0xff] %vm6040, %v5987
      %6053 = vst.msk [vmem:[%s143 + $0x60] sm:$0xff] %vm6040, %v5988
      %6054 = vst.msk [vmem:[%s143 + $0x68] sm:$0xff] %vm6040, %v5989
      %6055 = vst.msk [vmem:[%s143 + $0x70] sm:$0xff] %vm6040, %v5990
      %6056 = vst.msk [vmem:[%s143 + $0x78] sm:$0xff] %vm6040, %v5991
      %6057 = vst.msk [vmem:[%s143 + $0x80] sm:$0xff] %vm6040, %v5992
      %6058 = vst.msk [vmem:[%s143 + $0x88] sm:$0xff] %vm6040, %v5993
      %6059 = vst.msk [vmem:[%s143 + $0x90] sm:$0xff] %vm6040, %v5994
      %6060 = vst.msk [vmem:[%s143 + $0x98] sm:$0xff] %vm6040, %v5995
      %6061 = vst.msk [vmem:[%s143 + $0xa0] sm:$0xff] %vm6040, %v5996
      %6062 = vst.msk [vmem:[%s143 + $0xa8] sm:$0xff] %vm6040, %v5997
      %6063 = vst.msk [vmem:[%s143 + $0xb0] sm:$0xff] %vm6040, %v5998
      %6064 = vst.msk [vmem:[%s143 + $0xb8] sm:$0xff] %vm6040, %v5999
      %6065 = vst.msk [vmem:[%s143 + $0xc0] sm:$0xff] %vm6040, %v6000
      %6066 = vst.msk [vmem:[%s143 + $0xc8] sm:$0xff] %vm6040, %v6001
      %6067 = vst.msk [vmem:[%s143 + $0xd0] sm:$0xff] %vm6040, %v6002
      %6068 = vst.msk [vmem:[%s143 + $0xd8] sm:$0xff] %vm6040, %v6003
      %6069 = vst.msk [vmem:[%s143 + $0xe0] sm:$0xff] %vm6040, %v6004
      %6070 = vst.msk [vmem:[%s143 + $0xe8] sm:$0xff] %vm6040, %v6005
      %6071 = vst.msk [vmem:[%s143 + $0xf0] sm:$0xff] %vm6040, %v6006
      %6072 = vst.msk [vmem:[%s143 + $0xf8] sm:$0xff] %vm6040, %v6007
      %6073 = vst.msk [vmem:[%s143 + $0x100] sm:$0xff] %vm6040, %v6008
      %6074 = vst.msk [vmem:[%s143 + $0x108] sm:$0xff] %vm6040, %v6009
      %6075 = vst.msk [vmem:[%s143 + $0x110] sm:$0xff] %vm6040, %v6010
      %6076 = vst.msk [vmem:[%s143 + $0x118] sm:$0xff] %vm6040, %v6011
      %6077 = vst.msk [vmem:[%s143 + $0x120] sm:$0xff] %vm6040, %v6012
      %6078 = vst.msk [vmem:[%s143 + $0x128] sm:$0xff] %vm6040, %v6013
      %6079 = vst.msk [vmem:[%s143 + $0x130] sm:$0xff] %vm6040, %v6014
      %6080 = vst.msk [vmem:[%s143 + $0x138] sm:$0xff] %vm6040, %v6015
      %6081 = vst.msk [vmem:[%s143 + $0x140] sm:$0xff] %vm6040, %v6016
      %6082 = vst.msk [vmem:[%s143 + $0x148] sm:$0xff] %vm6040, %v6017
      %6083 = vst.msk [vmem:[%s143 + $0x150] sm:$0xff] %vm6040, %v6018
      %6084 = vst.msk [vmem:[%s143 + $0x158] sm:$0xff] %vm6040, %v6019
      %6085 = vst.msk [vmem:[%s143 + $0x160] sm:$0xff] %vm6040, %v6020
      %6086 = vst.msk [vmem:[%s143 + $0x168] sm:$0xff] %vm6040, %v6021
      %6087 = vst.msk [vmem:[%s143 + $0x170] sm:$0xff] %vm6040, %v6022
      %6088 = vst.msk [vmem:[%s143 + $0x178] sm:$0xff] %vm6040, %v6023
      %6089 = vst.msk [vmem:[%s143 + $0x180] sm:$0xff] %vm6040, %v6024
      %6090 = vst.msk [vmem:[%s143 + $0x188] sm:$0xff] %vm6040, %v6025
      %6091 = vst.msk [vmem:[%s143 + $0x190] sm:$0xff] %vm6040, %v6026
      %6092 = vst.msk [vmem:[%s143 + $0x198] sm:$0xff] %vm6040, %v6027
      %6093 = vst.msk [vmem:[%s143 + $0x1a0] sm:$0xff] %vm6040, %v6028
      %6094 = vst.msk [vmem:[%s143 + $0x1a8] sm:$0xff] %vm6040, %v6029
      %6095 = vst.msk [vmem:[%s143 + $0x1b0] sm:$0xff] %vm6040, %v6030
      %6096 = vst.msk [vmem:[%s143 + $0x1b8] sm:$0xff] %vm6040, %v6031
      %6097 = vst.msk [vmem:[%s143 + $0x1c0] sm:$0xff] %vm6040, %v6032
      %6098 = vst.msk [vmem:[%s143 + $0x1c8] sm:$0xff] %vm6040, %v6033
      %6099 = vst.msk [vmem:[%s143 + $0x1d0] sm:$0xff] %vm6040, %v6034
      %6100 = vst.msk [vmem:[%s143 + $0x1d8] sm:$0xff] %vm6040, %v6035
      %6101 = vst.msk [vmem:[%s143 + $0x1e0] sm:$0xff] %vm6040, %v6036
      %6102 = vst.msk [vmem:[%s143 + $0x1e8] sm:$0xff] %vm6040, %v6037
      %6103 = vst.msk [vmem:[%s143 + $0x1f0] sm:$0xff] %vm6040, %v6038
      %6104 = vst.msk [vmem:[%s143 + $0x1f8] sm:$0xff] %vm6040, %v6039
      %p6105 = scmp.lt.s32.totalorder %s13, 1
      %s6106 = scalar_select %p6105, %s13, 1
      %s6107 = smul.addr %s6106, 64
      %s6108 = smul.addr %s6107, 8
      %s6109 = scalar_lea.vmem %s2, %s6108
      // Predicated region
      $region29: #{mlsif_forward.10} parent=27 // pred_check
        %p6110 = pneg %p78
      $region30: #{mlsif_forward.10} parent=27 // pred_check_branch
        %6112 = sbr.rel (%p6110) target = $region32
      $region31: #{mlsif_forward.10} parent=27 // pred_region
        _
      $region32: #{mlsif_forward.10} parent=27 // pred_fallthru
        _
    $region28: #{mlsif_forward.10} parent=5 // pred_fallthru
      _
    %p6113 = scmp.le.s32.totalorder 2, %s8
    // Predicated region
    $region33: #{mlsif_forward.10} parent=5 // pred_check
      %p6114 = pneg %p6113
    $region34: #{mlsif_forward.10} parent=5 // pred_check_branch
      %6116 = sbr.rel (%p6114) target = $region36
    $region35: #{mlsif_forward.10} parent=5 // pred_region
      %s6117 = ssub.s32 %s8, 2
      // Predicated region
      $region37: #{mlsif_forward.10} parent=35 // pred_check
        %p6118 = pneg %p84
      $region38: #{mlsif_forward.10} parent=35 // pred_check_branch
        %6120 = sbr.rel (%p6118) target = $region40
      $region39: #{mlsif_forward.10} parent=35 // pred_region
        %p6121 = scmp.lt.s32.totalorder %s14, 1
        %s6122 = scalar_select %p6121, %s14, 1
        %s6123 = smul.addr %s6122, 64
        %s6124 = smul.addr %s6123, 8
        %s6125 = scalar_lea.vmem %s2, %s6124
      $region40: #{mlsif_forward.10} parent=35 // pred_fallthru
        _
    $region36: #{mlsif_forward.10} parent=5 // pred_fallthru
      _
  $region6: #{mlsif_forward.10} parent=0 // loop_footer
    %s12 = sadd.s32 1, %s8
  $region7: #{mlsif_forward.10} parent=0 // loop_footer_branch
    %7 = sbr.rel target = $region3
  $region8: #{mlsif_forward.10} parent=0 // loop_exit
    _

</llo_original>
